<compile_context>
chip_gen: v6e
topology: v6e:2x2x1
jax: 0.10.0
libtpu: 0.0.40
codegen_flags: <defaults>
</compile_context>

<pallas_src>
import math

import jax
import jax.numpy as jnp
from jax import lax
from jax.experimental import pallas as pl
from jax.experimental.pallas import tpu as pltpu


# ----------------------------------------------------------------------------
# Small numerics helpers (used both inside the kernel and in the JAX reference)
# ----------------------------------------------------------------------------
def _layer_norm(v, eps=1e-5):
    """PyTorch nn.LayerNorm (biased variance, eps=1e-5), no affine."""
    mu = jnp.mean(v, axis=-1, keepdims=True)
    c = v - mu
    var = jnp.mean(c * c, axis=-1, keepdims=True)
    return c * lax.rsqrt(var + eps)


def _gelu_erf(x):
    """Exact (erf-based) GELU via the Abramowitz-Stegun 7.1.26 erf approximation
    (|err| < 1.5e-7).  Uses only exp / mul / add / where, which lower cleanly in
    Mosaic (avoids relying on an erf primitive inside the kernel)."""
    z = x * 0.7071067811865476                       # x / sqrt(2)
    az = jnp.abs(z)
    t = 1.0 / (1.0 + 0.3275911 * az)
    poly = ((((1.061405429 * t - 1.453152027) * t + 1.421413741) * t
             - 0.284496736) * t + 0.254829592) * t
    erf_abs = 1.0 - poly * jnp.exp(-az * az)
    erf = jnp.where(z >= 0, erf_abs, -erf_abs)
    return 0.5 * x * (1.0 + erf)


def _round_up(n, m):
    return -(-n // m) * m


# ----------------------------------------------------------------------------
# Fused Decoder kernel: one grid step = one (batch block, decoder layer)
# ----------------------------------------------------------------------------
def _decoder_kernel(x_ref, ctx_ref, mask_self_ref, mask_ctx_ref,
                    wqkv_ref, bqkv_ref, wo_ref, bo_ref, ln_post_ref,
                    w1_ref, w2_ref, y_ref, x_sc):
    layer = pl.program_id(1)
    n_layers = pl.num_programs(1)

    N, E = x_ref.shape                       # N = Bt * Lq_pad  (rows, flattened batch)
    Lqp = mask_self_ref.shape[0]
    Lcp = mask_ctx_ref.shape[1]
    Bt = N // Lqp
    H = wo_ref.shape[1]
    Dh = wo_ref.shape[2]
    scale = 1.0 / math.sqrt(Dh)

    # Residual stream lives in VMEM across the inner ("arbitrary") layer axis.
    @pl.when(layer == 0)
    def _():
        x_sc[...] = x_ref[...]

    x = x_sc[...]                            # (N, E)  f32 residual stream
    ctx = ctx_ref[...]                       # (Bt*Lcp, E)

    # ---------------- self-attention block ----------------
    q_in = _layer_norm(x)                    # query rows; also the query rows of K/V
    m_self = mask_self_ref[...]              # (Lqp, Lqp) additive causal(+pad) mask
    m_ctx = mask_ctx_ref[...]                # (Lqp, Lcp) additive pad mask

    attn = jnp.zeros((N, E), jnp.float32)
    for h in range(H):                       # all heads inside ONE kernel step
        wq = wqkv_ref[0, h]                  # (E, Dh)
        wk = wqkv_ref[0, H + h]
        wv = wqkv_ref[0, 2 * H + h]
        bq = bqkv_ref[0, h]                  # (1, Dh)
        bk = bqkv_ref[0, H + h]
        bv = bqkv_ref[0, 2 * H + h]

        # Projections over the whole batch tile at once (2-D MXU matmuls), then a
        # tile-aligned leading-dim split to the per-batch 3-D attention layout.
        q_h = (jnp.dot(q_in, wq, preferred_element_type=jnp.float32) + bq
               ).reshape(Bt, Lqp, Dh)
        k_s = (jnp.dot(q_in, wk, preferred_element_type=jnp.float32) + bk
               ).reshape(Bt, Lqp, Dh)
        v_s = (jnp.dot(q_in, wv, preferred_element_type=jnp.float32) + bv
               ).reshape(Bt, Lqp, Dh)
        k_c = (jnp.dot(ctx, wk, preferred_element_type=jnp.float32) + bk
               ).reshape(Bt, Lcp, Dh)
        v_c = (jnp.dot(ctx, wv, preferred_element_type=jnp.float32) + bv
               ).reshape(Bt, Lcp, Dh)

        s_c = jnp.einsum('bqd,bkd->bqk', q_h, k_c,
                         preferred_element_type=jnp.float32) * scale + m_ctx
        s_s = jnp.einsum('bqd,bkd->bqk', q_h, k_s,
                         preferred_element_type=jnp.float32) * scale + m_self

        # Two-block softmax over keys = [context ; query]  (avoids in-kernel concat).
        m = jnp.maximum(jnp.max(s_c, axis=-1, keepdims=True),
                        jnp.max(s_s, axis=-1, keepdims=True))
        p_c = jnp.exp(s_c - m)
        p_s = jnp.exp(s_s - m)
        denom = (jnp.sum(p_c, axis=-1, keepdims=True)
                 + jnp.sum(p_s, axis=-1, keepdims=True))
        inv = pl.reciprocal(denom, approx=True)      # EUP slot
        inv = inv * (2.0 - denom * inv)              # one Newton step -> ~f32-exact

        o_h = (jnp.einsum('bqk,bkd->bqd', p_c, v_c,
                          preferred_element_type=jnp.float32)
               + jnp.einsum('bqk,bkd->bqd', p_s, v_s,
                            preferred_element_type=jnp.float32)) * inv   # (Bt, Lqp, Dh)

        # Head-merge fused into the out-projection:  concat_h(o_h) @ Wo == sum_h o_h @ Wo[h]
        attn = attn + jnp.dot(o_h.reshape(N, Dh), wo_ref[0, h],
                              preferred_element_type=jnp.float32)

    attn = attn + bo_ref[0]                          # (N, E)

    # post-attention LayerNorm (affine) + residual
    x = x + (_layer_norm(attn) * ln_post_ref[0, 0] + ln_post_ref[0, 1])

    # ---------------- feed-forward block ----------------
    f_in = _layer_norm(x)
    a = jnp.dot(f_in, w1_ref[0, 0], preferred_element_type=jnp.float32)   # value half
    g = jnp.dot(f_in, w1_ref[0, 1], preferred_element_type=jnp.float32)   # gate half
    val = _layer_norm(a * _gelu_erf(g))
    x = x + jnp.dot(val, w2_ref[0], preferred_element_type=jnp.float32)

    x_sc[...] = x

    @pl.when(layer == n_layers - 1)
    def _():
        y_ref[...] = _layer_norm(x)                  # Decoder.output_norm


# ----------------------------------------------------------------------------
# Parameter init (mirrors the PyTorch module) and one-time kernel-layout packing
# ----------------------------------------------------------------------------
def init_decoder_params(key, num_layers, hidden_size, num_heads):
    del num_heads  # head count only matters when packing
    E = hidden_size
    Hff = E * 4 // 3
    std = math.sqrt(2.0 / (5.0 * E))
    keys = jax.random.split(key, num_layers * 4)
    params = []
    for i in range(num_layers):
        k_in, k_out, k_w1, k_w2 = keys[4 * i: 4 * i + 4]
        depth = math.sqrt(1.0 / (2.0 * (1 + i)))       # Decoder.__init__ depth scaling
        params.append({
            "in_proj_weight": jax.random.truncated_normal(
                k_in, -2.0, 2.0, (3 * E, E), jnp.float32) * std,
            "in_proj_bias": jnp.zeros((3 * E,), jnp.float32),
            "out_proj_weight": jax.random.truncated_normal(
                k_out, -2.0, 2.0, (E, E), jnp.float32) * std,
            "out_proj_bias": jnp.zeros((E,), jnp.float32),
            "ln_post_gamma": jnp.ones((E,), jnp.float32),
            "ln_post_beta": jnp.zeros((E,), jnp.float32),
            "w1": jax.random.truncated_normal(
                k_w1, -2.0, 2.0, (2 * Hff, E), jnp.float32) * std * depth,
            "w2": jax.random.truncated_normal(
                k_w2, -2.0, 2.0, (E, Hff), jnp.float32) * std * depth,
        })
    return params


def pack_decoder_params(layer_params, num_heads):
    """One-time repack into the exact layout the kernel consumes (pre-transposed,
    per-head split) so the kernel needs no transposes / lane slicing."""
    E = layer_params[0]["in_proj_weight"].shape[1]
    H = num_heads
    Dh = E // H
    Hff = layer_params[0]["w2"].shape[1]

    wqkv, bqkv, wo, bo, lnp, w1, w2 = [], [], [], [], [], [], []
    for p in layer_params:
        Wi, bi = p["in_proj_weight"], p["in_proj_bias"]
        per_w, per_b = [], []
        for j in range(3):                                      # q, k, v
            Wj = Wi[j * E:(j + 1) * E]                          # (E_out, E_in)
            bj = bi[j * E:(j + 1) * E]
            per_w.append(Wj.T.reshape(E, H, Dh).transpose(1, 0, 2))   # (H, E, Dh)
            per_b.append(bj.reshape(H, 1, Dh))                        # (H, 1, Dh)
        wqkv.append(jnp.concatenate(per_w, axis=0))             # (3H, E, Dh)
        bqkv.append(jnp.concatenate(per_b, axis=0))             # (3H, 1, Dh)
        wo.append(p["out_proj_weight"].T.reshape(H, Dh, E))     # (H, Dh, E)
        bo.append(p["out_proj_bias"].reshape(1, E))
        lnp.append(jnp.stack([p["ln_post_gamma"].reshape(1, E),
                              p["ln_post_beta"].reshape(1, E)], axis=0))   # (2, 1, E)
        W1 = p["w1"]                                            # (2*Hff, E)
        w1.append(jnp.stack([W1[:Hff].T, W1[Hff:].T], axis=0))  # (2, E, Hff)
        w2.append(p["w2"].T)                                    # (Hff, E)

    return {
        "wqkv": jnp.stack(wqkv), "bqkv": jnp.stack(bqkv),
        "wo": jnp.stack(wo), "bo": jnp.stack(bo),
        "ln_post": jnp.stack(lnp), "w1": jnp.stack(w1), "w2": jnp.stack(w2),
    }


# ----------------------------------------------------------------------------
# Decoder forward (PyTorch layout at the boundary: (seq, batch, hidden))
# ----------------------------------------------------------------------------
def decoder_forward(packed, x, context, *, batch_tile=None):
    Lq, B, E = x.shape
    Lc = context.shape[0]
    NL, H3, _, Dh = packed["wqkv"].shape
    H = H3 // 3
    Hff = packed["w2"].shape[1]

    # Pad sequence dims to sublane multiples so all in-kernel leading-dim
    # reshapes are tile-aligned; padded key rows are masked out exactly below.
    Lqp = _round_up(Lq, 8)
    Lcp = _round_up(Lc, 8)
    Bt = B if batch_tile is None else batch_tile
    assert B % Bt == 0, "batch_tile must divide batch"

    xb = jnp.transpose(x, (1, 0, 2))            # (B, Lq, E)
    cb = jnp.transpose(context, (1, 0, 2))      # (B, Lc, E)
    if Lqp != Lq:
        xb = jnp.pad(xb, ((0, 0), (0, Lqp - Lq), (0, 0)))
    if Lcp != Lc:
        cb = jnp.pad(cb, ((0, 0), (0, Lcp - Lc), (0, 0)))
    xb = xb.reshape(B * Lqp, E)                 # flat row-major (batch-major) layout
    cb = cb.reshape(B * Lcp, E)

    # Additive masks, de-duplicated: one (Lqp, Lqp) causal mask shared by every
    # batch element / head / layer (also masks padded self keys since those rows
    # are always "in the future" of every real query), plus a (Lqp, Lcp) mask that
    # only disables the padded context columns.  No per-(batch*head) replication.
    neg = jnp.float32(-1e30)
    idx = jnp.arange(Lqp)
    mask_self = jnp.where(idx[None, :] > idx[:, None], neg, 0.0).astype(jnp.float32)
    mask_ctx = jnp.broadcast_to(
        jnp.where(jnp.arange(Lcp)[None, :] >= Lc, neg, 0.0).astype(jnp.float32),
        (Lqp, Lcp))

    yb = pl.pallas_call(
        _decoder_kernel,
        out_shape=jax.ShapeDtypeStruct((B * Lqp, E), jnp.float32),
        grid=(B // Bt, NL),
        in_specs=[
            pl.BlockSpec((Bt * Lqp, E), lambda b, l: (b, 0)),            # x (flat rows)
            pl.BlockSpec((Bt * Lcp, E), lambda b, l: (b, 0)),            # context
            pl.BlockSpec((Lqp, Lqp), lambda b, l: (0, 0)),               # causal mask
            pl.BlockSpec((Lqp, Lcp), lambda b, l: (0, 0)),               # context-pad mask
            pl.BlockSpec((1, 3 * H, E, Dh), lambda b, l: (l, 0, 0, 0)),  # W_qkv (per head)
            pl.BlockSpec((1, 3 * H, 1, Dh), lambda b, l: (l, 0, 0, 0)),  # b_qkv (per head)
            pl.BlockSpec((1, H, Dh, E), lambda b, l: (l, 0, 0, 0)),      # W_out (per head)
            pl.BlockSpec((1, 1, E), lambda b, l: (l, 0, 0)),             # b_out
            pl.BlockSpec((1, 2, 1, E), lambda b, l: (l, 0, 0, 0)),       # post-LN gamma/beta
            pl.BlockSpec((1, 2, E, Hff), lambda b, l: (l, 0, 0, 0)),     # FF W1 (value/gate)
            pl.BlockSpec((1, Hff, E), lambda b, l: (l, 0, 0)),           # FF W2
        ],
        out_specs=pl.BlockSpec((Bt * Lqp, E), lambda b, l: (b, 0)),
        scratch_shapes=[pltpu.VMEM((Bt * Lqp, E), jnp.float32)],         # residual carry
        compiler_params=pltpu.CompilerParams(
            dimension_semantics=("parallel", "arbitrary")),
    )(xb, cb, mask_self, mask_ctx,
      packed["wqkv"], packed["bqkv"], packed["wo"], packed["bo"],
      packed["ln_post"], packed["w1"], packed["w2"])

    y = yb.reshape(B, Lqp, E)[:, :Lq]
    return jnp.transpose(y, (1, 0, 2))           # back to (Lq, B, E)


# ----------------------------------------------------------------------------
# Pure-JAX reference (mirrors the PyTorch module semantics) for correctness check
# ----------------------------------------------------------------------------
def reference_decoder(layer_params, x, context, num_heads):
    Lq, B, E = x.shape
    Lc = context.shape[0]
    Lk = Lc + Lq
    H, Dh = num_heads, E // num_heads
    HIGH = jax.lax.Precision.HIGHEST

    bool_mask = jnp.triu(jnp.ones((Lq, Lk), dtype=bool), k=1 + Lc)
    amask = jnp.where(bool_mask, jnp.float32(-1e30), jnp.float32(0.0))

    for p in layer_params:
        q = _layer_norm(x)
        kv = jnp.concatenate([context, q], axis=0)
        Wi, bi = p["in_proj_weight"], p["in_proj_bias"]
        qp = jnp.matmul(q, Wi[:E].T, precision=HIGH) + bi[:E]
        kp = jnp.matmul(kv, Wi[E:2 * E].T, precision=HIGH) + bi[E:2 * E]
        vp = jnp.matmul(kv, Wi[2 * E:].T, precision=HIGH) + bi[2 * E:]
        qh = qp.reshape(Lq, B, H, Dh).transpose(1, 2, 0, 3)
        kh = kp.reshape(Lk, B, H, Dh).transpose(1, 2, 0, 3)
        vh = vp.reshape(Lk, B, H, Dh).transpose(1, 2, 0, 3)
        s = jnp.einsum("bhqd,bhkd->bhqk", qh, kh, precision=HIGH) / math.sqrt(Dh)
        s = s + amask[None, None]
        pr = jax.nn.softmax(s, axis=-1)
        o = jnp.einsum("bhqk,bhkd->bhqd", pr, vh, precision=HIGH)
        o = o.transpose(2, 0, 1, 3).reshape(Lq, B, E)
        attn = jnp.matmul(o, p["out_proj_weight"].T, precision=HIGH) + p["out_proj_bias"]
        x = x + (_layer_norm(attn) * p["ln_post_gamma"] + p["ln_post_beta"])

        Hff = p["w2"].shape[1]
        f_in = _layer_norm(x)
        hcat = jnp.matmul(f_in, p["w1"].T, precision=HIGH)
        a, g = hcat[..., :Hff], hcat[..., Hff:]
        val = _layer_norm(a * jax.nn.gelu(g, approximate=False))
        x = x + jnp.matmul(val, p["w2"].T, precision=HIGH)
    return _layer_norm(x)


# ----------------------------------------------------------------------------
if __name__ == "__main__":
    num_layers = 2
    hidden_size = 32
    num_heads = 4
    seq_len = 8      # query length
    ctx_len = 3      # Decoder's mask construction hard-codes 3 context tokens
    batch = 2

    root = jax.random.PRNGKey(0)
    kp, kx, kc = jax.random.split(root, 3)
    params = init_decoder_params(kp, num_layers, hidden_size, num_heads)
    packed = pack_decoder_params(params, num_heads)

    # PyTorch batch_first=False layout: (seq, batch, hidden)
    x = jax.random.normal(kx, (seq_len, batch, hidden_size), jnp.float32)
    context = jax.random.normal(kc, (ctx_len, batch, hidden_size), jnp.float32)

    out = decoder_forward(packed, x, context)
    out = jax.block_until_ready(out)

    ref = reference_decoder(params, x, context, num_heads)
    assert out.shape == (seq_len, batch, hidden_size)
    assert jnp.allclose(out, ref, atol=1e-3, rtol=1e-3), (
        "mismatch vs reference: max|diff|=%e" % float(jnp.max(jnp.abs(out - ref))))

    print("KERNEL_OK")
</pallas_src>

<mosaic_0001>
module attributes {stable_mosaic.version = 11 : i64} {
  func.func @_decoder_kernel(%arg0: i32, %arg1: i32, %arg2: memref<16x32xf32, #tpu.memory_space<vmem>>, %arg3: memref<16x32xf32, #tpu.memory_space<vmem>>, %arg4: memref<8x8xf32, #tpu.memory_space<vmem>>, %arg5: memref<8x8xf32, #tpu.memory_space<vmem>>, %arg6: memref<1x12x32x8xf32, #tpu.memory_space<vmem>>, %arg7: memref<1x12x1x8xf32, #tpu.memory_space<vmem>>, %arg8: memref<1x4x8x32xf32, #tpu.memory_space<vmem>>, %arg9: memref<1x1x32xf32, #tpu.memory_space<vmem>>, %arg10: memref<1x2x1x32xf32, #tpu.memory_space<vmem>>, %arg11: memref<1x2x32x42xf32, #tpu.memory_space<vmem>>, %arg12: memref<1x42x32xf32, #tpu.memory_space<vmem>>, %arg13: memref<16x32xf32, #tpu.memory_space<vmem>>, %arg14: memref<16x32xf32, #tpu.memory_space<vmem>>) attributes {dimension_semantics = [#tpu.dimension_semantics<parallel>, #tpu.dimension_semantics<arbitrary>], iteration_bounds = array<i64: 1, 2>, scalar_prefetch = 0 : i64, scratch_operands = 1 : i64, tpu.core_type = #tpu.core_type<tc>, window_params = [{transform_indices = @transform_0, window_bounds = array<i64: 16, 32>}, {transform_indices = @transform_1, window_bounds = array<i64: 16, 32>}, {pipeline_mode = #tpu.pipeline_mode<synchronous>, transform_indices = @transform_2, window_bounds = array<i64: 8, 8>}, {pipeline_mode = #tpu.pipeline_mode<synchronous>, transform_indices = @transform_3, window_bounds = array<i64: 8, 8>}, {transform_indices = @transform_4, window_bounds = array<i64: 1, 12, 32, 8>}, {transform_indices = @transform_5, window_bounds = array<i64: 1, 12, 1, 8>}, {transform_indices = @transform_6, window_bounds = array<i64: 1, 4, 8, 32>}, {transform_indices = @transform_7, window_bounds = array<i64: 1, 1, 32>}, {transform_indices = @transform_8, window_bounds = array<i64: 1, 2, 1, 32>}, {transform_indices = @transform_9, window_bounds = array<i64: 1, 2, 32, 42>}, {transform_indices = @transform_10, window_bounds = array<i64: 1, 42, 32>}, {transform_indices = @transform_11, window_bounds = array<i64: 16, 32>}]} {
    %c0_i32 = arith.constant 0 : i32
    %0 = arith.cmpi eq, %arg1, %c0_i32 : i32
    %1 = arith.extui %0 : i1 to i32
    %c0_i32_0 = arith.constant 0 : i32
    %2 = arith.cmpi ne, %1, %c0_i32_0 : i32
    scf.if %2 {
      %c0_240 = arith.constant 0 : index
      %c0_241 = arith.constant 0 : index
      %440 = vector.load %arg2[%c0_240, %c0_241] : memref<16x32xf32, #tpu.memory_space<vmem>>, vector<16x32xf32>
      %c0_242 = arith.constant 0 : index
      %c0_243 = arith.constant 0 : index
      %441 = vector.load %arg14[%c0_242, %c0_243] : memref<16x32xf32, #tpu.memory_space<vmem>>, vector<16x32xf32>
      tpu.vector_store %arg14[%c0_242, %c0_243], %440 {strides = array<i32>} : memref<16x32xf32, #tpu.memory_space<vmem>>, vector<16x32xf32>,
    } else {
    }
    %c0 = arith.constant 0 : index
    %c0_1 = arith.constant 0 : index
    %3 = vector.load %arg14[%c0, %c0_1] : memref<16x32xf32, #tpu.memory_space<vmem>>, vector<16x32xf32>
    %c0_2 = arith.constant 0 : index
    %c0_3 = arith.constant 0 : index
    %4 = vector.load %arg3[%c0_2, %c0_3] : memref<16x32xf32, #tpu.memory_space<vmem>>, vector<16x32xf32>
    %cst = arith.constant dense<0.000000e+00> : vector<16xf32>
    %5 = vector.multi_reduction <add>, %3, %cst [1] : vector<16x32xf32> to vector<16xf32>
    %6 = vector.shape_cast %5 : vector<16xf32> to vector<16x1xf32>
    %cst_4 = arith.constant 3.200000e+01 : f32
    %7 = vector.broadcast %cst_4 : f32 to vector<16x1xf32>
    %8 = arith.divf %6, %7 : vector<16x1xf32>
    %9 = vector.broadcast %8 : vector<16x1xf32> to vector<16x32xf32>
    %10 = arith.subf %3, %9 : vector<16x32xf32>
    %11 = arith.mulf %10, %10 : vector<16x32xf32>
    %cst_5 = arith.constant dense<0.000000e+00> : vector<16xf32>
    %12 = vector.multi_reduction <add>, %11, %cst_5 [1] : vector<16x32xf32> to vector<16xf32>
    %13 = vector.shape_cast %12 : vector<16xf32> to vector<16x1xf32>
    %cst_6 = arith.constant 3.200000e+01 : f32
    %14 = vector.broadcast %cst_6 : f32 to vector<16x1xf32>
    %15 = arith.divf %13, %14 : vector<16x1xf32>
    %cst_7 = arith.constant 9.99999974E-6 : f32
    %16 = vector.broadcast %cst_7 : f32 to vector<16x1xf32>
    %17 = arith.addf %15, %16 : vector<16x1xf32>
    %18 = math.rsqrt %17 : vector<16x1xf32>
    %19 = vector.broadcast %18 : vector<16x1xf32> to vector<16x32xf32>
    %20 = arith.mulf %10, %19 : vector<16x32xf32>
    %c0_8 = arith.constant 0 : index
    %c0_9 = arith.constant 0 : index
    %21 = vector.load %arg4[%c0_8, %c0_9] : memref<8x8xf32, #tpu.memory_space<vmem>>, vector<8x8xf32>
    %c0_10 = arith.constant 0 : index
    %c0_11 = arith.constant 0 : index
    %22 = vector.load %arg5[%c0_10, %c0_11] : memref<8x8xf32, #tpu.memory_space<vmem>>, vector<8x8xf32>
    %cst_12 = arith.constant 0.000000e+00 : f32
    %23 = vector.broadcast %cst_12 : f32 to vector<16x32xf32>
    %c0_13 = arith.constant 0 : index
    %c0_14 = arith.constant 0 : index
    %c0_15 = arith.constant 0 : index
    %c0_16 = arith.constant 0 : index
    %24 = vector.load %arg6[%c0_13, %c0_14, %c0_15, %c0_16] : memref<1x12x32x8xf32, #tpu.memory_space<vmem>>, vector<1x1x32x8xf32>
    %25 = vector.shape_cast %24 : vector<1x1x32x8xf32> to vector<32x8xf32>
    %c0_17 = arith.constant 0 : index
    %c4 = arith.constant 4 : index
    %c0_18 = arith.constant 0 : index
    %c0_19 = arith.constant 0 : index
    %26 = vector.load %arg6[%c0_17, %c4, %c0_18, %c0_19] : memref<1x12x32x8xf32, #tpu.memory_space<vmem>>, vector<1x1x32x8xf32>
    %27 = vector.shape_cast %26 : vector<1x1x32x8xf32> to vector<32x8xf32>
    %c0_20 = arith.constant 0 : index
    %c8 = arith.constant 8 : index
    %c0_21 = arith.constant 0 : index
    %c0_22 = arith.constant 0 : index
    %28 = vector.load %arg6[%c0_20, %c8, %c0_21, %c0_22] : memref<1x12x32x8xf32, #tpu.memory_space<vmem>>, vector<1x1x32x8xf32>
    %29 = vector.shape_cast %28 : vector<1x1x32x8xf32> to vector<32x8xf32>
    %c0_23 = arith.constant 0 : index
    %c0_24 = arith.constant 0 : index
    %c0_25 = arith.constant 0 : index
    %c0_26 = arith.constant 0 : index
    %30 = vector.load %arg7[%c0_23, %c0_24, %c0_25, %c0_26] : memref<1x12x1x8xf32, #tpu.memory_space<vmem>>, vector<1x1x1x8xf32>
    %31 = vector.shape_cast %30 : vector<1x1x1x8xf32> to vector<1x8xf32>
    %c0_27 = arith.constant 0 : index
    %c4_28 = arith.constant 4 : index
    %c0_29 = arith.constant 0 : index
    %c0_30 = arith.constant 0 : index
    %32 = vector.load %arg7[%c0_27, %c4_28, %c0_29, %c0_30] : memref<1x12x1x8xf32, #tpu.memory_space<vmem>>, vector<1x1x1x8xf32>
    %33 = vector.shape_cast %32 : vector<1x1x1x8xf32> to vector<1x8xf32>
    %c0_31 = arith.constant 0 : index
    %c8_32 = arith.constant 8 : index
    %c0_33 = arith.constant 0 : index
    %c0_34 = arith.constant 0 : index
    %34 = vector.load %arg7[%c0_31, %c8_32, %c0_33, %c0_34] : memref<1x12x1x8xf32, #tpu.memory_space<vmem>>, vector<1x1x1x8xf32>
    %35 = vector.shape_cast %34 : vector<1x1x1x8xf32> to vector<1x8xf32>
    %cst_35 = arith.constant dense<0.000000e+00> : vector<16x8xf32>
    %36 = tpu.matmul %20, %25, %cst_35 {dimension_numbers = #tpu.dot_dimension_numbers<[1], [0], [0], [1], [0, 0, 1, 1], [], []>} : vector<16x32xf32>, vector<32x8xf32>, vector<16x8xf32> -> vector<16x8xf32>
    %37 = vector.broadcast %31 : vector<1x8xf32> to vector<16x8xf32>
    %38 = arith.addf %36, %37 : vector<16x8xf32>
    %39 = vector.shape_cast %38 : vector<16x8xf32> to vector<2x8x8xf32>
    %cst_36 = arith.constant dense<0.000000e+00> : vector<16x8xf32>
    %40 = tpu.matmul %20, %27, %cst_36 {dimension_numbers = #tpu.dot_dimension_numbers<[1], [0], [0], [1], [0, 0, 1, 1], [], []>} : vector<16x32xf32>, vector<32x8xf32>, vector<16x8xf32> -> vector<16x8xf32>
    %41 = vector.broadcast %33 : vector<1x8xf32> to vector<16x8xf32>
    %42 = arith.addf %40, %41 : vector<16x8xf32>
    %43 = vector.shape_cast %42 : vector<16x8xf32> to vector<2x8x8xf32>
    %cst_37 = arith.constant dense<0.000000e+00> : vector<16x8xf32>
    %44 = tpu.matmul %20, %29, %cst_37 {dimension_numbers = #tpu.dot_dimension_numbers<[1], [0], [0], [1], [0, 0, 1, 1], [], []>} : vector<16x32xf32>, vector<32x8xf32>, vector<16x8xf32> -> vector<16x8xf32>
    %45 = vector.broadcast %35 : vector<1x8xf32> to vector<16x8xf32>
    %46 = arith.addf %44, %45 : vector<16x8xf32>
    %47 = vector.shape_cast %46 : vector<16x8xf32> to vector<2x8x8xf32>
    %cst_38 = arith.constant dense<0.000000e+00> : vector<16x8xf32>
    %48 = tpu.matmul %4, %27, %cst_38 {dimension_numbers = #tpu.dot_dimension_numbers<[1], [0], [0], [1], [0, 0, 1, 1], [], []>} : vector<16x32xf32>, vector<32x8xf32>, vector<16x8xf32> -> vector<16x8xf32>
    %49 = vector.broadcast %33 : vector<1x8xf32> to vector<16x8xf32>
    %50 = arith.addf %48, %49 : vector<16x8xf32>
    %51 = vector.shape_cast %50 : vector<16x8xf32> to vector<2x8x8xf32>
    %cst_39 = arith.constant dense<0.000000e+00> : vector<16x8xf32>
    %52 = tpu.matmul %4, %29, %cst_39 {dimension_numbers = #tpu.dot_dimension_numbers<[1], [0], [0], [1], [0, 0, 1, 1], [], []>} : vector<16x32xf32>, vector<32x8xf32>, vector<16x8xf32> -> vector<16x8xf32>
    %53 = vector.broadcast %35 : vector<1x8xf32> to vector<16x8xf32>
    %54 = arith.addf %52, %53 : vector<16x8xf32>
    %55 = vector.shape_cast %54 : vector<16x8xf32> to vector<2x8x8xf32>
    "tpu.trace_start"() <{level = 10 : i32, message = "bqd,bkd->bqk"}> : () -> ()
    %cst_40 = arith.constant dense<0.000000e+00> : vector<2x8x8xf32>
    %56 = tpu.matmul %39, %51, %cst_40 {dimension_numbers = #tpu.dot_dimension_numbers<[2], [2], [1], [1], [0, 0, 0, 1, 1, 1], [0], [0]>} : vector<2x8x8xf32>, vector<2x8x8xf32>, vector<2x8x8xf32> -> vector<2x8x8xf32>
    "tpu.trace_stop"() : () -> ()
    %cst_41 = arith.constant 0.353553385 : f32
    %57 = vector.broadcast %cst_41 : f32 to vector<2x8x8xf32>
    %58 = arith.mulf %56, %57 : vector<2x8x8xf32>
    %59 = vector.shape_cast %22 : vector<8x8xf32> to vector<1x8x8xf32>
    %60 = vector.broadcast %59 : vector<1x8x8xf32> to vector<2x8x8xf32>
    %61 = arith.addf %58, %60 : vector<2x8x8xf32>
    "tpu.trace_start"() <{level = 10 : i32, message = "bqd,bkd->bqk"}> : () -> ()
    %cst_42 = arith.constant dense<0.000000e+00> : vector<2x8x8xf32>
    %62 = tpu.matmul %39, %43, %cst_42 {dimension_numbers = #tpu.dot_dimension_numbers<[2], [2], [1], [1], [0, 0, 0, 1, 1, 1], [0], [0]>} : vector<2x8x8xf32>, vector<2x8x8xf32>, vector<2x8x8xf32> -> vector<2x8x8xf32>
    "tpu.trace_stop"() : () -> ()
    %cst_43 = arith.constant 0.353553385 : f32
    %63 = vector.broadcast %cst_43 : f32 to vector<2x8x8xf32>
    %64 = arith.mulf %62, %63 : vector<2x8x8xf32>
    %65 = vector.shape_cast %21 : vector<8x8xf32> to vector<1x8x8xf32>
    %66 = vector.broadcast %65 : vector<1x8x8xf32> to vector<2x8x8xf32>
    %67 = arith.addf %64, %66 : vector<2x8x8xf32>
    %cst_44 = arith.constant dense<0xFF800000> : vector<2x8xf32>
    %68 = vector.multi_reduction <maximumf>, %61, %cst_44 [2] : vector<2x8x8xf32> to vector<2x8xf32>
    %69 = vector.shape_cast %68 : vector<2x8xf32> to vector<2x8x1xf32>
    %cst_45 = arith.constant dense<0xFF800000> : vector<2x8xf32>
    %70 = vector.multi_reduction <maximumf>, %67, %cst_45 [2] : vector<2x8x8xf32> to vector<2x8xf32>
    %71 = vector.shape_cast %70 : vector<2x8xf32> to vector<2x8x1xf32>
    %72 = arith.maximumf %69, %71 : vector<2x8x1xf32>
    %73 = vector.broadcast %72 : vector<2x8x1xf32> to vector<2x8x8xf32>
    %74 = arith.subf %61, %73 : vector<2x8x8xf32>
    %75 = math.exp %74 : vector<2x8x8xf32>
    %76 = vector.broadcast %72 : vector<2x8x1xf32> to vector<2x8x8xf32>
    %77 = arith.subf %67, %76 : vector<2x8x8xf32>
    %78 = math.exp %77 : vector<2x8x8xf32>
    %cst_46 = arith.constant dense<0.000000e+00> : vector<2x8xf32>
    %79 = vector.multi_reduction <add>, %75, %cst_46 [2] : vector<2x8x8xf32> to vector<2x8xf32>
    %80 = vector.shape_cast %79 : vector<2x8xf32> to vector<2x8x1xf32>
    %cst_47 = arith.constant dense<0.000000e+00> : vector<2x8xf32>
    %81 = vector.multi_reduction <add>, %78, %cst_47 [2] : vector<2x8x8xf32> to vector<2x8xf32>
    %82 = vector.shape_cast %81 : vector<2x8xf32> to vector<2x8x1xf32>
    %83 = arith.addf %80, %82 : vector<2x8x1xf32>
    %84 = tpu.reciprocal %83 {approx = true} : vector<2x8x1xf32> -> vector<2x8x1xf32>
    %85 = arith.mulf %83, %84 : vector<2x8x1xf32>
    %cst_48 = arith.constant 2.000000e+00 : f32
    %86 = vector.broadcast %cst_48 : f32 to vector<2x8x1xf32>
    %87 = arith.subf %86, %85 : vector<2x8x1xf32>
    %88 = arith.mulf %84, %87 : vector<2x8x1xf32>
    "tpu.trace_start"() <{level = 10 : i32, message = "bqk,bkd->bqd"}> : () -> ()
    %cst_49 = arith.constant dense<0.000000e+00> : vector<2x8x8xf32>
    %89 = tpu.matmul %75, %55, %cst_49 {dimension_numbers = #tpu.dot_dimension_numbers<[2], [1], [1], [2], [0, 0, 0, 1, 1, 2], [0], [0]>} : vector<2x8x8xf32>, vector<2x8x8xf32>, vector<2x8x8xf32> -> vector<2x8x8xf32>
    %cst_50 = arith.constant dense<0.000000e+00> : vector<2x8x8xf32>
    %90 = tpu.matmul %78, %47, %cst_50 {dimension_numbers = #tpu.dot_dimension_numbers<[2], [1], [1], [2], [0, 0, 0, 1, 1, 2], [0], [0]>} : vector<2x8x8xf32>, vector<2x8x8xf32>, vector<2x8x8xf32> -> vector<2x8x8xf32>
    "tpu.trace_stop"() : () -> ()
    %91 = arith.addf %89, %90 : vector<2x8x8xf32>
    %92 = vector.broadcast %88 : vector<2x8x1xf32> to vector<2x8x8xf32>
    %93 = arith.mulf %91, %92 : vector<2x8x8xf32>
    %94 = vector.shape_cast %93 : vector<2x8x8xf32> to vector<16x8xf32>
    %c0_51 = arith.constant 0 : index
    %c0_52 = arith.constant 0 : index
    %c0_53 = arith.constant 0 : index
    %c0_54 = arith.constant 0 : index
    %95 = vector.load %arg8[%c0_51, %c0_52, %c0_53, %c0_54] : memref<1x4x8x32xf32, #tpu.memory_space<vmem>>, vector<1x1x8x32xf32>
    %96 = vector.shape_cast %95 : vector<1x1x8x32xf32> to vector<8x32xf32>
    %cst_55 = arith.constant dense<0.000000e+00> : vector<16x32xf32>
    %97 = tpu.matmul %94, %96, %cst_55 {dimension_numbers = #tpu.dot_dimension_numbers<[1], [0], [0], [1], [0, 0, 1, 1], [], []>} : vector<16x8xf32>, vector<8x32xf32>, vector<16x32xf32> -> vector<16x32xf32>
    %98 = arith.addf %23, %97 : vector<16x32xf32>
    %c0_56 = arith.constant 0 : index
    %c1 = arith.constant 1 : index
    %c0_57 = arith.constant 0 : index
    %c0_58 = arith.constant 0 : index
    %99 = vector.load %arg6[%c0_56, %c1, %c0_57, %c0_58] : memref<1x12x32x8xf32, #tpu.memory_space<vmem>>, vector<1x1x32x8xf32>
    %100 = vector.shape_cast %99 : vector<1x1x32x8xf32> to vector<32x8xf32>
    %c0_59 = arith.constant 0 : index
    %c5 = arith.constant 5 : index
    %c0_60 = arith.constant 0 : index
    %c0_61 = arith.constant 0 : index
    %101 = vector.load %arg6[%c0_59, %c5, %c0_60, %c0_61] : memref<1x12x32x8xf32, #tpu.memory_space<vmem>>, vector<1x1x32x8xf32>
    %102 = vector.shape_cast %101 : vector<1x1x32x8xf32> to vector<32x8xf32>
    %c0_62 = arith.constant 0 : index
    %c9 = arith.constant 9 : index
    %c0_63 = arith.constant 0 : index
    %c0_64 = arith.constant 0 : index
    %103 = vector.load %arg6[%c0_62, %c9, %c0_63, %c0_64] : memref<1x12x32x8xf32, #tpu.memory_space<vmem>>, vector<1x1x32x8xf32>
    %104 = vector.shape_cast %103 : vector<1x1x32x8xf32> to vector<32x8xf32>
    %c0_65 = arith.constant 0 : index
    %c1_66 = arith.constant 1 : index
    %c0_67 = arith.constant 0 : index
    %c0_68 = arith.constant 0 : index
    %105 = vector.load %arg7[%c0_65, %c1_66, %c0_67, %c0_68] : memref<1x12x1x8xf32, #tpu.memory_space<vmem>>, vector<1x1x1x8xf32>
    %106 = vector.shape_cast %105 : vector<1x1x1x8xf32> to vector<1x8xf32>
    %c0_69 = arith.constant 0 : index
    %c5_70 = arith.constant 5 : index
    %c0_71 = arith.constant 0 : index
    %c0_72 = arith.constant 0 : index
    %107 = vector.load %arg7[%c0_69, %c5_70, %c0_71, %c0_72] : memref<1x12x1x8xf32, #tpu.memory_space<vmem>>, vector<1x1x1x8xf32>
    %108 = vector.shape_cast %107 : vector<1x1x1x8xf32> to vector<1x8xf32>
    %c0_73 = arith.constant 0 : index
    %c9_74 = arith.constant 9 : index
    %c0_75 = arith.constant 0 : index
    %c0_76 = arith.constant 0 : index
    %109 = vector.load %arg7[%c0_73, %c9_74, %c0_75, %c0_76] : memref<1x12x1x8xf32, #tpu.memory_space<vmem>>, vector<1x1x1x8xf32>
    %110 = vector.shape_cast %109 : vector<1x1x1x8xf32> to vector<1x8xf32>
    %cst_77 = arith.constant dense<0.000000e+00> : vector<16x8xf32>
    %111 = tpu.matmul %20, %100, %cst_77 {dimension_numbers = #tpu.dot_dimension_numbers<[1], [0], [0], [1], [0, 0, 1, 1], [], []>} : vector<16x32xf32>, vector<32x8xf32>, vector<16x8xf32> -> vector<16x8xf32>
    %112 = vector.broadcast %106 : vector<1x8xf32> to vector<16x8xf32>
    %113 = arith.addf %111, %112 : vector<16x8xf32>
    %114 = vector.shape_cast %113 : vector<16x8xf32> to vector<2x8x8xf32>
    %cst_78 = arith.constant dense<0.000000e+00> : vector<16x8xf32>
    %115 = tpu.matmul %20, %102, %cst_78 {dimension_numbers = #tpu.dot_dimension_numbers<[1], [0], [0], [1], [0, 0, 1, 1], [], []>} : vector<16x32xf32>, vector<32x8xf32>, vector<16x8xf32> -> vector<16x8xf32>
    %116 = vector.broadcast %108 : vector<1x8xf32> to vector<16x8xf32>
    %117 = arith.addf %115, %116 : vector<16x8xf32>
    %118 = vector.shape_cast %117 : vector<16x8xf32> to vector<2x8x8xf32>
    %cst_79 = arith.constant dense<0.000000e+00> : vector<16x8xf32>
    %119 = tpu.matmul %20, %104, %cst_79 {dimension_numbers = #tpu.dot_dimension_numbers<[1], [0], [0], [1], [0, 0, 1, 1], [], []>} : vector<16x32xf32>, vector<32x8xf32>, vector<16x8xf32> -> vector<16x8xf32>
    %120 = vector.broadcast %110 : vector<1x8xf32> to vector<16x8xf32>
    %121 = arith.addf %119, %120 : vector<16x8xf32>
    %122 = vector.shape_cast %121 : vector<16x8xf32> to vector<2x8x8xf32>
    %cst_80 = arith.constant dense<0.000000e+00> : vector<16x8xf32>
    %123 = tpu.matmul %4, %102, %cst_80 {dimension_numbers = #tpu.dot_dimension_numbers<[1], [0], [0], [1], [0, 0, 1, 1], [], []>} : vector<16x32xf32>, vector<32x8xf32>, vector<16x8xf32> -> vector<16x8xf32>
    %124 = vector.broadcast %108 : vector<1x8xf32> to vector<16x8xf32>
    %125 = arith.addf %123, %124 : vector<16x8xf32>
    %126 = vector.shape_cast %125 : vector<16x8xf32> to vector<2x8x8xf32>
    %cst_81 = arith.constant dense<0.000000e+00> : vector<16x8xf32>
    %127 = tpu.matmul %4, %104, %cst_81 {dimension_numbers = #tpu.dot_dimension_numbers<[1], [0], [0], [1], [0, 0, 1, 1], [], []>} : vector<16x32xf32>, vector<32x8xf32>, vector<16x8xf32> -> vector<16x8xf32>
    %128 = vector.broadcast %110 : vector<1x8xf32> to vector<16x8xf32>
    %129 = arith.addf %127, %128 : vector<16x8xf32>
    %130 = vector.shape_cast %129 : vector<16x8xf32> to vector<2x8x8xf32>
    "tpu.trace_start"() <{level = 10 : i32, message = "bqd,bkd->bqk"}> : () -> ()
    %cst_82 = arith.constant dense<0.000000e+00> : vector<2x8x8xf32>
    %131 = tpu.matmul %114, %126, %cst_82 {dimension_numbers = #tpu.dot_dimension_numbers<[2], [2], [1], [1], [0, 0, 0, 1, 1, 1], [0], [0]>} : vector<2x8x8xf32>, vector<2x8x8xf32>, vector<2x8x8xf32> -> vector<2x8x8xf32>
    "tpu.trace_stop"() : () -> ()
    %cst_83 = arith.constant 0.353553385 : f32
    %132 = vector.broadcast %cst_83 : f32 to vector<2x8x8xf32>
    %133 = arith.mulf %131, %132 : vector<2x8x8xf32>
    %134 = vector.shape_cast %22 : vector<8x8xf32> to vector<1x8x8xf32>
    %135 = vector.broadcast %134 : vector<1x8x8xf32> to vector<2x8x8xf32>
    %136 = arith.addf %133, %135 : vector<2x8x8xf32>
    "tpu.trace_start"() <{level = 10 : i32, message = "bqd,bkd->bqk"}> : () -> ()
    %cst_84 = arith.constant dense<0.000000e+00> : vector<2x8x8xf32>
    %137 = tpu.matmul %114, %118, %cst_84 {dimension_numbers = #tpu.dot_dimension_numbers<[2], [2], [1], [1], [0, 0, 0, 1, 1, 1], [0], [0]>} : vector<2x8x8xf32>, vector<2x8x8xf32>, vector<2x8x8xf32> -> vector<2x8x8xf32>
    "tpu.trace_stop"() : () -> ()
    %cst_85 = arith.constant 0.353553385 : f32
    %138 = vector.broadcast %cst_85 : f32 to vector<2x8x8xf32>
    %139 = arith.mulf %137, %138 : vector<2x8x8xf32>
    %140 = vector.shape_cast %21 : vector<8x8xf32> to vector<1x8x8xf32>
    %141 = vector.broadcast %140 : vector<1x8x8xf32> to vector<2x8x8xf32>
    %142 = arith.addf %139, %141 : vector<2x8x8xf32>
    %cst_86 = arith.constant dense<0xFF800000> : vector<2x8xf32>
    %143 = vector.multi_reduction <maximumf>, %136, %cst_86 [2] : vector<2x8x8xf32> to vector<2x8xf32>
    %144 = vector.shape_cast %143 : vector<2x8xf32> to vector<2x8x1xf32>
    %cst_87 = arith.constant dense<0xFF800000> : vector<2x8xf32>
    %145 = vector.multi_reduction <maximumf>, %142, %cst_87 [2] : vector<2x8x8xf32> to vector<2x8xf32>
    %146 = vector.shape_cast %145 : vector<2x8xf32> to vector<2x8x1xf32>
    %147 = arith.maximumf %144, %146 : vector<2x8x1xf32>
    %148 = vector.broadcast %147 : vector<2x8x1xf32> to vector<2x8x8xf32>
    %149 = arith.subf %136, %148 : vector<2x8x8xf32>
    %150 = math.exp %149 : vector<2x8x8xf32>
    %151 = vector.broadcast %147 : vector<2x8x1xf32> to vector<2x8x8xf32>
    %152 = arith.subf %142, %151 : vector<2x8x8xf32>
    %153 = math.exp %152 : vector<2x8x8xf32>
    %cst_88 = arith.constant dense<0.000000e+00> : vector<2x8xf32>
    %154 = vector.multi_reduction <add>, %150, %cst_88 [2] : vector<2x8x8xf32> to vector<2x8xf32>
    %155 = vector.shape_cast %154 : vector<2x8xf32> to vector<2x8x1xf32>
    %cst_89 = arith.constant dense<0.000000e+00> : vector<2x8xf32>
    %156 = vector.multi_reduction <add>, %153, %cst_89 [2] : vector<2x8x8xf32> to vector<2x8xf32>
    %157 = vector.shape_cast %156 : vector<2x8xf32> to vector<2x8x1xf32>
    %158 = arith.addf %155, %157 : vector<2x8x1xf32>
    %159 = tpu.reciprocal %158 {approx = true} : vector<2x8x1xf32> -> vector<2x8x1xf32>
    %160 = arith.mulf %158, %159 : vector<2x8x1xf32>
    %cst_90 = arith.constant 2.000000e+00 : f32
    %161 = vector.broadcast %cst_90 : f32 to vector<2x8x1xf32>
    %162 = arith.subf %161, %160 : vector<2x8x1xf32>
    %163 = arith.mulf %159, %162 : vector<2x8x1xf32>
    "tpu.trace_start"() <{level = 10 : i32, message = "bqk,bkd->bqd"}> : () -> ()
    %cst_91 = arith.constant dense<0.000000e+00> : vector<2x8x8xf32>
    %164 = tpu.matmul %150, %130, %cst_91 {dimension_numbers = #tpu.dot_dimension_numbers<[2], [1], [1], [2], [0, 0, 0, 1, 1, 2], [0], [0]>} : vector<2x8x8xf32>, vector<2x8x8xf32>, vector<2x8x8xf32> -> vector<2x8x8xf32>
    %cst_92 = arith.constant dense<0.000000e+00> : vector<2x8x8xf32>
    %165 = tpu.matmul %153, %122, %cst_92 {dimension_numbers = #tpu.dot_dimension_numbers<[2], [1], [1], [2], [0, 0, 0, 1, 1, 2], [0], [0]>} : vector<2x8x8xf32>, vector<2x8x8xf32>, vector<2x8x8xf32> -> vector<2x8x8xf32>
    "tpu.trace_stop"() : () -> ()
    %166 = arith.addf %164, %165 : vector<2x8x8xf32>
    %167 = vector.broadcast %163 : vector<2x8x1xf32> to vector<2x8x8xf32>
    %168 = arith.mulf %166, %167 : vector<2x8x8xf32>
    %169 = vector.shape_cast %168 : vector<2x8x8xf32> to vector<16x8xf32>
    %c0_93 = arith.constant 0 : index
    %c1_94 = arith.constant 1 : index
    %c0_95 = arith.constant 0 : index
    %c0_96 = arith.constant 0 : index
    %170 = vector.load %arg8[%c0_93, %c1_94, %c0_95, %c0_96] : memref<1x4x8x32xf32, #tpu.memory_space<vmem>>, vector<1x1x8x32xf32>
    %171 = vector.shape_cast %170 : vector<1x1x8x32xf32> to vector<8x32xf32>
    %cst_97 = arith.constant dense<0.000000e+00> : vector<16x32xf32>
    %172 = tpu.matmul %169, %171, %cst_97 {dimension_numbers = #tpu.dot_dimension_numbers<[1], [0], [0], [1], [0, 0, 1, 1], [], []>} : vector<16x8xf32>, vector<8x32xf32>, vector<16x32xf32> -> vector<16x32xf32>
    %173 = arith.addf %98, %172 : vector<16x32xf32>
    %c0_98 = arith.constant 0 : index
    %c2 = arith.constant 2 : index
    %c0_99 = arith.constant 0 : index
    %c0_100 = arith.constant 0 : index
    %174 = vector.load %arg6[%c0_98, %c2, %c0_99, %c0_100] : memref<1x12x32x8xf32, #tpu.memory_space<vmem>>, vector<1x1x32x8xf32>
    %175 = vector.shape_cast %174 : vector<1x1x32x8xf32> to vector<32x8xf32>
    %c0_101 = arith.constant 0 : index
    %c6 = arith.constant 6 : index
    %c0_102 = arith.constant 0 : index
    %c0_103 = arith.constant 0 : index
    %176 = vector.load %arg6[%c0_101, %c6, %c0_102, %c0_103] : memref<1x12x32x8xf32, #tpu.memory_space<vmem>>, vector<1x1x32x8xf32>
    %177 = vector.shape_cast %176 : vector<1x1x32x8xf32> to vector<32x8xf32>
    %c0_104 = arith.constant 0 : index
    %c10 = arith.constant 10 : index
    %c0_105 = arith.constant 0 : index
    %c0_106 = arith.constant 0 : index
    %178 = vector.load %arg6[%c0_104, %c10, %c0_105, %c0_106] : memref<1x12x32x8xf32, #tpu.memory_space<vmem>>, vector<1x1x32x8xf32>
    %179 = vector.shape_cast %178 : vector<1x1x32x8xf32> to vector<32x8xf32>
    %c0_107 = arith.constant 0 : index
    %c2_108 = arith.constant 2 : index
    %c0_109 = arith.constant 0 : index
    %c0_110 = arith.constant 0 : index
    %180 = vector.load %arg7[%c0_107, %c2_108, %c0_109, %c0_110] : memref<1x12x1x8xf32, #tpu.memory_space<vmem>>, vector<1x1x1x8xf32>
    %181 = vector.shape_cast %180 : vector<1x1x1x8xf32> to vector<1x8xf32>
    %c0_111 = arith.constant 0 : index
    %c6_112 = arith.constant 6 : index
    %c0_113 = arith.constant 0 : index
    %c0_114 = arith.constant 0 : index
    %182 = vector.load %arg7[%c0_111, %c6_112, %c0_113, %c0_114] : memref<1x12x1x8xf32, #tpu.memory_space<vmem>>, vector<1x1x1x8xf32>
    %183 = vector.shape_cast %182 : vector<1x1x1x8xf32> to vector<1x8xf32>
    %c0_115 = arith.constant 0 : index
    %c10_116 = arith.constant 10 : index
    %c0_117 = arith.constant 0 : index
    %c0_118 = arith.constant 0 : index
    %184 = vector.load %arg7[%c0_115, %c10_116, %c0_117, %c0_118] : memref<1x12x1x8xf32, #tpu.memory_space<vmem>>, vector<1x1x1x8xf32>
    %185 = vector.shape_cast %184 : vector<1x1x1x8xf32> to vector<1x8xf32>
    %cst_119 = arith.constant dense<0.000000e+00> : vector<16x8xf32>
    %186 = tpu.matmul %20, %175, %cst_119 {dimension_numbers = #tpu.dot_dimension_numbers<[1], [0], [0], [1], [0, 0, 1, 1], [], []>} : vector<16x32xf32>, vector<32x8xf32>, vector<16x8xf32> -> vector<16x8xf32>
    %187 = vector.broadcast %181 : vector<1x8xf32> to vector<16x8xf32>
    %188 = arith.addf %186, %187 : vector<16x8xf32>
    %189 = vector.shape_cast %188 : vector<16x8xf32> to vector<2x8x8xf32>
    %cst_120 = arith.constant dense<0.000000e+00> : vector<16x8xf32>
    %190 = tpu.matmul %20, %177, %cst_120 {dimension_numbers = #tpu.dot_dimension_numbers<[1], [0], [0], [1], [0, 0, 1, 1], [], []>} : vector<16x32xf32>, vector<32x8xf32>, vector<16x8xf32> -> vector<16x8xf32>
    %191 = vector.broadcast %183 : vector<1x8xf32> to vector<16x8xf32>
    %192 = arith.addf %190, %191 : vector<16x8xf32>
    %193 = vector.shape_cast %192 : vector<16x8xf32> to vector<2x8x8xf32>
    %cst_121 = arith.constant dense<0.000000e+00> : vector<16x8xf32>
    %194 = tpu.matmul %20, %179, %cst_121 {dimension_numbers = #tpu.dot_dimension_numbers<[1], [0], [0], [1], [0, 0, 1, 1], [], []>} : vector<16x32xf32>, vector<32x8xf32>, vector<16x8xf32> -> vector<16x8xf32>
    %195 = vector.broadcast %185 : vector<1x8xf32> to vector<16x8xf32>
    %196 = arith.addf %194, %195 : vector<16x8xf32>
    %197 = vector.shape_cast %196 : vector<16x8xf32> to vector<2x8x8xf32>
    %cst_122 = arith.constant dense<0.000000e+00> : vector<16x8xf32>
    %198 = tpu.matmul %4, %177, %cst_122 {dimension_numbers = #tpu.dot_dimension_numbers<[1], [0], [0], [1], [0, 0, 1, 1], [], []>} : vector<16x32xf32>, vector<32x8xf32>, vector<16x8xf32> -> vector<16x8xf32>
    %199 = vector.broadcast %183 : vector<1x8xf32> to vector<16x8xf32>
    %200 = arith.addf %198, %199 : vector<16x8xf32>
    %201 = vector.shape_cast %200 : vector<16x8xf32> to vector<2x8x8xf32>
    %cst_123 = arith.constant dense<0.000000e+00> : vector<16x8xf32>
    %202 = tpu.matmul %4, %179, %cst_123 {dimension_numbers = #tpu.dot_dimension_numbers<[1], [0], [0], [1], [0, 0, 1, 1], [], []>} : vector<16x32xf32>, vector<32x8xf32>, vector<16x8xf32> -> vector<16x8xf32>
    %203 = vector.broadcast %185 : vector<1x8xf32> to vector<16x8xf32>
    %204 = arith.addf %202, %203 : vector<16x8xf32>
    %205 = vector.shape_cast %204 : vector<16x8xf32> to vector<2x8x8xf32>
    "tpu.trace_start"() <{level = 10 : i32, message = "bqd,bkd->bqk"}> : () -> ()
    %cst_124 = arith.constant dense<0.000000e+00> : vector<2x8x8xf32>
    %206 = tpu.matmul %189, %201, %cst_124 {dimension_numbers = #tpu.dot_dimension_numbers<[2], [2], [1], [1], [0, 0, 0, 1, 1, 1], [0], [0]>} : vector<2x8x8xf32>, vector<2x8x8xf32>, vector<2x8x8xf32> -> vector<2x8x8xf32>
    "tpu.trace_stop"() : () -> ()
    %cst_125 = arith.constant 0.353553385 : f32
    %207 = vector.broadcast %cst_125 : f32 to vector<2x8x8xf32>
    %208 = arith.mulf %206, %207 : vector<2x8x8xf32>
    %209 = vector.shape_cast %22 : vector<8x8xf32> to vector<1x8x8xf32>
    %210 = vector.broadcast %209 : vector<1x8x8xf32> to vector<2x8x8xf32>
    %211 = arith.addf %208, %210 : vector<2x8x8xf32>
    "tpu.trace_start"() <{level = 10 : i32, message = "bqd,bkd->bqk"}> : () -> ()
    %cst_126 = arith.constant dense<0.000000e+00> : vector<2x8x8xf32>
    %212 = tpu.matmul %189, %193, %cst_126 {dimension_numbers = #tpu.dot_dimension_numbers<[2], [2], [1], [1], [0, 0, 0, 1, 1, 1], [0], [0]>} : vector<2x8x8xf32>, vector<2x8x8xf32>, vector<2x8x8xf32> -> vector<2x8x8xf32>
    "tpu.trace_stop"() : () -> ()
    %cst_127 = arith.constant 0.353553385 : f32
    %213 = vector.broadcast %cst_127 : f32 to vector<2x8x8xf32>
    %214 = arith.mulf %212, %213 : vector<2x8x8xf32>
    %215 = vector.shape_cast %21 : vector<8x8xf32> to vector<1x8x8xf32>
    %216 = vector.broadcast %215 : vector<1x8x8xf32> to vector<2x8x8xf32>
    %217 = arith.addf %214, %216 : vector<2x8x8xf32>
    %cst_128 = arith.constant dense<0xFF800000> : vector<2x8xf32>
    %218 = vector.multi_reduction <maximumf>, %211, %cst_128 [2] : vector<2x8x8xf32> to vector<2x8xf32>
    %219 = vector.shape_cast %218 : vector<2x8xf32> to vector<2x8x1xf32>
    %cst_129 = arith.constant dense<0xFF800000> : vector<2x8xf32>
    %220 = vector.multi_reduction <maximumf>, %217, %cst_129 [2] : vector<2x8x8xf32> to vector<2x8xf32>
    %221 = vector.shape_cast %220 : vector<2x8xf32> to vector<2x8x1xf32>
    %222 = arith.maximumf %219, %221 : vector<2x8x1xf32>
    %223 = vector.broadcast %222 : vector<2x8x1xf32> to vector<2x8x8xf32>
    %224 = arith.subf %211, %223 : vector<2x8x8xf32>
    %225 = math.exp %224 : vector<2x8x8xf32>
    %226 = vector.broadcast %222 : vector<2x8x1xf32> to vector<2x8x8xf32>
    %227 = arith.subf %217, %226 : vector<2x8x8xf32>
    %228 = math.exp %227 : vector<2x8x8xf32>
    %cst_130 = arith.constant dense<0.000000e+00> : vector<2x8xf32>
    %229 = vector.multi_reduction <add>, %225, %cst_130 [2] : vector<2x8x8xf32> to vector<2x8xf32>
    %230 = vector.shape_cast %229 : vector<2x8xf32> to vector<2x8x1xf32>
    %cst_131 = arith.constant dense<0.000000e+00> : vector<2x8xf32>
    %231 = vector.multi_reduction <add>, %228, %cst_131 [2] : vector<2x8x8xf32> to vector<2x8xf32>
    %232 = vector.shape_cast %231 : vector<2x8xf32> to vector<2x8x1xf32>
    %233 = arith.addf %230, %232 : vector<2x8x1xf32>
    %234 = tpu.reciprocal %233 {approx = true} : vector<2x8x1xf32> -> vector<2x8x1xf32>
    %235 = arith.mulf %233, %234 : vector<2x8x1xf32>
    %cst_132 = arith.constant 2.000000e+00 : f32
    %236 = vector.broadcast %cst_132 : f32 to vector<2x8x1xf32>
    %237 = arith.subf %236, %235 : vector<2x8x1xf32>
    %238 = arith.mulf %234, %237 : vector<2x8x1xf32>
    "tpu.trace_start"() <{level = 10 : i32, message = "bqk,bkd->bqd"}> : () -> ()
    %cst_133 = arith.constant dense<0.000000e+00> : vector<2x8x8xf32>
    %239 = tpu.matmul %225, %205, %cst_133 {dimension_numbers = #tpu.dot_dimension_numbers<[2], [1], [1], [2], [0, 0, 0, 1, 1, 2], [0], [0]>} : vector<2x8x8xf32>, vector<2x8x8xf32>, vector<2x8x8xf32> -> vector<2x8x8xf32>
    %cst_134 = arith.constant dense<0.000000e+00> : vector<2x8x8xf32>
    %240 = tpu.matmul %228, %197, %cst_134 {dimension_numbers = #tpu.dot_dimension_numbers<[2], [1], [1], [2], [0, 0, 0, 1, 1, 2], [0], [0]>} : vector<2x8x8xf32>, vector<2x8x8xf32>, vector<2x8x8xf32> -> vector<2x8x8xf32>
    "tpu.trace_stop"() : () -> ()
    %241 = arith.addf %239, %240 : vector<2x8x8xf32>
    %242 = vector.broadcast %238 : vector<2x8x1xf32> to vector<2x8x8xf32>
    %243 = arith.mulf %241, %242 : vector<2x8x8xf32>
    %244 = vector.shape_cast %243 : vector<2x8x8xf32> to vector<16x8xf32>
    %c0_135 = arith.constant 0 : index
    %c2_136 = arith.constant 2 : index
    %c0_137 = arith.constant 0 : index
    %c0_138 = arith.constant 0 : index
    %245 = vector.load %arg8[%c0_135, %c2_136, %c0_137, %c0_138] : memref<1x4x8x32xf32, #tpu.memory_space<vmem>>, vector<1x1x8x32xf32>
    %246 = vector.shape_cast %245 : vector<1x1x8x32xf32> to vector<8x32xf32>
    %cst_139 = arith.constant dense<0.000000e+00> : vector<16x32xf32>
    %247 = tpu.matmul %244, %246, %cst_139 {dimension_numbers = #tpu.dot_dimension_numbers<[1], [0], [0], [1], [0, 0, 1, 1], [], []>} : vector<16x8xf32>, vector<8x32xf32>, vector<16x32xf32> -> vector<16x32xf32>
    %248 = arith.addf %173, %247 : vector<16x32xf32>
    %c0_140 = arith.constant 0 : index
    %c3 = arith.constant 3 : index
    %c0_141 = arith.constant 0 : index
    %c0_142 = arith.constant 0 : index
    %249 = vector.load %arg6[%c0_140, %c3, %c0_141, %c0_142] : memref<1x12x32x8xf32, #tpu.memory_space<vmem>>, vector<1x1x32x8xf32>
    %250 = vector.shape_cast %249 : vector<1x1x32x8xf32> to vector<32x8xf32>
    %c0_143 = arith.constant 0 : index
    %c7 = arith.constant 7 : index
    %c0_144 = arith.constant 0 : index
    %c0_145 = arith.constant 0 : index
    %251 = vector.load %arg6[%c0_143, %c7, %c0_144, %c0_145] : memref<1x12x32x8xf32, #tpu.memory_space<vmem>>, vector<1x1x32x8xf32>
    %252 = vector.shape_cast %251 : vector<1x1x32x8xf32> to vector<32x8xf32>
    %c0_146 = arith.constant 0 : index
    %c11 = arith.constant 11 : index
    %c0_147 = arith.constant 0 : index
    %c0_148 = arith.constant 0 : index
    %253 = vector.load %arg6[%c0_146, %c11, %c0_147, %c0_148] : memref<1x12x32x8xf32, #tpu.memory_space<vmem>>, vector<1x1x32x8xf32>
    %254 = vector.shape_cast %253 : vector<1x1x32x8xf32> to vector<32x8xf32>
    %c0_149 = arith.constant 0 : index
    %c3_150 = arith.constant 3 : index
    %c0_151 = arith.constant 0 : index
    %c0_152 = arith.constant 0 : index
    %255 = vector.load %arg7[%c0_149, %c3_150, %c0_151, %c0_152] : memref<1x12x1x8xf32, #tpu.memory_space<vmem>>, vector<1x1x1x8xf32>
    %256 = vector.shape_cast %255 : vector<1x1x1x8xf32> to vector<1x8xf32>
    %c0_153 = arith.constant 0 : index
    %c7_154 = arith.constant 7 : index
    %c0_155 = arith.constant 0 : index
    %c0_156 = arith.constant 0 : index
    %257 = vector.load %arg7[%c0_153, %c7_154, %c0_155, %c0_156] : memref<1x12x1x8xf32, #tpu.memory_space<vmem>>, vector<1x1x1x8xf32>
    %258 = vector.shape_cast %257 : vector<1x1x1x8xf32> to vector<1x8xf32>
    %c0_157 = arith.constant 0 : index
    %c11_158 = arith.constant 11 : index
    %c0_159 = arith.constant 0 : index
    %c0_160 = arith.constant 0 : index
    %259 = vector.load %arg7[%c0_157, %c11_158, %c0_159, %c0_160] : memref<1x12x1x8xf32, #tpu.memory_space<vmem>>, vector<1x1x1x8xf32>
    %260 = vector.shape_cast %259 : vector<1x1x1x8xf32> to vector<1x8xf32>
    %cst_161 = arith.constant dense<0.000000e+00> : vector<16x8xf32>
    %261 = tpu.matmul %20, %250, %cst_161 {dimension_numbers = #tpu.dot_dimension_numbers<[1], [0], [0], [1], [0, 0, 1, 1], [], []>} : vector<16x32xf32>, vector<32x8xf32>, vector<16x8xf32> -> vector<16x8xf32>
    %262 = vector.broadcast %256 : vector<1x8xf32> to vector<16x8xf32>
    %263 = arith.addf %261, %262 : vector<16x8xf32>
    %264 = vector.shape_cast %263 : vector<16x8xf32> to vector<2x8x8xf32>
    %cst_162 = arith.constant dense<0.000000e+00> : vector<16x8xf32>
    %265 = tpu.matmul %20, %252, %cst_162 {dimension_numbers = #tpu.dot_dimension_numbers<[1], [0], [0], [1], [0, 0, 1, 1], [], []>} : vector<16x32xf32>, vector<32x8xf32>, vector<16x8xf32> -> vector<16x8xf32>
    %266 = vector.broadcast %258 : vector<1x8xf32> to vector<16x8xf32>
    %267 = arith.addf %265, %266 : vector<16x8xf32>
    %268 = vector.shape_cast %267 : vector<16x8xf32> to vector<2x8x8xf32>
    %cst_163 = arith.constant dense<0.000000e+00> : vector<16x8xf32>
    %269 = tpu.matmul %20, %254, %cst_163 {dimension_numbers = #tpu.dot_dimension_numbers<[1], [0], [0], [1], [0, 0, 1, 1], [], []>} : vector<16x32xf32>, vector<32x8xf32>, vector<16x8xf32> -> vector<16x8xf32>
    %270 = vector.broadcast %260 : vector<1x8xf32> to vector<16x8xf32>
    %271 = arith.addf %269, %270 : vector<16x8xf32>
    %272 = vector.shape_cast %271 : vector<16x8xf32> to vector<2x8x8xf32>
    %cst_164 = arith.constant dense<0.000000e+00> : vector<16x8xf32>
    %273 = tpu.matmul %4, %252, %cst_164 {dimension_numbers = #tpu.dot_dimension_numbers<[1], [0], [0], [1], [0, 0, 1, 1], [], []>} : vector<16x32xf32>, vector<32x8xf32>, vector<16x8xf32> -> vector<16x8xf32>
    %274 = vector.broadcast %258 : vector<1x8xf32> to vector<16x8xf32>
    %275 = arith.addf %273, %274 : vector<16x8xf32>
    %276 = vector.shape_cast %275 : vector<16x8xf32> to vector<2x8x8xf32>
    %cst_165 = arith.constant dense<0.000000e+00> : vector<16x8xf32>
    %277 = tpu.matmul %4, %254, %cst_165 {dimension_numbers = #tpu.dot_dimension_numbers<[1], [0], [0], [1], [0, 0, 1, 1], [], []>} : vector<16x32xf32>, vector<32x8xf32>, vector<16x8xf32> -> vector<16x8xf32>
    %278 = vector.broadcast %260 : vector<1x8xf32> to vector<16x8xf32>
    %279 = arith.addf %277, %278 : vector<16x8xf32>
    %280 = vector.shape_cast %279 : vector<16x8xf32> to vector<2x8x8xf32>
    "tpu.trace_start"() <{level = 10 : i32, message = "bqd,bkd->bqk"}> : () -> ()
    %cst_166 = arith.constant dense<0.000000e+00> : vector<2x8x8xf32>
    %281 = tpu.matmul %264, %276, %cst_166 {dimension_numbers = #tpu.dot_dimension_numbers<[2], [2], [1], [1], [0, 0, 0, 1, 1, 1], [0], [0]>} : vector<2x8x8xf32>, vector<2x8x8xf32>, vector<2x8x8xf32> -> vector<2x8x8xf32>
    "tpu.trace_stop"() : () -> ()
    %cst_167 = arith.constant 0.353553385 : f32
    %282 = vector.broadcast %cst_167 : f32 to vector<2x8x8xf32>
    %283 = arith.mulf %281, %282 : vector<2x8x8xf32>
    %284 = vector.shape_cast %22 : vector<8x8xf32> to vector<1x8x8xf32>
    %285 = vector.broadcast %284 : vector<1x8x8xf32> to vector<2x8x8xf32>
    %286 = arith.addf %283, %285 : vector<2x8x8xf32>
    "tpu.trace_start"() <{level = 10 : i32, message = "bqd,bkd->bqk"}> : () -> ()
    %cst_168 = arith.constant dense<0.000000e+00> : vector<2x8x8xf32>
    %287 = tpu.matmul %264, %268, %cst_168 {dimension_numbers = #tpu.dot_dimension_numbers<[2], [2], [1], [1], [0, 0, 0, 1, 1, 1], [0], [0]>} : vector<2x8x8xf32>, vector<2x8x8xf32>, vector<2x8x8xf32> -> vector<2x8x8xf32>
    "tpu.trace_stop"() : () -> ()
    %cst_169 = arith.constant 0.353553385 : f32
    %288 = vector.broadcast %cst_169 : f32 to vector<2x8x8xf32>
    %289 = arith.mulf %287, %288 : vector<2x8x8xf32>
    %290 = vector.shape_cast %21 : vector<8x8xf32> to vector<1x8x8xf32>
    %291 = vector.broadcast %290 : vector<1x8x8xf32> to vector<2x8x8xf32>
    %292 = arith.addf %289, %291 : vector<2x8x8xf32>
    %cst_170 = arith.constant dense<0xFF800000> : vector<2x8xf32>
    %293 = vector.multi_reduction <maximumf>, %286, %cst_170 [2] : vector<2x8x8xf32> to vector<2x8xf32>
    %294 = vector.shape_cast %293 : vector<2x8xf32> to vector<2x8x1xf32>
    %cst_171 = arith.constant dense<0xFF800000> : vector<2x8xf32>
    %295 = vector.multi_reduction <maximumf>, %292, %cst_171 [2] : vector<2x8x8xf32> to vector<2x8xf32>
    %296 = vector.shape_cast %295 : vector<2x8xf32> to vector<2x8x1xf32>
    %297 = arith.maximumf %294, %296 : vector<2x8x1xf32>
    %298 = vector.broadcast %297 : vector<2x8x1xf32> to vector<2x8x8xf32>
    %299 = arith.subf %286, %298 : vector<2x8x8xf32>
    %300 = math.exp %299 : vector<2x8x8xf32>
    %301 = vector.broadcast %297 : vector<2x8x1xf32> to vector<2x8x8xf32>
    %302 = arith.subf %292, %301 : vector<2x8x8xf32>
    %303 = math.exp %302 : vector<2x8x8xf32>
    %cst_172 = arith.constant dense<0.000000e+00> : vector<2x8xf32>
    %304 = vector.multi_reduction <add>, %300, %cst_172 [2] : vector<2x8x8xf32> to vector<2x8xf32>
    %305 = vector.shape_cast %304 : vector<2x8xf32> to vector<2x8x1xf32>
    %cst_173 = arith.constant dense<0.000000e+00> : vector<2x8xf32>
    %306 = vector.multi_reduction <add>, %303, %cst_173 [2] : vector<2x8x8xf32> to vector<2x8xf32>
    %307 = vector.shape_cast %306 : vector<2x8xf32> to vector<2x8x1xf32>
    %308 = arith.addf %305, %307 : vector<2x8x1xf32>
    %309 = tpu.reciprocal %308 {approx = true} : vector<2x8x1xf32> -> vector<2x8x1xf32>
    %310 = arith.mulf %308, %309 : vector<2x8x1xf32>
    %cst_174 = arith.constant 2.000000e+00 : f32
    %311 = vector.broadcast %cst_174 : f32 to vector<2x8x1xf32>
    %312 = arith.subf %311, %310 : vector<2x8x1xf32>
    %313 = arith.mulf %309, %312 : vector<2x8x1xf32>
    "tpu.trace_start"() <{level = 10 : i32, message = "bqk,bkd->bqd"}> : () -> ()
    %cst_175 = arith.constant dense<0.000000e+00> : vector<2x8x8xf32>
    %314 = tpu.matmul %300, %280, %cst_175 {dimension_numbers = #tpu.dot_dimension_numbers<[2], [1], [1], [2], [0, 0, 0, 1, 1, 2], [0], [0]>} : vector<2x8x8xf32>, vector<2x8x8xf32>, vector<2x8x8xf32> -> vector<2x8x8xf32>
    %cst_176 = arith.constant dense<0.000000e+00> : vector<2x8x8xf32>
    %315 = tpu.matmul %303, %272, %cst_176 {dimension_numbers = #tpu.dot_dimension_numbers<[2], [1], [1], [2], [0, 0, 0, 1, 1, 2], [0], [0]>} : vector<2x8x8xf32>, vector<2x8x8xf32>, vector<2x8x8xf32> -> vector<2x8x8xf32>
    "tpu.trace_stop"() : () -> ()
    %316 = arith.addf %314, %315 : vector<2x8x8xf32>
    %317 = vector.broadcast %313 : vector<2x8x1xf32> to vector<2x8x8xf32>
    %318 = arith.mulf %316, %317 : vector<2x8x8xf32>
    %319 = vector.shape_cast %318 : vector<2x8x8xf32> to vector<16x8xf32>
    %c0_177 = arith.constant 0 : index
    %c3_178 = arith.constant 3 : index
    %c0_179 = arith.constant 0 : index
    %c0_180 = arith.constant 0 : index
    %320 = vector.load %arg8[%c0_177, %c3_178, %c0_179, %c0_180] : memref<1x4x8x32xf32, #tpu.memory_space<vmem>>, vector<1x1x8x32xf32>
    %321 = vector.shape_cast %320 : vector<1x1x8x32xf32> to vector<8x32xf32>
    %cst_181 = arith.constant dense<0.000000e+00> : vector<16x32xf32>
    %322 = tpu.matmul %319, %321, %cst_181 {dimension_numbers = #tpu.dot_dimension_numbers<[1], [0], [0], [1], [0, 0, 1, 1], [], []>} : vector<16x8xf32>, vector<8x32xf32>, vector<16x32xf32> -> vector<16x32xf32>
    %323 = arith.addf %248, %322 : vector<16x32xf32>
    %c0_182 = arith.constant 0 : index
    %c0_183 = arith.constant 0 : index
    %c0_184 = arith.constant 0 : index
    %324 = vector.load %arg9[%c0_182, %c0_183, %c0_184] : memref<1x1x32xf32, #tpu.memory_space<vmem>>, vector<1x1x32xf32>
    %325 = vector.shape_cast %324 : vector<1x1x32xf32> to vector<1x32xf32>
    %326 = vector.broadcast %325 : vector<1x32xf32> to vector<16x32xf32>
    %327 = arith.addf %323, %326 : vector<16x32xf32>
    %cst_185 = arith.constant dense<0.000000e+00> : vector<16xf32>
    %328 = vector.multi_reduction <add>, %327, %cst_185 [1] : vector<16x32xf32> to vector<16xf32>
    %329 = vector.shape_cast %328 : vector<16xf32> to vector<16x1xf32>
    %cst_186 = arith.constant 3.200000e+01 : f32
    %330 = vector.broadcast %cst_186 : f32 to vector<16x1xf32>
    %331 = arith.divf %329, %330 : vector<16x1xf32>
    %332 = vector.broadcast %331 : vector<16x1xf32> to vector<16x32xf32>
    %333 = arith.subf %327, %332 : vector<16x32xf32>
    %334 = arith.mulf %333, %333 : vector<16x32xf32>
    %cst_187 = arith.constant dense<0.000000e+00> : vector<16xf32>
    %335 = vector.multi_reduction <add>, %334, %cst_187 [1] : vector<16x32xf32> to vector<16xf32>
    %336 = vector.shape_cast %335 : vector<16xf32> to vector<16x1xf32>
    %cst_188 = arith.constant 3.200000e+01 : f32
    %337 = vector.broadcast %cst_188 : f32 to vector<16x1xf32>
    %338 = arith.divf %336, %337 : vector<16x1xf32>
    %cst_189 = arith.constant 9.99999974E-6 : f32
    %339 = vector.broadcast %cst_189 : f32 to vector<16x1xf32>
    %340 = arith.addf %338, %339 : vector<16x1xf32>
    %341 = math.rsqrt %340 : vector<16x1xf32>
    %342 = vector.broadcast %341 : vector<16x1xf32> to vector<16x32xf32>
    %343 = arith.mulf %333, %342 : vector<16x32xf32>
    %c0_190 = arith.constant 0 : index
    %c0_191 = arith.constant 0 : index
    %c0_192 = arith.constant 0 : index
    %c0_193 = arith.constant 0 : index
    %344 = vector.load %arg10[%c0_190, %c0_191, %c0_192, %c0_193] : memref<1x2x1x32xf32, #tpu.memory_space<vmem>>, vector<1x1x1x32xf32>
    %345 = vector.shape_cast %344 : vector<1x1x1x32xf32> to vector<1x32xf32>
    %346 = vector.broadcast %345 : vector<1x32xf32> to vector<16x32xf32>
    %347 = arith.mulf %343, %346 : vector<16x32xf32>
    %c0_194 = arith.constant 0 : index
    %c1_195 = arith.constant 1 : index
    %c0_196 = arith.constant 0 : index
    %c0_197 = arith.constant 0 : index
    %348 = vector.load %arg10[%c0_194, %c1_195, %c0_196, %c0_197] : memref<1x2x1x32xf32, #tpu.memory_space<vmem>>, vector<1x1x1x32xf32>
    %349 = vector.shape_cast %348 : vector<1x1x1x32xf32> to vector<1x32xf32>
    %350 = vector.broadcast %349 : vector<1x32xf32> to vector<16x32xf32>
    %351 = arith.addf %347, %350 : vector<16x32xf32>
    %352 = arith.addf %3, %351 : vector<16x32xf32>
    %cst_198 = arith.constant dense<0.000000e+00> : vector<16xf32>
    %353 = vector.multi_reduction <add>, %352, %cst_198 [1] : vector<16x32xf32> to vector<16xf32>
    %354 = vector.shape_cast %353 : vector<16xf32> to vector<16x1xf32>
    %cst_199 = arith.constant 3.200000e+01 : f32
    %355 = vector.broadcast %cst_199 : f32 to vector<16x1xf32>
    %356 = arith.divf %354, %355 : vector<16x1xf32>
    %357 = vector.broadcast %356 : vector<16x1xf32> to vector<16x32xf32>
    %358 = arith.subf %352, %357 : vector<16x32xf32>
    %359 = arith.mulf %358, %358 : vector<16x32xf32>
    %cst_200 = arith.constant dense<0.000000e+00> : vector<16xf32>
    %360 = vector.multi_reduction <add>, %359, %cst_200 [1] : vector<16x32xf32> to vector<16xf32>
    %361 = vector.shape_cast %360 : vector<16xf32> to vector<16x1xf32>
    %cst_201 = arith.constant 3.200000e+01 : f32
    %362 = vector.broadcast %cst_201 : f32 to vector<16x1xf32>
    %363 = arith.divf %361, %362 : vector<16x1xf32>
    %cst_202 = arith.constant 9.99999974E-6 : f32
    %364 = vector.broadcast %cst_202 : f32 to vector<16x1xf32>
    %365 = arith.addf %363, %364 : vector<16x1xf32>
    %366 = math.rsqrt %365 : vector<16x1xf32>
    %367 = vector.broadcast %366 : vector<16x1xf32> to vector<16x32xf32>
    %368 = arith.mulf %358, %367 : vector<16x32xf32>
    %c0_203 = arith.constant 0 : index
    %c0_204 = arith.constant 0 : index
    %c0_205 = arith.constant 0 : index
    %c0_206 = arith.constant 0 : index
    %369 = vector.load %arg11[%c0_203, %c0_204, %c0_205, %c0_206] : memref<1x2x32x42xf32, #tpu.memory_space<vmem>>, vector<1x1x32x42xf32>
    %370 = vector.shape_cast %369 : vector<1x1x32x42xf32> to vector<32x42xf32>
    %cst_207 = arith.constant dense<0.000000e+00> : vector<16x42xf32>
    %371 = tpu.matmul %368, %370, %cst_207 {dimension_numbers = #tpu.dot_dimension_numbers<[1], [0], [0], [1], [0, 0, 1, 1], [], []>} : vector<16x32xf32>, vector<32x42xf32>, vector<16x42xf32> -> vector<16x42xf32>
    %c0_208 = arith.constant 0 : index
    %c1_209 = arith.constant 1 : index
    %c0_210 = arith.constant 0 : index
    %c0_211 = arith.constant 0 : index
    %372 = vector.load %arg11[%c0_208, %c1_209, %c0_210, %c0_211] : memref<1x2x32x42xf32, #tpu.memory_space<vmem>>, vector<1x1x32x42xf32>
    %373 = vector.shape_cast %372 : vector<1x1x32x42xf32> to vector<32x42xf32>
    %cst_212 = arith.constant dense<0.000000e+00> : vector<16x42xf32>
    %374 = tpu.matmul %368, %373, %cst_212 {dimension_numbers = #tpu.dot_dimension_numbers<[1], [0], [0], [1], [0, 0, 1, 1], [], []>} : vector<16x32xf32>, vector<32x42xf32>, vector<16x42xf32> -> vector<16x42xf32>
    %cst_213 = arith.constant 0.707106769 : f32
    %375 = vector.broadcast %cst_213 : f32 to vector<16x42xf32>
    %376 = arith.mulf %374, %375 : vector<16x42xf32>
    %377 = math.absf %376 : vector<16x42xf32>
    %cst_214 = arith.constant 0.327591091 : f32
    %378 = vector.broadcast %cst_214 : f32 to vector<16x42xf32>
    %379 = arith.mulf %378, %377 : vector<16x42xf32>
    %cst_215 = arith.constant 1.000000e+00 : f32
    %380 = vector.broadcast %cst_215 : f32 to vector<16x42xf32>
    %381 = arith.addf %380, %379 : vector<16x42xf32>
    %cst_216 = arith.constant 1.000000e+00 : f32
    %382 = vector.broadcast %cst_216 : f32 to vector<16x42xf32>
    %383 = arith.divf %382, %381 : vector<16x42xf32>
    %cst_217 = arith.constant 1.06140542 : f32
    %384 = vector.broadcast %cst_217 : f32 to vector<16x42xf32>
    %385 = arith.mulf %384, %383 : vector<16x42xf32>
    %cst_218 = arith.constant 1.45315206 : f32
    %386 = vector.broadcast %cst_218 : f32 to vector<16x42xf32>
    %387 = arith.subf %385, %386 : vector<16x42xf32>
    %388 = arith.mulf %387, %383 : vector<16x42xf32>
    %cst_219 = arith.constant 1.42141378 : f32
    %389 = vector.broadcast %cst_219 : f32 to vector<16x42xf32>
    %390 = arith.addf %388, %389 : vector<16x42xf32>
    %391 = arith.mulf %390, %383 : vector<16x42xf32>
    %cst_220 = arith.constant 0.284496725 : f32
    %392 = vector.broadcast %cst_220 : f32 to vector<16x42xf32>
    %393 = arith.subf %391, %392 : vector<16x42xf32>
    %394 = arith.mulf %393, %383 : vector<16x42xf32>
    %cst_221 = arith.constant 0.254829586 : f32
    %395 = vector.broadcast %cst_221 : f32 to vector<16x42xf32>
    %396 = arith.addf %394, %395 : vector<16x42xf32>
    %397 = arith.mulf %396, %383 : vector<16x42xf32>
    %cst_222 = arith.constant 0.000000e+00 : f32
    %398 = vector.broadcast %cst_222 : f32 to vector<16x42xf32>
    %399 = arith.subf %398, %377 : vector<16x42xf32>
    %400 = arith.mulf %399, %377 : vector<16x42xf32>
    %401 = math.exp %400 : vector<16x42xf32>
    %402 = arith.mulf %397, %401 : vector<16x42xf32>
    %cst_223 = arith.constant 1.000000e+00 : f32
    %403 = vector.broadcast %cst_223 : f32 to vector<16x42xf32>
    %404 = arith.subf %403, %402 : vector<16x42xf32>
    %cst_224 = arith.constant 0.000000e+00 : f32
    %405 = vector.broadcast %cst_224 : f32 to vector<16x42xf32>
    %406 = arith.cmpf oge, %376, %405 : vector<16x42xf32>
    %cst_225 = arith.constant 0.000000e+00 : f32
    %407 = vector.broadcast %cst_225 : f32 to vector<16x42xf32>
    %408 = arith.subf %407, %404 : vector<16x42xf32>
    %409 = arith.select %406, %404, %408 : vector<16x42xi1>, vector<16x42xf32>
    %cst_226 = arith.constant 5.000000e-01 : f32
    %410 = vector.broadcast %cst_226 : f32 to vector<16x42xf32>
    %411 = arith.mulf %410, %374 : vector<16x42xf32>
    %cst_227 = arith.constant 1.000000e+00 : f32
    %412 = vector.broadcast %cst_227 : f32 to vector<16x42xf32>
    %413 = arith.addf %412, %409 : vector<16x42xf32>
    %414 = arith.mulf %411, %413 : vector<16x42xf32>
    %415 = arith.mulf %371, %414 : vector<16x42xf32>
    %cst_228 = arith.constant dense<0.000000e+00> : vector<16xf32>
    %416 = vector.multi_reduction <add>, %415, %cst_228 [1] : vector<16x42xf32> to vector<16xf32>
    %417 = vector.shape_cast %416 : vector<16xf32> to vector<16x1xf32>
    %cst_229 = arith.constant 4.200000e+01 : f32
    %418 = vector.broadcast %cst_229 : f32 to vector<16x1xf32>
    %419 = arith.divf %417, %418 : vector<16x1xf32>
    %420 = vector.broadcast %419 : vector<16x1xf32> to vector<16x42xf32>
    %421 = arith.subf %415, %420 : vector<16x42xf32>
    %422 = arith.mulf %421, %421 : vector<16x42xf32>
    %cst_230 = arith.constant dense<0.000000e+00> : vector<16xf32>
    %423 = vector.multi_reduction <add>, %422, %cst_230 [1] : vector<16x42xf32> to vector<16xf32>
    %424 = vector.shape_cast %423 : vector<16xf32> to vector<16x1xf32>
    %cst_231 = arith.constant 4.200000e+01 : f32
    %425 = vector.broadcast %cst_231 : f32 to vector<16x1xf32>
    %426 = arith.divf %424, %425 : vector<16x1xf32>
    %cst_232 = arith.constant 9.99999974E-6 : f32
    %427 = vector.broadcast %cst_232 : f32 to vector<16x1xf32>
    %428 = arith.addf %426, %427 : vector<16x1xf32>
    %429 = math.rsqrt %428 : vector<16x1xf32>
    %430 = vector.broadcast %429 : vector<16x1xf32> to vector<16x42xf32>
    %431 = arith.mulf %421, %430 : vector<16x42xf32>
    %c0_233 = arith.constant 0 : index
    %c0_234 = arith.constant 0 : index
    %c0_235 = arith.constant 0 : index
    %432 = vector.load %arg12[%c0_233, %c0_234, %c0_235] : memref<1x42x32xf32, #tpu.memory_space<vmem>>, vector<1x42x32xf32>
    %433 = vector.shape_cast %432 : vector<1x42x32xf32> to vector<42x32xf32>
    %cst_236 = arith.constant dense<0.000000e+00> : vector<16x32xf32>
    %434 = tpu.matmul %431, %433, %cst_236 {dimension_numbers = #tpu.dot_dimension_numbers<[1], [0], [0], [1], [0, 0, 1, 1], [], []>} : vector<16x42xf32>, vector<42x32xf32>, vector<16x32xf32> -> vector<16x32xf32>
    %435 = arith.addf %352, %434 : vector<16x32xf32>
    %c0_237 = arith.constant 0 : index
    %c0_238 = arith.constant 0 : index
    %436 = vector.load %arg14[%c0_237, %c0_238] : memref<16x32xf32, #tpu.memory_space<vmem>>, vector<16x32xf32>
    tpu.vector_store %arg14[%c0_237, %c0_238], %435 {strides = array<i32>} : memref<16x32xf32, #tpu.memory_space<vmem>>, vector<16x32xf32>,
    %c1_i32 = arith.constant 1 : i32
    %437 = arith.cmpi eq, %arg1, %c1_i32 : i32
    %438 = arith.extui %437 : i1 to i32
    %c0_i32_239 = arith.constant 0 : i32
    %439 = arith.cmpi ne, %438, %c0_i32_239 : i32
    scf.if %439 {
      %cst_240 = arith.constant dense<0.000000e+00> : vector<16xf32>
      %440 = vector.multi_reduction <add>, %435, %cst_240 [1] : vector<16x32xf32> to vector<16xf32>
      %441 = vector.shape_cast %440 : vector<16xf32> to vector<16x1xf32>
      %cst_241 = arith.constant 3.200000e+01 : f32
      %442 = vector.broadcast %cst_241 : f32 to vector<16x1xf32>
      %443 = arith.divf %441, %442 : vector<16x1xf32>
      %444 = vector.broadcast %443 : vector<16x1xf32> to vector<16x32xf32>
      %445 = arith.subf %435, %444 : vector<16x32xf32>
      %446 = arith.mulf %445, %445 : vector<16x32xf32>
      %cst_242 = arith.constant dense<0.000000e+00> : vector<16xf32>
      %447 = vector.multi_reduction <add>, %446, %cst_242 [1] : vector<16x32xf32> to vector<16xf32>
      %448 = vector.shape_cast %447 : vector<16xf32> to vector<16x1xf32>
      %cst_243 = arith.constant 3.200000e+01 : f32
      %449 = vector.broadcast %cst_243 : f32 to vector<16x1xf32>
      %450 = arith.divf %448, %449 : vector<16x1xf32>
      %cst_244 = arith.constant 9.99999974E-6 : f32
      %451 = vector.broadcast %cst_244 : f32 to vector<16x1xf32>
      %452 = arith.addf %450, %451 : vector<16x1xf32>
      %453 = math.rsqrt %452 : vector<16x1xf32>
      %454 = vector.broadcast %453 : vector<16x1xf32> to vector<16x32xf32>
      %455 = arith.mulf %445, %454 : vector<16x32xf32>
      %c0_245 = arith.constant 0 : index
      %c0_246 = arith.constant 0 : index
      %456 = vector.load %arg13[%c0_245, %c0_246] : memref<16x32xf32, #tpu.memory_space<vmem>>, vector<16x32xf32>
      tpu.vector_store %arg13[%c0_245, %c0_246], %455 {strides = array<i32>} : memref<16x32xf32, #tpu.memory_space<vmem>>, vector<16x32xf32>,
    } else {
    }
    return
  }
  func.func @transform_0(%arg0: i32, %arg1: i32) -> (i32, i32) {
    %c0_i32 = arith.constant 0 : i32
    %c0_i32_0 = arith.constant 0 : i32
    return %arg0, %c0_i32 : i32, i32
  }
  func.func @transform_1(%arg0: i32, %arg1: i32) -> (i32, i32) {
    %c0_i32 = arith.constant 0 : i32
    %c0_i32_0 = arith.constant 0 : i32
    return %arg0, %c0_i32 : i32, i32
  }
  func.func @transform_2(%arg0: i32, %arg1: i32) -> (i32, i32) {
    %c0_i32 = arith.constant 0 : i32
    %c0_i32_0 = arith.constant 0 : i32
    %c0_i32_1 = arith.constant 0 : i32
    return %c0_i32, %c0_i32_0 : i32, i32
  }
  func.func @transform_3(%arg0: i32, %arg1: i32) -> (i32, i32) {
    %c0_i32 = arith.constant 0 : i32
    %c0_i32_0 = arith.constant 0 : i32
    %c0_i32_1 = arith.constant 0 : i32
    return %c0_i32, %c0_i32_0 : i32, i32
  }
  func.func @transform_4(%arg0: i32, %arg1: i32) -> (i32, i32, i32, i32) {
    %c0_i32 = arith.constant 0 : i32
    %c0_i32_0 = arith.constant 0 : i32
    %c0_i32_1 = arith.constant 0 : i32
    %c0_i32_2 = arith.constant 0 : i32
    return %arg1, %c0_i32, %c0_i32_0, %c0_i32_1 : i32, i32, i32, i32
  }
  func.func @transform_5(%arg0: i32, %arg1: i32) -> (i32, i32, i32, i32) {
    %c0_i32 = arith.constant 0 : i32
    %c0_i32_0 = arith.constant 0 : i32
    %c0_i32_1 = arith.constant 0 : i32
    %c0_i32_2 = arith.constant 0 : i32
    return %arg1, %c0_i32, %c0_i32_0, %c0_i32_1 : i32, i32, i32, i32
  }
  func.func @transform_6(%arg0: i32, %arg1: i32) -> (i32, i32, i32, i32) {
    %c0_i32 = arith.constant 0 : i32
    %c0_i32_0 = arith.constant 0 : i32
    %c0_i32_1 = arith.constant 0 : i32
    %c0_i32_2 = arith.constant 0 : i32
    return %arg1, %c0_i32, %c0_i32_0, %c0_i32_1 : i32, i32, i32, i32
  }
  func.func @transform_7(%arg0: i32, %arg1: i32) -> (i32, i32, i32) {
    %c0_i32 = arith.constant 0 : i32
    %c0_i32_0 = arith.constant 0 : i32
    %c0_i32_1 = arith.constant 0 : i32
    return %arg1, %c0_i32, %c0_i32_0 : i32, i32, i32
  }
  func.func @transform_8(%arg0: i32, %arg1: i32) -> (i32, i32, i32, i32) {
    %c0_i32 = arith.constant 0 : i32
    %c0_i32_0 = arith.constant 0 : i32
    %c0_i32_1 = arith.constant 0 : i32
    %c0_i32_2 = arith.constant 0 : i32
    return %arg1, %c0_i32, %c0_i32_0, %c0_i32_1 : i32, i32, i32, i32
  }
  func.func @transform_9(%arg0: i32, %arg1: i32) -> (i32, i32, i32, i32) {
    %c0_i32 = arith.constant 0 : i32
    %c0_i32_0 = arith.constant 0 : i32
    %c0_i32_1 = arith.constant 0 : i32
    %c0_i32_2 = arith.constant 0 : i32
    return %arg1, %c0_i32, %c0_i32_0, %c0_i32_1 : i32, i32, i32, i32
  }
  func.func @transform_10(%arg0: i32, %arg1: i32) -> (i32, i32, i32) {
    %c0_i32 = arith.constant 0 : i32
    %c0_i32_0 = arith.constant 0 : i32
    %c0_i32_1 = arith.constant 0 : i32
    return %arg1, %c0_i32, %c0_i32_0 : i32, i32, i32
  }
  func.func @transform_11(%arg0: i32, %arg1: i32) -> (i32, i32) {
    %c0_i32 = arith.constant 0 : i32
    %c0_i32_0 = arith.constant 0 : i32
    return %arg0, %c0_i32 : i32, i32
  }
}

</mosaic_0001>

<llo_original>
// kernel: tpu_custom_call.1
$region0: #{tpu_custom_call.1}
  #allocation0 [shape = 'u32[]', space=smem, size = 0x4, offset = 0x4, fixed_abs, tag = 'smem constant byte address 0x4 - core index']
  #allocation1 [shape = 'u32[144,128]{1,0:T(1,128)}', space=vmem, size = 0x12000, scoped, tag = 'internal scratch']
  #allocation2 [shape = 'f32[16,32]{1,0:T(8,128)}', space=vmem, size = 0x2000, scoped, tag = 'scratch operand']
  %s0 = inlined_call_operand.vmem [shape: f32[16,32], index: 0, kind: input, shape index: {}]
  %s1 = inlined_call_operand.vmem [shape: f32[16,32], index: 1, kind: input, shape index: {}]
  %s2 = inlined_call_operand.vmem [shape: f32[8,8], index: 2, kind: input, shape index: {}]
  %s3 = inlined_call_operand.vmem [shape: f32[8,8], index: 3, kind: input, shape index: {}]
  %s4 = inlined_call_operand.vmem [shape: f32[2,12,32,8], index: 4, kind: input, shape index: {}]
  %s5 = inlined_call_operand.vmem [shape: f32[2,12,1,8], index: 5, kind: input, shape index: {}]
  %s6 = inlined_call_operand.vmem [shape: f32[2,4,8,32], index: 6, kind: input, shape index: {}]
  %s7 = inlined_call_operand.vmem [shape: f32[2,1,32], index: 7, kind: input, shape index: {}]
  %s8 = inlined_call_operand.vmem [shape: f32[2,2,1,32], index: 8, kind: input, shape index: {}]
  %s9 = inlined_call_operand.vmem [shape: f32[2,2,32,42], index: 9, kind: input, shape index: {}]
  %s10 = inlined_call_operand.vmem [shape: f32[2,42,32], index: 10, kind: input, shape index: {}]
  %s11 = inlined_call_operand.hbm [shape: f32[16,32], index: 11, kind: output, shape index: {}]
  %s12 = sld [smem:[#allocation0]]
  $region85: #{tpu_custom_call.1} parent=0
    _
  %s14 = ssub.s32 1, %s12
  %s15 = scalar_select 0, %s14, %s12
  $region1: #{tpu_custom_call.1} parent=0
    #allocation3 [shape = 'u8[8192]{0}', space=vmem, size = 0x2000, scoped, tag = 'output window, operand 0, single buffered']
    #allocation4 [shape = 's32[2]{0}', space=sflag, size = 0x8, scoped, tag = 'scoped memory for tpu_custom_call.1']
    %16 = vsyncpa [#allocation4], 0
    loop: start=0, step=1, limit=4
    $region2: #{tpu_custom_call.1} parent=1 // loop_pre_header
      _
    $region3: #{tpu_custom_call.1} parent=1 // loop_header
      %s18 = sphi 0, %s22
      %p19 = scmp.ge.s32.totalorder %s18, 4
      %s25 = sphi 0, %s37
      %s26 = sphi 0, %s33
      %s27 = sphi 0, %s25
      %s28 = sphi 0, %s26
      %s29 = sphi 0, %s27
      %s30 = sphi 0, %s28
      %s40 = sphi 0, %s42
      %s43 = sphi 0, %s40
      %s44 = sphi 0, %s43
      %s60 = sphi 0, %s44
      %s66 = sphi 0, %s68
      %s69 = sphi 0, %s66
      %s70 = sphi 0, %s69
      %s86 = sphi 0, %s70
      %s90 = sphi 0, %s90
      %s92 = sphi 0, %s90
      %s93 = sphi 0, %s92
      %s107 = sphi 0, %s93
      %s111 = sphi 0, %s111
      %s113 = sphi 0, %s111
      %s114 = sphi 0, %s113
      %s128 = sphi 0, %s114
      %s134 = sphi 0, %s136
      %s137 = sphi 0, %s134
      %s138 = sphi 0, %s137
      %s154 = sphi 0, %s138
      %s160 = sphi 0, %s162
      %s163 = sphi 0, %s160
      %s164 = sphi 0, %s163
      %s180 = sphi 0, %s164
      %s186 = sphi 0, %s188
      %s189 = sphi 0, %s186
      %s190 = sphi 0, %s189
      %s206 = sphi 0, %s190
      %s212 = sphi 0, %s214
      %s215 = sphi 0, %s212
      %s216 = sphi 0, %s215
      %s232 = sphi 0, %s216
      %s238 = sphi 0, %s240
      %s241 = sphi 0, %s238
      %s242 = sphi 0, %s241
      %s258 = sphi 0, %s242
      %s264 = sphi 0, %s266
      %s267 = sphi 0, %s264
      %s268 = sphi 0, %s267
      %s284 = sphi 0, %s268
      %s290 = sphi 0, %s292
      %s293 = sphi 0, %s290
      %s294 = sphi 0, %s293
      %s310 = sphi 0, %s294
      %s316 = sphi 0, %s318
      %s319 = sphi 0, %s316
      %s320 = sphi 0, %s319
      %s336 = sphi 0, %s320
    $region4: #{tpu_custom_call.1} parent=1 // loop_header_branch
      %21 = sbr.rel (%p19) target = $region8
    $region5: #{tpu_custom_call.1} parent=1 // loop_body
      %s23 = ssub.s32 %s18, 1
      %s24 = ssub.s32 %s18, 2
      %s31 = sadd.s32 1, %s26
      %p32 = scmp.ge.s32.totalorder %s31, 2
      %s33 = scalar_select %p32, 0, %s31
      %s34 = sadd.s32 1, %s25
      %s35 = scalar_select %p32, %s34, %s25
      %p36 = scmp.ge.s32.totalorder %s35, 1
      %s37 = scalar_select %p36, 0, %s35
      %s38 = ssub.s32 %s25, %s37
      %p39 = scmp.eq.s32.totalorder %s38, 0
      %s41 = sadd.s32 %s40, 1
      %s42 = scalar_select %p39, %s40, %s41
      %p45 = pneg %p39
      %p46 = scmp.eq.s32.totalorder %s18, 1
      %p47 = por %p45, %p46
      %p48 = scmp.ne.s32.totalorder %s40, %s43
      %p49 = scmp.eq.s32.totalorder %s18, 0
      %p50 = por %p48, %p49
      %p51 = scmp.ne.s32.totalorder %s40, %s43
      %p52 = scmp.eq.s32.totalorder %s23, 1
      %p53 = por %p51, %p52
      %p54 = scmp.ne.s32.totalorder %s43, %s44
      %p55 = scmp.eq.s32.totalorder %s23, 0
      %p56 = por %p54, %p55
      %p57 = scmp.ne.s32.totalorder %s43, %s44
      %p58 = scmp.eq.s32.totalorder %s24, 1
      %p59 = por %p57, %p58
      %p61 = scmp.ne.s32.totalorder %s44, %s60
      %p62 = scmp.eq.s32.totalorder %s24, 0
      %p63 = por %p61, %p62
      %s64 = ssub.s32 %s25, %s37
      %p65 = scmp.eq.s32.totalorder %s64, 0
      %s67 = sadd.s32 %s66, 1
      %s68 = scalar_select %p65, %s66, %s67
      %p71 = pneg %p65
      %p72 = scmp.eq.s32.totalorder %s18, 1
      %p73 = por %p71, %p72
      %p74 = scmp.ne.s32.totalorder %s66, %s69
      %p75 = scmp.eq.s32.totalorder %s18, 0
      %p76 = por %p74, %p75
      %p77 = scmp.ne.s32.totalorder %s66, %s69
      %p78 = scmp.eq.s32.totalorder %s23, 1
      %p79 = por %p77, %p78
      %p80 = scmp.ne.s32.totalorder %s69, %s70
      %p81 = scmp.eq.s32.totalorder %s23, 0
      %p82 = por %p80, %p81
      %p83 = scmp.ne.s32.totalorder %s69, %s70
      %p84 = scmp.eq.s32.totalorder %s24, 1
      %p85 = por %p83, %p84
      %p87 = scmp.ne.s32.totalorder %s70, %s86
      %p88 = scmp.eq.s32.totalorder %s24, 0
      %p89 = por %p87, %p88
      %s91 = sadd.s32 %s90, 1
      %p94 = scmp.eq.s32.totalorder %s18, 1
      %p95 = scmp.ne.s32.totalorder %s90, %s92
      %p96 = scmp.eq.s32.totalorder %s18, 0
      %p97 = por %p95, %p96
      %p98 = scmp.ne.s32.totalorder %s90, %s92
      %p99 = scmp.eq.s32.totalorder %s23, 1
      %p100 = por %p98, %p99
      %p101 = scmp.ne.s32.totalorder %s92, %s93
      %p102 = scmp.eq.s32.totalorder %s23, 0
      %p103 = por %p101, %p102
      %p104 = scmp.ne.s32.totalorder %s92, %s93
      %p105 = scmp.eq.s32.totalorder %s24, 1
      %p106 = por %p104, %p105
      %p108 = scmp.ne.s32.totalorder %s93, %s107
      %p109 = scmp.eq.s32.totalorder %s24, 0
      %p110 = por %p108, %p109
      %s112 = sadd.s32 %s111, 1
      %p115 = scmp.eq.s32.totalorder %s18, 1
      %p116 = scmp.ne.s32.totalorder %s111, %s113
      %p117 = scmp.eq.s32.totalorder %s18, 0
      %p118 = por %p116, %p117
      %p119 = scmp.ne.s32.totalorder %s111, %s113
      %p120 = scmp.eq.s32.totalorder %s23, 1
      %p121 = por %p119, %p120
      %p122 = scmp.ne.s32.totalorder %s113, %s114
      %p123 = scmp.eq.s32.totalorder %s23, 0
      %p124 = por %p122, %p123
      %p125 = scmp.ne.s32.totalorder %s113, %s114
      %p126 = scmp.eq.s32.totalorder %s24, 1
      %p127 = por %p125, %p126
      %p129 = scmp.ne.s32.totalorder %s114, %s128
      %p130 = scmp.eq.s32.totalorder %s24, 0
      %p131 = por %p129, %p130
      %s132 = ssub.s32 %s26, %s33
      %p133 = scmp.eq.s32.totalorder %s132, 0
      %s135 = sadd.s32 %s134, 1
      %s136 = scalar_select %p133, %s134, %s135
      %p139 = pneg %p133
      %p140 = scmp.eq.s32.totalorder %s18, 1
      %p141 = por %p139, %p140
      %p142 = scmp.ne.s32.totalorder %s134, %s137
      %p143 = scmp.eq.s32.totalorder %s18, 0
      %p144 = por %p142, %p143
      %p145 = scmp.ne.s32.totalorder %s134, %s137
      %p146 = scmp.eq.s32.totalorder %s23, 1
      %p147 = por %p145, %p146
      %p148 = scmp.ne.s32.totalorder %s137, %s138
      %p149 = scmp.eq.s32.totalorder %s23, 0
      %p150 = por %p148, %p149
      %p151 = scmp.ne.s32.totalorder %s137, %s138
      %p152 = scmp.eq.s32.totalorder %s24, 1
      %p153 = por %p151, %p152
      %p155 = scmp.ne.s32.totalorder %s138, %s154
      %p156 = scmp.eq.s32.totalorder %s24, 0
      %p157 = por %p155, %p156
      %s158 = ssub.s32 %s26, %s33
      %p159 = scmp.eq.s32.totalorder %s158, 0
      %s161 = sadd.s32 %s160, 1
      %s162 = scalar_select %p159, %s160, %s161
      %p165 = pneg %p159
      %p166 = scmp.eq.s32.totalorder %s18, 1
      %p167 = por %p165, %p166
      %p168 = scmp.ne.s32.totalorder %s160, %s163
      %p169 = scmp.eq.s32.totalorder %s18, 0
      %p170 = por %p168, %p169
      %p171 = scmp.ne.s32.totalorder %s160, %s163
      %p172 = scmp.eq.s32.totalorder %s23, 1
      %p173 = por %p171, %p172
      %p174 = scmp.ne.s32.totalorder %s163, %s164
      %p175 = scmp.eq.s32.totalorder %s23, 0
      %p176 = por %p174, %p175
      %p177 = scmp.ne.s32.totalorder %s163, %s164
      %p178 = scmp.eq.s32.totalorder %s24, 1
      %p179 = por %p177, %p178
      %p181 = scmp.ne.s32.totalorder %s164, %s180
      %p182 = scmp.eq.s32.totalorder %s24, 0
      %p183 = por %p181, %p182
      %s184 = ssub.s32 %s26, %s33
      %p185 = scmp.eq.s32.totalorder %s184, 0
      %s187 = sadd.s32 %s186, 1
      %s188 = scalar_select %p185, %s186, %s187
      %p191 = pneg %p185
      %p192 = scmp.eq.s32.totalorder %s18, 1
      %p193 = por %p191, %p192
      %p194 = scmp.ne.s32.totalorder %s186, %s189
      %p195 = scmp.eq.s32.totalorder %s18, 0
      %p196 = por %p194, %p195
      %p197 = scmp.ne.s32.totalorder %s186, %s189
      %p198 = scmp.eq.s32.totalorder %s23, 1
      %p199 = por %p197, %p198
      %p200 = scmp.ne.s32.totalorder %s189, %s190
      %p201 = scmp.eq.s32.totalorder %s23, 0
      %p202 = por %p200, %p201
      %p203 = scmp.ne.s32.totalorder %s189, %s190
      %p204 = scmp.eq.s32.totalorder %s24, 1
      %p205 = por %p203, %p204
      %p207 = scmp.ne.s32.totalorder %s190, %s206
      %p208 = scmp.eq.s32.totalorder %s24, 0
      %p209 = por %p207, %p208
      %s210 = ssub.s32 %s26, %s33
      %p211 = scmp.eq.s32.totalorder %s210, 0
      %s213 = sadd.s32 %s212, 1
      %s214 = scalar_select %p211, %s212, %s213
      %p217 = pneg %p211
      %p218 = scmp.eq.s32.totalorder %s18, 1
      %p219 = por %p217, %p218
      %p220 = scmp.ne.s32.totalorder %s212, %s215
      %p221 = scmp.eq.s32.totalorder %s18, 0
      %p222 = por %p220, %p221
      %p223 = scmp.ne.s32.totalorder %s212, %s215
      %p224 = scmp.eq.s32.totalorder %s23, 1
      %p225 = por %p223, %p224
      %p226 = scmp.ne.s32.totalorder %s215, %s216
      %p227 = scmp.eq.s32.totalorder %s23, 0
      %p228 = por %p226, %p227
      %p229 = scmp.ne.s32.totalorder %s215, %s216
      %p230 = scmp.eq.s32.totalorder %s24, 1
      %p231 = por %p229, %p230
      %p233 = scmp.ne.s32.totalorder %s216, %s232
      %p234 = scmp.eq.s32.totalorder %s24, 0
      %p235 = por %p233, %p234
      %s236 = ssub.s32 %s26, %s33
      %p237 = scmp.eq.s32.totalorder %s236, 0
      %s239 = sadd.s32 %s238, 1
      %s240 = scalar_select %p237, %s238, %s239
      %p243 = pneg %p237
      %p244 = scmp.eq.s32.totalorder %s18, 1
      %p245 = por %p243, %p244
      %p246 = scmp.ne.s32.totalorder %s238, %s241
      %p247 = scmp.eq.s32.totalorder %s18, 0
      %p248 = por %p246, %p247
      %p249 = scmp.ne.s32.totalorder %s238, %s241
      %p250 = scmp.eq.s32.totalorder %s23, 1
      %p251 = por %p249, %p250
      %p252 = scmp.ne.s32.totalorder %s241, %s242
      %p253 = scmp.eq.s32.totalorder %s23, 0
      %p254 = por %p252, %p253
      %p255 = scmp.ne.s32.totalorder %s241, %s242
      %p256 = scmp.eq.s32.totalorder %s24, 1
      %p257 = por %p255, %p256
      %p259 = scmp.ne.s32.totalorder %s242, %s258
      %p260 = scmp.eq.s32.totalorder %s24, 0
      %p261 = por %p259, %p260
      %s262 = ssub.s32 %s26, %s33
      %p263 = scmp.eq.s32.totalorder %s262, 0
      %s265 = sadd.s32 %s264, 1
      %s266 = scalar_select %p263, %s264, %s265
      %p269 = pneg %p263
      %p270 = scmp.eq.s32.totalorder %s18, 1
      %p271 = por %p269, %p270
      %p272 = scmp.ne.s32.totalorder %s264, %s267
      %p273 = scmp.eq.s32.totalorder %s18, 0
      %p274 = por %p272, %p273
      %p275 = scmp.ne.s32.totalorder %s264, %s267
      %p276 = scmp.eq.s32.totalorder %s23, 1
      %p277 = por %p275, %p276
      %p278 = scmp.ne.s32.totalorder %s267, %s268
      %p279 = scmp.eq.s32.totalorder %s23, 0
      %p280 = por %p278, %p279
      %p281 = scmp.ne.s32.totalorder %s267, %s268
      %p282 = scmp.eq.s32.totalorder %s24, 1
      %p283 = por %p281, %p282
      %p285 = scmp.ne.s32.totalorder %s268, %s284
      %p286 = scmp.eq.s32.totalorder %s24, 0
      %p287 = por %p285, %p286
      %s288 = ssub.s32 %s26, %s33
      %p289 = scmp.eq.s32.totalorder %s288, 0
      %s291 = sadd.s32 %s290, 1
      %s292 = scalar_select %p289, %s290, %s291
      %p295 = pneg %p289
      %p296 = scmp.eq.s32.totalorder %s18, 1
      %p297 = por %p295, %p296
      %p298 = scmp.ne.s32.totalorder %s290, %s293
      %p299 = scmp.eq.s32.totalorder %s18, 0
      %p300 = por %p298, %p299
      %p301 = scmp.ne.s32.totalorder %s290, %s293
      %p302 = scmp.eq.s32.totalorder %s23, 1
      %p303 = por %p301, %p302
      %p304 = scmp.ne.s32.totalorder %s293, %s294
      %p305 = scmp.eq.s32.totalorder %s23, 0
      %p306 = por %p304, %p305
      %p307 = scmp.ne.s32.totalorder %s293, %s294
      %p308 = scmp.eq.s32.totalorder %s24, 1
      %p309 = por %p307, %p308
      %p311 = scmp.ne.s32.totalorder %s294, %s310
      %p312 = scmp.eq.s32.totalorder %s24, 0
      %p313 = por %p311, %p312
      %s314 = ssub.s32 %s25, %s37
      %p315 = scmp.eq.s32.totalorder %s314, 0
      %s317 = sadd.s32 %s316, 1
      %s318 = scalar_select %p315, %s316, %s317
      %p321 = pneg %p315
      %p322 = scmp.eq.s32.totalorder %s18, 1
      %p323 = por %p321, %p322
      %p324 = scmp.ne.s32.totalorder %s316, %s319
      %p325 = scmp.eq.s32.totalorder %s18, 0
      %p326 = por %p324, %p325
      %p327 = scmp.ne.s32.totalorder %s316, %s319
      %p328 = scmp.eq.s32.totalorder %s23, 1
      %p329 = por %p327, %p328
      %p330 = scmp.ne.s32.totalorder %s319, %s320
      %p331 = scmp.eq.s32.totalorder %s23, 0
      %p332 = por %p330, %p331
      %p333 = scmp.ne.s32.totalorder %s319, %s320
      %p334 = scmp.eq.s32.totalorder %s24, 1
      %p335 = por %p333, %p334
      %p337 = scmp.ne.s32.totalorder %s320, %s336
      %p338 = scmp.eq.s32.totalorder %s24, 0
      %p339 = por %p337, %p338
      %p340 = scmp.le.s32.totalorder 1, %s18
      %p341 = scmp.lt.s32.totalorder %s18, 3
      %p342 = pnand %p340, %p341
      %p343 = pneg %p342
      // Predicated region
      $region9: #{tpu_custom_call.1} parent=5 // pred_check
        _
      $region10: #{tpu_custom_call.1} parent=5 // pred_check_branch
        %345 = sbr.rel (%p342) target = $region12
      $region11: #{tpu_custom_call.1} parent=5 // pred_region
        %s346 = ssub.s32 %s18, 1
        // Predicated region
        $region13: #{tpu_custom_call.1} parent=11 // pred_check
          %p347 = pneg %p56
        $region14: #{tpu_custom_call.1} parent=11 // pred_check_branch
          %349 = sbr.rel (%p347) target = $region16
        $region15: #{tpu_custom_call.1} parent=11 // pred_region
          %s350 = smul.u32 2, %s27
          %p351 = scmp.lt.s32.totalorder %s350, 1
          %s352 = scalar_select %p351, %s350, 1
          %s353 = smul.addr %s352, 8
          %s354 = scalar_lea.vmem %s0, %s353
          %s355 = smul.u32 2, %s27
        $region16: #{tpu_custom_call.1} parent=11 // pred_fallthru
          _
        // Predicated region
        $region17: #{tpu_custom_call.1} parent=11 // pred_check
          %p356 = pneg %p82
        $region18: #{tpu_custom_call.1} parent=11 // pred_check_branch
          %358 = sbr.rel (%p356) target = $region20
        $region19: #{tpu_custom_call.1} parent=11 // pred_region
          %s359 = smul.u32 2, %s27
          %p360 = scmp.lt.s32.totalorder %s359, 1
          %s361 = scalar_select %p360, %s359, 1
          %s362 = smul.addr %s361, 8
          %s363 = scalar_lea.vmem %s1, %s362
          %s364 = smul.u32 2, %s27
        $region20: #{tpu_custom_call.1} parent=11 // pred_fallthru
          _
        // Predicated region
        $region21: #{tpu_custom_call.1} parent=11 // pred_check
          %p365 = pneg %p103
        $region22: #{tpu_custom_call.1} parent=11 // pred_check_branch
          %367 = sbr.rel (%p365) target = $region24
        $region23: #{tpu_custom_call.1} parent=11 // pred_region
          _
        $region24: #{tpu_custom_call.1} parent=11 // pred_fallthru
          _
        // Predicated region
        $region25: #{tpu_custom_call.1} parent=11 // pred_check
          %p368 = pneg %p124
        $region26: #{tpu_custom_call.1} parent=11 // pred_check_branch
          %370 = sbr.rel (%p368) target = $region28
        $region27: #{tpu_custom_call.1} parent=11 // pred_region
          _
        $region28: #{tpu_custom_call.1} parent=11 // pred_fallthru
          _
      $region12: #{tpu_custom_call.1} parent=5 // pred_fallthru
        _
      %p371 = scmp.lt.s32.totalorder %s18, 2
      // Predicated region
      $region29: #{tpu_custom_call.1} parent=5 // pred_check
        %p372 = pneg %p371
      $region30: #{tpu_custom_call.1} parent=5 // pred_check_branch
        %374 = sbr.rel (%p372) target = $region32
      $region31: #{tpu_custom_call.1} parent=5 // pred_region
        // Predicated region
        $region33: #{tpu_custom_call.1} parent=31 // pred_check
          %p375 = pneg %p144
        $region34: #{tpu_custom_call.1} parent=31 // pred_check_branch
          %377 = sbr.rel (%p375) target = $region36
        $region35: #{tpu_custom_call.1} parent=31 // pred_region
          %p378 = scmp.lt.s32.totalorder %s26, 1
          %s379 = scalar_select %p378, %s26, 1
          %s380 = smul.addr %s379, 48
          %s381 = smul.addr %s380, 8
          %s382 = scalar_lea.vmem %s4, %s381
        $region36: #{tpu_custom_call.1} parent=31 // pred_fallthru
          _
        // Predicated region
        $region37: #{tpu_custom_call.1} parent=31 // pred_check
          %p383 = pneg %p170
        $region38: #{tpu_custom_call.1} parent=31 // pred_check_branch
          %385 = sbr.rel (%p383) target = $region40
        $region39: #{tpu_custom_call.1} parent=31 // pred_region
          %p386 = scmp.lt.s32.totalorder %s26, 1
          %s387 = scalar_select %p386, %s26, 1
          %s388 = smul.addr %s387, 12
          %s389 = scalar_lea.vmem %s5, %s388
        $region40: #{tpu_custom_call.1} parent=31 // pred_fallthru
          _
        // Predicated region
        $region41: #{tpu_custom_call.1} parent=31 // pred_check
          %p390 = pneg %p196
        $region42: #{tpu_custom_call.1} parent=31 // pred_check_branch
          %392 = sbr.rel (%p390) target = $region44
        $region43: #{tpu_custom_call.1} parent=31 // pred_region
          %p393 = scmp.lt.s32.totalorder %s26, 1
          %s394 = scalar_select %p393, %s26, 1
          %s395 = smul.addr %s394, 4
          %s396 = smul.addr %s395, 8
          %s397 = scalar_lea.vmem %s6, %s396
        $region44: #{tpu_custom_call.1} parent=31 // pred_fallthru
          _
        // Predicated region
        $region45: #{tpu_custom_call.1} parent=31 // pred_check
          %p398 = pneg %p222
        $region46: #{tpu_custom_call.1} parent=31 // pred_check_branch
          %400 = sbr.rel (%p398) target = $region48
        $region47: #{tpu_custom_call.1} parent=31 // pred_region
          %p401 = scmp.lt.s32.totalorder %s26, 1
          %s402 = scalar_select %p401, %s26, 1
          %s403 = scalar_lea.vmem %s7, %s402
        $region48: #{tpu_custom_call.1} parent=31 // pred_fallthru
          _
        // Predicated region
        $region49: #{tpu_custom_call.1} parent=31 // pred_check
          %p404 = pneg %p248
        $region50: #{tpu_custom_call.1} parent=31 // pred_check_branch
          %406 = sbr.rel (%p404) target = $region52
        $region51: #{tpu_custom_call.1} parent=31 // pred_region
          %p407 = scmp.lt.s32.totalorder %s26, 1
          %s408 = scalar_select %p407, %s26, 1
          %s409 = smul.addr %s408, 2
          %s410 = scalar_lea.vmem %s8, %s409
        $region52: #{tpu_custom_call.1} parent=31 // pred_fallthru
          _
        // Predicated region
        $region53: #{tpu_custom_call.1} parent=31 // pred_check
          %p411 = pneg %p274
        $region54: #{tpu_custom_call.1} parent=31 // pred_check_branch
          %413 = sbr.rel (%p411) target = $region56
        $region55: #{tpu_custom_call.1} parent=31 // pred_region
          %p414 = scmp.lt.s32.totalorder %s26, 1
          %s415 = scalar_select %p414, %s26, 1
          %s416 = smul.addr %s415, 8
          %s417 = smul.addr %s416, 8
          %s418 = scalar_lea.vmem %s9, %s417
        $region56: #{tpu_custom_call.1} parent=31 // pred_fallthru
          _
        // Predicated region
        $region57: #{tpu_custom_call.1} parent=31 // pred_check
          %p419 = pneg %p300
        $region58: #{tpu_custom_call.1} parent=31 // pred_check_branch
          %421 = sbr.rel (%p419) target = $region60
        $region59: #{tpu_custom_call.1} parent=31 // pred_region
          %p422 = scmp.lt.s32.totalorder %s26, 1
          %s423 = scalar_select %p422, %s26, 1
          %s424 = smul.addr %s423, 6
          %s425 = smul.addr %s424, 8
          %s426 = scalar_lea.vmem %s10, %s425
        $region60: #{tpu_custom_call.1} parent=31 // pred_fallthru
          _
      $region32: #{tpu_custom_call.1} parent=5 // pred_fallthru
        _
      %p427 = scmp.le.s32.totalorder 1, %s18
      %p428 = scmp.lt.s32.totalorder %s18, 3
      %p429 = pnand %p427, %p428
      %p430 = pneg %p429
      // Predicated region
      $region61: #{tpu_custom_call.1} parent=5 // pred_check
        _
      $region62: #{tpu_custom_call.1} parent=5 // pred_check_branch
        %432 = sbr.rel (%p429) target = $region64
      $region63: #{tpu_custom_call.1} parent=5 // pred_region
        %s433 = ssub.s32 %s18, 1
        %s434 = smul.u32 2, %s27
        %p435 = scmp.lt.s32.totalorder %s434, 1
        %s436 = scalar_select %p435, %s434, 1
        %s437 = smul.addr %s436, 8
        %s438 = scalar_lea.vmem %s0, %s437
        %p439 = pneg %p56
        %p440 = pneg %p53
        %s441 = smul.u32 2, %s27
        %p442 = scmp.lt.s32.totalorder %s441, 1
        %s443 = scalar_select %p442, %s441, 1
        %s444 = smul.addr %s443, 8
        %s445 = scalar_lea.vmem %s1, %s444
        %p446 = pneg %p82
        %p447 = pneg %p79
        %p448 = pneg %p103
        %p449 = pneg %p100
        %p450 = pneg %p124
        %p451 = pneg %p121
        %p452 = scmp.lt.s32.totalorder %s28, 1
        %s453 = scalar_select %p452, %s28, 1
        %s454 = smul.addr %s453, 48
        %s455 = smul.addr %s454, 8
        %s456 = scalar_lea.vmem %s4, %s455
        %p457 = pneg %p150
        %p458 = pneg %p147
        %p459 = scmp.lt.s32.totalorder %s28, 1
        %s460 = scalar_select %p459, %s28, 1
        %s461 = smul.addr %s460, 12
        %s462 = scalar_lea.vmem %s5, %s461
        %p463 = pneg %p176
        %p464 = pneg %p173
        %p465 = scmp.lt.s32.totalorder %s28, 1
        %s466 = scalar_select %p465, %s28, 1
        %s467 = smul.addr %s466, 4
        %s468 = smul.addr %s467, 8
        %s469 = scalar_lea.vmem %s6, %s468
        %p470 = pneg %p202
        %p471 = pneg %p199
        %p472 = scmp.lt.s32.totalorder %s28, 1
        %s473 = scalar_select %p472, %s28, 1
        %s474 = scalar_lea.vmem %s7, %s473
        %p475 = pneg %p228
        %p476 = pneg %p225
        %p477 = scmp.lt.s32.totalorder %s28, 1
        %s478 = scalar_select %p477, %s28, 1
        %s479 = smul.addr %s478, 2
        %s480 = scalar_lea.vmem %s8, %s479
        %p481 = pneg %p254
        %p482 = pneg %p251
        %p483 = scmp.lt.s32.totalorder %s28, 1
        %s484 = scalar_select %p483, %s28, 1
        %s485 = smul.addr %s484, 8
        %s486 = smul.addr %s485, 8
        %s487 = scalar_lea.vmem %s9, %s486
        %p488 = pneg %p280
        %p489 = pneg %p277
        %p490 = scmp.lt.s32.totalorder %s28, 1
        %s491 = scalar_select %p490, %s28, 1
        %s492 = smul.addr %s491, 6
        %s493 = smul.addr %s492, 8
        %s494 = scalar_lea.vmem %s10, %s493
        %p495 = pneg %p306
        %p496 = pneg %p303
        %p497 = pneg %p332
        %p498 = pneg %p329
        %s499 = smul.u32 2, %s27
        %p500 = scmp.lt.s32.totalorder %s499, 1
        %s501 = scalar_select %p500, %s499, 1
        %s502 = smul.addr %s501, 8
        %s503 = scalar_lea.vmem %s0, %s502
        %s504 = smul.u32 2, %s27
        %s505 = smul.u32 2, %s27
        %p506 = scmp.lt.s32.totalorder %s505, 1
        %s507 = scalar_select %p506, %s505, 1
        %s508 = smul.addr %s507, 8
        %s509 = scalar_lea.vmem %s1, %s508
        %s510 = smul.u32 2, %s27
        %p511 = scmp.lt.s32.totalorder %s28, 1
        %s512 = scalar_select %p511, %s28, 1
        %s513 = smul.addr %s512, 48
        %s514 = smul.addr %s513, 8
        %s515 = scalar_lea.vmem %s4, %s514
        %p516 = scmp.lt.s32.totalorder %s28, 1
        %s517 = scalar_select %p516, %s28, 1
        %s518 = smul.addr %s517, 12
        %s519 = scalar_lea.vmem %s5, %s518
        %p520 = scmp.lt.s32.totalorder %s28, 1
        %s521 = scalar_select %p520, %s28, 1
        %s522 = smul.addr %s521, 4
        %s523 = smul.addr %s522, 8
        %s524 = scalar_lea.vmem %s6, %s523
        %p525 = scmp.lt.s32.totalorder %s28, 1
        %s526 = scalar_select %p525, %s28, 1
        %s527 = scalar_lea.vmem %s7, %s526
        %p528 = scmp.lt.s32.totalorder %s28, 1
        %s529 = scalar_select %p528, %s28, 1
        %s530 = smul.addr %s529, 2
        %s531 = scalar_lea.vmem %s8, %s530
        %p532 = scmp.lt.s32.totalorder %s28, 1
        %s533 = scalar_select %p532, %s28, 1
        %s534 = smul.addr %s533, 8
        %s535 = smul.addr %s534, 8
        %s536 = scalar_lea.vmem %s9, %s535
        %p537 = scmp.lt.s32.totalorder %s28, 1
        %s538 = scalar_select %p537, %s28, 1
        %s539 = smul.addr %s538, 6
        %s540 = smul.addr %s539, 8
        %s541 = scalar_lea.vmem %s10, %s540
        %s542 = smul.u32 2, %s27
        %p543 = scmp.eq.s32.totalorder %s28, 0
        // Predicated region
        $region65: #{tpu_custom_call.1} parent=63 // pred_check
          %p544 = pneg %p543
        $region66: #{tpu_custom_call.1} parent=63 // pred_check_branch
          %546 = sbr.rel (%p544) target = $region68
        $region67: #{tpu_custom_call.1} parent=63 // pred_region
          %v547 = vld [vmem:[%s503] sm:$0xff]
          %v548 = vld [vmem:[%s503 + $0x8] sm:$0xff]
          %vm549 = vcmask 261120
          %550 = vst.msk [vmem:[#allocation2] sm:$0xff] %vm549, %v547
          %551 = vst.msk [vmem:[#allocation2 + $0x8] sm:$0xff] %vm549, %v548
        $region68: #{tpu_custom_call.1} parent=63 // pred_fallthru
          _
        %v552 = vld [vmem:[#allocation2] sm:$0xff]
        %v553 = vld [vmem:[#allocation2 + $0x8] sm:$0xff]
        %v554 = vld [vmem:[%s509] sm:$0xff]
        %v555 = vld [vmem:[%s509 + $0x8] sm:$0xff]
        %vm556 = vcmask 261120
        %v557 = vsel %vm556, %v552, 0.0
        %558 = vadd.xlane.f32.xlu0 %v557
        %v559 = vpop.xlane.xlu0 %558
        %v560 = vsel %vm556, %v553, 0.0
        %561 = vadd.xlane.f32.xlu0 %v560
        %v562 = vpop.xlane.xlu0 %561
        %v563 = vrcp.pop 32.0
        %v564 = vmul.f32 %v559, %v563
        %v565 = vmul.f32 %v562, %v563
        %v566 = vsub.f32 %v552, %v564
        %v567 = vsub.f32 %v553, %v565
        %v568 = vmul.f32 %v566, %v566
        %v569 = vmul.f32 %v567, %v567
        %v570 = vsel %vm556, %v568, 0.0
        %571 = vadd.xlane.f32.xlu0 %v570
        %v572 = vpop.xlane.xlu0 %571
        %v573 = vsel %vm556, %v569, 0.0
        %574 = vadd.xlane.f32.xlu0 %v573
        %v575 = vpop.xlane.xlu0 %574
        %v576 = vmul.f32 %v572, %v563
        %v577 = vmul.f32 %v575, %v563
        %v578 = vadd.f32 %v576, 1e-05
        %v579 = vadd.f32 %v577, 1e-05
        %v580 = vrsqrt.pop %v578
        %v581 = vrsqrt.pop %v579
        %v582 = vmul.f32 %v566, %v580
        %v583 = vmul.f32 %v567, %v581
        %v584 = vld [vmem:[%s2] sm:$0xff]
        %v585 = vld [vmem:[%s3] sm:$0xff]
        %v586 = vld [vmem:[%s515] sm:$0xff]
        %v587 = vld [vmem:[%s515 + $0x8] sm:$0xff]
        %v588 = vld [vmem:[%s515 + $0x10] sm:$0xff]
        %v589 = vld [vmem:[%s515 + $0x18] sm:$0xff]
        %s590 = scalar_lea.vmem %s515, 128
        %v591 = vld [vmem:[%s590] sm:$0xff]
        %v592 = vld [vmem:[%s590 + $0x8] sm:$0xff]
        %v593 = vld [vmem:[%s590 + $0x10] sm:$0xff]
        %v594 = vld [vmem:[%s590 + $0x18] sm:$0xff]
        %s595 = scalar_lea.vmem %s515, 256
        %v596 = vld [vmem:[%s595] sm:$0xff]
        %v597 = vld [vmem:[%s595 + $0x8] sm:$0xff]
        %v598 = vld [vmem:[%s595 + $0x10] sm:$0xff]
        %v599 = vld [vmem:[%s595 + $0x18] sm:$0xff]
        %v600 = vld [vmem:[%s519] sm:$0x1]
        %s601 = scalar_lea.vmem %s519, 4
        %v602 = vld [vmem:[%s601] sm:$0x1]
        %s603 = scalar_lea.vmem %s519, 8
        %v604 = vld [vmem:[%s603] sm:$0x1]
        %v606 = vlaneseq
        %v607 = vshrl.u32 %v606, 7
        %v608 = vsub.s32 0, %v607
        %v609 = vrot.slane %v600, %v608
        %v612 = vsel %vm556, %v582, 0
        %v615 = vsel %vm556, %v583, 0
        %617 = vmatprep.subr.mxu0 0.0
        %618 = vmatpush1.msra.mxu0 0.0
        %619 = vmatprep.subr.mxu0 0.0
        %620 = vmatpush1.msra.mxu0 0.0
        %621 = vmatprep.subr.mxu0 0.0
        %622 = vmatpush1.msra.mxu0 0.0
        %623 = vmatprep.subr.mxu0 0.0
        %624 = vmatpush1.msra.mxu0 0.0
        %625 = vmatprep.subr.mxu0 0.0
        %626 = vmatpush1.msra.mxu0 0.0
        %627 = vmatprep.subr.mxu0 0.0
        %628 = vmatpush1.msra.mxu0 0.0
        %629 = vmatprep.subr.mxu0 0.0
        %630 = vmatpush1.msra.mxu0 0.0
        %631 = vmatprep.subr.mxu0 0.0
        %632 = vmatpush1.msra.mxu0 0.0
        %633 = vmatprep.subr.mxu0 0.0
        %634 = vmatpush1.msra.mxu0 0.0
        %635 = vmatprep.subr.mxu0 0.0
        %636 = vmatpush1.msra.mxu0 0.0
        %637 = vmatprep.subr.mxu0 0.0
        %638 = vmatpush1.msra.mxu0 0.0
        %639 = vmatprep.subr.mxu0 0.0
        %640 = vmatpush1.msra.mxu0 0.0
        %641 = vmatprep.subr.mxu0 0.0
        %642 = vmatpush1.msra.mxu0 %v589
        %643 = vmatprep.subr.mxu0 0.0
        %644 = vmatpush1.msra.mxu0 %v588
        %645 = vmatprep.subr.mxu0 0.0
        %646 = vmatpush1.msra.mxu0 %v587
        %647 = vmatprep.subr.mxu0 0.0
        %648 = vmatpush1.msra.mxu0 %v586
        %649 = vmatprep.subr.mxu0 0.0
        %650 = vmatpush2.msra.mxu0 0.0
        %651 = vmatprep.subr.mxu0 0.0
        %652 = vmatpush2.msra.mxu0 0.0
        %653 = vmatprep.subr.mxu0 0.0
        %654 = vmatpush2.msra.mxu0 0.0
        %655 = vmatprep.subr.mxu0 0.0
        %656 = vmatpush2.msra.mxu0 0.0
        %657 = vmatprep.subr.mxu0 0.0
        %658 = vmatpush2.msra.mxu0 0.0
        %659 = vmatprep.subr.mxu0 0.0
        %660 = vmatpush2.msra.mxu0 0.0
        %661 = vmatprep.subr.mxu0 0.0
        %662 = vmatpush2.msra.mxu0 0.0
        %663 = vmatprep.subr.mxu0 0.0
        %664 = vmatpush2.msra.mxu0 0.0
        %665 = vmatprep.subr.mxu0 0.0
        %666 = vmatpush2.msra.mxu0 0.0
        %667 = vmatprep.subr.mxu0 0.0
        %668 = vmatpush2.msra.mxu0 0.0
        %669 = vmatprep.subr.mxu0 0.0
        %670 = vmatpush2.msra.mxu0 0.0
        %671 = vmatprep.subr.mxu0 0.0
        %672 = vmatpush2.msra.mxu0 0.0
        %673 = vmatprep.subr.mxu0 0.0
        %674 = vmatpush2.msra.mxu0 0.0
        %675 = vmatprep.subr.mxu0 0.0
        %676 = vmatpush2.msra.mxu0 0.0
        %677 = vmatprep.subr.mxu0 0.0
        %678 = vmatpush2.msra.mxu0 0.0
        %679 = vmatprep.subr.mxu0 0.0
        %680 = vmatpush2.msra.mxu0 0.0
        %681 = vmatprep.mubr.f32.mxu0 0.0
        %682 = vmatmul.mubr.f32.gmra.mxu0 %v612
        %v683 = vpop.f32.mrf.mxu0
        %v684 = vadd.f32 %v609, %v683
        %v685 = vpop.f32.mrf.mxu0
        %686 = vmatprep.mubr.f32.mxu0 0.0
        %687 = vmatmul.mubr.f32.gmra.mxu0 %v615
        %v688 = vpop.f32.mrf.mxu0
        %v689 = vadd.f32 %v609, %v688
        %v690 = vpop.f32.mrf.mxu0
        %691 = vdwg.mxu0
        %v693 = vlaneseq
        %v694 = vshrl.u32 %v693, 7
        %v695 = vsub.s32 0, %v694
        %v696 = vrot.slane %v602, %v695
        %698 = vmatprep.subr.mxu0 0.0
        %699 = vmatpush1.msra.mxu0 0.0
        %700 = vmatprep.subr.mxu0 0.0
        %701 = vmatpush1.msra.mxu0 0.0
        %702 = vmatprep.subr.mxu0 0.0
        %703 = vmatpush1.msra.mxu0 0.0
        %704 = vmatprep.subr.mxu0 0.0
        %705 = vmatpush1.msra.mxu0 0.0
        %706 = vmatprep.subr.mxu0 0.0
        %707 = vmatpush1.msra.mxu0 0.0
        %708 = vmatprep.subr.mxu0 0.0
        %709 = vmatpush1.msra.mxu0 0.0
        %710 = vmatprep.subr.mxu0 0.0
        %711 = vmatpush1.msra.mxu0 0.0
        %712 = vmatprep.subr.mxu0 0.0
        %713 = vmatpush1.msra.mxu0 0.0
        %714 = vmatprep.subr.mxu0 0.0
        %715 = vmatpush1.msra.mxu0 0.0
        %716 = vmatprep.subr.mxu0 0.0
        %717 = vmatpush1.msra.mxu0 0.0
        %718 = vmatprep.subr.mxu0 0.0
        %719 = vmatpush1.msra.mxu0 0.0
        %720 = vmatprep.subr.mxu0 0.0
        %721 = vmatpush1.msra.mxu0 0.0
        %722 = vmatprep.subr.mxu0 0.0
        %723 = vmatpush1.msra.mxu0 %v594
        %724 = vmatprep.subr.mxu0 0.0
        %725 = vmatpush1.msra.mxu0 %v593
        %726 = vmatprep.subr.mxu0 0.0
        %727 = vmatpush1.msra.mxu0 %v592
        %728 = vmatprep.subr.mxu0 0.0
        %729 = vmatpush1.msra.mxu0 %v591
        %730 = vmatprep.subr.mxu0 0.0
        %731 = vmatpush2.msra.mxu0 0.0
        %732 = vmatprep.subr.mxu0 0.0
        %733 = vmatpush2.msra.mxu0 0.0
        %734 = vmatprep.subr.mxu0 0.0
        %735 = vmatpush2.msra.mxu0 0.0
        %736 = vmatprep.subr.mxu0 0.0
        %737 = vmatpush2.msra.mxu0 0.0
        %738 = vmatprep.subr.mxu0 0.0
        %739 = vmatpush2.msra.mxu0 0.0
        %740 = vmatprep.subr.mxu0 0.0
        %741 = vmatpush2.msra.mxu0 0.0
        %742 = vmatprep.subr.mxu0 0.0
        %743 = vmatpush2.msra.mxu0 0.0
        %744 = vmatprep.subr.mxu0 0.0
        %745 = vmatpush2.msra.mxu0 0.0
        %746 = vmatprep.subr.mxu0 0.0
        %747 = vmatpush2.msra.mxu0 0.0
        %748 = vmatprep.subr.mxu0 0.0
        %749 = vmatpush2.msra.mxu0 0.0
        %750 = vmatprep.subr.mxu0 0.0
        %751 = vmatpush2.msra.mxu0 0.0
        %752 = vmatprep.subr.mxu0 0.0
        %753 = vmatpush2.msra.mxu0 0.0
        %754 = vmatprep.subr.mxu0 0.0
        %755 = vmatpush2.msra.mxu0 0.0
        %756 = vmatprep.subr.mxu0 0.0
        %757 = vmatpush2.msra.mxu0 0.0
        %758 = vmatprep.subr.mxu0 0.0
        %759 = vmatpush2.msra.mxu0 0.0
        %760 = vmatprep.subr.mxu0 0.0
        %761 = vmatpush2.msra.mxu0 0.0
        %762 = vmatprep.mubr.f32.mxu0 0.0
        %763 = vmatmul.mubr.f32.gmra.mxu0 %v612
        %v764 = vpop.f32.mrf.mxu0
        %v765 = vadd.f32 %v696, %v764
        %v766 = vpop.f32.mrf.mxu0
        %767 = vmatprep.mubr.f32.mxu0 0.0
        %768 = vmatmul.mubr.f32.gmra.mxu0 %v615
        %v769 = vpop.f32.mrf.mxu0
        %v770 = vadd.f32 %v696, %v769
        %v771 = vpop.f32.mrf.mxu0
        %772 = vdwg.mxu0
        %v774 = vlaneseq
        %v775 = vshrl.u32 %v774, 7
        %v776 = vsub.s32 0, %v775
        %v777 = vrot.slane %v604, %v776
        %779 = vmatprep.subr.mxu0 0.0
        %780 = vmatpush1.msra.mxu0 0.0
        %781 = vmatprep.subr.mxu0 0.0
        %782 = vmatpush1.msra.mxu0 0.0
        %783 = vmatprep.subr.mxu0 0.0
        %784 = vmatpush1.msra.mxu0 0.0
        %785 = vmatprep.subr.mxu0 0.0
        %786 = vmatpush1.msra.mxu0 0.0
        %787 = vmatprep.subr.mxu0 0.0
        %788 = vmatpush1.msra.mxu0 0.0
        %789 = vmatprep.subr.mxu0 0.0
        %790 = vmatpush1.msra.mxu0 0.0
        %791 = vmatprep.subr.mxu0 0.0
        %792 = vmatpush1.msra.mxu0 0.0
        %793 = vmatprep.subr.mxu0 0.0
        %794 = vmatpush1.msra.mxu0 0.0
        %795 = vmatprep.subr.mxu0 0.0
        %796 = vmatpush1.msra.mxu0 0.0
        %797 = vmatprep.subr.mxu0 0.0
        %798 = vmatpush1.msra.mxu0 0.0
        %799 = vmatprep.subr.mxu0 0.0
        %800 = vmatpush1.msra.mxu0 0.0
        %801 = vmatprep.subr.mxu0 0.0
        %802 = vmatpush1.msra.mxu0 0.0
        %803 = vmatprep.subr.mxu0 0.0
        %804 = vmatpush1.msra.mxu0 %v599
        %805 = vmatprep.subr.mxu0 0.0
        %806 = vmatpush1.msra.mxu0 %v598
        %807 = vmatprep.subr.mxu0 0.0
        %808 = vmatpush1.msra.mxu0 %v597
        %809 = vmatprep.subr.mxu0 0.0
        %810 = vmatpush1.msra.mxu0 %v596
        %811 = vmatprep.subr.mxu0 0.0
        %812 = vmatpush2.msra.mxu0 0.0
        %813 = vmatprep.subr.mxu0 0.0
        %814 = vmatpush2.msra.mxu0 0.0
        %815 = vmatprep.subr.mxu0 0.0
        %816 = vmatpush2.msra.mxu0 0.0
        %817 = vmatprep.subr.mxu0 0.0
        %818 = vmatpush2.msra.mxu0 0.0
        %819 = vmatprep.subr.mxu0 0.0
        %820 = vmatpush2.msra.mxu0 0.0
        %821 = vmatprep.subr.mxu0 0.0
        %822 = vmatpush2.msra.mxu0 0.0
        %823 = vmatprep.subr.mxu0 0.0
        %824 = vmatpush2.msra.mxu0 0.0
        %825 = vmatprep.subr.mxu0 0.0
        %826 = vmatpush2.msra.mxu0 0.0
        %827 = vmatprep.subr.mxu0 0.0
        %828 = vmatpush2.msra.mxu0 0.0
        %829 = vmatprep.subr.mxu0 0.0
        %830 = vmatpush2.msra.mxu0 0.0
        %831 = vmatprep.subr.mxu0 0.0
        %832 = vmatpush2.msra.mxu0 0.0
        %833 = vmatprep.subr.mxu0 0.0
        %834 = vmatpush2.msra.mxu0 0.0
        %835 = vmatprep.subr.mxu0 0.0
        %836 = vmatpush2.msra.mxu0 0.0
        %837 = vmatprep.subr.mxu0 0.0
        %838 = vmatpush2.msra.mxu0 0.0
        %839 = vmatprep.subr.mxu0 0.0
        %840 = vmatpush2.msra.mxu0 0.0
        %841 = vmatprep.subr.mxu0 0.0
        %842 = vmatpush2.msra.mxu0 0.0
        %843 = vmatprep.mubr.f32.mxu0 0.0
        %844 = vmatmul.mubr.f32.gmra.mxu0 %v612
        %v845 = vpop.f32.mrf.mxu0
        %v846 = vadd.f32 %v777, %v845
        %v847 = vpop.f32.mrf.mxu0
        %848 = vmatprep.mubr.f32.mxu0 0.0
        %849 = vmatmul.mubr.f32.gmra.mxu0 %v615
        %v850 = vpop.f32.mrf.mxu0
        %v851 = vadd.f32 %v777, %v850
        %v852 = vpop.f32.mrf.mxu0
        %853 = vdwg.mxu0
        %v855 = vsel %vm556, %v554, 0
        %v858 = vsel %vm556, %v555, 0
        %860 = vmatprep.subr.mxu0 0.0
        %861 = vmatpush1.msra.mxu0 0.0
        %862 = vmatprep.subr.mxu0 0.0
        %863 = vmatpush1.msra.mxu0 0.0
        %864 = vmatprep.subr.mxu0 0.0
        %865 = vmatpush1.msra.mxu0 0.0
        %866 = vmatprep.subr.mxu0 0.0
        %867 = vmatpush1.msra.mxu0 0.0
        %868 = vmatprep.subr.mxu0 0.0
        %869 = vmatpush1.msra.mxu0 0.0
        %870 = vmatprep.subr.mxu0 0.0
        %871 = vmatpush1.msra.mxu0 0.0
        %872 = vmatprep.subr.mxu0 0.0
        %873 = vmatpush1.msra.mxu0 0.0
        %874 = vmatprep.subr.mxu0 0.0
        %875 = vmatpush1.msra.mxu0 0.0
        %876 = vmatprep.subr.mxu0 0.0
        %877 = vmatpush1.msra.mxu0 0.0
        %878 = vmatprep.subr.mxu0 0.0
        %879 = vmatpush1.msra.mxu0 0.0
        %880 = vmatprep.subr.mxu0 0.0
        %881 = vmatpush1.msra.mxu0 0.0
        %882 = vmatprep.subr.mxu0 0.0
        %883 = vmatpush1.msra.mxu0 0.0
        %884 = vmatprep.subr.mxu0 0.0
        %885 = vmatpush1.msra.mxu0 %v594
        %886 = vmatprep.subr.mxu0 0.0
        %887 = vmatpush1.msra.mxu0 %v593
        %888 = vmatprep.subr.mxu0 0.0
        %889 = vmatpush1.msra.mxu0 %v592
        %890 = vmatprep.subr.mxu0 0.0
        %891 = vmatpush1.msra.mxu0 %v591
        %892 = vmatprep.subr.mxu0 0.0
        %893 = vmatpush2.msra.mxu0 0.0
        %894 = vmatprep.subr.mxu0 0.0
        %895 = vmatpush2.msra.mxu0 0.0
        %896 = vmatprep.subr.mxu0 0.0
        %897 = vmatpush2.msra.mxu0 0.0
        %898 = vmatprep.subr.mxu0 0.0
        %899 = vmatpush2.msra.mxu0 0.0
        %900 = vmatprep.subr.mxu0 0.0
        %901 = vmatpush2.msra.mxu0 0.0
        %902 = vmatprep.subr.mxu0 0.0
        %903 = vmatpush2.msra.mxu0 0.0
        %904 = vmatprep.subr.mxu0 0.0
        %905 = vmatpush2.msra.mxu0 0.0
        %906 = vmatprep.subr.mxu0 0.0
        %907 = vmatpush2.msra.mxu0 0.0
        %908 = vmatprep.subr.mxu0 0.0
        %909 = vmatpush2.msra.mxu0 0.0
        %910 = vmatprep.subr.mxu0 0.0
        %911 = vmatpush2.msra.mxu0 0.0
        %912 = vmatprep.subr.mxu0 0.0
        %913 = vmatpush2.msra.mxu0 0.0
        %914 = vmatprep.subr.mxu0 0.0
        %915 = vmatpush2.msra.mxu0 0.0
        %916 = vmatprep.subr.mxu0 0.0
        %917 = vmatpush2.msra.mxu0 0.0
        %918 = vmatprep.subr.mxu0 0.0
        %919 = vmatpush2.msra.mxu0 0.0
        %920 = vmatprep.subr.mxu0 0.0
        %921 = vmatpush2.msra.mxu0 0.0
        %922 = vmatprep.subr.mxu0 0.0
        %923 = vmatpush2.msra.mxu0 0.0
        %924 = vmatprep.mubr.f32.mxu0 0.0
        %925 = vmatmul.mubr.f32.gmra.mxu0 %v855
        %v926 = vpop.f32.mrf.mxu0
        %v927 = vadd.f32 %v696, %v926
        %v928 = vpop.f32.mrf.mxu0
        %929 = vmatprep.mubr.f32.mxu0 0.0
        %930 = vmatmul.mubr.f32.gmra.mxu0 %v858
        %v931 = vpop.f32.mrf.mxu0
        %v932 = vadd.f32 %v696, %v931
        %v933 = vpop.f32.mrf.mxu0
        %934 = vdwg.mxu0
        %935 = vmatprep.subr.mxu0 0.0
        %936 = vmatpush1.msra.mxu0 0.0
        %937 = vmatprep.subr.mxu0 0.0
        %938 = vmatpush1.msra.mxu0 0.0
        %939 = vmatprep.subr.mxu0 0.0
        %940 = vmatpush1.msra.mxu0 0.0
        %941 = vmatprep.subr.mxu0 0.0
        %942 = vmatpush1.msra.mxu0 0.0
        %943 = vmatprep.subr.mxu0 0.0
        %944 = vmatpush1.msra.mxu0 0.0
        %945 = vmatprep.subr.mxu0 0.0
        %946 = vmatpush1.msra.mxu0 0.0
        %947 = vmatprep.subr.mxu0 0.0
        %948 = vmatpush1.msra.mxu0 0.0
        %949 = vmatprep.subr.mxu0 0.0
        %950 = vmatpush1.msra.mxu0 0.0
        %951 = vmatprep.subr.mxu0 0.0
        %952 = vmatpush1.msra.mxu0 0.0
        %953 = vmatprep.subr.mxu0 0.0
        %954 = vmatpush1.msra.mxu0 0.0
        %955 = vmatprep.subr.mxu0 0.0
        %956 = vmatpush1.msra.mxu0 0.0
        %957 = vmatprep.subr.mxu0 0.0
        %958 = vmatpush1.msra.mxu0 0.0
        %959 = vmatprep.subr.mxu0 0.0
        %960 = vmatpush1.msra.mxu0 %v599
        %961 = vmatprep.subr.mxu0 0.0
        %962 = vmatpush1.msra.mxu0 %v598
        %963 = vmatprep.subr.mxu0 0.0
        %964 = vmatpush1.msra.mxu0 %v597
        %965 = vmatprep.subr.mxu0 0.0
        %966 = vmatpush1.msra.mxu0 %v596
        %967 = vmatprep.subr.mxu0 0.0
        %968 = vmatpush2.msra.mxu0 0.0
        %969 = vmatprep.subr.mxu0 0.0
        %970 = vmatpush2.msra.mxu0 0.0
        %971 = vmatprep.subr.mxu0 0.0
        %972 = vmatpush2.msra.mxu0 0.0
        %973 = vmatprep.subr.mxu0 0.0
        %974 = vmatpush2.msra.mxu0 0.0
        %975 = vmatprep.subr.mxu0 0.0
        %976 = vmatpush2.msra.mxu0 0.0
        %977 = vmatprep.subr.mxu0 0.0
        %978 = vmatpush2.msra.mxu0 0.0
        %979 = vmatprep.subr.mxu0 0.0
        %980 = vmatpush2.msra.mxu0 0.0
        %981 = vmatprep.subr.mxu0 0.0
        %982 = vmatpush2.msra.mxu0 0.0
        %983 = vmatprep.subr.mxu0 0.0
        %984 = vmatpush2.msra.mxu0 0.0
        %985 = vmatprep.subr.mxu0 0.0
        %986 = vmatpush2.msra.mxu0 0.0
        %987 = vmatprep.subr.mxu0 0.0
        %988 = vmatpush2.msra.mxu0 0.0
        %989 = vmatprep.subr.mxu0 0.0
        %990 = vmatpush2.msra.mxu0 0.0
        %991 = vmatprep.subr.mxu0 0.0
        %992 = vmatpush2.msra.mxu0 0.0
        %993 = vmatprep.subr.mxu0 0.0
        %994 = vmatpush2.msra.mxu0 0.0
        %995 = vmatprep.subr.mxu0 0.0
        %996 = vmatpush2.msra.mxu0 0.0
        %997 = vmatprep.subr.mxu0 0.0
        %998 = vmatpush2.msra.mxu0 0.0
        %999 = vmatprep.mubr.f32.mxu0 0.0
        %1000 = vmatmul.mubr.f32.gmra.mxu0 %v855
        %v1001 = vpop.f32.mrf.mxu0
        %v1002 = vadd.f32 %v777, %v1001
        %v1003 = vpop.f32.mrf.mxu0
        %1004 = vmatprep.mubr.f32.mxu0 0.0
        %1005 = vmatmul.mubr.f32.gmra.mxu0 %v858
        %v1006 = vpop.f32.mrf.mxu0
        %v1007 = vadd.f32 %v777, %v1006
        %v1008 = vpop.f32.mrf.mxu0
        %1009 = vdwg.mxu0
        %vm1010 = vcmask 64512
        %v1012 = vsel %vm1010, %v684, 0
        %v1015 = vsel %vm1010, %v927, 0
        %1017 = vmatprep.subr.mxu0 0.0
        %1018 = vmatpush1.xpose.msra.mxu0 0.0
        %1019 = vmatprep.subr.mxu0 0.0
        %1020 = vmatpush1.xpose.msra.mxu0 0.0
        %1021 = vmatprep.subr.mxu0 0.0
        %1022 = vmatpush1.xpose.msra.mxu0 0.0
        %1023 = vmatprep.subr.mxu0 0.0
        %1024 = vmatpush1.xpose.msra.mxu0 0.0
        %1025 = vmatprep.subr.mxu0 0.0
        %1026 = vmatpush1.xpose.msra.mxu0 0.0
        %1027 = vmatprep.subr.mxu0 0.0
        %1028 = vmatpush1.xpose.msra.mxu0 0.0
        %1029 = vmatprep.subr.mxu0 0.0
        %1030 = vmatpush1.xpose.msra.mxu0 0.0
        %1031 = vmatprep.subr.mxu0 0.0
        %1032 = vmatpush1.xpose.msra.mxu0 0.0
        %1033 = vmatprep.subr.mxu0 0.0
        %1034 = vmatpush1.xpose.msra.mxu0 0.0
        %1035 = vmatprep.subr.mxu0 0.0
        %1036 = vmatpush1.xpose.msra.mxu0 0.0
        %1037 = vmatprep.subr.mxu0 0.0
        %1038 = vmatpush1.xpose.msra.mxu0 0.0
        %1039 = vmatprep.subr.mxu0 0.0
        %1040 = vmatpush1.xpose.msra.mxu0 0.0
        %1041 = vmatprep.subr.mxu0 0.0
        %1042 = vmatpush1.xpose.msra.mxu0 0.0
        %1043 = vmatprep.subr.mxu0 0.0
        %1044 = vmatpush1.xpose.msra.mxu0 0.0
        %1045 = vmatprep.subr.mxu0 0.0
        %1046 = vmatpush1.xpose.msra.mxu0 0.0
        %1047 = vmatprep.subr.mxu0 0.0
        %1048 = vmatpush1.xpose.msra.mxu0 %v1015
        %1049 = vmatprep.subr.mxu0 0.0
        %1050 = vmatpush2.xpose.msra.mxu0 0.0
        %1051 = vmatprep.subr.mxu0 0.0
        %1052 = vmatpush2.xpose.msra.mxu0 0.0
        %1053 = vmatprep.subr.mxu0 0.0
        %1054 = vmatpush2.xpose.msra.mxu0 0.0
        %1055 = vmatprep.subr.mxu0 0.0
        %1056 = vmatpush2.xpose.msra.mxu0 0.0
        %1057 = vmatprep.subr.mxu0 0.0
        %1058 = vmatpush2.xpose.msra.mxu0 0.0
        %1059 = vmatprep.subr.mxu0 0.0
        %1060 = vmatpush2.xpose.msra.mxu0 0.0
        %1061 = vmatprep.subr.mxu0 0.0
        %1062 = vmatpush2.xpose.msra.mxu0 0.0
        %1063 = vmatprep.subr.mxu0 0.0
        %1064 = vmatpush2.xpose.msra.mxu0 0.0
        %1065 = vmatprep.subr.mxu0 0.0
        %1066 = vmatpush2.xpose.msra.mxu0 0.0
        %1067 = vmatprep.subr.mxu0 0.0
        %1068 = vmatpush2.xpose.msra.mxu0 0.0
        %1069 = vmatprep.subr.mxu0 0.0
        %1070 = vmatpush2.xpose.msra.mxu0 0.0
        %1071 = vmatprep.subr.mxu0 0.0
        %1072 = vmatpush2.xpose.msra.mxu0 0.0
        %1073 = vmatprep.subr.mxu0 0.0
        %1074 = vmatpush2.xpose.msra.mxu0 0.0
        %1075 = vmatprep.subr.mxu0 0.0
        %1076 = vmatpush2.xpose.msra.mxu0 0.0
        %1077 = vmatprep.subr.mxu0 0.0
        %1078 = vmatpush2.xpose.msra.mxu0 0.0
        %1079 = vmatprep.subr.mxu0 0.0
        %1080 = vmatpush2.xpose.msra.mxu0 0.0
        %1081 = vmatprep.mubr.f32.mxu0 0.0
        %1082 = vmatmul.mubr.f32.gmra.mxu0 %v1012
        %v1083 = vpop.f32.mrf.mxu0
        %v1084 = vadd.f32 0.0, %v1083
        %v1085 = vpop.f32.mrf.mxu0
        %1086 = vdwg.mxu0
        %v1088 = vsel %vm1010, %v689, 0
        %v1091 = vsel %vm1010, %v932, 0
        %1093 = vmatprep.subr.mxu0 0.0
        %1094 = vmatpush1.xpose.msra.mxu0 0.0
        %1095 = vmatprep.subr.mxu0 0.0
        %1096 = vmatpush1.xpose.msra.mxu0 0.0
        %1097 = vmatprep.subr.mxu0 0.0
        %1098 = vmatpush1.xpose.msra.mxu0 0.0
        %1099 = vmatprep.subr.mxu0 0.0
        %1100 = vmatpush1.xpose.msra.mxu0 0.0
        %1101 = vmatprep.subr.mxu0 0.0
        %1102 = vmatpush1.xpose.msra.mxu0 0.0
        %1103 = vmatprep.subr.mxu0 0.0
        %1104 = vmatpush1.xpose.msra.mxu0 0.0
        %1105 = vmatprep.subr.mxu0 0.0
        %1106 = vmatpush1.xpose.msra.mxu0 0.0
        %1107 = vmatprep.subr.mxu0 0.0
        %1108 = vmatpush1.xpose.msra.mxu0 0.0
        %1109 = vmatprep.subr.mxu0 0.0
        %1110 = vmatpush1.xpose.msra.mxu0 0.0
        %1111 = vmatprep.subr.mxu0 0.0
        %1112 = vmatpush1.xpose.msra.mxu0 0.0
        %1113 = vmatprep.subr.mxu0 0.0
        %1114 = vmatpush1.xpose.msra.mxu0 0.0
        %1115 = vmatprep.subr.mxu0 0.0
        %1116 = vmatpush1.xpose.msra.mxu0 0.0
        %1117 = vmatprep.subr.mxu0 0.0
        %1118 = vmatpush1.xpose.msra.mxu0 0.0
        %1119 = vmatprep.subr.mxu0 0.0
        %1120 = vmatpush1.xpose.msra.mxu0 0.0
        %1121 = vmatprep.subr.mxu0 0.0
        %1122 = vmatpush1.xpose.msra.mxu0 0.0
        %1123 = vmatprep.subr.mxu0 0.0
        %1124 = vmatpush1.xpose.msra.mxu0 %v1091
        %1125 = vmatprep.subr.mxu0 0.0
        %1126 = vmatpush2.xpose.msra.mxu0 0.0
        %1127 = vmatprep.subr.mxu0 0.0
        %1128 = vmatpush2.xpose.msra.mxu0 0.0
        %1129 = vmatprep.subr.mxu0 0.0
        %1130 = vmatpush2.xpose.msra.mxu0 0.0
        %1131 = vmatprep.subr.mxu0 0.0
        %1132 = vmatpush2.xpose.msra.mxu0 0.0
        %1133 = vmatprep.subr.mxu0 0.0
        %1134 = vmatpush2.xpose.msra.mxu0 0.0
        %1135 = vmatprep.subr.mxu0 0.0
        %1136 = vmatpush2.xpose.msra.mxu0 0.0
        %1137 = vmatprep.subr.mxu0 0.0
        %1138 = vmatpush2.xpose.msra.mxu0 0.0
        %1139 = vmatprep.subr.mxu0 0.0
        %1140 = vmatpush2.xpose.msra.mxu0 0.0
        %1141 = vmatprep.subr.mxu0 0.0
        %1142 = vmatpush2.xpose.msra.mxu0 0.0
        %1143 = vmatprep.subr.mxu0 0.0
        %1144 = vmatpush2.xpose.msra.mxu0 0.0
        %1145 = vmatprep.subr.mxu0 0.0
        %1146 = vmatpush2.xpose.msra.mxu0 0.0
        %1147 = vmatprep.subr.mxu0 0.0
        %1148 = vmatpush2.xpose.msra.mxu0 0.0
        %1149 = vmatprep.subr.mxu0 0.0
        %1150 = vmatpush2.xpose.msra.mxu0 0.0
        %1151 = vmatprep.subr.mxu0 0.0
        %1152 = vmatpush2.xpose.msra.mxu0 0.0
        %1153 = vmatprep.subr.mxu0 0.0
        %1154 = vmatpush2.xpose.msra.mxu0 0.0
        %1155 = vmatprep.subr.mxu0 0.0
        %1156 = vmatpush2.xpose.msra.mxu0 0.0
        %1157 = vmatprep.mubr.f32.mxu0 0.0
        %1158 = vmatmul.mubr.f32.gmra.mxu0 %v1088
        %v1159 = vpop.f32.mrf.mxu0
        %v1160 = vadd.f32 0.0, %v1159
        %v1161 = vpop.f32.mrf.mxu0
        %1162 = vdwg.mxu0
        %v1163 = vmul.f32 %v1084, 0.35355338
        %v1164 = vmul.f32 %v1160, 0.35355338
        %v1165 = vadd.f32 %v1163, %v585
        %v1166 = vadd.f32 %v1164, %v585
        %v1168 = vsel %vm1010, %v765, 0
        %1170 = vmatprep.subr.mxu0 0.0
        %1171 = vmatpush1.xpose.msra.mxu0 0.0
        %1172 = vmatprep.subr.mxu0 0.0
        %1173 = vmatpush1.xpose.msra.mxu0 0.0
        %1174 = vmatprep.subr.mxu0 0.0
        %1175 = vmatpush1.xpose.msra.mxu0 0.0
        %1176 = vmatprep.subr.mxu0 0.0
        %1177 = vmatpush1.xpose.msra.mxu0 0.0
        %1178 = vmatprep.subr.mxu0 0.0
        %1179 = vmatpush1.xpose.msra.mxu0 0.0
        %1180 = vmatprep.subr.mxu0 0.0
        %1181 = vmatpush1.xpose.msra.mxu0 0.0
        %1182 = vmatprep.subr.mxu0 0.0
        %1183 = vmatpush1.xpose.msra.mxu0 0.0
        %1184 = vmatprep.subr.mxu0 0.0
        %1185 = vmatpush1.xpose.msra.mxu0 0.0
        %1186 = vmatprep.subr.mxu0 0.0
        %1187 = vmatpush1.xpose.msra.mxu0 0.0
        %1188 = vmatprep.subr.mxu0 0.0
        %1189 = vmatpush1.xpose.msra.mxu0 0.0
        %1190 = vmatprep.subr.mxu0 0.0
        %1191 = vmatpush1.xpose.msra.mxu0 0.0
        %1192 = vmatprep.subr.mxu0 0.0
        %1193 = vmatpush1.xpose.msra.mxu0 0.0
        %1194 = vmatprep.subr.mxu0 0.0
        %1195 = vmatpush1.xpose.msra.mxu0 0.0
        %1196 = vmatprep.subr.mxu0 0.0
        %1197 = vmatpush1.xpose.msra.mxu0 0.0
        %1198 = vmatprep.subr.mxu0 0.0
        %1199 = vmatpush1.xpose.msra.mxu0 0.0
        %1200 = vmatprep.subr.mxu0 0.0
        %1201 = vmatpush1.xpose.msra.mxu0 %v1168
        %1202 = vmatprep.subr.mxu0 0.0
        %1203 = vmatpush2.xpose.msra.mxu0 0.0
        %1204 = vmatprep.subr.mxu0 0.0
        %1205 = vmatpush2.xpose.msra.mxu0 0.0
        %1206 = vmatprep.subr.mxu0 0.0
        %1207 = vmatpush2.xpose.msra.mxu0 0.0
        %1208 = vmatprep.subr.mxu0 0.0
        %1209 = vmatpush2.xpose.msra.mxu0 0.0
        %1210 = vmatprep.subr.mxu0 0.0
        %1211 = vmatpush2.xpose.msra.mxu0 0.0
        %1212 = vmatprep.subr.mxu0 0.0
        %1213 = vmatpush2.xpose.msra.mxu0 0.0
        %1214 = vmatprep.subr.mxu0 0.0
        %1215 = vmatpush2.xpose.msra.mxu0 0.0
        %1216 = vmatprep.subr.mxu0 0.0
        %1217 = vmatpush2.xpose.msra.mxu0 0.0
        %1218 = vmatprep.subr.mxu0 0.0
        %1219 = vmatpush2.xpose.msra.mxu0 0.0
        %1220 = vmatprep.subr.mxu0 0.0
        %1221 = vmatpush2.xpose.msra.mxu0 0.0
        %1222 = vmatprep.subr.mxu0 0.0
        %1223 = vmatpush2.xpose.msra.mxu0 0.0
        %1224 = vmatprep.subr.mxu0 0.0
        %1225 = vmatpush2.xpose.msra.mxu0 0.0
        %1226 = vmatprep.subr.mxu0 0.0
        %1227 = vmatpush2.xpose.msra.mxu0 0.0
        %1228 = vmatprep.subr.mxu0 0.0
        %1229 = vmatpush2.xpose.msra.mxu0 0.0
        %1230 = vmatprep.subr.mxu0 0.0
        %1231 = vmatpush2.xpose.msra.mxu0 0.0
        %1232 = vmatprep.subr.mxu0 0.0
        %1233 = vmatpush2.xpose.msra.mxu0 0.0
        %1234 = vmatprep.mubr.f32.mxu0 0.0
        %1235 = vmatmul.mubr.f32.gmra.mxu0 %v1012
        %v1236 = vpop.f32.mrf.mxu0
        %v1237 = vadd.f32 0.0, %v1236
        %v1238 = vpop.f32.mrf.mxu0
        %1239 = vdwg.mxu0
        %v1241 = vsel %vm1010, %v770, 0
        %1243 = vmatprep.subr.mxu0 0.0
        %1244 = vmatpush1.xpose.msra.mxu0 0.0
        %1245 = vmatprep.subr.mxu0 0.0
        %1246 = vmatpush1.xpose.msra.mxu0 0.0
        %1247 = vmatprep.subr.mxu0 0.0
        %1248 = vmatpush1.xpose.msra.mxu0 0.0
        %1249 = vmatprep.subr.mxu0 0.0
        %1250 = vmatpush1.xpose.msra.mxu0 0.0
        %1251 = vmatprep.subr.mxu0 0.0
        %1252 = vmatpush1.xpose.msra.mxu0 0.0
        %1253 = vmatprep.subr.mxu0 0.0
        %1254 = vmatpush1.xpose.msra.mxu0 0.0
        %1255 = vmatprep.subr.mxu0 0.0
        %1256 = vmatpush1.xpose.msra.mxu0 0.0
        %1257 = vmatprep.subr.mxu0 0.0
        %1258 = vmatpush1.xpose.msra.mxu0 0.0
        %1259 = vmatprep.subr.mxu0 0.0
        %1260 = vmatpush1.xpose.msra.mxu0 0.0
        %1261 = vmatprep.subr.mxu0 0.0
        %1262 = vmatpush1.xpose.msra.mxu0 0.0
        %1263 = vmatprep.subr.mxu0 0.0
        %1264 = vmatpush1.xpose.msra.mxu0 0.0
        %1265 = vmatprep.subr.mxu0 0.0
        %1266 = vmatpush1.xpose.msra.mxu0 0.0
        %1267 = vmatprep.subr.mxu0 0.0
        %1268 = vmatpush1.xpose.msra.mxu0 0.0
        %1269 = vmatprep.subr.mxu0 0.0
        %1270 = vmatpush1.xpose.msra.mxu0 0.0
        %1271 = vmatprep.subr.mxu0 0.0
        %1272 = vmatpush1.xpose.msra.mxu0 0.0
        %1273 = vmatprep.subr.mxu0 0.0
        %1274 = vmatpush1.xpose.msra.mxu0 %v1241
        %1275 = vmatprep.subr.mxu0 0.0
        %1276 = vmatpush2.xpose.msra.mxu0 0.0
        %1277 = vmatprep.subr.mxu0 0.0
        %1278 = vmatpush2.xpose.msra.mxu0 0.0
        %1279 = vmatprep.subr.mxu0 0.0
        %1280 = vmatpush2.xpose.msra.mxu0 0.0
        %1281 = vmatprep.subr.mxu0 0.0
        %1282 = vmatpush2.xpose.msra.mxu0 0.0
        %1283 = vmatprep.subr.mxu0 0.0
        %1284 = vmatpush2.xpose.msra.mxu0 0.0
        %1285 = vmatprep.subr.mxu0 0.0
        %1286 = vmatpush2.xpose.msra.mxu0 0.0
        %1287 = vmatprep.subr.mxu0 0.0
        %1288 = vmatpush2.xpose.msra.mxu0 0.0
        %1289 = vmatprep.subr.mxu0 0.0
        %1290 = vmatpush2.xpose.msra.mxu0 0.0
        %1291 = vmatprep.subr.mxu0 0.0
        %1292 = vmatpush2.xpose.msra.mxu0 0.0
        %1293 = vmatprep.subr.mxu0 0.0
        %1294 = vmatpush2.xpose.msra.mxu0 0.0
        %1295 = vmatprep.subr.mxu0 0.0
        %1296 = vmatpush2.xpose.msra.mxu0 0.0
        %1297 = vmatprep.subr.mxu0 0.0
        %1298 = vmatpush2.xpose.msra.mxu0 0.0
        %1299 = vmatprep.subr.mxu0 0.0
        %1300 = vmatpush2.xpose.msra.mxu0 0.0
        %1301 = vmatprep.subr.mxu0 0.0
        %1302 = vmatpush2.xpose.msra.mxu0 0.0
        %1303 = vmatprep.subr.mxu0 0.0
        %1304 = vmatpush2.xpose.msra.mxu0 0.0
        %1305 = vmatprep.subr.mxu0 0.0
        %1306 = vmatpush2.xpose.msra.mxu0 0.0
        %1307 = vmatprep.mubr.f32.mxu0 0.0
        %1308 = vmatmul.mubr.f32.gmra.mxu0 %v1088
        %v1309 = vpop.f32.mrf.mxu0
        %v1310 = vadd.f32 0.0, %v1309
        %v1311 = vpop.f32.mrf.mxu0
        %1312 = vdwg.mxu0
        %v1313 = vmul.f32 %v1237, 0.35355338
        %v1314 = vmul.f32 %v1310, 0.35355338
        %v1315 = vadd.f32 %v1313, %v584
        %v1316 = vadd.f32 %v1314, %v584
        %v1317 = vsel %vm1010, %v1165, -inf
        %1318 = vmax.xlane.f32.xlu0 %v1317
        %v1319 = vpop.xlane.xlu0 %1318
        %v1320 = vsel %vm1010, %v1166, -inf
        %1321 = vmax.xlane.f32.xlu0 %v1320
        %v1322 = vpop.xlane.xlu0 %1321
        %v1323 = vsel %vm1010, %v1315, -inf
        %1324 = vmax.xlane.f32.xlu0 %v1323
        %v1325 = vpop.xlane.xlu0 %1324
        %v1326 = vsel %vm1010, %v1316, -inf
        %1327 = vmax.xlane.f32.xlu0 %v1326
        %v1328 = vpop.xlane.xlu0 %1327
        %v1329 = vmax.f32 %v1319, %v1325
        %v1330 = vmax.f32 %v1322, %v1328
        %v1331 = vsub.f32 %v1165, %v1329
        %v1332 = vsub.f32 %v1166, %v1330
        %v1333 = vmul.f32 %v1331, 1.442695
        %v1334 = vpow.pop %v1333
        %v1335 = vmul.f32 %v1332, 1.442695
        %v1336 = vpow.pop %v1335
        %v1337 = vsub.f32 %v1315, %v1329
        %v1338 = vsub.f32 %v1316, %v1330
        %v1339 = vmul.f32 %v1337, 1.442695
        %v1340 = vpow.pop %v1339
        %v1341 = vmul.f32 %v1338, 1.442695
        %v1342 = vpow.pop %v1341
        %v1343 = vsel %vm1010, %v1334, 0.0
        %1344 = vadd.xlane.f32.xlu0 %v1343
        %v1345 = vpop.xlane.xlu0 %1344
        %v1346 = vsel %vm1010, %v1336, 0.0
        %1347 = vadd.xlane.f32.xlu0 %v1346
        %v1348 = vpop.xlane.xlu0 %1347
        %v1349 = vsel %vm1010, %v1340, 0.0
        %1350 = vadd.xlane.f32.xlu0 %v1349
        %v1351 = vpop.xlane.xlu0 %1350
        %v1352 = vsel %vm1010, %v1342, 0.0
        %1353 = vadd.xlane.f32.xlu0 %v1352
        %v1354 = vpop.xlane.xlu0 %1353
        %v1355 = vadd.f32 %v1345, %v1351
        %v1356 = vadd.f32 %v1348, %v1354
        %v1357 = vrcp.pop %v1355
        %v1358 = vrcp.pop %v1356
        %v1359 = vmul.f32 %v1355, %v1357
        %v1360 = vmul.f32 %v1356, %v1358
        %v1361 = vsub.f32 2.0, %v1359
        %v1362 = vsub.f32 2.0, %v1360
        %v1363 = vmul.f32 %v1357, %v1361
        %v1364 = vmul.f32 %v1358, %v1362
        %v1366 = vsel %vm1010, %v1340, 0
        %1368 = vmatprep.subr.mxu0 0.0
        %1369 = vmatpush1.msra.mxu0 0.0
        %1370 = vmatprep.subr.mxu0 0.0
        %1371 = vmatpush1.msra.mxu0 0.0
        %1372 = vmatprep.subr.mxu0 0.0
        %1373 = vmatpush1.msra.mxu0 0.0
        %1374 = vmatprep.subr.mxu0 0.0
        %1375 = vmatpush1.msra.mxu0 0.0
        %1376 = vmatprep.subr.mxu0 0.0
        %1377 = vmatpush1.msra.mxu0 0.0
        %1378 = vmatprep.subr.mxu0 0.0
        %1379 = vmatpush1.msra.mxu0 0.0
        %1380 = vmatprep.subr.mxu0 0.0
        %1381 = vmatpush1.msra.mxu0 0.0
        %1382 = vmatprep.subr.mxu0 0.0
        %1383 = vmatpush1.msra.mxu0 0.0
        %1384 = vmatprep.subr.mxu0 0.0
        %1385 = vmatpush1.msra.mxu0 0.0
        %1386 = vmatprep.subr.mxu0 0.0
        %1387 = vmatpush1.msra.mxu0 0.0
        %1388 = vmatprep.subr.mxu0 0.0
        %1389 = vmatpush1.msra.mxu0 0.0
        %1390 = vmatprep.subr.mxu0 0.0
        %1391 = vmatpush1.msra.mxu0 0.0
        %1392 = vmatprep.subr.mxu0 0.0
        %1393 = vmatpush1.msra.mxu0 0.0
        %1394 = vmatprep.subr.mxu0 0.0
        %1395 = vmatpush1.msra.mxu0 0.0
        %1396 = vmatprep.subr.mxu0 0.0
        %1397 = vmatpush1.msra.mxu0 0.0
        %1398 = vmatprep.subr.mxu0 0.0
        %1399 = vmatpush1.msra.mxu0 %v846
        %1400 = vmatprep.subr.mxu0 0.0
        %1401 = vmatpush2.msra.mxu0 0.0
        %1402 = vmatprep.subr.mxu0 0.0
        %1403 = vmatpush2.msra.mxu0 0.0
        %1404 = vmatprep.subr.mxu0 0.0
        %1405 = vmatpush2.msra.mxu0 0.0
        %1406 = vmatprep.subr.mxu0 0.0
        %1407 = vmatpush2.msra.mxu0 0.0
        %1408 = vmatprep.subr.mxu0 0.0
        %1409 = vmatpush2.msra.mxu0 0.0
        %1410 = vmatprep.subr.mxu0 0.0
        %1411 = vmatpush2.msra.mxu0 0.0
        %1412 = vmatprep.subr.mxu0 0.0
        %1413 = vmatpush2.msra.mxu0 0.0
        %1414 = vmatprep.subr.mxu0 0.0
        %1415 = vmatpush2.msra.mxu0 0.0
        %1416 = vmatprep.subr.mxu0 0.0
        %1417 = vmatpush2.msra.mxu0 0.0
        %1418 = vmatprep.subr.mxu0 0.0
        %1419 = vmatpush2.msra.mxu0 0.0
        %1420 = vmatprep.subr.mxu0 0.0
        %1421 = vmatpush2.msra.mxu0 0.0
        %1422 = vmatprep.subr.mxu0 0.0
        %1423 = vmatpush2.msra.mxu0 0.0
        %1424 = vmatprep.subr.mxu0 0.0
        %1425 = vmatpush2.msra.mxu0 0.0
        %1426 = vmatprep.subr.mxu0 0.0
        %1427 = vmatpush2.msra.mxu0 0.0
        %1428 = vmatprep.subr.mxu0 0.0
        %1429 = vmatpush2.msra.mxu0 0.0
        %1430 = vmatprep.subr.mxu0 0.0
        %1431 = vmatpush2.msra.mxu0 0.0
        %1432 = vmatprep.mubr.f32.mxu0 0.0
        %1433 = vmatmul.mubr.f32.gmra.mxu0 %v1366
        %v1434 = vpop.f32.mrf.mxu0
        %v1435 = vadd.f32 0.0, %v1434
        %v1436 = vpop.f32.mrf.mxu0
        %1437 = vdwg.mxu0
        %v1439 = vsel %vm1010, %v1342, 0
        %1441 = vmatprep.subr.mxu0 0.0
        %1442 = vmatpush1.msra.mxu0 0.0
        %1443 = vmatprep.subr.mxu0 0.0
        %1444 = vmatpush1.msra.mxu0 0.0
        %1445 = vmatprep.subr.mxu0 0.0
        %1446 = vmatpush1.msra.mxu0 0.0
        %1447 = vmatprep.subr.mxu0 0.0
        %1448 = vmatpush1.msra.mxu0 0.0
        %1449 = vmatprep.subr.mxu0 0.0
        %1450 = vmatpush1.msra.mxu0 0.0
        %1451 = vmatprep.subr.mxu0 0.0
        %1452 = vmatpush1.msra.mxu0 0.0
        %1453 = vmatprep.subr.mxu0 0.0
        %1454 = vmatpush1.msra.mxu0 0.0
        %1455 = vmatprep.subr.mxu0 0.0
        %1456 = vmatpush1.msra.mxu0 0.0
        %1457 = vmatprep.subr.mxu0 0.0
        %1458 = vmatpush1.msra.mxu0 0.0
        %1459 = vmatprep.subr.mxu0 0.0
        %1460 = vmatpush1.msra.mxu0 0.0
        %1461 = vmatprep.subr.mxu0 0.0
        %1462 = vmatpush1.msra.mxu0 0.0
        %1463 = vmatprep.subr.mxu0 0.0
        %1464 = vmatpush1.msra.mxu0 0.0
        %1465 = vmatprep.subr.mxu0 0.0
        %1466 = vmatpush1.msra.mxu0 0.0
        %1467 = vmatprep.subr.mxu0 0.0
        %1468 = vmatpush1.msra.mxu0 0.0
        %1469 = vmatprep.subr.mxu0 0.0
        %1470 = vmatpush1.msra.mxu0 0.0
        %1471 = vmatprep.subr.mxu0 0.0
        %1472 = vmatpush1.msra.mxu0 %v851
        %1473 = vmatprep.subr.mxu0 0.0
        %1474 = vmatpush2.msra.mxu0 0.0
        %1475 = vmatprep.subr.mxu0 0.0
        %1476 = vmatpush2.msra.mxu0 0.0
        %1477 = vmatprep.subr.mxu0 0.0
        %1478 = vmatpush2.msra.mxu0 0.0
        %1479 = vmatprep.subr.mxu0 0.0
        %1480 = vmatpush2.msra.mxu0 0.0
        %1481 = vmatprep.subr.mxu0 0.0
        %1482 = vmatpush2.msra.mxu0 0.0
        %1483 = vmatprep.subr.mxu0 0.0
        %1484 = vmatpush2.msra.mxu0 0.0
        %1485 = vmatprep.subr.mxu0 0.0
        %1486 = vmatpush2.msra.mxu0 0.0
        %1487 = vmatprep.subr.mxu0 0.0
        %1488 = vmatpush2.msra.mxu0 0.0
        %1489 = vmatprep.subr.mxu0 0.0
        %1490 = vmatpush2.msra.mxu0 0.0
        %1491 = vmatprep.subr.mxu0 0.0
        %1492 = vmatpush2.msra.mxu0 0.0
        %1493 = vmatprep.subr.mxu0 0.0
        %1494 = vmatpush2.msra.mxu0 0.0
        %1495 = vmatprep.subr.mxu0 0.0
        %1496 = vmatpush2.msra.mxu0 0.0
        %1497 = vmatprep.subr.mxu0 0.0
        %1498 = vmatpush2.msra.mxu0 0.0
        %1499 = vmatprep.subr.mxu0 0.0
        %1500 = vmatpush2.msra.mxu0 0.0
        %1501 = vmatprep.subr.mxu0 0.0
        %1502 = vmatpush2.msra.mxu0 0.0
        %1503 = vmatprep.subr.mxu0 0.0
        %1504 = vmatpush2.msra.mxu0 0.0
        %1505 = vmatprep.mubr.f32.mxu0 0.0
        %1506 = vmatmul.mubr.f32.gmra.mxu0 %v1439
        %v1507 = vpop.f32.mrf.mxu0
        %v1508 = vadd.f32 0.0, %v1507
        %v1509 = vpop.f32.mrf.mxu0
        %1510 = vdwg.mxu0
        %v1512 = vsel %vm1010, %v1334, 0
        %1514 = vmatprep.subr.mxu0 0.0
        %1515 = vmatpush1.msra.mxu0 0.0
        %1516 = vmatprep.subr.mxu0 0.0
        %1517 = vmatpush1.msra.mxu0 0.0
        %1518 = vmatprep.subr.mxu0 0.0
        %1519 = vmatpush1.msra.mxu0 0.0
        %1520 = vmatprep.subr.mxu0 0.0
        %1521 = vmatpush1.msra.mxu0 0.0
        %1522 = vmatprep.subr.mxu0 0.0
        %1523 = vmatpush1.msra.mxu0 0.0
        %1524 = vmatprep.subr.mxu0 0.0
        %1525 = vmatpush1.msra.mxu0 0.0
        %1526 = vmatprep.subr.mxu0 0.0
        %1527 = vmatpush1.msra.mxu0 0.0
        %1528 = vmatprep.subr.mxu0 0.0
        %1529 = vmatpush1.msra.mxu0 0.0
        %1530 = vmatprep.subr.mxu0 0.0
        %1531 = vmatpush1.msra.mxu0 0.0
        %1532 = vmatprep.subr.mxu0 0.0
        %1533 = vmatpush1.msra.mxu0 0.0
        %1534 = vmatprep.subr.mxu0 0.0
        %1535 = vmatpush1.msra.mxu0 0.0
        %1536 = vmatprep.subr.mxu0 0.0
        %1537 = vmatpush1.msra.mxu0 0.0
        %1538 = vmatprep.subr.mxu0 0.0
        %1539 = vmatpush1.msra.mxu0 0.0
        %1540 = vmatprep.subr.mxu0 0.0
        %1541 = vmatpush1.msra.mxu0 0.0
        %1542 = vmatprep.subr.mxu0 0.0
        %1543 = vmatpush1.msra.mxu0 0.0
        %1544 = vmatprep.subr.mxu0 0.0
        %1545 = vmatpush1.msra.mxu0 %v1002
        %1546 = vmatprep.subr.mxu0 0.0
        %1547 = vmatpush2.msra.mxu0 0.0
        %1548 = vmatprep.subr.mxu0 0.0
        %1549 = vmatpush2.msra.mxu0 0.0
        %1550 = vmatprep.subr.mxu0 0.0
        %1551 = vmatpush2.msra.mxu0 0.0
        %1552 = vmatprep.subr.mxu0 0.0
        %1553 = vmatpush2.msra.mxu0 0.0
        %1554 = vmatprep.subr.mxu0 0.0
        %1555 = vmatpush2.msra.mxu0 0.0
        %1556 = vmatprep.subr.mxu0 0.0
        %1557 = vmatpush2.msra.mxu0 0.0
        %1558 = vmatprep.subr.mxu0 0.0
        %1559 = vmatpush2.msra.mxu0 0.0
        %1560 = vmatprep.subr.mxu0 0.0
        %1561 = vmatpush2.msra.mxu0 0.0
        %1562 = vmatprep.subr.mxu0 0.0
        %1563 = vmatpush2.msra.mxu0 0.0
        %1564 = vmatprep.subr.mxu0 0.0
        %1565 = vmatpush2.msra.mxu0 0.0
        %1566 = vmatprep.subr.mxu0 0.0
        %1567 = vmatpush2.msra.mxu0 0.0
        %1568 = vmatprep.subr.mxu0 0.0
        %1569 = vmatpush2.msra.mxu0 0.0
        %1570 = vmatprep.subr.mxu0 0.0
        %1571 = vmatpush2.msra.mxu0 0.0
        %1572 = vmatprep.subr.mxu0 0.0
        %1573 = vmatpush2.msra.mxu0 0.0
        %1574 = vmatprep.subr.mxu0 0.0
        %1575 = vmatpush2.msra.mxu0 0.0
        %1576 = vmatprep.subr.mxu0 0.0
        %1577 = vmatpush2.msra.mxu0 0.0
        %1578 = vmatprep.mubr.f32.mxu0 0.0
        %1579 = vmatmul.mubr.f32.gmra.mxu0 %v1512
        %v1580 = vpop.f32.mrf.mxu0
        %v1581 = vadd.f32 %v1435, %v1580
        %v1582 = vpop.f32.mrf.mxu0
        %1583 = vdwg.mxu0
        %v1585 = vsel %vm1010, %v1336, 0
        %1587 = vmatprep.subr.mxu0 0.0
        %1588 = vmatpush1.msra.mxu0 0.0
        %1589 = vmatprep.subr.mxu0 0.0
        %1590 = vmatpush1.msra.mxu0 0.0
        %1591 = vmatprep.subr.mxu0 0.0
        %1592 = vmatpush1.msra.mxu0 0.0
        %1593 = vmatprep.subr.mxu0 0.0
        %1594 = vmatpush1.msra.mxu0 0.0
        %1595 = vmatprep.subr.mxu0 0.0
        %1596 = vmatpush1.msra.mxu0 0.0
        %1597 = vmatprep.subr.mxu0 0.0
        %1598 = vmatpush1.msra.mxu0 0.0
        %1599 = vmatprep.subr.mxu0 0.0
        %1600 = vmatpush1.msra.mxu0 0.0
        %1601 = vmatprep.subr.mxu0 0.0
        %1602 = vmatpush1.msra.mxu0 0.0
        %1603 = vmatprep.subr.mxu0 0.0
        %1604 = vmatpush1.msra.mxu0 0.0
        %1605 = vmatprep.subr.mxu0 0.0
        %1606 = vmatpush1.msra.mxu0 0.0
        %1607 = vmatprep.subr.mxu0 0.0
        %1608 = vmatpush1.msra.mxu0 0.0
        %1609 = vmatprep.subr.mxu0 0.0
        %1610 = vmatpush1.msra.mxu0 0.0
        %1611 = vmatprep.subr.mxu0 0.0
        %1612 = vmatpush1.msra.mxu0 0.0
        %1613 = vmatprep.subr.mxu0 0.0
        %1614 = vmatpush1.msra.mxu0 0.0
        %1615 = vmatprep.subr.mxu0 0.0
        %1616 = vmatpush1.msra.mxu0 0.0
        %1617 = vmatprep.subr.mxu0 0.0
        %1618 = vmatpush1.msra.mxu0 %v1007
        %1619 = vmatprep.subr.mxu0 0.0
        %1620 = vmatpush2.msra.mxu0 0.0
        %1621 = vmatprep.subr.mxu0 0.0
        %1622 = vmatpush2.msra.mxu0 0.0
        %1623 = vmatprep.subr.mxu0 0.0
        %1624 = vmatpush2.msra.mxu0 0.0
        %1625 = vmatprep.subr.mxu0 0.0
        %1626 = vmatpush2.msra.mxu0 0.0
        %1627 = vmatprep.subr.mxu0 0.0
        %1628 = vmatpush2.msra.mxu0 0.0
        %1629 = vmatprep.subr.mxu0 0.0
        %1630 = vmatpush2.msra.mxu0 0.0
        %1631 = vmatprep.subr.mxu0 0.0
        %1632 = vmatpush2.msra.mxu0 0.0
        %1633 = vmatprep.subr.mxu0 0.0
        %1634 = vmatpush2.msra.mxu0 0.0
        %1635 = vmatprep.subr.mxu0 0.0
        %1636 = vmatpush2.msra.mxu0 0.0
        %1637 = vmatprep.subr.mxu0 0.0
        %1638 = vmatpush2.msra.mxu0 0.0
        %1639 = vmatprep.subr.mxu0 0.0
        %1640 = vmatpush2.msra.mxu0 0.0
        %1641 = vmatprep.subr.mxu0 0.0
        %1642 = vmatpush2.msra.mxu0 0.0
        %1643 = vmatprep.subr.mxu0 0.0
        %1644 = vmatpush2.msra.mxu0 0.0
        %1645 = vmatprep.subr.mxu0 0.0
        %1646 = vmatpush2.msra.mxu0 0.0
        %1647 = vmatprep.subr.mxu0 0.0
        %1648 = vmatpush2.msra.mxu0 0.0
        %1649 = vmatprep.subr.mxu0 0.0
        %1650 = vmatpush2.msra.mxu0 0.0
        %1651 = vmatprep.mubr.f32.mxu0 0.0
        %1652 = vmatmul.mubr.f32.gmra.mxu0 %v1585
        %v1653 = vpop.f32.mrf.mxu0
        %v1654 = vadd.f32 %v1508, %v1653
        %v1655 = vpop.f32.mrf.mxu0
        %1656 = vdwg.mxu0
        %v1657 = vmul.f32 %v1581, %v1363
        %v1658 = vmul.f32 %v1654, %v1364
        %v1659 = vld [vmem:[%s524] sm:$0xff]
        %s1660 = scalar_lea.vmem %s515, 32
        %v1661 = vld [vmem:[%s1660] sm:$0xff]
        %v1662 = vld [vmem:[%s1660 + $0x8] sm:$0xff]
        %v1663 = vld [vmem:[%s1660 + $0x10] sm:$0xff]
        %v1664 = vld [vmem:[%s1660 + $0x18] sm:$0xff]
        %s1665 = scalar_lea.vmem %s515, 160
        %v1666 = vld [vmem:[%s1665] sm:$0xff]
        %v1667 = vld [vmem:[%s1665 + $0x8] sm:$0xff]
        %v1668 = vld [vmem:[%s1665 + $0x10] sm:$0xff]
        %v1669 = vld [vmem:[%s1665 + $0x18] sm:$0xff]
        %s1670 = scalar_lea.vmem %s515, 288
        %v1671 = vld [vmem:[%s1670] sm:$0xff]
        %v1672 = vld [vmem:[%s1670 + $0x8] sm:$0xff]
        %v1673 = vld [vmem:[%s1670 + $0x10] sm:$0xff]
        %v1674 = vld [vmem:[%s1670 + $0x18] sm:$0xff]
        %s1675 = scalar_lea.vmem %s519, 1
        %v1676 = vld [vmem:[%s1675] sm:$0x1]
        %s1677 = scalar_lea.vmem %s519, 5
        %v1678 = vld [vmem:[%s1677] sm:$0x1]
        %s1679 = scalar_lea.vmem %s519, 9
        %v1680 = vld [vmem:[%s1679] sm:$0x1]
        %v1682 = vlaneseq
        %v1683 = vshrl.u32 %v1682, 7
        %v1684 = vsub.s32 0, %v1683
        %v1685 = vrot.slane %v1676, %v1684
        %1687 = vmatprep.subr.mxu0 0.0
        %1688 = vmatpush1.msra.mxu0 0.0
        %1689 = vmatprep.subr.mxu0 0.0
        %1690 = vmatpush1.msra.mxu0 0.0
        %1691 = vmatprep.subr.mxu0 0.0
        %1692 = vmatpush1.msra.mxu0 0.0
        %1693 = vmatprep.subr.mxu0 0.0
        %1694 = vmatpush1.msra.mxu0 0.0
        %1695 = vmatprep.subr.mxu0 0.0
        %1696 = vmatpush1.msra.mxu0 0.0
        %1697 = vmatprep.subr.mxu0 0.0
        %1698 = vmatpush1.msra.mxu0 0.0
        %1699 = vmatprep.subr.mxu0 0.0
        %1700 = vmatpush1.msra.mxu0 0.0
        %1701 = vmatprep.subr.mxu0 0.0
        %1702 = vmatpush1.msra.mxu0 0.0
        %1703 = vmatprep.subr.mxu0 0.0
        %1704 = vmatpush1.msra.mxu0 0.0
        %1705 = vmatprep.subr.mxu0 0.0
        %1706 = vmatpush1.msra.mxu0 0.0
        %1707 = vmatprep.subr.mxu0 0.0
        %1708 = vmatpush1.msra.mxu0 0.0
        %1709 = vmatprep.subr.mxu0 0.0
        %1710 = vmatpush1.msra.mxu0 0.0
        %1711 = vmatprep.subr.mxu0 0.0
        %1712 = vmatpush1.msra.mxu0 %v1664
        %1713 = vmatprep.subr.mxu0 0.0
        %1714 = vmatpush1.msra.mxu0 %v1663
        %1715 = vmatprep.subr.mxu0 0.0
        %1716 = vmatpush1.msra.mxu0 %v1662
        %1717 = vmatprep.subr.mxu0 0.0
        %1718 = vmatpush1.msra.mxu0 %v1661
        %1719 = vmatprep.subr.mxu0 0.0
        %1720 = vmatpush2.msra.mxu0 0.0
        %1721 = vmatprep.subr.mxu0 0.0
        %1722 = vmatpush2.msra.mxu0 0.0
        %1723 = vmatprep.subr.mxu0 0.0
        %1724 = vmatpush2.msra.mxu0 0.0
        %1725 = vmatprep.subr.mxu0 0.0
        %1726 = vmatpush2.msra.mxu0 0.0
        %1727 = vmatprep.subr.mxu0 0.0
        %1728 = vmatpush2.msra.mxu0 0.0
        %1729 = vmatprep.subr.mxu0 0.0
        %1730 = vmatpush2.msra.mxu0 0.0
        %1731 = vmatprep.subr.mxu0 0.0
        %1732 = vmatpush2.msra.mxu0 0.0
        %1733 = vmatprep.subr.mxu0 0.0
        %1734 = vmatpush2.msra.mxu0 0.0
        %1735 = vmatprep.subr.mxu0 0.0
        %1736 = vmatpush2.msra.mxu0 0.0
        %1737 = vmatprep.subr.mxu0 0.0
        %1738 = vmatpush2.msra.mxu0 0.0
        %1739 = vmatprep.subr.mxu0 0.0
        %1740 = vmatpush2.msra.mxu0 0.0
        %1741 = vmatprep.subr.mxu0 0.0
        %1742 = vmatpush2.msra.mxu0 0.0
        %1743 = vmatprep.subr.mxu0 0.0
        %1744 = vmatpush2.msra.mxu0 0.0
        %1745 = vmatprep.subr.mxu0 0.0
        %1746 = vmatpush2.msra.mxu0 0.0
        %1747 = vmatprep.subr.mxu0 0.0
        %1748 = vmatpush2.msra.mxu0 0.0
        %1749 = vmatprep.subr.mxu0 0.0
        %1750 = vmatpush2.msra.mxu0 0.0
        %1751 = vmatprep.mubr.f32.mxu0 0.0
        %1752 = vmatmul.mubr.f32.gmra.mxu0 %v612
        %v1753 = vpop.f32.mrf.mxu0
        %v1754 = vadd.f32 %v1685, %v1753
        %v1755 = vpop.f32.mrf.mxu0
        %1756 = vmatprep.mubr.f32.mxu0 0.0
        %1757 = vmatmul.mubr.f32.gmra.mxu0 %v615
        %v1758 = vpop.f32.mrf.mxu0
        %v1759 = vadd.f32 %v1685, %v1758
        %v1760 = vpop.f32.mrf.mxu0
        %1761 = vdwg.mxu0
        %v1763 = vlaneseq
        %v1764 = vshrl.u32 %v1763, 7
        %v1765 = vsub.s32 0, %v1764
        %v1766 = vrot.slane %v1678, %v1765
        %1768 = vmatprep.subr.mxu0 0.0
        %1769 = vmatpush1.msra.mxu0 0.0
        %1770 = vmatprep.subr.mxu0 0.0
        %1771 = vmatpush1.msra.mxu0 0.0
        %1772 = vmatprep.subr.mxu0 0.0
        %1773 = vmatpush1.msra.mxu0 0.0
        %1774 = vmatprep.subr.mxu0 0.0
        %1775 = vmatpush1.msra.mxu0 0.0
        %1776 = vmatprep.subr.mxu0 0.0
        %1777 = vmatpush1.msra.mxu0 0.0
        %1778 = vmatprep.subr.mxu0 0.0
        %1779 = vmatpush1.msra.mxu0 0.0
        %1780 = vmatprep.subr.mxu0 0.0
        %1781 = vmatpush1.msra.mxu0 0.0
        %1782 = vmatprep.subr.mxu0 0.0
        %1783 = vmatpush1.msra.mxu0 0.0
        %1784 = vmatprep.subr.mxu0 0.0
        %1785 = vmatpush1.msra.mxu0 0.0
        %1786 = vmatprep.subr.mxu0 0.0
        %1787 = vmatpush1.msra.mxu0 0.0
        %1788 = vmatprep.subr.mxu0 0.0
        %1789 = vmatpush1.msra.mxu0 0.0
        %1790 = vmatprep.subr.mxu0 0.0
        %1791 = vmatpush1.msra.mxu0 0.0
        %1792 = vmatprep.subr.mxu0 0.0
        %1793 = vmatpush1.msra.mxu0 %v1669
        %1794 = vmatprep.subr.mxu0 0.0
        %1795 = vmatpush1.msra.mxu0 %v1668
        %1796 = vmatprep.subr.mxu0 0.0
        %1797 = vmatpush1.msra.mxu0 %v1667
        %1798 = vmatprep.subr.mxu0 0.0
        %1799 = vmatpush1.msra.mxu0 %v1666
        %1800 = vmatprep.subr.mxu0 0.0
        %1801 = vmatpush2.msra.mxu0 0.0
        %1802 = vmatprep.subr.mxu0 0.0
        %1803 = vmatpush2.msra.mxu0 0.0
        %1804 = vmatprep.subr.mxu0 0.0
        %1805 = vmatpush2.msra.mxu0 0.0
        %1806 = vmatprep.subr.mxu0 0.0
        %1807 = vmatpush2.msra.mxu0 0.0
        %1808 = vmatprep.subr.mxu0 0.0
        %1809 = vmatpush2.msra.mxu0 0.0
        %1810 = vmatprep.subr.mxu0 0.0
        %1811 = vmatpush2.msra.mxu0 0.0
        %1812 = vmatprep.subr.mxu0 0.0
        %1813 = vmatpush2.msra.mxu0 0.0
        %1814 = vmatprep.subr.mxu0 0.0
        %1815 = vmatpush2.msra.mxu0 0.0
        %1816 = vmatprep.subr.mxu0 0.0
        %1817 = vmatpush2.msra.mxu0 0.0
        %1818 = vmatprep.subr.mxu0 0.0
        %1819 = vmatpush2.msra.mxu0 0.0
        %1820 = vmatprep.subr.mxu0 0.0
        %1821 = vmatpush2.msra.mxu0 0.0
        %1822 = vmatprep.subr.mxu0 0.0
        %1823 = vmatpush2.msra.mxu0 0.0
        %1824 = vmatprep.subr.mxu0 0.0
        %1825 = vmatpush2.msra.mxu0 0.0
        %1826 = vmatprep.subr.mxu0 0.0
        %1827 = vmatpush2.msra.mxu0 0.0
        %1828 = vmatprep.subr.mxu0 0.0
        %1829 = vmatpush2.msra.mxu0 0.0
        %1830 = vmatprep.subr.mxu0 0.0
        %1831 = vmatpush2.msra.mxu0 0.0
        %1832 = vmatprep.mubr.f32.mxu0 0.0
        %1833 = vmatmul.mubr.f32.gmra.mxu0 %v612
        %v1834 = vpop.f32.mrf.mxu0
        %v1835 = vadd.f32 %v1766, %v1834
        %v1836 = vpop.f32.mrf.mxu0
        %1837 = vmatprep.mubr.f32.mxu0 0.0
        %1838 = vmatmul.mubr.f32.gmra.mxu0 %v615
        %v1839 = vpop.f32.mrf.mxu0
        %v1840 = vadd.f32 %v1766, %v1839
        %v1841 = vpop.f32.mrf.mxu0
        %1842 = vdwg.mxu0
        %v1844 = vlaneseq
        %v1845 = vshrl.u32 %v1844, 7
        %v1846 = vsub.s32 0, %v1845
        %v1847 = vrot.slane %v1680, %v1846
        %1849 = vmatprep.subr.mxu0 0.0
        %1850 = vmatpush1.msra.mxu0 0.0
        %1851 = vmatprep.subr.mxu0 0.0
        %1852 = vmatpush1.msra.mxu0 0.0
        %1853 = vmatprep.subr.mxu0 0.0
        %1854 = vmatpush1.msra.mxu0 0.0
        %1855 = vmatprep.subr.mxu0 0.0
        %1856 = vmatpush1.msra.mxu0 0.0
        %1857 = vmatprep.subr.mxu0 0.0
        %1858 = vmatpush1.msra.mxu0 0.0
        %1859 = vmatprep.subr.mxu0 0.0
        %1860 = vmatpush1.msra.mxu0 0.0
        %1861 = vmatprep.subr.mxu0 0.0
        %1862 = vmatpush1.msra.mxu0 0.0
        %1863 = vmatprep.subr.mxu0 0.0
        %1864 = vmatpush1.msra.mxu0 0.0
        %1865 = vmatprep.subr.mxu0 0.0
        %1866 = vmatpush1.msra.mxu0 0.0
        %1867 = vmatprep.subr.mxu0 0.0
        %1868 = vmatpush1.msra.mxu0 0.0
        %1869 = vmatprep.subr.mxu0 0.0
        %1870 = vmatpush1.msra.mxu0 0.0
        %1871 = vmatprep.subr.mxu0 0.0
        %1872 = vmatpush1.msra.mxu0 0.0
        %1873 = vmatprep.subr.mxu0 0.0
        %1874 = vmatpush1.msra.mxu0 %v1674
        %1875 = vmatprep.subr.mxu0 0.0
        %1876 = vmatpush1.msra.mxu0 %v1673
        %1877 = vmatprep.subr.mxu0 0.0
        %1878 = vmatpush1.msra.mxu0 %v1672
        %1879 = vmatprep.subr.mxu0 0.0
        %1880 = vmatpush1.msra.mxu0 %v1671
        %1881 = vmatprep.subr.mxu0 0.0
        %1882 = vmatpush2.msra.mxu0 0.0
        %1883 = vmatprep.subr.mxu0 0.0
        %1884 = vmatpush2.msra.mxu0 0.0
        %1885 = vmatprep.subr.mxu0 0.0
        %1886 = vmatpush2.msra.mxu0 0.0
        %1887 = vmatprep.subr.mxu0 0.0
        %1888 = vmatpush2.msra.mxu0 0.0
        %1889 = vmatprep.subr.mxu0 0.0
        %1890 = vmatpush2.msra.mxu0 0.0
        %1891 = vmatprep.subr.mxu0 0.0
        %1892 = vmatpush2.msra.mxu0 0.0
        %1893 = vmatprep.subr.mxu0 0.0
        %1894 = vmatpush2.msra.mxu0 0.0
        %1895 = vmatprep.subr.mxu0 0.0
        %1896 = vmatpush2.msra.mxu0 0.0
        %1897 = vmatprep.subr.mxu0 0.0
        %1898 = vmatpush2.msra.mxu0 0.0
        %1899 = vmatprep.subr.mxu0 0.0
        %1900 = vmatpush2.msra.mxu0 0.0
        %1901 = vmatprep.subr.mxu0 0.0
        %1902 = vmatpush2.msra.mxu0 0.0
        %1903 = vmatprep.subr.mxu0 0.0
        %1904 = vmatpush2.msra.mxu0 0.0
        %1905 = vmatprep.subr.mxu0 0.0
        %1906 = vmatpush2.msra.mxu0 0.0
        %1907 = vmatprep.subr.mxu0 0.0
        %1908 = vmatpush2.msra.mxu0 0.0
        %1909 = vmatprep.subr.mxu0 0.0
        %1910 = vmatpush2.msra.mxu0 0.0
        %1911 = vmatprep.subr.mxu0 0.0
        %1912 = vmatpush2.msra.mxu0 0.0
        %1913 = vmatprep.mubr.f32.mxu0 0.0
        %1914 = vmatmul.mubr.f32.gmra.mxu0 %v612
        %v1915 = vpop.f32.mrf.mxu0
        %v1916 = vadd.f32 %v1847, %v1915
        %v1917 = vpop.f32.mrf.mxu0
        %1918 = vmatprep.mubr.f32.mxu0 0.0
        %1919 = vmatmul.mubr.f32.gmra.mxu0 %v615
        %v1920 = vpop.f32.mrf.mxu0
        %v1921 = vadd.f32 %v1847, %v1920
        %v1922 = vpop.f32.mrf.mxu0
        %1923 = vdwg.mxu0
        %1924 = vmatprep.subr.mxu0 0.0
        %1925 = vmatpush1.msra.mxu0 0.0
        %1926 = vmatprep.subr.mxu0 0.0
        %1927 = vmatpush1.msra.mxu0 0.0
        %1928 = vmatprep.subr.mxu0 0.0
        %1929 = vmatpush1.msra.mxu0 0.0
        %1930 = vmatprep.subr.mxu0 0.0
        %1931 = vmatpush1.msra.mxu0 0.0
        %1932 = vmatprep.subr.mxu0 0.0
        %1933 = vmatpush1.msra.mxu0 0.0
        %1934 = vmatprep.subr.mxu0 0.0
        %1935 = vmatpush1.msra.mxu0 0.0
        %1936 = vmatprep.subr.mxu0 0.0
        %1937 = vmatpush1.msra.mxu0 0.0
        %1938 = vmatprep.subr.mxu0 0.0
        %1939 = vmatpush1.msra.mxu0 0.0
        %1940 = vmatprep.subr.mxu0 0.0
        %1941 = vmatpush1.msra.mxu0 0.0
        %1942 = vmatprep.subr.mxu0 0.0
        %1943 = vmatpush1.msra.mxu0 0.0
        %1944 = vmatprep.subr.mxu0 0.0
        %1945 = vmatpush1.msra.mxu0 0.0
        %1946 = vmatprep.subr.mxu0 0.0
        %1947 = vmatpush1.msra.mxu0 0.0
        %1948 = vmatprep.subr.mxu0 0.0
        %1949 = vmatpush1.msra.mxu0 %v1669
        %1950 = vmatprep.subr.mxu0 0.0
        %1951 = vmatpush1.msra.mxu0 %v1668
        %1952 = vmatprep.subr.mxu0 0.0
        %1953 = vmatpush1.msra.mxu0 %v1667
        %1954 = vmatprep.subr.mxu0 0.0
        %1955 = vmatpush1.msra.mxu0 %v1666
        %1956 = vmatprep.subr.mxu0 0.0
        %1957 = vmatpush2.msra.mxu0 0.0
        %1958 = vmatprep.subr.mxu0 0.0
        %1959 = vmatpush2.msra.mxu0 0.0
        %1960 = vmatprep.subr.mxu0 0.0
        %1961 = vmatpush2.msra.mxu0 0.0
        %1962 = vmatprep.subr.mxu0 0.0
        %1963 = vmatpush2.msra.mxu0 0.0
        %1964 = vmatprep.subr.mxu0 0.0
        %1965 = vmatpush2.msra.mxu0 0.0
        %1966 = vmatprep.subr.mxu0 0.0
        %1967 = vmatpush2.msra.mxu0 0.0
        %1968 = vmatprep.subr.mxu0 0.0
        %1969 = vmatpush2.msra.mxu0 0.0
        %1970 = vmatprep.subr.mxu0 0.0
        %1971 = vmatpush2.msra.mxu0 0.0
        %1972 = vmatprep.subr.mxu0 0.0
        %1973 = vmatpush2.msra.mxu0 0.0
        %1974 = vmatprep.subr.mxu0 0.0
        %1975 = vmatpush2.msra.mxu0 0.0
        %1976 = vmatprep.subr.mxu0 0.0
        %1977 = vmatpush2.msra.mxu0 0.0
        %1978 = vmatprep.subr.mxu0 0.0
        %1979 = vmatpush2.msra.mxu0 0.0
        %1980 = vmatprep.subr.mxu0 0.0
        %1981 = vmatpush2.msra.mxu0 0.0
        %1982 = vmatprep.subr.mxu0 0.0
        %1983 = vmatpush2.msra.mxu0 0.0
        %1984 = vmatprep.subr.mxu0 0.0
        %1985 = vmatpush2.msra.mxu0 0.0
        %1986 = vmatprep.subr.mxu0 0.0
        %1987 = vmatpush2.msra.mxu0 0.0
        %1988 = vmatprep.mubr.f32.mxu0 0.0
        %1989 = vmatmul.mubr.f32.gmra.mxu0 %v855
        %v1990 = vpop.f32.mrf.mxu0
        %v1991 = vadd.f32 %v1766, %v1990
        %v1992 = vpop.f32.mrf.mxu0
        %1993 = vmatprep.mubr.f32.mxu0 0.0
        %1994 = vmatmul.mubr.f32.gmra.mxu0 %v858
        %v1995 = vpop.f32.mrf.mxu0
        %v1996 = vadd.f32 %v1766, %v1995
        %v1997 = vpop.f32.mrf.mxu0
        %1998 = vdwg.mxu0
        %1999 = vmatprep.subr.mxu0 0.0
        %2000 = vmatpush1.msra.mxu0 0.0
        %2001 = vmatprep.subr.mxu0 0.0
        %2002 = vmatpush1.msra.mxu0 0.0
        %2003 = vmatprep.subr.mxu0 0.0
        %2004 = vmatpush1.msra.mxu0 0.0
        %2005 = vmatprep.subr.mxu0 0.0
        %2006 = vmatpush1.msra.mxu0 0.0
        %2007 = vmatprep.subr.mxu0 0.0
        %2008 = vmatpush1.msra.mxu0 0.0
        %2009 = vmatprep.subr.mxu0 0.0
        %2010 = vmatpush1.msra.mxu0 0.0
        %2011 = vmatprep.subr.mxu0 0.0
        %2012 = vmatpush1.msra.mxu0 0.0
        %2013 = vmatprep.subr.mxu0 0.0
        %2014 = vmatpush1.msra.mxu0 0.0
        %2015 = vmatprep.subr.mxu0 0.0
        %2016 = vmatpush1.msra.mxu0 0.0
        %2017 = vmatprep.subr.mxu0 0.0
        %2018 = vmatpush1.msra.mxu0 0.0
        %2019 = vmatprep.subr.mxu0 0.0
        %2020 = vmatpush1.msra.mxu0 0.0
        %2021 = vmatprep.subr.mxu0 0.0
        %2022 = vmatpush1.msra.mxu0 0.0
        %2023 = vmatprep.subr.mxu0 0.0
        %2024 = vmatpush1.msra.mxu0 %v1674
        %2025 = vmatprep.subr.mxu0 0.0
        %2026 = vmatpush1.msra.mxu0 %v1673
        %2027 = vmatprep.subr.mxu0 0.0
        %2028 = vmatpush1.msra.mxu0 %v1672
        %2029 = vmatprep.subr.mxu0 0.0
        %2030 = vmatpush1.msra.mxu0 %v1671
        %2031 = vmatprep.subr.mxu0 0.0
        %2032 = vmatpush2.msra.mxu0 0.0
        %2033 = vmatprep.subr.mxu0 0.0
        %2034 = vmatpush2.msra.mxu0 0.0
        %2035 = vmatprep.subr.mxu0 0.0
        %2036 = vmatpush2.msra.mxu0 0.0
        %2037 = vmatprep.subr.mxu0 0.0
        %2038 = vmatpush2.msra.mxu0 0.0
        %2039 = vmatprep.subr.mxu0 0.0
        %2040 = vmatpush2.msra.mxu0 0.0
        %2041 = vmatprep.subr.mxu0 0.0
        %2042 = vmatpush2.msra.mxu0 0.0
        %2043 = vmatprep.subr.mxu0 0.0
        %2044 = vmatpush2.msra.mxu0 0.0
        %2045 = vmatprep.subr.mxu0 0.0
        %2046 = vmatpush2.msra.mxu0 0.0
        %2047 = vmatprep.subr.mxu0 0.0
        %2048 = vmatpush2.msra.mxu0 0.0
        %2049 = vmatprep.subr.mxu0 0.0
        %2050 = vmatpush2.msra.mxu0 0.0
        %2051 = vmatprep.subr.mxu0 0.0
        %2052 = vmatpush2.msra.mxu0 0.0
        %2053 = vmatprep.subr.mxu0 0.0
        %2054 = vmatpush2.msra.mxu0 0.0
        %2055 = vmatprep.subr.mxu0 0.0
        %2056 = vmatpush2.msra.mxu0 0.0
        %2057 = vmatprep.subr.mxu0 0.0
        %2058 = vmatpush2.msra.mxu0 0.0
        %2059 = vmatprep.subr.mxu0 0.0
        %2060 = vmatpush2.msra.mxu0 0.0
        %2061 = vmatprep.subr.mxu0 0.0
        %2062 = vmatpush2.msra.mxu0 0.0
        %2063 = vmatprep.mubr.f32.mxu0 0.0
        %2064 = vmatmul.mubr.f32.gmra.mxu0 %v855
        %v2065 = vpop.f32.mrf.mxu0
        %v2066 = vadd.f32 %v1847, %v2065
        %v2067 = vpop.f32.mrf.mxu0
        %2068 = vmatprep.mubr.f32.mxu0 0.0
        %2069 = vmatmul.mubr.f32.gmra.mxu0 %v858
        %v2070 = vpop.f32.mrf.mxu0
        %v2071 = vadd.f32 %v1847, %v2070
        %v2072 = vpop.f32.mrf.mxu0
        %2073 = vdwg.mxu0
        %v2075 = vsel %vm1010, %v1754, 0
        %v2078 = vsel %vm1010, %v1991, 0
        %2080 = vmatprep.subr.mxu0 0.0
        %2081 = vmatpush1.xpose.msra.mxu0 0.0
        %2082 = vmatprep.subr.mxu0 0.0
        %2083 = vmatpush1.xpose.msra.mxu0 0.0
        %2084 = vmatprep.subr.mxu0 0.0
        %2085 = vmatpush1.xpose.msra.mxu0 0.0
        %2086 = vmatprep.subr.mxu0 0.0
        %2087 = vmatpush1.xpose.msra.mxu0 0.0
        %2088 = vmatprep.subr.mxu0 0.0
        %2089 = vmatpush1.xpose.msra.mxu0 0.0
        %2090 = vmatprep.subr.mxu0 0.0
        %2091 = vmatpush1.xpose.msra.mxu0 0.0
        %2092 = vmatprep.subr.mxu0 0.0
        %2093 = vmatpush1.xpose.msra.mxu0 0.0
        %2094 = vmatprep.subr.mxu0 0.0
        %2095 = vmatpush1.xpose.msra.mxu0 0.0
        %2096 = vmatprep.subr.mxu0 0.0
        %2097 = vmatpush1.xpose.msra.mxu0 0.0
        %2098 = vmatprep.subr.mxu0 0.0
        %2099 = vmatpush1.xpose.msra.mxu0 0.0
        %2100 = vmatprep.subr.mxu0 0.0
        %2101 = vmatpush1.xpose.msra.mxu0 0.0
        %2102 = vmatprep.subr.mxu0 0.0
        %2103 = vmatpush1.xpose.msra.mxu0 0.0
        %2104 = vmatprep.subr.mxu0 0.0
        %2105 = vmatpush1.xpose.msra.mxu0 0.0
        %2106 = vmatprep.subr.mxu0 0.0
        %2107 = vmatpush1.xpose.msra.mxu0 0.0
        %2108 = vmatprep.subr.mxu0 0.0
        %2109 = vmatpush1.xpose.msra.mxu0 0.0
        %2110 = vmatprep.subr.mxu0 0.0
        %2111 = vmatpush1.xpose.msra.mxu0 %v2078
        %2112 = vmatprep.subr.mxu0 0.0
        %2113 = vmatpush2.xpose.msra.mxu0 0.0
        %2114 = vmatprep.subr.mxu0 0.0
        %2115 = vmatpush2.xpose.msra.mxu0 0.0
        %2116 = vmatprep.subr.mxu0 0.0
        %2117 = vmatpush2.xpose.msra.mxu0 0.0
        %2118 = vmatprep.subr.mxu0 0.0
        %2119 = vmatpush2.xpose.msra.mxu0 0.0
        %2120 = vmatprep.subr.mxu0 0.0
        %2121 = vmatpush2.xpose.msra.mxu0 0.0
        %2122 = vmatprep.subr.mxu0 0.0
        %2123 = vmatpush2.xpose.msra.mxu0 0.0
        %2124 = vmatprep.subr.mxu0 0.0
        %2125 = vmatpush2.xpose.msra.mxu0 0.0
        %2126 = vmatprep.subr.mxu0 0.0
        %2127 = vmatpush2.xpose.msra.mxu0 0.0
        %2128 = vmatprep.subr.mxu0 0.0
        %2129 = vmatpush2.xpose.msra.mxu0 0.0
        %2130 = vmatprep.subr.mxu0 0.0
        %2131 = vmatpush2.xpose.msra.mxu0 0.0
        %2132 = vmatprep.subr.mxu0 0.0
        %2133 = vmatpush2.xpose.msra.mxu0 0.0
        %2134 = vmatprep.subr.mxu0 0.0
        %2135 = vmatpush2.xpose.msra.mxu0 0.0
        %2136 = vmatprep.subr.mxu0 0.0
        %2137 = vmatpush2.xpose.msra.mxu0 0.0
        %2138 = vmatprep.subr.mxu0 0.0
        %2139 = vmatpush2.xpose.msra.mxu0 0.0
        %2140 = vmatprep.subr.mxu0 0.0
        %2141 = vmatpush2.xpose.msra.mxu0 0.0
        %2142 = vmatprep.subr.mxu0 0.0
        %2143 = vmatpush2.xpose.msra.mxu0 0.0
        %2144 = vmatprep.mubr.f32.mxu0 0.0
        %2145 = vmatmul.mubr.f32.gmra.mxu0 %v2075
        %v2146 = vpop.f32.mrf.mxu0
        %v2147 = vadd.f32 0.0, %v2146
        %v2148 = vpop.f32.mrf.mxu0
        %2149 = vdwg.mxu0
        %v2151 = vsel %vm1010, %v1759, 0
        %v2154 = vsel %vm1010, %v1996, 0
        %2156 = vmatprep.subr.mxu0 0.0
        %2157 = vmatpush1.xpose.msra.mxu0 0.0
        %2158 = vmatprep.subr.mxu0 0.0
        %2159 = vmatpush1.xpose.msra.mxu0 0.0
        %2160 = vmatprep.subr.mxu0 0.0
        %2161 = vmatpush1.xpose.msra.mxu0 0.0
        %2162 = vmatprep.subr.mxu0 0.0
        %2163 = vmatpush1.xpose.msra.mxu0 0.0
        %2164 = vmatprep.subr.mxu0 0.0
        %2165 = vmatpush1.xpose.msra.mxu0 0.0
        %2166 = vmatprep.subr.mxu0 0.0
        %2167 = vmatpush1.xpose.msra.mxu0 0.0
        %2168 = vmatprep.subr.mxu0 0.0
        %2169 = vmatpush1.xpose.msra.mxu0 0.0
        %2170 = vmatprep.subr.mxu0 0.0
        %2171 = vmatpush1.xpose.msra.mxu0 0.0
        %2172 = vmatprep.subr.mxu0 0.0
        %2173 = vmatpush1.xpose.msra.mxu0 0.0
        %2174 = vmatprep.subr.mxu0 0.0
        %2175 = vmatpush1.xpose.msra.mxu0 0.0
        %2176 = vmatprep.subr.mxu0 0.0
        %2177 = vmatpush1.xpose.msra.mxu0 0.0
        %2178 = vmatprep.subr.mxu0 0.0
        %2179 = vmatpush1.xpose.msra.mxu0 0.0
        %2180 = vmatprep.subr.mxu0 0.0
        %2181 = vmatpush1.xpose.msra.mxu0 0.0
        %2182 = vmatprep.subr.mxu0 0.0
        %2183 = vmatpush1.xpose.msra.mxu0 0.0
        %2184 = vmatprep.subr.mxu0 0.0
        %2185 = vmatpush1.xpose.msra.mxu0 0.0
        %2186 = vmatprep.subr.mxu0 0.0
        %2187 = vmatpush1.xpose.msra.mxu0 %v2154
        %2188 = vmatprep.subr.mxu0 0.0
        %2189 = vmatpush2.xpose.msra.mxu0 0.0
        %2190 = vmatprep.subr.mxu0 0.0
        %2191 = vmatpush2.xpose.msra.mxu0 0.0
        %2192 = vmatprep.subr.mxu0 0.0
        %2193 = vmatpush2.xpose.msra.mxu0 0.0
        %2194 = vmatprep.subr.mxu0 0.0
        %2195 = vmatpush2.xpose.msra.mxu0 0.0
        %2196 = vmatprep.subr.mxu0 0.0
        %2197 = vmatpush2.xpose.msra.mxu0 0.0
        %2198 = vmatprep.subr.mxu0 0.0
        %2199 = vmatpush2.xpose.msra.mxu0 0.0
        %2200 = vmatprep.subr.mxu0 0.0
        %2201 = vmatpush2.xpose.msra.mxu0 0.0
        %2202 = vmatprep.subr.mxu0 0.0
        %2203 = vmatpush2.xpose.msra.mxu0 0.0
        %2204 = vmatprep.subr.mxu0 0.0
        %2205 = vmatpush2.xpose.msra.mxu0 0.0
        %2206 = vmatprep.subr.mxu0 0.0
        %2207 = vmatpush2.xpose.msra.mxu0 0.0
        %2208 = vmatprep.subr.mxu0 0.0
        %2209 = vmatpush2.xpose.msra.mxu0 0.0
        %2210 = vmatprep.subr.mxu0 0.0
        %2211 = vmatpush2.xpose.msra.mxu0 0.0
        %2212 = vmatprep.subr.mxu0 0.0
        %2213 = vmatpush2.xpose.msra.mxu0 0.0
        %2214 = vmatprep.subr.mxu0 0.0
        %2215 = vmatpush2.xpose.msra.mxu0 0.0
        %2216 = vmatprep.subr.mxu0 0.0
        %2217 = vmatpush2.xpose.msra.mxu0 0.0
        %2218 = vmatprep.subr.mxu0 0.0
        %2219 = vmatpush2.xpose.msra.mxu0 0.0
        %2220 = vmatprep.mubr.f32.mxu0 0.0
        %2221 = vmatmul.mubr.f32.gmra.mxu0 %v2151
        %v2222 = vpop.f32.mrf.mxu0
        %v2223 = vadd.f32 0.0, %v2222
        %v2224 = vpop.f32.mrf.mxu0
        %2225 = vdwg.mxu0
        %v2226 = vmul.f32 %v2147, 0.35355338
        %v2227 = vmul.f32 %v2223, 0.35355338
        %v2228 = vadd.f32 %v2226, %v585
        %v2229 = vadd.f32 %v2227, %v585
        %v2231 = vsel %vm1010, %v1835, 0
        %2233 = vmatprep.subr.mxu0 0.0
        %2234 = vmatpush1.xpose.msra.mxu0 0.0
        %2235 = vmatprep.subr.mxu0 0.0
        %2236 = vmatpush1.xpose.msra.mxu0 0.0
        %2237 = vmatprep.subr.mxu0 0.0
        %2238 = vmatpush1.xpose.msra.mxu0 0.0
        %2239 = vmatprep.subr.mxu0 0.0
        %2240 = vmatpush1.xpose.msra.mxu0 0.0
        %2241 = vmatprep.subr.mxu0 0.0
        %2242 = vmatpush1.xpose.msra.mxu0 0.0
        %2243 = vmatprep.subr.mxu0 0.0
        %2244 = vmatpush1.xpose.msra.mxu0 0.0
        %2245 = vmatprep.subr.mxu0 0.0
        %2246 = vmatpush1.xpose.msra.mxu0 0.0
        %2247 = vmatprep.subr.mxu0 0.0
        %2248 = vmatpush1.xpose.msra.mxu0 0.0
        %2249 = vmatprep.subr.mxu0 0.0
        %2250 = vmatpush1.xpose.msra.mxu0 0.0
        %2251 = vmatprep.subr.mxu0 0.0
        %2252 = vmatpush1.xpose.msra.mxu0 0.0
        %2253 = vmatprep.subr.mxu0 0.0
        %2254 = vmatpush1.xpose.msra.mxu0 0.0
        %2255 = vmatprep.subr.mxu0 0.0
        %2256 = vmatpush1.xpose.msra.mxu0 0.0
        %2257 = vmatprep.subr.mxu0 0.0
        %2258 = vmatpush1.xpose.msra.mxu0 0.0
        %2259 = vmatprep.subr.mxu0 0.0
        %2260 = vmatpush1.xpose.msra.mxu0 0.0
        %2261 = vmatprep.subr.mxu0 0.0
        %2262 = vmatpush1.xpose.msra.mxu0 0.0
        %2263 = vmatprep.subr.mxu0 0.0
        %2264 = vmatpush1.xpose.msra.mxu0 %v2231
        %2265 = vmatprep.subr.mxu0 0.0
        %2266 = vmatpush2.xpose.msra.mxu0 0.0
        %2267 = vmatprep.subr.mxu0 0.0
        %2268 = vmatpush2.xpose.msra.mxu0 0.0
        %2269 = vmatprep.subr.mxu0 0.0
        %2270 = vmatpush2.xpose.msra.mxu0 0.0
        %2271 = vmatprep.subr.mxu0 0.0
        %2272 = vmatpush2.xpose.msra.mxu0 0.0
        %2273 = vmatprep.subr.mxu0 0.0
        %2274 = vmatpush2.xpose.msra.mxu0 0.0
        %2275 = vmatprep.subr.mxu0 0.0
        %2276 = vmatpush2.xpose.msra.mxu0 0.0
        %2277 = vmatprep.subr.mxu0 0.0
        %2278 = vmatpush2.xpose.msra.mxu0 0.0
        %2279 = vmatprep.subr.mxu0 0.0
        %2280 = vmatpush2.xpose.msra.mxu0 0.0
        %2281 = vmatprep.subr.mxu0 0.0
        %2282 = vmatpush2.xpose.msra.mxu0 0.0
        %2283 = vmatprep.subr.mxu0 0.0
        %2284 = vmatpush2.xpose.msra.mxu0 0.0
        %2285 = vmatprep.subr.mxu0 0.0
        %2286 = vmatpush2.xpose.msra.mxu0 0.0
        %2287 = vmatprep.subr.mxu0 0.0
        %2288 = vmatpush2.xpose.msra.mxu0 0.0
        %2289 = vmatprep.subr.mxu0 0.0
        %2290 = vmatpush2.xpose.msra.mxu0 0.0
        %2291 = vmatprep.subr.mxu0 0.0
        %2292 = vmatpush2.xpose.msra.mxu0 0.0
        %2293 = vmatprep.subr.mxu0 0.0
        %2294 = vmatpush2.xpose.msra.mxu0 0.0
        %2295 = vmatprep.subr.mxu0 0.0
        %2296 = vmatpush2.xpose.msra.mxu0 0.0
        %2297 = vmatprep.mubr.f32.mxu0 0.0
        %2298 = vmatmul.mubr.f32.gmra.mxu0 %v2075
        %v2299 = vpop.f32.mrf.mxu0
        %v2300 = vadd.f32 0.0, %v2299
        %v2301 = vpop.f32.mrf.mxu0
        %2302 = vdwg.mxu0
        %v2304 = vsel %vm1010, %v1840, 0
        %2306 = vmatprep.subr.mxu0 0.0
        %2307 = vmatpush1.xpose.msra.mxu0 0.0
        %2308 = vmatprep.subr.mxu0 0.0
        %2309 = vmatpush1.xpose.msra.mxu0 0.0
        %2310 = vmatprep.subr.mxu0 0.0
        %2311 = vmatpush1.xpose.msra.mxu0 0.0
        %2312 = vmatprep.subr.mxu0 0.0
        %2313 = vmatpush1.xpose.msra.mxu0 0.0
        %2314 = vmatprep.subr.mxu0 0.0
        %2315 = vmatpush1.xpose.msra.mxu0 0.0
        %2316 = vmatprep.subr.mxu0 0.0
        %2317 = vmatpush1.xpose.msra.mxu0 0.0
        %2318 = vmatprep.subr.mxu0 0.0
        %2319 = vmatpush1.xpose.msra.mxu0 0.0
        %2320 = vmatprep.subr.mxu0 0.0
        %2321 = vmatpush1.xpose.msra.mxu0 0.0
        %2322 = vmatprep.subr.mxu0 0.0
        %2323 = vmatpush1.xpose.msra.mxu0 0.0
        %2324 = vmatprep.subr.mxu0 0.0
        %2325 = vmatpush1.xpose.msra.mxu0 0.0
        %2326 = vmatprep.subr.mxu0 0.0
        %2327 = vmatpush1.xpose.msra.mxu0 0.0
        %2328 = vmatprep.subr.mxu0 0.0
        %2329 = vmatpush1.xpose.msra.mxu0 0.0
        %2330 = vmatprep.subr.mxu0 0.0
        %2331 = vmatpush1.xpose.msra.mxu0 0.0
        %2332 = vmatprep.subr.mxu0 0.0
        %2333 = vmatpush1.xpose.msra.mxu0 0.0
        %2334 = vmatprep.subr.mxu0 0.0
        %2335 = vmatpush1.xpose.msra.mxu0 0.0
        %2336 = vmatprep.subr.mxu0 0.0
        %2337 = vmatpush1.xpose.msra.mxu0 %v2304
        %2338 = vmatprep.subr.mxu0 0.0
        %2339 = vmatpush2.xpose.msra.mxu0 0.0
        %2340 = vmatprep.subr.mxu0 0.0
        %2341 = vmatpush2.xpose.msra.mxu0 0.0
        %2342 = vmatprep.subr.mxu0 0.0
        %2343 = vmatpush2.xpose.msra.mxu0 0.0
        %2344 = vmatprep.subr.mxu0 0.0
        %2345 = vmatpush2.xpose.msra.mxu0 0.0
        %2346 = vmatprep.subr.mxu0 0.0
        %2347 = vmatpush2.xpose.msra.mxu0 0.0
        %2348 = vmatprep.subr.mxu0 0.0
        %2349 = vmatpush2.xpose.msra.mxu0 0.0
        %2350 = vmatprep.subr.mxu0 0.0
        %2351 = vmatpush2.xpose.msra.mxu0 0.0
        %2352 = vmatprep.subr.mxu0 0.0
        %2353 = vmatpush2.xpose.msra.mxu0 0.0
        %2354 = vmatprep.subr.mxu0 0.0
        %2355 = vmatpush2.xpose.msra.mxu0 0.0
        %2356 = vmatprep.subr.mxu0 0.0
        %2357 = vmatpush2.xpose.msra.mxu0 0.0
        %2358 = vmatprep.subr.mxu0 0.0
        %2359 = vmatpush2.xpose.msra.mxu0 0.0
        %2360 = vmatprep.subr.mxu0 0.0
        %2361 = vmatpush2.xpose.msra.mxu0 0.0
        %2362 = vmatprep.subr.mxu0 0.0
        %2363 = vmatpush2.xpose.msra.mxu0 0.0
        %2364 = vmatprep.subr.mxu0 0.0
        %2365 = vmatpush2.xpose.msra.mxu0 0.0
        %2366 = vmatprep.subr.mxu0 0.0
        %2367 = vmatpush2.xpose.msra.mxu0 0.0
        %2368 = vmatprep.subr.mxu0 0.0
        %2369 = vmatpush2.xpose.msra.mxu0 0.0
        %2370 = vmatprep.mubr.f32.mxu0 0.0
        %2371 = vmatmul.mubr.f32.gmra.mxu0 %v2151
        %v2372 = vpop.f32.mrf.mxu0
        %v2373 = vadd.f32 0.0, %v2372
        %v2374 = vpop.f32.mrf.mxu0
        %2375 = vdwg.mxu0
        %v2376 = vmul.f32 %v2300, 0.35355338
        %v2377 = vmul.f32 %v2373, 0.35355338
        %v2378 = vadd.f32 %v2376, %v584
        %v2379 = vadd.f32 %v2377, %v584
        %v2380 = vsel %vm1010, %v2228, -inf
        %2381 = vmax.xlane.f32.xlu0 %v2380
        %v2382 = vpop.xlane.xlu0 %2381
        %v2383 = vsel %vm1010, %v2229, -inf
        %2384 = vmax.xlane.f32.xlu0 %v2383
        %v2385 = vpop.xlane.xlu0 %2384
        %v2386 = vsel %vm1010, %v2378, -inf
        %2387 = vmax.xlane.f32.xlu0 %v2386
        %v2388 = vpop.xlane.xlu0 %2387
        %v2389 = vsel %vm1010, %v2379, -inf
        %2390 = vmax.xlane.f32.xlu0 %v2389
        %v2391 = vpop.xlane.xlu0 %2390
        %v2392 = vmax.f32 %v2382, %v2388
        %v2393 = vmax.f32 %v2385, %v2391
        %v2394 = vsub.f32 %v2228, %v2392
        %v2395 = vsub.f32 %v2229, %v2393
        %v2396 = vmul.f32 %v2394, 1.442695
        %v2397 = vpow.pop %v2396
        %v2398 = vmul.f32 %v2395, 1.442695
        %v2399 = vpow.pop %v2398
        %v2400 = vsub.f32 %v2378, %v2392
        %v2401 = vsub.f32 %v2379, %v2393
        %v2402 = vmul.f32 %v2400, 1.442695
        %v2403 = vpow.pop %v2402
        %v2404 = vmul.f32 %v2401, 1.442695
        %v2405 = vpow.pop %v2404
        %v2406 = vsel %vm1010, %v2397, 0.0
        %2407 = vadd.xlane.f32.xlu0 %v2406
        %v2408 = vpop.xlane.xlu0 %2407
        %v2409 = vsel %vm1010, %v2399, 0.0
        %2410 = vadd.xlane.f32.xlu0 %v2409
        %v2411 = vpop.xlane.xlu0 %2410
        %v2412 = vsel %vm1010, %v2403, 0.0
        %2413 = vadd.xlane.f32.xlu0 %v2412
        %v2414 = vpop.xlane.xlu0 %2413
        %v2415 = vsel %vm1010, %v2405, 0.0
        %2416 = vadd.xlane.f32.xlu0 %v2415
        %v2417 = vpop.xlane.xlu0 %2416
        %v2418 = vadd.f32 %v2408, %v2414
        %v2419 = vadd.f32 %v2411, %v2417
        %v2420 = vrcp.pop %v2418
        %v2421 = vrcp.pop %v2419
        %v2422 = vmul.f32 %v2418, %v2420
        %v2423 = vmul.f32 %v2419, %v2421
        %v2424 = vsub.f32 2.0, %v2422
        %v2425 = vsub.f32 2.0, %v2423
        %v2426 = vmul.f32 %v2420, %v2424
        %v2427 = vmul.f32 %v2421, %v2425
        %v2429 = vsel %vm1010, %v2403, 0
        %2431 = vmatprep.subr.mxu0 0.0
        %2432 = vmatpush1.msra.mxu0 0.0
        %2433 = vmatprep.subr.mxu0 0.0
        %2434 = vmatpush1.msra.mxu0 0.0
        %2435 = vmatprep.subr.mxu0 0.0
        %2436 = vmatpush1.msra.mxu0 0.0
        %2437 = vmatprep.subr.mxu0 0.0
        %2438 = vmatpush1.msra.mxu0 0.0
        %2439 = vmatprep.subr.mxu0 0.0
        %2440 = vmatpush1.msra.mxu0 0.0
        %2441 = vmatprep.subr.mxu0 0.0
        %2442 = vmatpush1.msra.mxu0 0.0
        %2443 = vmatprep.subr.mxu0 0.0
        %2444 = vmatpush1.msra.mxu0 0.0
        %2445 = vmatprep.subr.mxu0 0.0
        %2446 = vmatpush1.msra.mxu0 0.0
        %2447 = vmatprep.subr.mxu0 0.0
        %2448 = vmatpush1.msra.mxu0 0.0
        %2449 = vmatprep.subr.mxu0 0.0
        %2450 = vmatpush1.msra.mxu0 0.0
        %2451 = vmatprep.subr.mxu0 0.0
        %2452 = vmatpush1.msra.mxu0 0.0
        %2453 = vmatprep.subr.mxu0 0.0
        %2454 = vmatpush1.msra.mxu0 0.0
        %2455 = vmatprep.subr.mxu0 0.0
        %2456 = vmatpush1.msra.mxu0 0.0
        %2457 = vmatprep.subr.mxu0 0.0
        %2458 = vmatpush1.msra.mxu0 0.0
        %2459 = vmatprep.subr.mxu0 0.0
        %2460 = vmatpush1.msra.mxu0 0.0
        %2461 = vmatprep.subr.mxu0 0.0
        %2462 = vmatpush1.msra.mxu0 %v1916
        %2463 = vmatprep.subr.mxu0 0.0
        %2464 = vmatpush2.msra.mxu0 0.0
        %2465 = vmatprep.subr.mxu0 0.0
        %2466 = vmatpush2.msra.mxu0 0.0
        %2467 = vmatprep.subr.mxu0 0.0
        %2468 = vmatpush2.msra.mxu0 0.0
        %2469 = vmatprep.subr.mxu0 0.0
        %2470 = vmatpush2.msra.mxu0 0.0
        %2471 = vmatprep.subr.mxu0 0.0
        %2472 = vmatpush2.msra.mxu0 0.0
        %2473 = vmatprep.subr.mxu0 0.0
        %2474 = vmatpush2.msra.mxu0 0.0
        %2475 = vmatprep.subr.mxu0 0.0
        %2476 = vmatpush2.msra.mxu0 0.0
        %2477 = vmatprep.subr.mxu0 0.0
        %2478 = vmatpush2.msra.mxu0 0.0
        %2479 = vmatprep.subr.mxu0 0.0
        %2480 = vmatpush2.msra.mxu0 0.0
        %2481 = vmatprep.subr.mxu0 0.0
        %2482 = vmatpush2.msra.mxu0 0.0
        %2483 = vmatprep.subr.mxu0 0.0
        %2484 = vmatpush2.msra.mxu0 0.0
        %2485 = vmatprep.subr.mxu0 0.0
        %2486 = vmatpush2.msra.mxu0 0.0
        %2487 = vmatprep.subr.mxu0 0.0
        %2488 = vmatpush2.msra.mxu0 0.0
        %2489 = vmatprep.subr.mxu0 0.0
        %2490 = vmatpush2.msra.mxu0 0.0
        %2491 = vmatprep.subr.mxu0 0.0
        %2492 = vmatpush2.msra.mxu0 0.0
        %2493 = vmatprep.subr.mxu0 0.0
        %2494 = vmatpush2.msra.mxu0 0.0
        %2495 = vmatprep.mubr.f32.mxu0 0.0
        %2496 = vmatmul.mubr.f32.gmra.mxu0 %v2429
        %v2497 = vpop.f32.mrf.mxu0
        %v2498 = vadd.f32 0.0, %v2497
        %v2499 = vpop.f32.mrf.mxu0
        %2500 = vdwg.mxu0
        %v2502 = vsel %vm1010, %v2405, 0
        %2504 = vmatprep.subr.mxu0 0.0
        %2505 = vmatpush1.msra.mxu0 0.0
        %2506 = vmatprep.subr.mxu0 0.0
        %2507 = vmatpush1.msra.mxu0 0.0
        %2508 = vmatprep.subr.mxu0 0.0
        %2509 = vmatpush1.msra.mxu0 0.0
        %2510 = vmatprep.subr.mxu0 0.0
        %2511 = vmatpush1.msra.mxu0 0.0
        %2512 = vmatprep.subr.mxu0 0.0
        %2513 = vmatpush1.msra.mxu0 0.0
        %2514 = vmatprep.subr.mxu0 0.0
        %2515 = vmatpush1.msra.mxu0 0.0
        %2516 = vmatprep.subr.mxu0 0.0
        %2517 = vmatpush1.msra.mxu0 0.0
        %2518 = vmatprep.subr.mxu0 0.0
        %2519 = vmatpush1.msra.mxu0 0.0
        %2520 = vmatprep.subr.mxu0 0.0
        %2521 = vmatpush1.msra.mxu0 0.0
        %2522 = vmatprep.subr.mxu0 0.0
        %2523 = vmatpush1.msra.mxu0 0.0
        %2524 = vmatprep.subr.mxu0 0.0
        %2525 = vmatpush1.msra.mxu0 0.0
        %2526 = vmatprep.subr.mxu0 0.0
        %2527 = vmatpush1.msra.mxu0 0.0
        %2528 = vmatprep.subr.mxu0 0.0
        %2529 = vmatpush1.msra.mxu0 0.0
        %2530 = vmatprep.subr.mxu0 0.0
        %2531 = vmatpush1.msra.mxu0 0.0
        %2532 = vmatprep.subr.mxu0 0.0
        %2533 = vmatpush1.msra.mxu0 0.0
        %2534 = vmatprep.subr.mxu0 0.0
        %2535 = vmatpush1.msra.mxu0 %v1921
        %2536 = vmatprep.subr.mxu0 0.0
        %2537 = vmatpush2.msra.mxu0 0.0
        %2538 = vmatprep.subr.mxu0 0.0
        %2539 = vmatpush2.msra.mxu0 0.0
        %2540 = vmatprep.subr.mxu0 0.0
        %2541 = vmatpush2.msra.mxu0 0.0
        %2542 = vmatprep.subr.mxu0 0.0
        %2543 = vmatpush2.msra.mxu0 0.0
        %2544 = vmatprep.subr.mxu0 0.0
        %2545 = vmatpush2.msra.mxu0 0.0
        %2546 = vmatprep.subr.mxu0 0.0
        %2547 = vmatpush2.msra.mxu0 0.0
        %2548 = vmatprep.subr.mxu0 0.0
        %2549 = vmatpush2.msra.mxu0 0.0
        %2550 = vmatprep.subr.mxu0 0.0
        %2551 = vmatpush2.msra.mxu0 0.0
        %2552 = vmatprep.subr.mxu0 0.0
        %2553 = vmatpush2.msra.mxu0 0.0
        %2554 = vmatprep.subr.mxu0 0.0
        %2555 = vmatpush2.msra.mxu0 0.0
        %2556 = vmatprep.subr.mxu0 0.0
        %2557 = vmatpush2.msra.mxu0 0.0
        %2558 = vmatprep.subr.mxu0 0.0
        %2559 = vmatpush2.msra.mxu0 0.0
        %2560 = vmatprep.subr.mxu0 0.0
        %2561 = vmatpush2.msra.mxu0 0.0
        %2562 = vmatprep.subr.mxu0 0.0
        %2563 = vmatpush2.msra.mxu0 0.0
        %2564 = vmatprep.subr.mxu0 0.0
        %2565 = vmatpush2.msra.mxu0 0.0
        %2566 = vmatprep.subr.mxu0 0.0
        %2567 = vmatpush2.msra.mxu0 0.0
        %2568 = vmatprep.mubr.f32.mxu0 0.0
        %2569 = vmatmul.mubr.f32.gmra.mxu0 %v2502
        %v2570 = vpop.f32.mrf.mxu0
        %v2571 = vadd.f32 0.0, %v2570
        %v2572 = vpop.f32.mrf.mxu0
        %2573 = vdwg.mxu0
        %v2575 = vsel %vm1010, %v2397, 0
        %2577 = vmatprep.subr.mxu0 0.0
        %2578 = vmatpush1.msra.mxu0 0.0
        %2579 = vmatprep.subr.mxu0 0.0
        %2580 = vmatpush1.msra.mxu0 0.0
        %2581 = vmatprep.subr.mxu0 0.0
        %2582 = vmatpush1.msra.mxu0 0.0
        %2583 = vmatprep.subr.mxu0 0.0
        %2584 = vmatpush1.msra.mxu0 0.0
        %2585 = vmatprep.subr.mxu0 0.0
        %2586 = vmatpush1.msra.mxu0 0.0
        %2587 = vmatprep.subr.mxu0 0.0
        %2588 = vmatpush1.msra.mxu0 0.0
        %2589 = vmatprep.subr.mxu0 0.0
        %2590 = vmatpush1.msra.mxu0 0.0
        %2591 = vmatprep.subr.mxu0 0.0
        %2592 = vmatpush1.msra.mxu0 0.0
        %2593 = vmatprep.subr.mxu0 0.0
        %2594 = vmatpush1.msra.mxu0 0.0
        %2595 = vmatprep.subr.mxu0 0.0
        %2596 = vmatpush1.msra.mxu0 0.0
        %2597 = vmatprep.subr.mxu0 0.0
        %2598 = vmatpush1.msra.mxu0 0.0
        %2599 = vmatprep.subr.mxu0 0.0
        %2600 = vmatpush1.msra.mxu0 0.0
        %2601 = vmatprep.subr.mxu0 0.0
        %2602 = vmatpush1.msra.mxu0 0.0
        %2603 = vmatprep.subr.mxu0 0.0
        %2604 = vmatpush1.msra.mxu0 0.0
        %2605 = vmatprep.subr.mxu0 0.0
        %2606 = vmatpush1.msra.mxu0 0.0
        %2607 = vmatprep.subr.mxu0 0.0
        %2608 = vmatpush1.msra.mxu0 %v2066
        %2609 = vmatprep.subr.mxu0 0.0
        %2610 = vmatpush2.msra.mxu0 0.0
        %2611 = vmatprep.subr.mxu0 0.0
        %2612 = vmatpush2.msra.mxu0 0.0
        %2613 = vmatprep.subr.mxu0 0.0
        %2614 = vmatpush2.msra.mxu0 0.0
        %2615 = vmatprep.subr.mxu0 0.0
        %2616 = vmatpush2.msra.mxu0 0.0
        %2617 = vmatprep.subr.mxu0 0.0
        %2618 = vmatpush2.msra.mxu0 0.0
        %2619 = vmatprep.subr.mxu0 0.0
        %2620 = vmatpush2.msra.mxu0 0.0
        %2621 = vmatprep.subr.mxu0 0.0
        %2622 = vmatpush2.msra.mxu0 0.0
        %2623 = vmatprep.subr.mxu0 0.0
        %2624 = vmatpush2.msra.mxu0 0.0
        %2625 = vmatprep.subr.mxu0 0.0
        %2626 = vmatpush2.msra.mxu0 0.0
        %2627 = vmatprep.subr.mxu0 0.0
        %2628 = vmatpush2.msra.mxu0 0.0
        %2629 = vmatprep.subr.mxu0 0.0
        %2630 = vmatpush2.msra.mxu0 0.0
        %2631 = vmatprep.subr.mxu0 0.0
        %2632 = vmatpush2.msra.mxu0 0.0
        %2633 = vmatprep.subr.mxu0 0.0
        %2634 = vmatpush2.msra.mxu0 0.0
        %2635 = vmatprep.subr.mxu0 0.0
        %2636 = vmatpush2.msra.mxu0 0.0
        %2637 = vmatprep.subr.mxu0 0.0
        %2638 = vmatpush2.msra.mxu0 0.0
        %2639 = vmatprep.subr.mxu0 0.0
        %2640 = vmatpush2.msra.mxu0 0.0
        %2641 = vmatprep.mubr.f32.mxu0 0.0
        %2642 = vmatmul.mubr.f32.gmra.mxu0 %v2575
        %v2643 = vpop.f32.mrf.mxu0
        %v2644 = vadd.f32 %v2498, %v2643
        %v2645 = vpop.f32.mrf.mxu0
        %2646 = vdwg.mxu0
        %v2648 = vsel %vm1010, %v2399, 0
        %2650 = vmatprep.subr.mxu0 0.0
        %2651 = vmatpush1.msra.mxu0 0.0
        %2652 = vmatprep.subr.mxu0 0.0
        %2653 = vmatpush1.msra.mxu0 0.0
        %2654 = vmatprep.subr.mxu0 0.0
        %2655 = vmatpush1.msra.mxu0 0.0
        %2656 = vmatprep.subr.mxu0 0.0
        %2657 = vmatpush1.msra.mxu0 0.0
        %2658 = vmatprep.subr.mxu0 0.0
        %2659 = vmatpush1.msra.mxu0 0.0
        %2660 = vmatprep.subr.mxu0 0.0
        %2661 = vmatpush1.msra.mxu0 0.0
        %2662 = vmatprep.subr.mxu0 0.0
        %2663 = vmatpush1.msra.mxu0 0.0
        %2664 = vmatprep.subr.mxu0 0.0
        %2665 = vmatpush1.msra.mxu0 0.0
        %2666 = vmatprep.subr.mxu0 0.0
        %2667 = vmatpush1.msra.mxu0 0.0
        %2668 = vmatprep.subr.mxu0 0.0
        %2669 = vmatpush1.msra.mxu0 0.0
        %2670 = vmatprep.subr.mxu0 0.0
        %2671 = vmatpush1.msra.mxu0 0.0
        %2672 = vmatprep.subr.mxu0 0.0
        %2673 = vmatpush1.msra.mxu0 0.0
        %2674 = vmatprep.subr.mxu0 0.0
        %2675 = vmatpush1.msra.mxu0 0.0
        %2676 = vmatprep.subr.mxu0 0.0
        %2677 = vmatpush1.msra.mxu0 0.0
        %2678 = vmatprep.subr.mxu0 0.0
        %2679 = vmatpush1.msra.mxu0 0.0
        %2680 = vmatprep.subr.mxu0 0.0
        %2681 = vmatpush1.msra.mxu0 %v2071
        %2682 = vmatprep.subr.mxu0 0.0
        %2683 = vmatpush2.msra.mxu0 0.0
        %2684 = vmatprep.subr.mxu0 0.0
        %2685 = vmatpush2.msra.mxu0 0.0
        %2686 = vmatprep.subr.mxu0 0.0
        %2687 = vmatpush2.msra.mxu0 0.0
        %2688 = vmatprep.subr.mxu0 0.0
        %2689 = vmatpush2.msra.mxu0 0.0
        %2690 = vmatprep.subr.mxu0 0.0
        %2691 = vmatpush2.msra.mxu0 0.0
        %2692 = vmatprep.subr.mxu0 0.0
        %2693 = vmatpush2.msra.mxu0 0.0
        %2694 = vmatprep.subr.mxu0 0.0
        %2695 = vmatpush2.msra.mxu0 0.0
        %2696 = vmatprep.subr.mxu0 0.0
        %2697 = vmatpush2.msra.mxu0 0.0
        %2698 = vmatprep.subr.mxu0 0.0
        %2699 = vmatpush2.msra.mxu0 0.0
        %2700 = vmatprep.subr.mxu0 0.0
        %2701 = vmatpush2.msra.mxu0 0.0
        %2702 = vmatprep.subr.mxu0 0.0
        %2703 = vmatpush2.msra.mxu0 0.0
        %2704 = vmatprep.subr.mxu0 0.0
        %2705 = vmatpush2.msra.mxu0 0.0
        %2706 = vmatprep.subr.mxu0 0.0
        %2707 = vmatpush2.msra.mxu0 0.0
        %2708 = vmatprep.subr.mxu0 0.0
        %2709 = vmatpush2.msra.mxu0 0.0
        %2710 = vmatprep.subr.mxu0 0.0
        %2711 = vmatpush2.msra.mxu0 0.0
        %2712 = vmatprep.subr.mxu0 0.0
        %2713 = vmatpush2.msra.mxu0 0.0
        %2714 = vmatprep.mubr.f32.mxu0 0.0
        %2715 = vmatmul.mubr.f32.gmra.mxu0 %v2648
        %v2716 = vpop.f32.mrf.mxu0
        %v2717 = vadd.f32 %v2571, %v2716
        %v2718 = vpop.f32.mrf.mxu0
        %2719 = vdwg.mxu0
        %v2720 = vmul.f32 %v2644, %v2426
        %v2721 = vmul.f32 %v2717, %v2427
        %s2722 = scalar_lea.vmem %s524, 8
        %v2723 = vld [vmem:[%s2722] sm:$0xff]
        %v2725 = vsel %vm1010, %v2720, 0
        %v2728 = vsel %vm1010, %v2721, 0
        %2730 = vmatprep.subr.mxu0 0.0
        %2731 = vmatpush1.msra.mxu0 0.0
        %2732 = vmatprep.subr.mxu0 0.0
        %2733 = vmatpush1.msra.mxu0 0.0
        %2734 = vmatprep.subr.mxu0 0.0
        %2735 = vmatpush1.msra.mxu0 0.0
        %2736 = vmatprep.subr.mxu0 0.0
        %2737 = vmatpush1.msra.mxu0 0.0
        %2738 = vmatprep.subr.mxu0 0.0
        %2739 = vmatpush1.msra.mxu0 0.0
        %2740 = vmatprep.subr.mxu0 0.0
        %2741 = vmatpush1.msra.mxu0 0.0
        %2742 = vmatprep.subr.mxu0 0.0
        %2743 = vmatpush1.msra.mxu0 0.0
        %2744 = vmatprep.subr.mxu0 0.0
        %2745 = vmatpush1.msra.mxu0 0.0
        %2746 = vmatprep.subr.mxu0 0.0
        %2747 = vmatpush1.msra.mxu0 0.0
        %2748 = vmatprep.subr.mxu0 0.0
        %2749 = vmatpush1.msra.mxu0 0.0
        %2750 = vmatprep.subr.mxu0 0.0
        %2751 = vmatpush1.msra.mxu0 0.0
        %2752 = vmatprep.subr.mxu0 0.0
        %2753 = vmatpush1.msra.mxu0 0.0
        %2754 = vmatprep.subr.mxu0 0.0
        %2755 = vmatpush1.msra.mxu0 0.0
        %2756 = vmatprep.subr.mxu0 0.0
        %2757 = vmatpush1.msra.mxu0 0.0
        %2758 = vmatprep.subr.mxu0 0.0
        %2759 = vmatpush1.msra.mxu0 0.0
        %2760 = vmatprep.subr.mxu0 0.0
        %2761 = vmatpush1.msra.mxu0 %v2723
        %2762 = vmatprep.subr.mxu0 0.0
        %2763 = vmatpush2.msra.mxu0 0.0
        %2764 = vmatprep.subr.mxu0 0.0
        %2765 = vmatpush2.msra.mxu0 0.0
        %2766 = vmatprep.subr.mxu0 0.0
        %2767 = vmatpush2.msra.mxu0 0.0
        %2768 = vmatprep.subr.mxu0 0.0
        %2769 = vmatpush2.msra.mxu0 0.0
        %2770 = vmatprep.subr.mxu0 0.0
        %2771 = vmatpush2.msra.mxu0 0.0
        %2772 = vmatprep.subr.mxu0 0.0
        %2773 = vmatpush2.msra.mxu0 0.0
        %2774 = vmatprep.subr.mxu0 0.0
        %2775 = vmatpush2.msra.mxu0 0.0
        %2776 = vmatprep.subr.mxu0 0.0
        %2777 = vmatpush2.msra.mxu0 0.0
        %2778 = vmatprep.subr.mxu0 0.0
        %2779 = vmatpush2.msra.mxu0 0.0
        %2780 = vmatprep.subr.mxu0 0.0
        %2781 = vmatpush2.msra.mxu0 0.0
        %2782 = vmatprep.subr.mxu0 0.0
        %2783 = vmatpush2.msra.mxu0 0.0
        %2784 = vmatprep.subr.mxu0 0.0
        %2785 = vmatpush2.msra.mxu0 0.0
        %2786 = vmatprep.subr.mxu0 0.0
        %2787 = vmatpush2.msra.mxu0 0.0
        %2788 = vmatprep.subr.mxu0 0.0
        %2789 = vmatpush2.msra.mxu0 0.0
        %2790 = vmatprep.subr.mxu0 0.0
        %2791 = vmatpush2.msra.mxu0 0.0
        %2792 = vmatprep.subr.mxu0 0.0
        %2793 = vmatpush2.msra.mxu0 0.0
        %2794 = vmatprep.mubr.f32.mxu0 0.0
        %2795 = vmatmul.mubr.f32.gmra.mxu0 %v2725
        %v2796 = vpop.f32.mrf.mxu0
        %v2797 = vadd.f32 0.0, %v2796
        %v2798 = vpop.f32.mrf.mxu0
        %2799 = vmatprep.mubr.f32.mxu0 0.0
        %2800 = vmatmul.mubr.f32.gmra.mxu0 %v2728
        %v2801 = vpop.f32.mrf.mxu0
        %v2802 = vadd.f32 0.0, %v2801
        %v2803 = vpop.f32.mrf.mxu0
        %2804 = vdwg.mxu0
        %v2806 = vsel %vm1010, %v1657, 0
        %v2809 = vsel %vm1010, %v1658, 0
        %2811 = vmatprep.subr.mxu0 0.0
        %2812 = vmatpush1.msra.mxu0 0.0
        %2813 = vmatprep.subr.mxu0 0.0
        %2814 = vmatpush1.msra.mxu0 0.0
        %2815 = vmatprep.subr.mxu0 0.0
        %2816 = vmatpush1.msra.mxu0 0.0
        %2817 = vmatprep.subr.mxu0 0.0
        %2818 = vmatpush1.msra.mxu0 0.0
        %2819 = vmatprep.subr.mxu0 0.0
        %2820 = vmatpush1.msra.mxu0 0.0
        %2821 = vmatprep.subr.mxu0 0.0
        %2822 = vmatpush1.msra.mxu0 0.0
        %2823 = vmatprep.subr.mxu0 0.0
        %2824 = vmatpush1.msra.mxu0 0.0
        %2825 = vmatprep.subr.mxu0 0.0
        %2826 = vmatpush1.msra.mxu0 0.0
        %2827 = vmatprep.subr.mxu0 0.0
        %2828 = vmatpush1.msra.mxu0 0.0
        %2829 = vmatprep.subr.mxu0 0.0
        %2830 = vmatpush1.msra.mxu0 0.0
        %2831 = vmatprep.subr.mxu0 0.0
        %2832 = vmatpush1.msra.mxu0 0.0
        %2833 = vmatprep.subr.mxu0 0.0
        %2834 = vmatpush1.msra.mxu0 0.0
        %2835 = vmatprep.subr.mxu0 0.0
        %2836 = vmatpush1.msra.mxu0 0.0
        %2837 = vmatprep.subr.mxu0 0.0
        %2838 = vmatpush1.msra.mxu0 0.0
        %2839 = vmatprep.subr.mxu0 0.0
        %2840 = vmatpush1.msra.mxu0 0.0
        %2841 = vmatprep.subr.mxu0 0.0
        %2842 = vmatpush1.msra.mxu0 %v1659
        %2843 = vmatprep.subr.mxu0 0.0
        %2844 = vmatpush2.msra.mxu0 0.0
        %2845 = vmatprep.subr.mxu0 0.0
        %2846 = vmatpush2.msra.mxu0 0.0
        %2847 = vmatprep.subr.mxu0 0.0
        %2848 = vmatpush2.msra.mxu0 0.0
        %2849 = vmatprep.subr.mxu0 0.0
        %2850 = vmatpush2.msra.mxu0 0.0
        %2851 = vmatprep.subr.mxu0 0.0
        %2852 = vmatpush2.msra.mxu0 0.0
        %2853 = vmatprep.subr.mxu0 0.0
        %2854 = vmatpush2.msra.mxu0 0.0
        %2855 = vmatprep.subr.mxu0 0.0
        %2856 = vmatpush2.msra.mxu0 0.0
        %2857 = vmatprep.subr.mxu0 0.0
        %2858 = vmatpush2.msra.mxu0 0.0
        %2859 = vmatprep.subr.mxu0 0.0
        %2860 = vmatpush2.msra.mxu0 0.0
        %2861 = vmatprep.subr.mxu0 0.0
        %2862 = vmatpush2.msra.mxu0 0.0
        %2863 = vmatprep.subr.mxu0 0.0
        %2864 = vmatpush2.msra.mxu0 0.0
        %2865 = vmatprep.subr.mxu0 0.0
        %2866 = vmatpush2.msra.mxu0 0.0
        %2867 = vmatprep.subr.mxu0 0.0
        %2868 = vmatpush2.msra.mxu0 0.0
        %2869 = vmatprep.subr.mxu0 0.0
        %2870 = vmatpush2.msra.mxu0 0.0
        %2871 = vmatprep.subr.mxu0 0.0
        %2872 = vmatpush2.msra.mxu0 0.0
        %2873 = vmatprep.subr.mxu0 0.0
        %2874 = vmatpush2.msra.mxu0 0.0
        %2875 = vmatprep.mubr.f32.mxu0 0.0
        %2876 = vmatmul.mubr.f32.gmra.mxu0 %v2806
        %v2877 = vpop.f32.mrf.mxu0
        %v2878 = vadd.f32 %v2797, %v2877
        %v2879 = vpop.f32.mrf.mxu0
        %2880 = vmatprep.mubr.f32.mxu0 0.0
        %2881 = vmatmul.mubr.f32.gmra.mxu0 %v2809
        %v2882 = vpop.f32.mrf.mxu0
        %v2883 = vadd.f32 %v2802, %v2882
        %v2884 = vpop.f32.mrf.mxu0
        %2885 = vdwg.mxu0
        %s2886 = scalar_lea.vmem %s515, 64
        %v2887 = vld [vmem:[%s2886] sm:$0xff]
        %v2888 = vld [vmem:[%s2886 + $0x8] sm:$0xff]
        %v2889 = vld [vmem:[%s2886 + $0x10] sm:$0xff]
        %v2890 = vld [vmem:[%s2886 + $0x18] sm:$0xff]
        %s2891 = scalar_lea.vmem %s515, 192
        %v2892 = vld [vmem:[%s2891] sm:$0xff]
        %v2893 = vld [vmem:[%s2891 + $0x8] sm:$0xff]
        %v2894 = vld [vmem:[%s2891 + $0x10] sm:$0xff]
        %v2895 = vld [vmem:[%s2891 + $0x18] sm:$0xff]
        %s2896 = scalar_lea.vmem %s515, 320
        %v2897 = vld [vmem:[%s2896] sm:$0xff]
        %v2898 = vld [vmem:[%s2896 + $0x8] sm:$0xff]
        %v2899 = vld [vmem:[%s2896 + $0x10] sm:$0xff]
        %v2900 = vld [vmem:[%s2896 + $0x18] sm:$0xff]
        %s2901 = scalar_lea.vmem %s519, 2
        %v2902 = vld [vmem:[%s2901] sm:$0x1]
        %s2903 = scalar_lea.vmem %s519, 6
        %v2904 = vld [vmem:[%s2903] sm:$0x1]
        %s2905 = scalar_lea.vmem %s519, 10
        %v2906 = vld [vmem:[%s2905] sm:$0x1]
        %v2908 = vlaneseq
        %v2909 = vshrl.u32 %v2908, 7
        %v2910 = vsub.s32 0, %v2909
        %v2911 = vrot.slane %v2902, %v2910
        %2913 = vmatprep.subr.mxu0 0.0
        %2914 = vmatpush1.msra.mxu0 0.0
        %2915 = vmatprep.subr.mxu0 0.0
        %2916 = vmatpush1.msra.mxu0 0.0
        %2917 = vmatprep.subr.mxu0 0.0
        %2918 = vmatpush1.msra.mxu0 0.0
        %2919 = vmatprep.subr.mxu0 0.0
        %2920 = vmatpush1.msra.mxu0 0.0
        %2921 = vmatprep.subr.mxu0 0.0
        %2922 = vmatpush1.msra.mxu0 0.0
        %2923 = vmatprep.subr.mxu0 0.0
        %2924 = vmatpush1.msra.mxu0 0.0
        %2925 = vmatprep.subr.mxu0 0.0
        %2926 = vmatpush1.msra.mxu0 0.0
        %2927 = vmatprep.subr.mxu0 0.0
        %2928 = vmatpush1.msra.mxu0 0.0
        %2929 = vmatprep.subr.mxu0 0.0
        %2930 = vmatpush1.msra.mxu0 0.0
        %2931 = vmatprep.subr.mxu0 0.0
        %2932 = vmatpush1.msra.mxu0 0.0
        %2933 = vmatprep.subr.mxu0 0.0
        %2934 = vmatpush1.msra.mxu0 0.0
        %2935 = vmatprep.subr.mxu0 0.0
        %2936 = vmatpush1.msra.mxu0 0.0
        %2937 = vmatprep.subr.mxu0 0.0
        %2938 = vmatpush1.msra.mxu0 %v2890
        %2939 = vmatprep.subr.mxu0 0.0
        %2940 = vmatpush1.msra.mxu0 %v2889
        %2941 = vmatprep.subr.mxu0 0.0
        %2942 = vmatpush1.msra.mxu0 %v2888
        %2943 = vmatprep.subr.mxu0 0.0
        %2944 = vmatpush1.msra.mxu0 %v2887
        %2945 = vmatprep.subr.mxu0 0.0
        %2946 = vmatpush2.msra.mxu0 0.0
        %2947 = vmatprep.subr.mxu0 0.0
        %2948 = vmatpush2.msra.mxu0 0.0
        %2949 = vmatprep.subr.mxu0 0.0
        %2950 = vmatpush2.msra.mxu0 0.0
        %2951 = vmatprep.subr.mxu0 0.0
        %2952 = vmatpush2.msra.mxu0 0.0
        %2953 = vmatprep.subr.mxu0 0.0
        %2954 = vmatpush2.msra.mxu0 0.0
        %2955 = vmatprep.subr.mxu0 0.0
        %2956 = vmatpush2.msra.mxu0 0.0
        %2957 = vmatprep.subr.mxu0 0.0
        %2958 = vmatpush2.msra.mxu0 0.0
        %2959 = vmatprep.subr.mxu0 0.0
        %2960 = vmatpush2.msra.mxu0 0.0
        %2961 = vmatprep.subr.mxu0 0.0
        %2962 = vmatpush2.msra.mxu0 0.0
        %2963 = vmatprep.subr.mxu0 0.0
        %2964 = vmatpush2.msra.mxu0 0.0
        %2965 = vmatprep.subr.mxu0 0.0
        %2966 = vmatpush2.msra.mxu0 0.0
        %2967 = vmatprep.subr.mxu0 0.0
        %2968 = vmatpush2.msra.mxu0 0.0
        %2969 = vmatprep.subr.mxu0 0.0
        %2970 = vmatpush2.msra.mxu0 0.0
        %2971 = vmatprep.subr.mxu0 0.0
        %2972 = vmatpush2.msra.mxu0 0.0
        %2973 = vmatprep.subr.mxu0 0.0
        %2974 = vmatpush2.msra.mxu0 0.0
        %2975 = vmatprep.subr.mxu0 0.0
        %2976 = vmatpush2.msra.mxu0 0.0
        %2977 = vmatprep.mubr.f32.mxu0 0.0
        %2978 = vmatmul.mubr.f32.gmra.mxu0 %v612
        %v2979 = vpop.f32.mrf.mxu0
        %v2980 = vadd.f32 %v2911, %v2979
        %v2981 = vpop.f32.mrf.mxu0
        %2982 = vmatprep.mubr.f32.mxu0 0.0
        %2983 = vmatmul.mubr.f32.gmra.mxu0 %v615
        %v2984 = vpop.f32.mrf.mxu0
        %v2985 = vadd.f32 %v2911, %v2984
        %v2986 = vpop.f32.mrf.mxu0
        %2987 = vdwg.mxu0
        %v2989 = vlaneseq
        %v2990 = vshrl.u32 %v2989, 7
        %v2991 = vsub.s32 0, %v2990
        %v2992 = vrot.slane %v2904, %v2991
        %2994 = vmatprep.subr.mxu0 0.0
        %2995 = vmatpush1.msra.mxu0 0.0
        %2996 = vmatprep.subr.mxu0 0.0
        %2997 = vmatpush1.msra.mxu0 0.0
        %2998 = vmatprep.subr.mxu0 0.0
        %2999 = vmatpush1.msra.mxu0 0.0
        %3000 = vmatprep.subr.mxu0 0.0
        %3001 = vmatpush1.msra.mxu0 0.0
        %3002 = vmatprep.subr.mxu0 0.0
        %3003 = vmatpush1.msra.mxu0 0.0
        %3004 = vmatprep.subr.mxu0 0.0
        %3005 = vmatpush1.msra.mxu0 0.0
        %3006 = vmatprep.subr.mxu0 0.0
        %3007 = vmatpush1.msra.mxu0 0.0
        %3008 = vmatprep.subr.mxu0 0.0
        %3009 = vmatpush1.msra.mxu0 0.0
        %3010 = vmatprep.subr.mxu0 0.0
        %3011 = vmatpush1.msra.mxu0 0.0
        %3012 = vmatprep.subr.mxu0 0.0
        %3013 = vmatpush1.msra.mxu0 0.0
        %3014 = vmatprep.subr.mxu0 0.0
        %3015 = vmatpush1.msra.mxu0 0.0
        %3016 = vmatprep.subr.mxu0 0.0
        %3017 = vmatpush1.msra.mxu0 0.0
        %3018 = vmatprep.subr.mxu0 0.0
        %3019 = vmatpush1.msra.mxu0 %v2895
        %3020 = vmatprep.subr.mxu0 0.0
        %3021 = vmatpush1.msra.mxu0 %v2894
        %3022 = vmatprep.subr.mxu0 0.0
        %3023 = vmatpush1.msra.mxu0 %v2893
        %3024 = vmatprep.subr.mxu0 0.0
        %3025 = vmatpush1.msra.mxu0 %v2892
        %3026 = vmatprep.subr.mxu0 0.0
        %3027 = vmatpush2.msra.mxu0 0.0
        %3028 = vmatprep.subr.mxu0 0.0
        %3029 = vmatpush2.msra.mxu0 0.0
        %3030 = vmatprep.subr.mxu0 0.0
        %3031 = vmatpush2.msra.mxu0 0.0
        %3032 = vmatprep.subr.mxu0 0.0
        %3033 = vmatpush2.msra.mxu0 0.0
        %3034 = vmatprep.subr.mxu0 0.0
        %3035 = vmatpush2.msra.mxu0 0.0
        %3036 = vmatprep.subr.mxu0 0.0
        %3037 = vmatpush2.msra.mxu0 0.0
        %3038 = vmatprep.subr.mxu0 0.0
        %3039 = vmatpush2.msra.mxu0 0.0
        %3040 = vmatprep.subr.mxu0 0.0
        %3041 = vmatpush2.msra.mxu0 0.0
        %3042 = vmatprep.subr.mxu0 0.0
        %3043 = vmatpush2.msra.mxu0 0.0
        %3044 = vmatprep.subr.mxu0 0.0
        %3045 = vmatpush2.msra.mxu0 0.0
        %3046 = vmatprep.subr.mxu0 0.0
        %3047 = vmatpush2.msra.mxu0 0.0
        %3048 = vmatprep.subr.mxu0 0.0
        %3049 = vmatpush2.msra.mxu0 0.0
        %3050 = vmatprep.subr.mxu0 0.0
        %3051 = vmatpush2.msra.mxu0 0.0
        %3052 = vmatprep.subr.mxu0 0.0
        %3053 = vmatpush2.msra.mxu0 0.0
        %3054 = vmatprep.subr.mxu0 0.0
        %3055 = vmatpush2.msra.mxu0 0.0
        %3056 = vmatprep.subr.mxu0 0.0
        %3057 = vmatpush2.msra.mxu0 0.0
        %3058 = vmatprep.mubr.f32.mxu0 0.0
        %3059 = vmatmul.mubr.f32.gmra.mxu0 %v612
        %v3060 = vpop.f32.mrf.mxu0
        %v3061 = vadd.f32 %v2992, %v3060
        %v3062 = vpop.f32.mrf.mxu0
        %3063 = vmatprep.mubr.f32.mxu0 0.0
        %3064 = vmatmul.mubr.f32.gmra.mxu0 %v615
        %v3065 = vpop.f32.mrf.mxu0
        %v3066 = vadd.f32 %v2992, %v3065
        %v3067 = vpop.f32.mrf.mxu0
        %3068 = vdwg.mxu0
        %v3070 = vlaneseq
        %v3071 = vshrl.u32 %v3070, 7
        %v3072 = vsub.s32 0, %v3071
        %v3073 = vrot.slane %v2906, %v3072
        %3075 = vmatprep.subr.mxu0 0.0
        %3076 = vmatpush1.msra.mxu0 0.0
        %3077 = vmatprep.subr.mxu0 0.0
        %3078 = vmatpush1.msra.mxu0 0.0
        %3079 = vmatprep.subr.mxu0 0.0
        %3080 = vmatpush1.msra.mxu0 0.0
        %3081 = vmatprep.subr.mxu0 0.0
        %3082 = vmatpush1.msra.mxu0 0.0
        %3083 = vmatprep.subr.mxu0 0.0
        %3084 = vmatpush1.msra.mxu0 0.0
        %3085 = vmatprep.subr.mxu0 0.0
        %3086 = vmatpush1.msra.mxu0 0.0
        %3087 = vmatprep.subr.mxu0 0.0
        %3088 = vmatpush1.msra.mxu0 0.0
        %3089 = vmatprep.subr.mxu0 0.0
        %3090 = vmatpush1.msra.mxu0 0.0
        %3091 = vmatprep.subr.mxu0 0.0
        %3092 = vmatpush1.msra.mxu0 0.0
        %3093 = vmatprep.subr.mxu0 0.0
        %3094 = vmatpush1.msra.mxu0 0.0
        %3095 = vmatprep.subr.mxu0 0.0
        %3096 = vmatpush1.msra.mxu0 0.0
        %3097 = vmatprep.subr.mxu0 0.0
        %3098 = vmatpush1.msra.mxu0 0.0
        %3099 = vmatprep.subr.mxu0 0.0
        %3100 = vmatpush1.msra.mxu0 %v2900
        %3101 = vmatprep.subr.mxu0 0.0
        %3102 = vmatpush1.msra.mxu0 %v2899
        %3103 = vmatprep.subr.mxu0 0.0
        %3104 = vmatpush1.msra.mxu0 %v2898
        %3105 = vmatprep.subr.mxu0 0.0
        %3106 = vmatpush1.msra.mxu0 %v2897
        %3107 = vmatprep.subr.mxu0 0.0
        %3108 = vmatpush2.msra.mxu0 0.0
        %3109 = vmatprep.subr.mxu0 0.0
        %3110 = vmatpush2.msra.mxu0 0.0
        %3111 = vmatprep.subr.mxu0 0.0
        %3112 = vmatpush2.msra.mxu0 0.0
        %3113 = vmatprep.subr.mxu0 0.0
        %3114 = vmatpush2.msra.mxu0 0.0
        %3115 = vmatprep.subr.mxu0 0.0
        %3116 = vmatpush2.msra.mxu0 0.0
        %3117 = vmatprep.subr.mxu0 0.0
        %3118 = vmatpush2.msra.mxu0 0.0
        %3119 = vmatprep.subr.mxu0 0.0
        %3120 = vmatpush2.msra.mxu0 0.0
        %3121 = vmatprep.subr.mxu0 0.0
        %3122 = vmatpush2.msra.mxu0 0.0
        %3123 = vmatprep.subr.mxu0 0.0
        %3124 = vmatpush2.msra.mxu0 0.0
        %3125 = vmatprep.subr.mxu0 0.0
        %3126 = vmatpush2.msra.mxu0 0.0
        %3127 = vmatprep.subr.mxu0 0.0
        %3128 = vmatpush2.msra.mxu0 0.0
        %3129 = vmatprep.subr.mxu0 0.0
        %3130 = vmatpush2.msra.mxu0 0.0
        %3131 = vmatprep.subr.mxu0 0.0
        %3132 = vmatpush2.msra.mxu0 0.0
        %3133 = vmatprep.subr.mxu0 0.0
        %3134 = vmatpush2.msra.mxu0 0.0
        %3135 = vmatprep.subr.mxu0 0.0
        %3136 = vmatpush2.msra.mxu0 0.0
        %3137 = vmatprep.subr.mxu0 0.0
        %3138 = vmatpush2.msra.mxu0 0.0
        %3139 = vmatprep.mubr.f32.mxu0 0.0
        %3140 = vmatmul.mubr.f32.gmra.mxu0 %v612
        %v3141 = vpop.f32.mrf.mxu0
        %v3142 = vadd.f32 %v3073, %v3141
        %v3143 = vpop.f32.mrf.mxu0
        %3144 = vmatprep.mubr.f32.mxu0 0.0
        %3145 = vmatmul.mubr.f32.gmra.mxu0 %v615
        %v3146 = vpop.f32.mrf.mxu0
        %v3147 = vadd.f32 %v3073, %v3146
        %v3148 = vpop.f32.mrf.mxu0
        %3149 = vdwg.mxu0
        %3150 = vmatprep.subr.mxu0 0.0
        %3151 = vmatpush1.msra.mxu0 0.0
        %3152 = vmatprep.subr.mxu0 0.0
        %3153 = vmatpush1.msra.mxu0 0.0
        %3154 = vmatprep.subr.mxu0 0.0
        %3155 = vmatpush1.msra.mxu0 0.0
        %3156 = vmatprep.subr.mxu0 0.0
        %3157 = vmatpush1.msra.mxu0 0.0
        %3158 = vmatprep.subr.mxu0 0.0
        %3159 = vmatpush1.msra.mxu0 0.0
        %3160 = vmatprep.subr.mxu0 0.0
        %3161 = vmatpush1.msra.mxu0 0.0
        %3162 = vmatprep.subr.mxu0 0.0
        %3163 = vmatpush1.msra.mxu0 0.0
        %3164 = vmatprep.subr.mxu0 0.0
        %3165 = vmatpush1.msra.mxu0 0.0
        %3166 = vmatprep.subr.mxu0 0.0
        %3167 = vmatpush1.msra.mxu0 0.0
        %3168 = vmatprep.subr.mxu0 0.0
        %3169 = vmatpush1.msra.mxu0 0.0
        %3170 = vmatprep.subr.mxu0 0.0
        %3171 = vmatpush1.msra.mxu0 0.0
        %3172 = vmatprep.subr.mxu0 0.0
        %3173 = vmatpush1.msra.mxu0 0.0
        %3174 = vmatprep.subr.mxu0 0.0
        %3175 = vmatpush1.msra.mxu0 %v2895
        %3176 = vmatprep.subr.mxu0 0.0
        %3177 = vmatpush1.msra.mxu0 %v2894
        %3178 = vmatprep.subr.mxu0 0.0
        %3179 = vmatpush1.msra.mxu0 %v2893
        %3180 = vmatprep.subr.mxu0 0.0
        %3181 = vmatpush1.msra.mxu0 %v2892
        %3182 = vmatprep.subr.mxu0 0.0
        %3183 = vmatpush2.msra.mxu0 0.0
        %3184 = vmatprep.subr.mxu0 0.0
        %3185 = vmatpush2.msra.mxu0 0.0
        %3186 = vmatprep.subr.mxu0 0.0
        %3187 = vmatpush2.msra.mxu0 0.0
        %3188 = vmatprep.subr.mxu0 0.0
        %3189 = vmatpush2.msra.mxu0 0.0
        %3190 = vmatprep.subr.mxu0 0.0
        %3191 = vmatpush2.msra.mxu0 0.0
        %3192 = vmatprep.subr.mxu0 0.0
        %3193 = vmatpush2.msra.mxu0 0.0
        %3194 = vmatprep.subr.mxu0 0.0
        %3195 = vmatpush2.msra.mxu0 0.0
        %3196 = vmatprep.subr.mxu0 0.0
        %3197 = vmatpush2.msra.mxu0 0.0
        %3198 = vmatprep.subr.mxu0 0.0
        %3199 = vmatpush2.msra.mxu0 0.0
        %3200 = vmatprep.subr.mxu0 0.0
        %3201 = vmatpush2.msra.mxu0 0.0
        %3202 = vmatprep.subr.mxu0 0.0
        %3203 = vmatpush2.msra.mxu0 0.0
        %3204 = vmatprep.subr.mxu0 0.0
        %3205 = vmatpush2.msra.mxu0 0.0
        %3206 = vmatprep.subr.mxu0 0.0
        %3207 = vmatpush2.msra.mxu0 0.0
        %3208 = vmatprep.subr.mxu0 0.0
        %3209 = vmatpush2.msra.mxu0 0.0
        %3210 = vmatprep.subr.mxu0 0.0
        %3211 = vmatpush2.msra.mxu0 0.0
        %3212 = vmatprep.subr.mxu0 0.0
        %3213 = vmatpush2.msra.mxu0 0.0
        %3214 = vmatprep.mubr.f32.mxu0 0.0
        %3215 = vmatmul.mubr.f32.gmra.mxu0 %v855
        %v3216 = vpop.f32.mrf.mxu0
        %v3217 = vadd.f32 %v2992, %v3216
        %v3218 = vpop.f32.mrf.mxu0
        %3219 = vmatprep.mubr.f32.mxu0 0.0
        %3220 = vmatmul.mubr.f32.gmra.mxu0 %v858
        %v3221 = vpop.f32.mrf.mxu0
        %v3222 = vadd.f32 %v2992, %v3221
        %v3223 = vpop.f32.mrf.mxu0
        %3224 = vdwg.mxu0
        %3225 = vmatprep.subr.mxu0 0.0
        %3226 = vmatpush1.msra.mxu0 0.0
        %3227 = vmatprep.subr.mxu0 0.0
        %3228 = vmatpush1.msra.mxu0 0.0
        %3229 = vmatprep.subr.mxu0 0.0
        %3230 = vmatpush1.msra.mxu0 0.0
        %3231 = vmatprep.subr.mxu0 0.0
        %3232 = vmatpush1.msra.mxu0 0.0
        %3233 = vmatprep.subr.mxu0 0.0
        %3234 = vmatpush1.msra.mxu0 0.0
        %3235 = vmatprep.subr.mxu0 0.0
        %3236 = vmatpush1.msra.mxu0 0.0
        %3237 = vmatprep.subr.mxu0 0.0
        %3238 = vmatpush1.msra.mxu0 0.0
        %3239 = vmatprep.subr.mxu0 0.0
        %3240 = vmatpush1.msra.mxu0 0.0
        %3241 = vmatprep.subr.mxu0 0.0
        %3242 = vmatpush1.msra.mxu0 0.0
        %3243 = vmatprep.subr.mxu0 0.0
        %3244 = vmatpush1.msra.mxu0 0.0
        %3245 = vmatprep.subr.mxu0 0.0
        %3246 = vmatpush1.msra.mxu0 0.0
        %3247 = vmatprep.subr.mxu0 0.0
        %3248 = vmatpush1.msra.mxu0 0.0
        %3249 = vmatprep.subr.mxu0 0.0
        %3250 = vmatpush1.msra.mxu0 %v2900
        %3251 = vmatprep.subr.mxu0 0.0
        %3252 = vmatpush1.msra.mxu0 %v2899
        %3253 = vmatprep.subr.mxu0 0.0
        %3254 = vmatpush1.msra.mxu0 %v2898
        %3255 = vmatprep.subr.mxu0 0.0
        %3256 = vmatpush1.msra.mxu0 %v2897
        %3257 = vmatprep.subr.mxu0 0.0
        %3258 = vmatpush2.msra.mxu0 0.0
        %3259 = vmatprep.subr.mxu0 0.0
        %3260 = vmatpush2.msra.mxu0 0.0
        %3261 = vmatprep.subr.mxu0 0.0
        %3262 = vmatpush2.msra.mxu0 0.0
        %3263 = vmatprep.subr.mxu0 0.0
        %3264 = vmatpush2.msra.mxu0 0.0
        %3265 = vmatprep.subr.mxu0 0.0
        %3266 = vmatpush2.msra.mxu0 0.0
        %3267 = vmatprep.subr.mxu0 0.0
        %3268 = vmatpush2.msra.mxu0 0.0
        %3269 = vmatprep.subr.mxu0 0.0
        %3270 = vmatpush2.msra.mxu0 0.0
        %3271 = vmatprep.subr.mxu0 0.0
        %3272 = vmatpush2.msra.mxu0 0.0
        %3273 = vmatprep.subr.mxu0 0.0
        %3274 = vmatpush2.msra.mxu0 0.0
        %3275 = vmatprep.subr.mxu0 0.0
        %3276 = vmatpush2.msra.mxu0 0.0
        %3277 = vmatprep.subr.mxu0 0.0
        %3278 = vmatpush2.msra.mxu0 0.0
        %3279 = vmatprep.subr.mxu0 0.0
        %3280 = vmatpush2.msra.mxu0 0.0
        %3281 = vmatprep.subr.mxu0 0.0
        %3282 = vmatpush2.msra.mxu0 0.0
        %3283 = vmatprep.subr.mxu0 0.0
        %3284 = vmatpush2.msra.mxu0 0.0
        %3285 = vmatprep.subr.mxu0 0.0
        %3286 = vmatpush2.msra.mxu0 0.0
        %3287 = vmatprep.subr.mxu0 0.0
        %3288 = vmatpush2.msra.mxu0 0.0
        %3289 = vmatprep.mubr.f32.mxu0 0.0
        %3290 = vmatmul.mubr.f32.gmra.mxu0 %v855
        %v3291 = vpop.f32.mrf.mxu0
        %v3292 = vadd.f32 %v3073, %v3291
        %v3293 = vpop.f32.mrf.mxu0
        %3294 = vmatprep.mubr.f32.mxu0 0.0
        %3295 = vmatmul.mubr.f32.gmra.mxu0 %v858
        %v3296 = vpop.f32.mrf.mxu0
        %v3297 = vadd.f32 %v3073, %v3296
        %v3298 = vpop.f32.mrf.mxu0
        %3299 = vdwg.mxu0
        %v3301 = vsel %vm1010, %v2980, 0
        %v3304 = vsel %vm1010, %v3217, 0
        %3306 = vmatprep.subr.mxu0 0.0
        %3307 = vmatpush1.xpose.msra.mxu0 0.0
        %3308 = vmatprep.subr.mxu0 0.0
        %3309 = vmatpush1.xpose.msra.mxu0 0.0
        %3310 = vmatprep.subr.mxu0 0.0
        %3311 = vmatpush1.xpose.msra.mxu0 0.0
        %3312 = vmatprep.subr.mxu0 0.0
        %3313 = vmatpush1.xpose.msra.mxu0 0.0
        %3314 = vmatprep.subr.mxu0 0.0
        %3315 = vmatpush1.xpose.msra.mxu0 0.0
        %3316 = vmatprep.subr.mxu0 0.0
        %3317 = vmatpush1.xpose.msra.mxu0 0.0
        %3318 = vmatprep.subr.mxu0 0.0
        %3319 = vmatpush1.xpose.msra.mxu0 0.0
        %3320 = vmatprep.subr.mxu0 0.0
        %3321 = vmatpush1.xpose.msra.mxu0 0.0
        %3322 = vmatprep.subr.mxu0 0.0
        %3323 = vmatpush1.xpose.msra.mxu0 0.0
        %3324 = vmatprep.subr.mxu0 0.0
        %3325 = vmatpush1.xpose.msra.mxu0 0.0
        %3326 = vmatprep.subr.mxu0 0.0
        %3327 = vmatpush1.xpose.msra.mxu0 0.0
        %3328 = vmatprep.subr.mxu0 0.0
        %3329 = vmatpush1.xpose.msra.mxu0 0.0
        %3330 = vmatprep.subr.mxu0 0.0
        %3331 = vmatpush1.xpose.msra.mxu0 0.0
        %3332 = vmatprep.subr.mxu0 0.0
        %3333 = vmatpush1.xpose.msra.mxu0 0.0
        %3334 = vmatprep.subr.mxu0 0.0
        %3335 = vmatpush1.xpose.msra.mxu0 0.0
        %3336 = vmatprep.subr.mxu0 0.0
        %3337 = vmatpush1.xpose.msra.mxu0 %v3304
        %3338 = vmatprep.subr.mxu0 0.0
        %3339 = vmatpush2.xpose.msra.mxu0 0.0
        %3340 = vmatprep.subr.mxu0 0.0
        %3341 = vmatpush2.xpose.msra.mxu0 0.0
        %3342 = vmatprep.subr.mxu0 0.0
        %3343 = vmatpush2.xpose.msra.mxu0 0.0
        %3344 = vmatprep.subr.mxu0 0.0
        %3345 = vmatpush2.xpose.msra.mxu0 0.0
        %3346 = vmatprep.subr.mxu0 0.0
        %3347 = vmatpush2.xpose.msra.mxu0 0.0
        %3348 = vmatprep.subr.mxu0 0.0
        %3349 = vmatpush2.xpose.msra.mxu0 0.0
        %3350 = vmatprep.subr.mxu0 0.0
        %3351 = vmatpush2.xpose.msra.mxu0 0.0
        %3352 = vmatprep.subr.mxu0 0.0
        %3353 = vmatpush2.xpose.msra.mxu0 0.0
        %3354 = vmatprep.subr.mxu0 0.0
        %3355 = vmatpush2.xpose.msra.mxu0 0.0
        %3356 = vmatprep.subr.mxu0 0.0
        %3357 = vmatpush2.xpose.msra.mxu0 0.0
        %3358 = vmatprep.subr.mxu0 0.0
        %3359 = vmatpush2.xpose.msra.mxu0 0.0
        %3360 = vmatprep.subr.mxu0 0.0
        %3361 = vmatpush2.xpose.msra.mxu0 0.0
        %3362 = vmatprep.subr.mxu0 0.0
        %3363 = vmatpush2.xpose.msra.mxu0 0.0
        %3364 = vmatprep.subr.mxu0 0.0
        %3365 = vmatpush2.xpose.msra.mxu0 0.0
        %3366 = vmatprep.subr.mxu0 0.0
        %3367 = vmatpush2.xpose.msra.mxu0 0.0
        %3368 = vmatprep.subr.mxu0 0.0
        %3369 = vmatpush2.xpose.msra.mxu0 0.0
        %3370 = vmatprep.mubr.f32.mxu0 0.0
        %3371 = vmatmul.mubr.f32.gmra.mxu0 %v3301
        %v3372 = vpop.f32.mrf.mxu0
        %v3373 = vadd.f32 0.0, %v3372
        %v3374 = vpop.f32.mrf.mxu0
        %3375 = vdwg.mxu0
        %v3377 = vsel %vm1010, %v2985, 0
        %v3380 = vsel %vm1010, %v3222, 0
        %3382 = vmatprep.subr.mxu0 0.0
        %3383 = vmatpush1.xpose.msra.mxu0 0.0
        %3384 = vmatprep.subr.mxu0 0.0
        %3385 = vmatpush1.xpose.msra.mxu0 0.0
        %3386 = vmatprep.subr.mxu0 0.0
        %3387 = vmatpush1.xpose.msra.mxu0 0.0
        %3388 = vmatprep.subr.mxu0 0.0
        %3389 = vmatpush1.xpose.msra.mxu0 0.0
        %3390 = vmatprep.subr.mxu0 0.0
        %3391 = vmatpush1.xpose.msra.mxu0 0.0
        %3392 = vmatprep.subr.mxu0 0.0
        %3393 = vmatpush1.xpose.msra.mxu0 0.0
        %3394 = vmatprep.subr.mxu0 0.0
        %3395 = vmatpush1.xpose.msra.mxu0 0.0
        %3396 = vmatprep.subr.mxu0 0.0
        %3397 = vmatpush1.xpose.msra.mxu0 0.0
        %3398 = vmatprep.subr.mxu0 0.0
        %3399 = vmatpush1.xpose.msra.mxu0 0.0
        %3400 = vmatprep.subr.mxu0 0.0
        %3401 = vmatpush1.xpose.msra.mxu0 0.0
        %3402 = vmatprep.subr.mxu0 0.0
        %3403 = vmatpush1.xpose.msra.mxu0 0.0
        %3404 = vmatprep.subr.mxu0 0.0
        %3405 = vmatpush1.xpose.msra.mxu0 0.0
        %3406 = vmatprep.subr.mxu0 0.0
        %3407 = vmatpush1.xpose.msra.mxu0 0.0
        %3408 = vmatprep.subr.mxu0 0.0
        %3409 = vmatpush1.xpose.msra.mxu0 0.0
        %3410 = vmatprep.subr.mxu0 0.0
        %3411 = vmatpush1.xpose.msra.mxu0 0.0
        %3412 = vmatprep.subr.mxu0 0.0
        %3413 = vmatpush1.xpose.msra.mxu0 %v3380
        %3414 = vmatprep.subr.mxu0 0.0
        %3415 = vmatpush2.xpose.msra.mxu0 0.0
        %3416 = vmatprep.subr.mxu0 0.0
        %3417 = vmatpush2.xpose.msra.mxu0 0.0
        %3418 = vmatprep.subr.mxu0 0.0
        %3419 = vmatpush2.xpose.msra.mxu0 0.0
        %3420 = vmatprep.subr.mxu0 0.0
        %3421 = vmatpush2.xpose.msra.mxu0 0.0
        %3422 = vmatprep.subr.mxu0 0.0
        %3423 = vmatpush2.xpose.msra.mxu0 0.0
        %3424 = vmatprep.subr.mxu0 0.0
        %3425 = vmatpush2.xpose.msra.mxu0 0.0
        %3426 = vmatprep.subr.mxu0 0.0
        %3427 = vmatpush2.xpose.msra.mxu0 0.0
        %3428 = vmatprep.subr.mxu0 0.0
        %3429 = vmatpush2.xpose.msra.mxu0 0.0
        %3430 = vmatprep.subr.mxu0 0.0
        %3431 = vmatpush2.xpose.msra.mxu0 0.0
        %3432 = vmatprep.subr.mxu0 0.0
        %3433 = vmatpush2.xpose.msra.mxu0 0.0
        %3434 = vmatprep.subr.mxu0 0.0
        %3435 = vmatpush2.xpose.msra.mxu0 0.0
        %3436 = vmatprep.subr.mxu0 0.0
        %3437 = vmatpush2.xpose.msra.mxu0 0.0
        %3438 = vmatprep.subr.mxu0 0.0
        %3439 = vmatpush2.xpose.msra.mxu0 0.0
        %3440 = vmatprep.subr.mxu0 0.0
        %3441 = vmatpush2.xpose.msra.mxu0 0.0
        %3442 = vmatprep.subr.mxu0 0.0
        %3443 = vmatpush2.xpose.msra.mxu0 0.0
        %3444 = vmatprep.subr.mxu0 0.0
        %3445 = vmatpush2.xpose.msra.mxu0 0.0
        %3446 = vmatprep.mubr.f32.mxu0 0.0
        %3447 = vmatmul.mubr.f32.gmra.mxu0 %v3377
        %v3448 = vpop.f32.mrf.mxu0
        %v3449 = vadd.f32 0.0, %v3448
        %v3450 = vpop.f32.mrf.mxu0
        %3451 = vdwg.mxu0
        %v3452 = vmul.f32 %v3373, 0.35355338
        %v3453 = vmul.f32 %v3449, 0.35355338
        %v3454 = vadd.f32 %v3452, %v585
        %v3455 = vadd.f32 %v3453, %v585
        %v3457 = vsel %vm1010, %v3061, 0
        %3459 = vmatprep.subr.mxu0 0.0
        %3460 = vmatpush1.xpose.msra.mxu0 0.0
        %3461 = vmatprep.subr.mxu0 0.0
        %3462 = vmatpush1.xpose.msra.mxu0 0.0
        %3463 = vmatprep.subr.mxu0 0.0
        %3464 = vmatpush1.xpose.msra.mxu0 0.0
        %3465 = vmatprep.subr.mxu0 0.0
        %3466 = vmatpush1.xpose.msra.mxu0 0.0
        %3467 = vmatprep.subr.mxu0 0.0
        %3468 = vmatpush1.xpose.msra.mxu0 0.0
        %3469 = vmatprep.subr.mxu0 0.0
        %3470 = vmatpush1.xpose.msra.mxu0 0.0
        %3471 = vmatprep.subr.mxu0 0.0
        %3472 = vmatpush1.xpose.msra.mxu0 0.0
        %3473 = vmatprep.subr.mxu0 0.0
        %3474 = vmatpush1.xpose.msra.mxu0 0.0
        %3475 = vmatprep.subr.mxu0 0.0
        %3476 = vmatpush1.xpose.msra.mxu0 0.0
        %3477 = vmatprep.subr.mxu0 0.0
        %3478 = vmatpush1.xpose.msra.mxu0 0.0
        %3479 = vmatprep.subr.mxu0 0.0
        %3480 = vmatpush1.xpose.msra.mxu0 0.0
        %3481 = vmatprep.subr.mxu0 0.0
        %3482 = vmatpush1.xpose.msra.mxu0 0.0
        %3483 = vmatprep.subr.mxu0 0.0
        %3484 = vmatpush1.xpose.msra.mxu0 0.0
        %3485 = vmatprep.subr.mxu0 0.0
        %3486 = vmatpush1.xpose.msra.mxu0 0.0
        %3487 = vmatprep.subr.mxu0 0.0
        %3488 = vmatpush1.xpose.msra.mxu0 0.0
        %3489 = vmatprep.subr.mxu0 0.0
        %3490 = vmatpush1.xpose.msra.mxu0 %v3457
        %3491 = vmatprep.subr.mxu0 0.0
        %3492 = vmatpush2.xpose.msra.mxu0 0.0
        %3493 = vmatprep.subr.mxu0 0.0
        %3494 = vmatpush2.xpose.msra.mxu0 0.0
        %3495 = vmatprep.subr.mxu0 0.0
        %3496 = vmatpush2.xpose.msra.mxu0 0.0
        %3497 = vmatprep.subr.mxu0 0.0
        %3498 = vmatpush2.xpose.msra.mxu0 0.0
        %3499 = vmatprep.subr.mxu0 0.0
        %3500 = vmatpush2.xpose.msra.mxu0 0.0
        %3501 = vmatprep.subr.mxu0 0.0
        %3502 = vmatpush2.xpose.msra.mxu0 0.0
        %3503 = vmatprep.subr.mxu0 0.0
        %3504 = vmatpush2.xpose.msra.mxu0 0.0
        %3505 = vmatprep.subr.mxu0 0.0
        %3506 = vmatpush2.xpose.msra.mxu0 0.0
        %3507 = vmatprep.subr.mxu0 0.0
        %3508 = vmatpush2.xpose.msra.mxu0 0.0
        %3509 = vmatprep.subr.mxu0 0.0
        %3510 = vmatpush2.xpose.msra.mxu0 0.0
        %3511 = vmatprep.subr.mxu0 0.0
        %3512 = vmatpush2.xpose.msra.mxu0 0.0
        %3513 = vmatprep.subr.mxu0 0.0
        %3514 = vmatpush2.xpose.msra.mxu0 0.0
        %3515 = vmatprep.subr.mxu0 0.0
        %3516 = vmatpush2.xpose.msra.mxu0 0.0
        %3517 = vmatprep.subr.mxu0 0.0
        %3518 = vmatpush2.xpose.msra.mxu0 0.0
        %3519 = vmatprep.subr.mxu0 0.0
        %3520 = vmatpush2.xpose.msra.mxu0 0.0
        %3521 = vmatprep.subr.mxu0 0.0
        %3522 = vmatpush2.xpose.msra.mxu0 0.0
        %3523 = vmatprep.mubr.f32.mxu0 0.0
        %3524 = vmatmul.mubr.f32.gmra.mxu0 %v3301
        %v3525 = vpop.f32.mrf.mxu0
        %v3526 = vadd.f32 0.0, %v3525
        %v3527 = vpop.f32.mrf.mxu0
        %3528 = vdwg.mxu0
        %v3530 = vsel %vm1010, %v3066, 0
        %3532 = vmatprep.subr.mxu0 0.0
        %3533 = vmatpush1.xpose.msra.mxu0 0.0
        %3534 = vmatprep.subr.mxu0 0.0
        %3535 = vmatpush1.xpose.msra.mxu0 0.0
        %3536 = vmatprep.subr.mxu0 0.0
        %3537 = vmatpush1.xpose.msra.mxu0 0.0
        %3538 = vmatprep.subr.mxu0 0.0
        %3539 = vmatpush1.xpose.msra.mxu0 0.0
        %3540 = vmatprep.subr.mxu0 0.0
        %3541 = vmatpush1.xpose.msra.mxu0 0.0
        %3542 = vmatprep.subr.mxu0 0.0
        %3543 = vmatpush1.xpose.msra.mxu0 0.0
        %3544 = vmatprep.subr.mxu0 0.0
        %3545 = vmatpush1.xpose.msra.mxu0 0.0
        %3546 = vmatprep.subr.mxu0 0.0
        %3547 = vmatpush1.xpose.msra.mxu0 0.0
        %3548 = vmatprep.subr.mxu0 0.0
        %3549 = vmatpush1.xpose.msra.mxu0 0.0
        %3550 = vmatprep.subr.mxu0 0.0
        %3551 = vmatpush1.xpose.msra.mxu0 0.0
        %3552 = vmatprep.subr.mxu0 0.0
        %3553 = vmatpush1.xpose.msra.mxu0 0.0
        %3554 = vmatprep.subr.mxu0 0.0
        %3555 = vmatpush1.xpose.msra.mxu0 0.0
        %3556 = vmatprep.subr.mxu0 0.0
        %3557 = vmatpush1.xpose.msra.mxu0 0.0
        %3558 = vmatprep.subr.mxu0 0.0
        %3559 = vmatpush1.xpose.msra.mxu0 0.0
        %3560 = vmatprep.subr.mxu0 0.0
        %3561 = vmatpush1.xpose.msra.mxu0 0.0
        %3562 = vmatprep.subr.mxu0 0.0
        %3563 = vmatpush1.xpose.msra.mxu0 %v3530
        %3564 = vmatprep.subr.mxu0 0.0
        %3565 = vmatpush2.xpose.msra.mxu0 0.0
        %3566 = vmatprep.subr.mxu0 0.0
        %3567 = vmatpush2.xpose.msra.mxu0 0.0
        %3568 = vmatprep.subr.mxu0 0.0
        %3569 = vmatpush2.xpose.msra.mxu0 0.0
        %3570 = vmatprep.subr.mxu0 0.0
        %3571 = vmatpush2.xpose.msra.mxu0 0.0
        %3572 = vmatprep.subr.mxu0 0.0
        %3573 = vmatpush2.xpose.msra.mxu0 0.0
        %3574 = vmatprep.subr.mxu0 0.0
        %3575 = vmatpush2.xpose.msra.mxu0 0.0
        %3576 = vmatprep.subr.mxu0 0.0
        %3577 = vmatpush2.xpose.msra.mxu0 0.0
        %3578 = vmatprep.subr.mxu0 0.0
        %3579 = vmatpush2.xpose.msra.mxu0 0.0
        %3580 = vmatprep.subr.mxu0 0.0
        %3581 = vmatpush2.xpose.msra.mxu0 0.0
        %3582 = vmatprep.subr.mxu0 0.0
        %3583 = vmatpush2.xpose.msra.mxu0 0.0
        %3584 = vmatprep.subr.mxu0 0.0
        %3585 = vmatpush2.xpose.msra.mxu0 0.0
        %3586 = vmatprep.subr.mxu0 0.0
        %3587 = vmatpush2.xpose.msra.mxu0 0.0
        %3588 = vmatprep.subr.mxu0 0.0
        %3589 = vmatpush2.xpose.msra.mxu0 0.0
        %3590 = vmatprep.subr.mxu0 0.0
        %3591 = vmatpush2.xpose.msra.mxu0 0.0
        %3592 = vmatprep.subr.mxu0 0.0
        %3593 = vmatpush2.xpose.msra.mxu0 0.0
        %3594 = vmatprep.subr.mxu0 0.0
        %3595 = vmatpush2.xpose.msra.mxu0 0.0
        %3596 = vmatprep.mubr.f32.mxu0 0.0
        %3597 = vmatmul.mubr.f32.gmra.mxu0 %v3377
        %v3598 = vpop.f32.mrf.mxu0
        %v3599 = vadd.f32 0.0, %v3598
        %v3600 = vpop.f32.mrf.mxu0
        %3601 = vdwg.mxu0
        %v3602 = vmul.f32 %v3526, 0.35355338
        %v3603 = vmul.f32 %v3599, 0.35355338
        %v3604 = vadd.f32 %v3602, %v584
        %v3605 = vadd.f32 %v3603, %v584
        %v3606 = vsel %vm1010, %v3454, -inf
        %3607 = vmax.xlane.f32.xlu0 %v3606
        %v3608 = vpop.xlane.xlu0 %3607
        %v3609 = vsel %vm1010, %v3455, -inf
        %3610 = vmax.xlane.f32.xlu0 %v3609
        %v3611 = vpop.xlane.xlu0 %3610
        %v3612 = vsel %vm1010, %v3604, -inf
        %3613 = vmax.xlane.f32.xlu0 %v3612
        %v3614 = vpop.xlane.xlu0 %3613
        %v3615 = vsel %vm1010, %v3605, -inf
        %3616 = vmax.xlane.f32.xlu0 %v3615
        %v3617 = vpop.xlane.xlu0 %3616
        %v3618 = vmax.f32 %v3608, %v3614
        %v3619 = vmax.f32 %v3611, %v3617
        %v3620 = vsub.f32 %v3454, %v3618
        %v3621 = vsub.f32 %v3455, %v3619
        %v3622 = vmul.f32 %v3620, 1.442695
        %v3623 = vpow.pop %v3622
        %v3624 = vmul.f32 %v3621, 1.442695
        %v3625 = vpow.pop %v3624
        %v3626 = vsub.f32 %v3604, %v3618
        %v3627 = vsub.f32 %v3605, %v3619
        %v3628 = vmul.f32 %v3626, 1.442695
        %v3629 = vpow.pop %v3628
        %v3630 = vmul.f32 %v3627, 1.442695
        %v3631 = vpow.pop %v3630
        %v3632 = vsel %vm1010, %v3623, 0.0
        %3633 = vadd.xlane.f32.xlu0 %v3632
        %v3634 = vpop.xlane.xlu0 %3633
        %v3635 = vsel %vm1010, %v3625, 0.0
        %3636 = vadd.xlane.f32.xlu0 %v3635
        %v3637 = vpop.xlane.xlu0 %3636
        %v3638 = vsel %vm1010, %v3629, 0.0
        %3639 = vadd.xlane.f32.xlu0 %v3638
        %v3640 = vpop.xlane.xlu0 %3639
        %v3641 = vsel %vm1010, %v3631, 0.0
        %3642 = vadd.xlane.f32.xlu0 %v3641
        %v3643 = vpop.xlane.xlu0 %3642
        %v3644 = vadd.f32 %v3634, %v3640
        %v3645 = vadd.f32 %v3637, %v3643
        %v3646 = vrcp.pop %v3644
        %v3647 = vrcp.pop %v3645
        %v3648 = vmul.f32 %v3644, %v3646
        %v3649 = vmul.f32 %v3645, %v3647
        %v3650 = vsub.f32 2.0, %v3648
        %v3651 = vsub.f32 2.0, %v3649
        %v3652 = vmul.f32 %v3646, %v3650
        %v3653 = vmul.f32 %v3647, %v3651
        %v3655 = vsel %vm1010, %v3629, 0
        %3657 = vmatprep.subr.mxu0 0.0
        %3658 = vmatpush1.msra.mxu0 0.0
        %3659 = vmatprep.subr.mxu0 0.0
        %3660 = vmatpush1.msra.mxu0 0.0
        %3661 = vmatprep.subr.mxu0 0.0
        %3662 = vmatpush1.msra.mxu0 0.0
        %3663 = vmatprep.subr.mxu0 0.0
        %3664 = vmatpush1.msra.mxu0 0.0
        %3665 = vmatprep.subr.mxu0 0.0
        %3666 = vmatpush1.msra.mxu0 0.0
        %3667 = vmatprep.subr.mxu0 0.0
        %3668 = vmatpush1.msra.mxu0 0.0
        %3669 = vmatprep.subr.mxu0 0.0
        %3670 = vmatpush1.msra.mxu0 0.0
        %3671 = vmatprep.subr.mxu0 0.0
        %3672 = vmatpush1.msra.mxu0 0.0
        %3673 = vmatprep.subr.mxu0 0.0
        %3674 = vmatpush1.msra.mxu0 0.0
        %3675 = vmatprep.subr.mxu0 0.0
        %3676 = vmatpush1.msra.mxu0 0.0
        %3677 = vmatprep.subr.mxu0 0.0
        %3678 = vmatpush1.msra.mxu0 0.0
        %3679 = vmatprep.subr.mxu0 0.0
        %3680 = vmatpush1.msra.mxu0 0.0
        %3681 = vmatprep.subr.mxu0 0.0
        %3682 = vmatpush1.msra.mxu0 0.0
        %3683 = vmatprep.subr.mxu0 0.0
        %3684 = vmatpush1.msra.mxu0 0.0
        %3685 = vmatprep.subr.mxu0 0.0
        %3686 = vmatpush1.msra.mxu0 0.0
        %3687 = vmatprep.subr.mxu0 0.0
        %3688 = vmatpush1.msra.mxu0 %v3142
        %3689 = vmatprep.subr.mxu0 0.0
        %3690 = vmatpush2.msra.mxu0 0.0
        %3691 = vmatprep.subr.mxu0 0.0
        %3692 = vmatpush2.msra.mxu0 0.0
        %3693 = vmatprep.subr.mxu0 0.0
        %3694 = vmatpush2.msra.mxu0 0.0
        %3695 = vmatprep.subr.mxu0 0.0
        %3696 = vmatpush2.msra.mxu0 0.0
        %3697 = vmatprep.subr.mxu0 0.0
        %3698 = vmatpush2.msra.mxu0 0.0
        %3699 = vmatprep.subr.mxu0 0.0
        %3700 = vmatpush2.msra.mxu0 0.0
        %3701 = vmatprep.subr.mxu0 0.0
        %3702 = vmatpush2.msra.mxu0 0.0
        %3703 = vmatprep.subr.mxu0 0.0
        %3704 = vmatpush2.msra.mxu0 0.0
        %3705 = vmatprep.subr.mxu0 0.0
        %3706 = vmatpush2.msra.mxu0 0.0
        %3707 = vmatprep.subr.mxu0 0.0
        %3708 = vmatpush2.msra.mxu0 0.0
        %3709 = vmatprep.subr.mxu0 0.0
        %3710 = vmatpush2.msra.mxu0 0.0
        %3711 = vmatprep.subr.mxu0 0.0
        %3712 = vmatpush2.msra.mxu0 0.0
        %3713 = vmatprep.subr.mxu0 0.0
        %3714 = vmatpush2.msra.mxu0 0.0
        %3715 = vmatprep.subr.mxu0 0.0
        %3716 = vmatpush2.msra.mxu0 0.0
        %3717 = vmatprep.subr.mxu0 0.0
        %3718 = vmatpush2.msra.mxu0 0.0
        %3719 = vmatprep.subr.mxu0 0.0
        %3720 = vmatpush2.msra.mxu0 0.0
        %3721 = vmatprep.mubr.f32.mxu0 0.0
        %3722 = vmatmul.mubr.f32.gmra.mxu0 %v3655
        %v3723 = vpop.f32.mrf.mxu0
        %v3724 = vadd.f32 0.0, %v3723
        %v3725 = vpop.f32.mrf.mxu0
        %3726 = vdwg.mxu0
        %v3728 = vsel %vm1010, %v3631, 0
        %3730 = vmatprep.subr.mxu0 0.0
        %3731 = vmatpush1.msra.mxu0 0.0
        %3732 = vmatprep.subr.mxu0 0.0
        %3733 = vmatpush1.msra.mxu0 0.0
        %3734 = vmatprep.subr.mxu0 0.0
        %3735 = vmatpush1.msra.mxu0 0.0
        %3736 = vmatprep.subr.mxu0 0.0
        %3737 = vmatpush1.msra.mxu0 0.0
        %3738 = vmatprep.subr.mxu0 0.0
        %3739 = vmatpush1.msra.mxu0 0.0
        %3740 = vmatprep.subr.mxu0 0.0
        %3741 = vmatpush1.msra.mxu0 0.0
        %3742 = vmatprep.subr.mxu0 0.0
        %3743 = vmatpush1.msra.mxu0 0.0
        %3744 = vmatprep.subr.mxu0 0.0
        %3745 = vmatpush1.msra.mxu0 0.0
        %3746 = vmatprep.subr.mxu0 0.0
        %3747 = vmatpush1.msra.mxu0 0.0
        %3748 = vmatprep.subr.mxu0 0.0
        %3749 = vmatpush1.msra.mxu0 0.0
        %3750 = vmatprep.subr.mxu0 0.0
        %3751 = vmatpush1.msra.mxu0 0.0
        %3752 = vmatprep.subr.mxu0 0.0
        %3753 = vmatpush1.msra.mxu0 0.0
        %3754 = vmatprep.subr.mxu0 0.0
        %3755 = vmatpush1.msra.mxu0 0.0
        %3756 = vmatprep.subr.mxu0 0.0
        %3757 = vmatpush1.msra.mxu0 0.0
        %3758 = vmatprep.subr.mxu0 0.0
        %3759 = vmatpush1.msra.mxu0 0.0
        %3760 = vmatprep.subr.mxu0 0.0
        %3761 = vmatpush1.msra.mxu0 %v3147
        %3762 = vmatprep.subr.mxu0 0.0
        %3763 = vmatpush2.msra.mxu0 0.0
        %3764 = vmatprep.subr.mxu0 0.0
        %3765 = vmatpush2.msra.mxu0 0.0
        %3766 = vmatprep.subr.mxu0 0.0
        %3767 = vmatpush2.msra.mxu0 0.0
        %3768 = vmatprep.subr.mxu0 0.0
        %3769 = vmatpush2.msra.mxu0 0.0
        %3770 = vmatprep.subr.mxu0 0.0
        %3771 = vmatpush2.msra.mxu0 0.0
        %3772 = vmatprep.subr.mxu0 0.0
        %3773 = vmatpush2.msra.mxu0 0.0
        %3774 = vmatprep.subr.mxu0 0.0
        %3775 = vmatpush2.msra.mxu0 0.0
        %3776 = vmatprep.subr.mxu0 0.0
        %3777 = vmatpush2.msra.mxu0 0.0
        %3778 = vmatprep.subr.mxu0 0.0
        %3779 = vmatpush2.msra.mxu0 0.0
        %3780 = vmatprep.subr.mxu0 0.0
        %3781 = vmatpush2.msra.mxu0 0.0
        %3782 = vmatprep.subr.mxu0 0.0
        %3783 = vmatpush2.msra.mxu0 0.0
        %3784 = vmatprep.subr.mxu0 0.0
        %3785 = vmatpush2.msra.mxu0 0.0
        %3786 = vmatprep.subr.mxu0 0.0
        %3787 = vmatpush2.msra.mxu0 0.0
        %3788 = vmatprep.subr.mxu0 0.0
        %3789 = vmatpush2.msra.mxu0 0.0
        %3790 = vmatprep.subr.mxu0 0.0
        %3791 = vmatpush2.msra.mxu0 0.0
        %3792 = vmatprep.subr.mxu0 0.0
        %3793 = vmatpush2.msra.mxu0 0.0
        %3794 = vmatprep.mubr.f32.mxu0 0.0
        %3795 = vmatmul.mubr.f32.gmra.mxu0 %v3728
        %v3796 = vpop.f32.mrf.mxu0
        %v3797 = vadd.f32 0.0, %v3796
        %v3798 = vpop.f32.mrf.mxu0
        %3799 = vdwg.mxu0
        %v3801 = vsel %vm1010, %v3623, 0
        %3803 = vmatprep.subr.mxu0 0.0
        %3804 = vmatpush1.msra.mxu0 0.0
        %3805 = vmatprep.subr.mxu0 0.0
        %3806 = vmatpush1.msra.mxu0 0.0
        %3807 = vmatprep.subr.mxu0 0.0
        %3808 = vmatpush1.msra.mxu0 0.0
        %3809 = vmatprep.subr.mxu0 0.0
        %3810 = vmatpush1.msra.mxu0 0.0
        %3811 = vmatprep.subr.mxu0 0.0
        %3812 = vmatpush1.msra.mxu0 0.0
        %3813 = vmatprep.subr.mxu0 0.0
        %3814 = vmatpush1.msra.mxu0 0.0
        %3815 = vmatprep.subr.mxu0 0.0
        %3816 = vmatpush1.msra.mxu0 0.0
        %3817 = vmatprep.subr.mxu0 0.0
        %3818 = vmatpush1.msra.mxu0 0.0
        %3819 = vmatprep.subr.mxu0 0.0
        %3820 = vmatpush1.msra.mxu0 0.0
        %3821 = vmatprep.subr.mxu0 0.0
        %3822 = vmatpush1.msra.mxu0 0.0
        %3823 = vmatprep.subr.mxu0 0.0
        %3824 = vmatpush1.msra.mxu0 0.0
        %3825 = vmatprep.subr.mxu0 0.0
        %3826 = vmatpush1.msra.mxu0 0.0
        %3827 = vmatprep.subr.mxu0 0.0
        %3828 = vmatpush1.msra.mxu0 0.0
        %3829 = vmatprep.subr.mxu0 0.0
        %3830 = vmatpush1.msra.mxu0 0.0
        %3831 = vmatprep.subr.mxu0 0.0
        %3832 = vmatpush1.msra.mxu0 0.0
        %3833 = vmatprep.subr.mxu0 0.0
        %3834 = vmatpush1.msra.mxu0 %v3292
        %3835 = vmatprep.subr.mxu0 0.0
        %3836 = vmatpush2.msra.mxu0 0.0
        %3837 = vmatprep.subr.mxu0 0.0
        %3838 = vmatpush2.msra.mxu0 0.0
        %3839 = vmatprep.subr.mxu0 0.0
        %3840 = vmatpush2.msra.mxu0 0.0
        %3841 = vmatprep.subr.mxu0 0.0
        %3842 = vmatpush2.msra.mxu0 0.0
        %3843 = vmatprep.subr.mxu0 0.0
        %3844 = vmatpush2.msra.mxu0 0.0
        %3845 = vmatprep.subr.mxu0 0.0
        %3846 = vmatpush2.msra.mxu0 0.0
        %3847 = vmatprep.subr.mxu0 0.0
        %3848 = vmatpush2.msra.mxu0 0.0
        %3849 = vmatprep.subr.mxu0 0.0
        %3850 = vmatpush2.msra.mxu0 0.0
        %3851 = vmatprep.subr.mxu0 0.0
        %3852 = vmatpush2.msra.mxu0 0.0
        %3853 = vmatprep.subr.mxu0 0.0
        %3854 = vmatpush2.msra.mxu0 0.0
        %3855 = vmatprep.subr.mxu0 0.0
        %3856 = vmatpush2.msra.mxu0 0.0
        %3857 = vmatprep.subr.mxu0 0.0
        %3858 = vmatpush2.msra.mxu0 0.0
        %3859 = vmatprep.subr.mxu0 0.0
        %3860 = vmatpush2.msra.mxu0 0.0
        %3861 = vmatprep.subr.mxu0 0.0
        %3862 = vmatpush2.msra.mxu0 0.0
        %3863 = vmatprep.subr.mxu0 0.0
        %3864 = vmatpush2.msra.mxu0 0.0
        %3865 = vmatprep.subr.mxu0 0.0
        %3866 = vmatpush2.msra.mxu0 0.0
        %3867 = vmatprep.mubr.f32.mxu0 0.0
        %3868 = vmatmul.mubr.f32.gmra.mxu0 %v3801
        %v3869 = vpop.f32.mrf.mxu0
        %v3870 = vadd.f32 %v3724, %v3869
        %v3871 = vpop.f32.mrf.mxu0
        %3872 = vdwg.mxu0
        %v3874 = vsel %vm1010, %v3625, 0
        %3876 = vmatprep.subr.mxu0 0.0
        %3877 = vmatpush1.msra.mxu0 0.0
        %3878 = vmatprep.subr.mxu0 0.0
        %3879 = vmatpush1.msra.mxu0 0.0
        %3880 = vmatprep.subr.mxu0 0.0
        %3881 = vmatpush1.msra.mxu0 0.0
        %3882 = vmatprep.subr.mxu0 0.0
        %3883 = vmatpush1.msra.mxu0 0.0
        %3884 = vmatprep.subr.mxu0 0.0
        %3885 = vmatpush1.msra.mxu0 0.0
        %3886 = vmatprep.subr.mxu0 0.0
        %3887 = vmatpush1.msra.mxu0 0.0
        %3888 = vmatprep.subr.mxu0 0.0
        %3889 = vmatpush1.msra.mxu0 0.0
        %3890 = vmatprep.subr.mxu0 0.0
        %3891 = vmatpush1.msra.mxu0 0.0
        %3892 = vmatprep.subr.mxu0 0.0
        %3893 = vmatpush1.msra.mxu0 0.0
        %3894 = vmatprep.subr.mxu0 0.0
        %3895 = vmatpush1.msra.mxu0 0.0
        %3896 = vmatprep.subr.mxu0 0.0
        %3897 = vmatpush1.msra.mxu0 0.0
        %3898 = vmatprep.subr.mxu0 0.0
        %3899 = vmatpush1.msra.mxu0 0.0
        %3900 = vmatprep.subr.mxu0 0.0
        %3901 = vmatpush1.msra.mxu0 0.0
        %3902 = vmatprep.subr.mxu0 0.0
        %3903 = vmatpush1.msra.mxu0 0.0
        %3904 = vmatprep.subr.mxu0 0.0
        %3905 = vmatpush1.msra.mxu0 0.0
        %3906 = vmatprep.subr.mxu0 0.0
        %3907 = vmatpush1.msra.mxu0 %v3297
        %3908 = vmatprep.subr.mxu0 0.0
        %3909 = vmatpush2.msra.mxu0 0.0
        %3910 = vmatprep.subr.mxu0 0.0
        %3911 = vmatpush2.msra.mxu0 0.0
        %3912 = vmatprep.subr.mxu0 0.0
        %3913 = vmatpush2.msra.mxu0 0.0
        %3914 = vmatprep.subr.mxu0 0.0
        %3915 = vmatpush2.msra.mxu0 0.0
        %3916 = vmatprep.subr.mxu0 0.0
        %3917 = vmatpush2.msra.mxu0 0.0
        %3918 = vmatprep.subr.mxu0 0.0
        %3919 = vmatpush2.msra.mxu0 0.0
        %3920 = vmatprep.subr.mxu0 0.0
        %3921 = vmatpush2.msra.mxu0 0.0
        %3922 = vmatprep.subr.mxu0 0.0
        %3923 = vmatpush2.msra.mxu0 0.0
        %3924 = vmatprep.subr.mxu0 0.0
        %3925 = vmatpush2.msra.mxu0 0.0
        %3926 = vmatprep.subr.mxu0 0.0
        %3927 = vmatpush2.msra.mxu0 0.0
        %3928 = vmatprep.subr.mxu0 0.0
        %3929 = vmatpush2.msra.mxu0 0.0
        %3930 = vmatprep.subr.mxu0 0.0
        %3931 = vmatpush2.msra.mxu0 0.0
        %3932 = vmatprep.subr.mxu0 0.0
        %3933 = vmatpush2.msra.mxu0 0.0
        %3934 = vmatprep.subr.mxu0 0.0
        %3935 = vmatpush2.msra.mxu0 0.0
        %3936 = vmatprep.subr.mxu0 0.0
        %3937 = vmatpush2.msra.mxu0 0.0
        %3938 = vmatprep.subr.mxu0 0.0
        %3939 = vmatpush2.msra.mxu0 0.0
        %3940 = vmatprep.mubr.f32.mxu0 0.0
        %3941 = vmatmul.mubr.f32.gmra.mxu0 %v3874
        %v3942 = vpop.f32.mrf.mxu0
        %v3943 = vadd.f32 %v3797, %v3942
        %v3944 = vpop.f32.mrf.mxu0
        %3945 = vdwg.mxu0
        %v3946 = vmul.f32 %v3870, %v3652
        %v3947 = vmul.f32 %v3943, %v3653
        %s3948 = scalar_lea.vmem %s524, 16
        %v3949 = vld [vmem:[%s3948] sm:$0xff]
        %v3951 = vsel %vm1010, %v3946, 0
        %v3954 = vsel %vm1010, %v3947, 0
        %3956 = vmatprep.subr.mxu0 0.0
        %3957 = vmatpush1.msra.mxu0 0.0
        %3958 = vmatprep.subr.mxu0 0.0
        %3959 = vmatpush1.msra.mxu0 0.0
        %3960 = vmatprep.subr.mxu0 0.0
        %3961 = vmatpush1.msra.mxu0 0.0
        %3962 = vmatprep.subr.mxu0 0.0
        %3963 = vmatpush1.msra.mxu0 0.0
        %3964 = vmatprep.subr.mxu0 0.0
        %3965 = vmatpush1.msra.mxu0 0.0
        %3966 = vmatprep.subr.mxu0 0.0
        %3967 = vmatpush1.msra.mxu0 0.0
        %3968 = vmatprep.subr.mxu0 0.0
        %3969 = vmatpush1.msra.mxu0 0.0
        %3970 = vmatprep.subr.mxu0 0.0
        %3971 = vmatpush1.msra.mxu0 0.0
        %3972 = vmatprep.subr.mxu0 0.0
        %3973 = vmatpush1.msra.mxu0 0.0
        %3974 = vmatprep.subr.mxu0 0.0
        %3975 = vmatpush1.msra.mxu0 0.0
        %3976 = vmatprep.subr.mxu0 0.0
        %3977 = vmatpush1.msra.mxu0 0.0
        %3978 = vmatprep.subr.mxu0 0.0
        %3979 = vmatpush1.msra.mxu0 0.0
        %3980 = vmatprep.subr.mxu0 0.0
        %3981 = vmatpush1.msra.mxu0 0.0
        %3982 = vmatprep.subr.mxu0 0.0
        %3983 = vmatpush1.msra.mxu0 0.0
        %3984 = vmatprep.subr.mxu0 0.0
        %3985 = vmatpush1.msra.mxu0 0.0
        %3986 = vmatprep.subr.mxu0 0.0
        %3987 = vmatpush1.msra.mxu0 %v3949
        %3988 = vmatprep.subr.mxu0 0.0
        %3989 = vmatpush2.msra.mxu0 0.0
        %3990 = vmatprep.subr.mxu0 0.0
        %3991 = vmatpush2.msra.mxu0 0.0
        %3992 = vmatprep.subr.mxu0 0.0
        %3993 = vmatpush2.msra.mxu0 0.0
        %3994 = vmatprep.subr.mxu0 0.0
        %3995 = vmatpush2.msra.mxu0 0.0
        %3996 = vmatprep.subr.mxu0 0.0
        %3997 = vmatpush2.msra.mxu0 0.0
        %3998 = vmatprep.subr.mxu0 0.0
        %3999 = vmatpush2.msra.mxu0 0.0
        %4000 = vmatprep.subr.mxu0 0.0
        %4001 = vmatpush2.msra.mxu0 0.0
        %4002 = vmatprep.subr.mxu0 0.0
        %4003 = vmatpush2.msra.mxu0 0.0
        %4004 = vmatprep.subr.mxu0 0.0
        %4005 = vmatpush2.msra.mxu0 0.0
        %4006 = vmatprep.subr.mxu0 0.0
        %4007 = vmatpush2.msra.mxu0 0.0
        %4008 = vmatprep.subr.mxu0 0.0
        %4009 = vmatpush2.msra.mxu0 0.0
        %4010 = vmatprep.subr.mxu0 0.0
        %4011 = vmatpush2.msra.mxu0 0.0
        %4012 = vmatprep.subr.mxu0 0.0
        %4013 = vmatpush2.msra.mxu0 0.0
        %4014 = vmatprep.subr.mxu0 0.0
        %4015 = vmatpush2.msra.mxu0 0.0
        %4016 = vmatprep.subr.mxu0 0.0
        %4017 = vmatpush2.msra.mxu0 0.0
        %4018 = vmatprep.subr.mxu0 0.0
        %4019 = vmatpush2.msra.mxu0 0.0
        %4020 = vmatprep.mubr.f32.mxu0 0.0
        %4021 = vmatmul.mubr.f32.gmra.mxu0 %v3951
        %v4022 = vpop.f32.mrf.mxu0
        %v4023 = vadd.f32 0.0, %v4022
        %v4024 = vpop.f32.mrf.mxu0
        %4025 = vmatprep.mubr.f32.mxu0 0.0
        %4026 = vmatmul.mubr.f32.gmra.mxu0 %v3954
        %v4027 = vpop.f32.mrf.mxu0
        %v4028 = vadd.f32 0.0, %v4027
        %v4029 = vpop.f32.mrf.mxu0
        %4030 = vdwg.mxu0
        %v4031 = vadd.f32 %v2878, %v4023
        %v4032 = vadd.f32 %v2883, %v4028
        %s4033 = scalar_lea.vmem %s515, 96
        %v4034 = vld [vmem:[%s4033] sm:$0xff]
        %v4035 = vld [vmem:[%s4033 + $0x8] sm:$0xff]
        %v4036 = vld [vmem:[%s4033 + $0x10] sm:$0xff]
        %v4037 = vld [vmem:[%s4033 + $0x18] sm:$0xff]
        %s4038 = scalar_lea.vmem %s515, 224
        %v4039 = vld [vmem:[%s4038] sm:$0xff]
        %v4040 = vld [vmem:[%s4038 + $0x8] sm:$0xff]
        %v4041 = vld [vmem:[%s4038 + $0x10] sm:$0xff]
        %v4042 = vld [vmem:[%s4038 + $0x18] sm:$0xff]
        %s4043 = scalar_lea.vmem %s515, 352
        %v4044 = vld [vmem:[%s4043] sm:$0xff]
        %v4045 = vld [vmem:[%s4043 + $0x8] sm:$0xff]
        %v4046 = vld [vmem:[%s4043 + $0x10] sm:$0xff]
        %v4047 = vld [vmem:[%s4043 + $0x18] sm:$0xff]
        %s4048 = scalar_lea.vmem %s519, 3
        %v4049 = vld [vmem:[%s4048] sm:$0x1]
        %s4050 = scalar_lea.vmem %s519, 7
        %v4051 = vld [vmem:[%s4050] sm:$0x1]
        %s4052 = scalar_lea.vmem %s519, 11
        %v4053 = vld [vmem:[%s4052] sm:$0x1]
        %v4055 = vlaneseq
        %v4056 = vshrl.u32 %v4055, 7
        %v4057 = vsub.s32 0, %v4056
        %v4058 = vrot.slane %v4049, %v4057
        %4060 = vmatprep.subr.mxu0 0.0
        %4061 = vmatpush1.msra.mxu0 0.0
        %4062 = vmatprep.subr.mxu0 0.0
        %4063 = vmatpush1.msra.mxu0 0.0
        %4064 = vmatprep.subr.mxu0 0.0
        %4065 = vmatpush1.msra.mxu0 0.0
        %4066 = vmatprep.subr.mxu0 0.0
        %4067 = vmatpush1.msra.mxu0 0.0
        %4068 = vmatprep.subr.mxu0 0.0
        %4069 = vmatpush1.msra.mxu0 0.0
        %4070 = vmatprep.subr.mxu0 0.0
        %4071 = vmatpush1.msra.mxu0 0.0
        %4072 = vmatprep.subr.mxu0 0.0
        %4073 = vmatpush1.msra.mxu0 0.0
        %4074 = vmatprep.subr.mxu0 0.0
        %4075 = vmatpush1.msra.mxu0 0.0
        %4076 = vmatprep.subr.mxu0 0.0
        %4077 = vmatpush1.msra.mxu0 0.0
        %4078 = vmatprep.subr.mxu0 0.0
        %4079 = vmatpush1.msra.mxu0 0.0
        %4080 = vmatprep.subr.mxu0 0.0
        %4081 = vmatpush1.msra.mxu0 0.0
        %4082 = vmatprep.subr.mxu0 0.0
        %4083 = vmatpush1.msra.mxu0 0.0
        %4084 = vmatprep.subr.mxu0 0.0
        %4085 = vmatpush1.msra.mxu0 %v4037
        %4086 = vmatprep.subr.mxu0 0.0
        %4087 = vmatpush1.msra.mxu0 %v4036
        %4088 = vmatprep.subr.mxu0 0.0
        %4089 = vmatpush1.msra.mxu0 %v4035
        %4090 = vmatprep.subr.mxu0 0.0
        %4091 = vmatpush1.msra.mxu0 %v4034
        %4092 = vmatprep.subr.mxu0 0.0
        %4093 = vmatpush2.msra.mxu0 0.0
        %4094 = vmatprep.subr.mxu0 0.0
        %4095 = vmatpush2.msra.mxu0 0.0
        %4096 = vmatprep.subr.mxu0 0.0
        %4097 = vmatpush2.msra.mxu0 0.0
        %4098 = vmatprep.subr.mxu0 0.0
        %4099 = vmatpush2.msra.mxu0 0.0
        %4100 = vmatprep.subr.mxu0 0.0
        %4101 = vmatpush2.msra.mxu0 0.0
        %4102 = vmatprep.subr.mxu0 0.0
        %4103 = vmatpush2.msra.mxu0 0.0
        %4104 = vmatprep.subr.mxu0 0.0
        %4105 = vmatpush2.msra.mxu0 0.0
        %4106 = vmatprep.subr.mxu0 0.0
        %4107 = vmatpush2.msra.mxu0 0.0
        %4108 = vmatprep.subr.mxu0 0.0
        %4109 = vmatpush2.msra.mxu0 0.0
        %4110 = vmatprep.subr.mxu0 0.0
        %4111 = vmatpush2.msra.mxu0 0.0
        %4112 = vmatprep.subr.mxu0 0.0
        %4113 = vmatpush2.msra.mxu0 0.0
        %4114 = vmatprep.subr.mxu0 0.0
        %4115 = vmatpush2.msra.mxu0 0.0
        %4116 = vmatprep.subr.mxu0 0.0
        %4117 = vmatpush2.msra.mxu0 0.0
        %4118 = vmatprep.subr.mxu0 0.0
        %4119 = vmatpush2.msra.mxu0 0.0
        %4120 = vmatprep.subr.mxu0 0.0
        %4121 = vmatpush2.msra.mxu0 0.0
        %4122 = vmatprep.subr.mxu0 0.0
        %4123 = vmatpush2.msra.mxu0 0.0
        %4124 = vmatprep.mubr.f32.mxu0 0.0
        %4125 = vmatmul.mubr.f32.gmra.mxu0 %v612
        %v4126 = vpop.f32.mrf.mxu0
        %v4127 = vadd.f32 %v4058, %v4126
        %v4128 = vpop.f32.mrf.mxu0
        %4129 = vmatprep.mubr.f32.mxu0 0.0
        %4130 = vmatmul.mubr.f32.gmra.mxu0 %v615
        %v4131 = vpop.f32.mrf.mxu0
        %v4132 = vadd.f32 %v4058, %v4131
        %v4133 = vpop.f32.mrf.mxu0
        %4134 = vdwg.mxu0
        %v4136 = vlaneseq
        %v4137 = vshrl.u32 %v4136, 7
        %v4138 = vsub.s32 0, %v4137
        %v4139 = vrot.slane %v4051, %v4138
        %4141 = vmatprep.subr.mxu0 0.0
        %4142 = vmatpush1.msra.mxu0 0.0
        %4143 = vmatprep.subr.mxu0 0.0
        %4144 = vmatpush1.msra.mxu0 0.0
        %4145 = vmatprep.subr.mxu0 0.0
        %4146 = vmatpush1.msra.mxu0 0.0
        %4147 = vmatprep.subr.mxu0 0.0
        %4148 = vmatpush1.msra.mxu0 0.0
        %4149 = vmatprep.subr.mxu0 0.0
        %4150 = vmatpush1.msra.mxu0 0.0
        %4151 = vmatprep.subr.mxu0 0.0
        %4152 = vmatpush1.msra.mxu0 0.0
        %4153 = vmatprep.subr.mxu0 0.0
        %4154 = vmatpush1.msra.mxu0 0.0
        %4155 = vmatprep.subr.mxu0 0.0
        %4156 = vmatpush1.msra.mxu0 0.0
        %4157 = vmatprep.subr.mxu0 0.0
        %4158 = vmatpush1.msra.mxu0 0.0
        %4159 = vmatprep.subr.mxu0 0.0
        %4160 = vmatpush1.msra.mxu0 0.0
        %4161 = vmatprep.subr.mxu0 0.0
        %4162 = vmatpush1.msra.mxu0 0.0
        %4163 = vmatprep.subr.mxu0 0.0
        %4164 = vmatpush1.msra.mxu0 0.0
        %4165 = vmatprep.subr.mxu0 0.0
        %4166 = vmatpush1.msra.mxu0 %v4042
        %4167 = vmatprep.subr.mxu0 0.0
        %4168 = vmatpush1.msra.mxu0 %v4041
        %4169 = vmatprep.subr.mxu0 0.0
        %4170 = vmatpush1.msra.mxu0 %v4040
        %4171 = vmatprep.subr.mxu0 0.0
        %4172 = vmatpush1.msra.mxu0 %v4039
        %4173 = vmatprep.subr.mxu0 0.0
        %4174 = vmatpush2.msra.mxu0 0.0
        %4175 = vmatprep.subr.mxu0 0.0
        %4176 = vmatpush2.msra.mxu0 0.0
        %4177 = vmatprep.subr.mxu0 0.0
        %4178 = vmatpush2.msra.mxu0 0.0
        %4179 = vmatprep.subr.mxu0 0.0
        %4180 = vmatpush2.msra.mxu0 0.0
        %4181 = vmatprep.subr.mxu0 0.0
        %4182 = vmatpush2.msra.mxu0 0.0
        %4183 = vmatprep.subr.mxu0 0.0
        %4184 = vmatpush2.msra.mxu0 0.0
        %4185 = vmatprep.subr.mxu0 0.0
        %4186 = vmatpush2.msra.mxu0 0.0
        %4187 = vmatprep.subr.mxu0 0.0
        %4188 = vmatpush2.msra.mxu0 0.0
        %4189 = vmatprep.subr.mxu0 0.0
        %4190 = vmatpush2.msra.mxu0 0.0
        %4191 = vmatprep.subr.mxu0 0.0
        %4192 = vmatpush2.msra.mxu0 0.0
        %4193 = vmatprep.subr.mxu0 0.0
        %4194 = vmatpush2.msra.mxu0 0.0
        %4195 = vmatprep.subr.mxu0 0.0
        %4196 = vmatpush2.msra.mxu0 0.0
        %4197 = vmatprep.subr.mxu0 0.0
        %4198 = vmatpush2.msra.mxu0 0.0
        %4199 = vmatprep.subr.mxu0 0.0
        %4200 = vmatpush2.msra.mxu0 0.0
        %4201 = vmatprep.subr.mxu0 0.0
        %4202 = vmatpush2.msra.mxu0 0.0
        %4203 = vmatprep.subr.mxu0 0.0
        %4204 = vmatpush2.msra.mxu0 0.0
        %4205 = vmatprep.mubr.f32.mxu0 0.0
        %4206 = vmatmul.mubr.f32.gmra.mxu0 %v612
        %v4207 = vpop.f32.mrf.mxu0
        %v4208 = vadd.f32 %v4139, %v4207
        %v4209 = vpop.f32.mrf.mxu0
        %4210 = vmatprep.mubr.f32.mxu0 0.0
        %4211 = vmatmul.mubr.f32.gmra.mxu0 %v615
        %v4212 = vpop.f32.mrf.mxu0
        %v4213 = vadd.f32 %v4139, %v4212
        %v4214 = vpop.f32.mrf.mxu0
        %4215 = vdwg.mxu0
        %v4217 = vlaneseq
        %v4218 = vshrl.u32 %v4217, 7
        %v4219 = vsub.s32 0, %v4218
        %v4220 = vrot.slane %v4053, %v4219
        %4222 = vmatprep.subr.mxu0 0.0
        %4223 = vmatpush1.msra.mxu0 0.0
        %4224 = vmatprep.subr.mxu0 0.0
        %4225 = vmatpush1.msra.mxu0 0.0
        %4226 = vmatprep.subr.mxu0 0.0
        %4227 = vmatpush1.msra.mxu0 0.0
        %4228 = vmatprep.subr.mxu0 0.0
        %4229 = vmatpush1.msra.mxu0 0.0
        %4230 = vmatprep.subr.mxu0 0.0
        %4231 = vmatpush1.msra.mxu0 0.0
        %4232 = vmatprep.subr.mxu0 0.0
        %4233 = vmatpush1.msra.mxu0 0.0
        %4234 = vmatprep.subr.mxu0 0.0
        %4235 = vmatpush1.msra.mxu0 0.0
        %4236 = vmatprep.subr.mxu0 0.0
        %4237 = vmatpush1.msra.mxu0 0.0
        %4238 = vmatprep.subr.mxu0 0.0
        %4239 = vmatpush1.msra.mxu0 0.0
        %4240 = vmatprep.subr.mxu0 0.0
        %4241 = vmatpush1.msra.mxu0 0.0
        %4242 = vmatprep.subr.mxu0 0.0
        %4243 = vmatpush1.msra.mxu0 0.0
        %4244 = vmatprep.subr.mxu0 0.0
        %4245 = vmatpush1.msra.mxu0 0.0
        %4246 = vmatprep.subr.mxu0 0.0
        %4247 = vmatpush1.msra.mxu0 %v4047
        %4248 = vmatprep.subr.mxu0 0.0
        %4249 = vmatpush1.msra.mxu0 %v4046
        %4250 = vmatprep.subr.mxu0 0.0
        %4251 = vmatpush1.msra.mxu0 %v4045
        %4252 = vmatprep.subr.mxu0 0.0
        %4253 = vmatpush1.msra.mxu0 %v4044
        %4254 = vmatprep.subr.mxu0 0.0
        %4255 = vmatpush2.msra.mxu0 0.0
        %4256 = vmatprep.subr.mxu0 0.0
        %4257 = vmatpush2.msra.mxu0 0.0
        %4258 = vmatprep.subr.mxu0 0.0
        %4259 = vmatpush2.msra.mxu0 0.0
        %4260 = vmatprep.subr.mxu0 0.0
        %4261 = vmatpush2.msra.mxu0 0.0
        %4262 = vmatprep.subr.mxu0 0.0
        %4263 = vmatpush2.msra.mxu0 0.0
        %4264 = vmatprep.subr.mxu0 0.0
        %4265 = vmatpush2.msra.mxu0 0.0
        %4266 = vmatprep.subr.mxu0 0.0
        %4267 = vmatpush2.msra.mxu0 0.0
        %4268 = vmatprep.subr.mxu0 0.0
        %4269 = vmatpush2.msra.mxu0 0.0
        %4270 = vmatprep.subr.mxu0 0.0
        %4271 = vmatpush2.msra.mxu0 0.0
        %4272 = vmatprep.subr.mxu0 0.0
        %4273 = vmatpush2.msra.mxu0 0.0
        %4274 = vmatprep.subr.mxu0 0.0
        %4275 = vmatpush2.msra.mxu0 0.0
        %4276 = vmatprep.subr.mxu0 0.0
        %4277 = vmatpush2.msra.mxu0 0.0
        %4278 = vmatprep.subr.mxu0 0.0
        %4279 = vmatpush2.msra.mxu0 0.0
        %4280 = vmatprep.subr.mxu0 0.0
        %4281 = vmatpush2.msra.mxu0 0.0
        %4282 = vmatprep.subr.mxu0 0.0
        %4283 = vmatpush2.msra.mxu0 0.0
        %4284 = vmatprep.subr.mxu0 0.0
        %4285 = vmatpush2.msra.mxu0 0.0
        %4286 = vmatprep.mubr.f32.mxu0 0.0
        %4287 = vmatmul.mubr.f32.gmra.mxu0 %v612
        %v4288 = vpop.f32.mrf.mxu0
        %v4289 = vadd.f32 %v4220, %v4288
        %v4290 = vpop.f32.mrf.mxu0
        %4291 = vmatprep.mubr.f32.mxu0 0.0
        %4292 = vmatmul.mubr.f32.gmra.mxu0 %v615
        %v4293 = vpop.f32.mrf.mxu0
        %v4294 = vadd.f32 %v4220, %v4293
        %v4295 = vpop.f32.mrf.mxu0
        %4296 = vdwg.mxu0
        %4297 = vmatprep.subr.mxu0 0.0
        %4298 = vmatpush1.msra.mxu0 0.0
        %4299 = vmatprep.subr.mxu0 0.0
        %4300 = vmatpush1.msra.mxu0 0.0
        %4301 = vmatprep.subr.mxu0 0.0
        %4302 = vmatpush1.msra.mxu0 0.0
        %4303 = vmatprep.subr.mxu0 0.0
        %4304 = vmatpush1.msra.mxu0 0.0
        %4305 = vmatprep.subr.mxu0 0.0
        %4306 = vmatpush1.msra.mxu0 0.0
        %4307 = vmatprep.subr.mxu0 0.0
        %4308 = vmatpush1.msra.mxu0 0.0
        %4309 = vmatprep.subr.mxu0 0.0
        %4310 = vmatpush1.msra.mxu0 0.0
        %4311 = vmatprep.subr.mxu0 0.0
        %4312 = vmatpush1.msra.mxu0 0.0
        %4313 = vmatprep.subr.mxu0 0.0
        %4314 = vmatpush1.msra.mxu0 0.0
        %4315 = vmatprep.subr.mxu0 0.0
        %4316 = vmatpush1.msra.mxu0 0.0
        %4317 = vmatprep.subr.mxu0 0.0
        %4318 = vmatpush1.msra.mxu0 0.0
        %4319 = vmatprep.subr.mxu0 0.0
        %4320 = vmatpush1.msra.mxu0 0.0
        %4321 = vmatprep.subr.mxu0 0.0
        %4322 = vmatpush1.msra.mxu0 %v4042
        %4323 = vmatprep.subr.mxu0 0.0
        %4324 = vmatpush1.msra.mxu0 %v4041
        %4325 = vmatprep.subr.mxu0 0.0
        %4326 = vmatpush1.msra.mxu0 %v4040
        %4327 = vmatprep.subr.mxu0 0.0
        %4328 = vmatpush1.msra.mxu0 %v4039
        %4329 = vmatprep.subr.mxu0 0.0
        %4330 = vmatpush2.msra.mxu0 0.0
        %4331 = vmatprep.subr.mxu0 0.0
        %4332 = vmatpush2.msra.mxu0 0.0
        %4333 = vmatprep.subr.mxu0 0.0
        %4334 = vmatpush2.msra.mxu0 0.0
        %4335 = vmatprep.subr.mxu0 0.0
        %4336 = vmatpush2.msra.mxu0 0.0
        %4337 = vmatprep.subr.mxu0 0.0
        %4338 = vmatpush2.msra.mxu0 0.0
        %4339 = vmatprep.subr.mxu0 0.0
        %4340 = vmatpush2.msra.mxu0 0.0
        %4341 = vmatprep.subr.mxu0 0.0
        %4342 = vmatpush2.msra.mxu0 0.0
        %4343 = vmatprep.subr.mxu0 0.0
        %4344 = vmatpush2.msra.mxu0 0.0
        %4345 = vmatprep.subr.mxu0 0.0
        %4346 = vmatpush2.msra.mxu0 0.0
        %4347 = vmatprep.subr.mxu0 0.0
        %4348 = vmatpush2.msra.mxu0 0.0
        %4349 = vmatprep.subr.mxu0 0.0
        %4350 = vmatpush2.msra.mxu0 0.0
        %4351 = vmatprep.subr.mxu0 0.0
        %4352 = vmatpush2.msra.mxu0 0.0
        %4353 = vmatprep.subr.mxu0 0.0
        %4354 = vmatpush2.msra.mxu0 0.0
        %4355 = vmatprep.subr.mxu0 0.0
        %4356 = vmatpush2.msra.mxu0 0.0
        %4357 = vmatprep.subr.mxu0 0.0
        %4358 = vmatpush2.msra.mxu0 0.0
        %4359 = vmatprep.subr.mxu0 0.0
        %4360 = vmatpush2.msra.mxu0 0.0
        %4361 = vmatprep.mubr.f32.mxu0 0.0
        %4362 = vmatmul.mubr.f32.gmra.mxu0 %v855
        %v4363 = vpop.f32.mrf.mxu0
        %v4364 = vadd.f32 %v4139, %v4363
        %v4365 = vpop.f32.mrf.mxu0
        %4366 = vmatprep.mubr.f32.mxu0 0.0
        %4367 = vmatmul.mubr.f32.gmra.mxu0 %v858
        %v4368 = vpop.f32.mrf.mxu0
        %v4369 = vadd.f32 %v4139, %v4368
        %v4370 = vpop.f32.mrf.mxu0
        %4371 = vdwg.mxu0
        %4372 = vmatprep.subr.mxu0 0.0
        %4373 = vmatpush1.msra.mxu0 0.0
        %4374 = vmatprep.subr.mxu0 0.0
        %4375 = vmatpush1.msra.mxu0 0.0
        %4376 = vmatprep.subr.mxu0 0.0
        %4377 = vmatpush1.msra.mxu0 0.0
        %4378 = vmatprep.subr.mxu0 0.0
        %4379 = vmatpush1.msra.mxu0 0.0
        %4380 = vmatprep.subr.mxu0 0.0
        %4381 = vmatpush1.msra.mxu0 0.0
        %4382 = vmatprep.subr.mxu0 0.0
        %4383 = vmatpush1.msra.mxu0 0.0
        %4384 = vmatprep.subr.mxu0 0.0
        %4385 = vmatpush1.msra.mxu0 0.0
        %4386 = vmatprep.subr.mxu0 0.0
        %4387 = vmatpush1.msra.mxu0 0.0
        %4388 = vmatprep.subr.mxu0 0.0
        %4389 = vmatpush1.msra.mxu0 0.0
        %4390 = vmatprep.subr.mxu0 0.0
        %4391 = vmatpush1.msra.mxu0 0.0
        %4392 = vmatprep.subr.mxu0 0.0
        %4393 = vmatpush1.msra.mxu0 0.0
        %4394 = vmatprep.subr.mxu0 0.0
        %4395 = vmatpush1.msra.mxu0 0.0
        %4396 = vmatprep.subr.mxu0 0.0
        %4397 = vmatpush1.msra.mxu0 %v4047
        %4398 = vmatprep.subr.mxu0 0.0
        %4399 = vmatpush1.msra.mxu0 %v4046
        %4400 = vmatprep.subr.mxu0 0.0
        %4401 = vmatpush1.msra.mxu0 %v4045
        %4402 = vmatprep.subr.mxu0 0.0
        %4403 = vmatpush1.msra.mxu0 %v4044
        %4404 = vmatprep.subr.mxu0 0.0
        %4405 = vmatpush2.msra.mxu0 0.0
        %4406 = vmatprep.subr.mxu0 0.0
        %4407 = vmatpush2.msra.mxu0 0.0
        %4408 = vmatprep.subr.mxu0 0.0
        %4409 = vmatpush2.msra.mxu0 0.0
        %4410 = vmatprep.subr.mxu0 0.0
        %4411 = vmatpush2.msra.mxu0 0.0
        %4412 = vmatprep.subr.mxu0 0.0
        %4413 = vmatpush2.msra.mxu0 0.0
        %4414 = vmatprep.subr.mxu0 0.0
        %4415 = vmatpush2.msra.mxu0 0.0
        %4416 = vmatprep.subr.mxu0 0.0
        %4417 = vmatpush2.msra.mxu0 0.0
        %4418 = vmatprep.subr.mxu0 0.0
        %4419 = vmatpush2.msra.mxu0 0.0
        %4420 = vmatprep.subr.mxu0 0.0
        %4421 = vmatpush2.msra.mxu0 0.0
        %4422 = vmatprep.subr.mxu0 0.0
        %4423 = vmatpush2.msra.mxu0 0.0
        %4424 = vmatprep.subr.mxu0 0.0
        %4425 = vmatpush2.msra.mxu0 0.0
        %4426 = vmatprep.subr.mxu0 0.0
        %4427 = vmatpush2.msra.mxu0 0.0
        %4428 = vmatprep.subr.mxu0 0.0
        %4429 = vmatpush2.msra.mxu0 0.0
        %4430 = vmatprep.subr.mxu0 0.0
        %4431 = vmatpush2.msra.mxu0 0.0
        %4432 = vmatprep.subr.mxu0 0.0
        %4433 = vmatpush2.msra.mxu0 0.0
        %4434 = vmatprep.subr.mxu0 0.0
        %4435 = vmatpush2.msra.mxu0 0.0
        %4436 = vmatprep.mubr.f32.mxu0 0.0
        %4437 = vmatmul.mubr.f32.gmra.mxu0 %v855
        %v4438 = vpop.f32.mrf.mxu0
        %v4439 = vadd.f32 %v4220, %v4438
        %v4440 = vpop.f32.mrf.mxu0
        %4441 = vmatprep.mubr.f32.mxu0 0.0
        %4442 = vmatmul.mubr.f32.gmra.mxu0 %v858
        %v4443 = vpop.f32.mrf.mxu0
        %v4444 = vadd.f32 %v4220, %v4443
        %v4445 = vpop.f32.mrf.mxu0
        %4446 = vdwg.mxu0
        %v4448 = vsel %vm1010, %v4127, 0
        %v4451 = vsel %vm1010, %v4364, 0
        %4453 = vmatprep.subr.mxu0 0.0
        %4454 = vmatpush1.xpose.msra.mxu0 0.0
        %4455 = vmatprep.subr.mxu0 0.0
        %4456 = vmatpush1.xpose.msra.mxu0 0.0
        %4457 = vmatprep.subr.mxu0 0.0
        %4458 = vmatpush1.xpose.msra.mxu0 0.0
        %4459 = vmatprep.subr.mxu0 0.0
        %4460 = vmatpush1.xpose.msra.mxu0 0.0
        %4461 = vmatprep.subr.mxu0 0.0
        %4462 = vmatpush1.xpose.msra.mxu0 0.0
        %4463 = vmatprep.subr.mxu0 0.0
        %4464 = vmatpush1.xpose.msra.mxu0 0.0
        %4465 = vmatprep.subr.mxu0 0.0
        %4466 = vmatpush1.xpose.msra.mxu0 0.0
        %4467 = vmatprep.subr.mxu0 0.0
        %4468 = vmatpush1.xpose.msra.mxu0 0.0
        %4469 = vmatprep.subr.mxu0 0.0
        %4470 = vmatpush1.xpose.msra.mxu0 0.0
        %4471 = vmatprep.subr.mxu0 0.0
        %4472 = vmatpush1.xpose.msra.mxu0 0.0
        %4473 = vmatprep.subr.mxu0 0.0
        %4474 = vmatpush1.xpose.msra.mxu0 0.0
        %4475 = vmatprep.subr.mxu0 0.0
        %4476 = vmatpush1.xpose.msra.mxu0 0.0
        %4477 = vmatprep.subr.mxu0 0.0
        %4478 = vmatpush1.xpose.msra.mxu0 0.0
        %4479 = vmatprep.subr.mxu0 0.0
        %4480 = vmatpush1.xpose.msra.mxu0 0.0
        %4481 = vmatprep.subr.mxu0 0.0
        %4482 = vmatpush1.xpose.msra.mxu0 0.0
        %4483 = vmatprep.subr.mxu0 0.0
        %4484 = vmatpush1.xpose.msra.mxu0 %v4451
        %4485 = vmatprep.subr.mxu0 0.0
        %4486 = vmatpush2.xpose.msra.mxu0 0.0
        %4487 = vmatprep.subr.mxu0 0.0
        %4488 = vmatpush2.xpose.msra.mxu0 0.0
        %4489 = vmatprep.subr.mxu0 0.0
        %4490 = vmatpush2.xpose.msra.mxu0 0.0
        %4491 = vmatprep.subr.mxu0 0.0
        %4492 = vmatpush2.xpose.msra.mxu0 0.0
        %4493 = vmatprep.subr.mxu0 0.0
        %4494 = vmatpush2.xpose.msra.mxu0 0.0
        %4495 = vmatprep.subr.mxu0 0.0
        %4496 = vmatpush2.xpose.msra.mxu0 0.0
        %4497 = vmatprep.subr.mxu0 0.0
        %4498 = vmatpush2.xpose.msra.mxu0 0.0
        %4499 = vmatprep.subr.mxu0 0.0
        %4500 = vmatpush2.xpose.msra.mxu0 0.0
        %4501 = vmatprep.subr.mxu0 0.0
        %4502 = vmatpush2.xpose.msra.mxu0 0.0
        %4503 = vmatprep.subr.mxu0 0.0
        %4504 = vmatpush2.xpose.msra.mxu0 0.0
        %4505 = vmatprep.subr.mxu0 0.0
        %4506 = vmatpush2.xpose.msra.mxu0 0.0
        %4507 = vmatprep.subr.mxu0 0.0
        %4508 = vmatpush2.xpose.msra.mxu0 0.0
        %4509 = vmatprep.subr.mxu0 0.0
        %4510 = vmatpush2.xpose.msra.mxu0 0.0
        %4511 = vmatprep.subr.mxu0 0.0
        %4512 = vmatpush2.xpose.msra.mxu0 0.0
        %4513 = vmatprep.subr.mxu0 0.0
        %4514 = vmatpush2.xpose.msra.mxu0 0.0
        %4515 = vmatprep.subr.mxu0 0.0
        %4516 = vmatpush2.xpose.msra.mxu0 0.0
        %4517 = vmatprep.mubr.f32.mxu0 0.0
        %4518 = vmatmul.mubr.f32.gmra.mxu0 %v4448
        %v4519 = vpop.f32.mrf.mxu0
        %v4520 = vadd.f32 0.0, %v4519
        %v4521 = vpop.f32.mrf.mxu0
        %4522 = vdwg.mxu0
        %v4524 = vsel %vm1010, %v4132, 0
        %v4527 = vsel %vm1010, %v4369, 0
        %4529 = vmatprep.subr.mxu0 0.0
        %4530 = vmatpush1.xpose.msra.mxu0 0.0
        %4531 = vmatprep.subr.mxu0 0.0
        %4532 = vmatpush1.xpose.msra.mxu0 0.0
        %4533 = vmatprep.subr.mxu0 0.0
        %4534 = vmatpush1.xpose.msra.mxu0 0.0
        %4535 = vmatprep.subr.mxu0 0.0
        %4536 = vmatpush1.xpose.msra.mxu0 0.0
        %4537 = vmatprep.subr.mxu0 0.0
        %4538 = vmatpush1.xpose.msra.mxu0 0.0
        %4539 = vmatprep.subr.mxu0 0.0
        %4540 = vmatpush1.xpose.msra.mxu0 0.0
        %4541 = vmatprep.subr.mxu0 0.0
        %4542 = vmatpush1.xpose.msra.mxu0 0.0
        %4543 = vmatprep.subr.mxu0 0.0
        %4544 = vmatpush1.xpose.msra.mxu0 0.0
        %4545 = vmatprep.subr.mxu0 0.0
        %4546 = vmatpush1.xpose.msra.mxu0 0.0
        %4547 = vmatprep.subr.mxu0 0.0
        %4548 = vmatpush1.xpose.msra.mxu0 0.0
        %4549 = vmatprep.subr.mxu0 0.0
        %4550 = vmatpush1.xpose.msra.mxu0 0.0
        %4551 = vmatprep.subr.mxu0 0.0
        %4552 = vmatpush1.xpose.msra.mxu0 0.0
        %4553 = vmatprep.subr.mxu0 0.0
        %4554 = vmatpush1.xpose.msra.mxu0 0.0
        %4555 = vmatprep.subr.mxu0 0.0
        %4556 = vmatpush1.xpose.msra.mxu0 0.0
        %4557 = vmatprep.subr.mxu0 0.0
        %4558 = vmatpush1.xpose.msra.mxu0 0.0
        %4559 = vmatprep.subr.mxu0 0.0
        %4560 = vmatpush1.xpose.msra.mxu0 %v4527
        %4561 = vmatprep.subr.mxu0 0.0
        %4562 = vmatpush2.xpose.msra.mxu0 0.0
        %4563 = vmatprep.subr.mxu0 0.0
        %4564 = vmatpush2.xpose.msra.mxu0 0.0
        %4565 = vmatprep.subr.mxu0 0.0
        %4566 = vmatpush2.xpose.msra.mxu0 0.0
        %4567 = vmatprep.subr.mxu0 0.0
        %4568 = vmatpush2.xpose.msra.mxu0 0.0
        %4569 = vmatprep.subr.mxu0 0.0
        %4570 = vmatpush2.xpose.msra.mxu0 0.0
        %4571 = vmatprep.subr.mxu0 0.0
        %4572 = vmatpush2.xpose.msra.mxu0 0.0
        %4573 = vmatprep.subr.mxu0 0.0
        %4574 = vmatpush2.xpose.msra.mxu0 0.0
        %4575 = vmatprep.subr.mxu0 0.0
        %4576 = vmatpush2.xpose.msra.mxu0 0.0
        %4577 = vmatprep.subr.mxu0 0.0
        %4578 = vmatpush2.xpose.msra.mxu0 0.0
        %4579 = vmatprep.subr.mxu0 0.0
        %4580 = vmatpush2.xpose.msra.mxu0 0.0
        %4581 = vmatprep.subr.mxu0 0.0
        %4582 = vmatpush2.xpose.msra.mxu0 0.0
        %4583 = vmatprep.subr.mxu0 0.0
        %4584 = vmatpush2.xpose.msra.mxu0 0.0
        %4585 = vmatprep.subr.mxu0 0.0
        %4586 = vmatpush2.xpose.msra.mxu0 0.0
        %4587 = vmatprep.subr.mxu0 0.0
        %4588 = vmatpush2.xpose.msra.mxu0 0.0
        %4589 = vmatprep.subr.mxu0 0.0
        %4590 = vmatpush2.xpose.msra.mxu0 0.0
        %4591 = vmatprep.subr.mxu0 0.0
        %4592 = vmatpush2.xpose.msra.mxu0 0.0
        %4593 = vmatprep.mubr.f32.mxu0 0.0
        %4594 = vmatmul.mubr.f32.gmra.mxu0 %v4524
        %v4595 = vpop.f32.mrf.mxu0
        %v4596 = vadd.f32 0.0, %v4595
        %v4597 = vpop.f32.mrf.mxu0
        %4598 = vdwg.mxu0
        %v4599 = vmul.f32 %v4520, 0.35355338
        %v4600 = vmul.f32 %v4596, 0.35355338
        %v4601 = vadd.f32 %v4599, %v585
        %v4602 = vadd.f32 %v4600, %v585
        %v4604 = vsel %vm1010, %v4208, 0
        %4606 = vmatprep.subr.mxu0 0.0
        %4607 = vmatpush1.xpose.msra.mxu0 0.0
        %4608 = vmatprep.subr.mxu0 0.0
        %4609 = vmatpush1.xpose.msra.mxu0 0.0
        %4610 = vmatprep.subr.mxu0 0.0
        %4611 = vmatpush1.xpose.msra.mxu0 0.0
        %4612 = vmatprep.subr.mxu0 0.0
        %4613 = vmatpush1.xpose.msra.mxu0 0.0
        %4614 = vmatprep.subr.mxu0 0.0
        %4615 = vmatpush1.xpose.msra.mxu0 0.0
        %4616 = vmatprep.subr.mxu0 0.0
        %4617 = vmatpush1.xpose.msra.mxu0 0.0
        %4618 = vmatprep.subr.mxu0 0.0
        %4619 = vmatpush1.xpose.msra.mxu0 0.0
        %4620 = vmatprep.subr.mxu0 0.0
        %4621 = vmatpush1.xpose.msra.mxu0 0.0
        %4622 = vmatprep.subr.mxu0 0.0
        %4623 = vmatpush1.xpose.msra.mxu0 0.0
        %4624 = vmatprep.subr.mxu0 0.0
        %4625 = vmatpush1.xpose.msra.mxu0 0.0
        %4626 = vmatprep.subr.mxu0 0.0
        %4627 = vmatpush1.xpose.msra.mxu0 0.0
        %4628 = vmatprep.subr.mxu0 0.0
        %4629 = vmatpush1.xpose.msra.mxu0 0.0
        %4630 = vmatprep.subr.mxu0 0.0
        %4631 = vmatpush1.xpose.msra.mxu0 0.0
        %4632 = vmatprep.subr.mxu0 0.0
        %4633 = vmatpush1.xpose.msra.mxu0 0.0
        %4634 = vmatprep.subr.mxu0 0.0
        %4635 = vmatpush1.xpose.msra.mxu0 0.0
        %4636 = vmatprep.subr.mxu0 0.0
        %4637 = vmatpush1.xpose.msra.mxu0 %v4604
        %4638 = vmatprep.subr.mxu0 0.0
        %4639 = vmatpush2.xpose.msra.mxu0 0.0
        %4640 = vmatprep.subr.mxu0 0.0
        %4641 = vmatpush2.xpose.msra.mxu0 0.0
        %4642 = vmatprep.subr.mxu0 0.0
        %4643 = vmatpush2.xpose.msra.mxu0 0.0
        %4644 = vmatprep.subr.mxu0 0.0
        %4645 = vmatpush2.xpose.msra.mxu0 0.0
        %4646 = vmatprep.subr.mxu0 0.0
        %4647 = vmatpush2.xpose.msra.mxu0 0.0
        %4648 = vmatprep.subr.mxu0 0.0
        %4649 = vmatpush2.xpose.msra.mxu0 0.0
        %4650 = vmatprep.subr.mxu0 0.0
        %4651 = vmatpush2.xpose.msra.mxu0 0.0
        %4652 = vmatprep.subr.mxu0 0.0
        %4653 = vmatpush2.xpose.msra.mxu0 0.0
        %4654 = vmatprep.subr.mxu0 0.0
        %4655 = vmatpush2.xpose.msra.mxu0 0.0
        %4656 = vmatprep.subr.mxu0 0.0
        %4657 = vmatpush2.xpose.msra.mxu0 0.0
        %4658 = vmatprep.subr.mxu0 0.0
        %4659 = vmatpush2.xpose.msra.mxu0 0.0
        %4660 = vmatprep.subr.mxu0 0.0
        %4661 = vmatpush2.xpose.msra.mxu0 0.0
        %4662 = vmatprep.subr.mxu0 0.0
        %4663 = vmatpush2.xpose.msra.mxu0 0.0
        %4664 = vmatprep.subr.mxu0 0.0
        %4665 = vmatpush2.xpose.msra.mxu0 0.0
        %4666 = vmatprep.subr.mxu0 0.0
        %4667 = vmatpush2.xpose.msra.mxu0 0.0
        %4668 = vmatprep.subr.mxu0 0.0
        %4669 = vmatpush2.xpose.msra.mxu0 0.0
        %4670 = vmatprep.mubr.f32.mxu0 0.0
        %4671 = vmatmul.mubr.f32.gmra.mxu0 %v4448
        %v4672 = vpop.f32.mrf.mxu0
        %v4673 = vadd.f32 0.0, %v4672
        %v4674 = vpop.f32.mrf.mxu0
        %4675 = vdwg.mxu0
        %v4677 = vsel %vm1010, %v4213, 0
        %4679 = vmatprep.subr.mxu0 0.0
        %4680 = vmatpush1.xpose.msra.mxu0 0.0
        %4681 = vmatprep.subr.mxu0 0.0
        %4682 = vmatpush1.xpose.msra.mxu0 0.0
        %4683 = vmatprep.subr.mxu0 0.0
        %4684 = vmatpush1.xpose.msra.mxu0 0.0
        %4685 = vmatprep.subr.mxu0 0.0
        %4686 = vmatpush1.xpose.msra.mxu0 0.0
        %4687 = vmatprep.subr.mxu0 0.0
        %4688 = vmatpush1.xpose.msra.mxu0 0.0
        %4689 = vmatprep.subr.mxu0 0.0
        %4690 = vmatpush1.xpose.msra.mxu0 0.0
        %4691 = vmatprep.subr.mxu0 0.0
        %4692 = vmatpush1.xpose.msra.mxu0 0.0
        %4693 = vmatprep.subr.mxu0 0.0
        %4694 = vmatpush1.xpose.msra.mxu0 0.0
        %4695 = vmatprep.subr.mxu0 0.0
        %4696 = vmatpush1.xpose.msra.mxu0 0.0
        %4697 = vmatprep.subr.mxu0 0.0
        %4698 = vmatpush1.xpose.msra.mxu0 0.0
        %4699 = vmatprep.subr.mxu0 0.0
        %4700 = vmatpush1.xpose.msra.mxu0 0.0
        %4701 = vmatprep.subr.mxu0 0.0
        %4702 = vmatpush1.xpose.msra.mxu0 0.0
        %4703 = vmatprep.subr.mxu0 0.0
        %4704 = vmatpush1.xpose.msra.mxu0 0.0
        %4705 = vmatprep.subr.mxu0 0.0
        %4706 = vmatpush1.xpose.msra.mxu0 0.0
        %4707 = vmatprep.subr.mxu0 0.0
        %4708 = vmatpush1.xpose.msra.mxu0 0.0
        %4709 = vmatprep.subr.mxu0 0.0
        %4710 = vmatpush1.xpose.msra.mxu0 %v4677
        %4711 = vmatprep.subr.mxu0 0.0
        %4712 = vmatpush2.xpose.msra.mxu0 0.0
        %4713 = vmatprep.subr.mxu0 0.0
        %4714 = vmatpush2.xpose.msra.mxu0 0.0
        %4715 = vmatprep.subr.mxu0 0.0
        %4716 = vmatpush2.xpose.msra.mxu0 0.0
        %4717 = vmatprep.subr.mxu0 0.0
        %4718 = vmatpush2.xpose.msra.mxu0 0.0
        %4719 = vmatprep.subr.mxu0 0.0
        %4720 = vmatpush2.xpose.msra.mxu0 0.0
        %4721 = vmatprep.subr.mxu0 0.0
        %4722 = vmatpush2.xpose.msra.mxu0 0.0
        %4723 = vmatprep.subr.mxu0 0.0
        %4724 = vmatpush2.xpose.msra.mxu0 0.0
        %4725 = vmatprep.subr.mxu0 0.0
        %4726 = vmatpush2.xpose.msra.mxu0 0.0
        %4727 = vmatprep.subr.mxu0 0.0
        %4728 = vmatpush2.xpose.msra.mxu0 0.0
        %4729 = vmatprep.subr.mxu0 0.0
        %4730 = vmatpush2.xpose.msra.mxu0 0.0
        %4731 = vmatprep.subr.mxu0 0.0
        %4732 = vmatpush2.xpose.msra.mxu0 0.0
        %4733 = vmatprep.subr.mxu0 0.0
        %4734 = vmatpush2.xpose.msra.mxu0 0.0
        %4735 = vmatprep.subr.mxu0 0.0
        %4736 = vmatpush2.xpose.msra.mxu0 0.0
        %4737 = vmatprep.subr.mxu0 0.0
        %4738 = vmatpush2.xpose.msra.mxu0 0.0
        %4739 = vmatprep.subr.mxu0 0.0
        %4740 = vmatpush2.xpose.msra.mxu0 0.0
        %4741 = vmatprep.subr.mxu0 0.0
        %4742 = vmatpush2.xpose.msra.mxu0 0.0
        %4743 = vmatprep.mubr.f32.mxu0 0.0
        %4744 = vmatmul.mubr.f32.gmra.mxu0 %v4524
        %v4745 = vpop.f32.mrf.mxu0
        %v4746 = vadd.f32 0.0, %v4745
        %v4747 = vpop.f32.mrf.mxu0
        %4748 = vdwg.mxu0
        %v4749 = vmul.f32 %v4673, 0.35355338
        %v4750 = vmul.f32 %v4746, 0.35355338
        %v4751 = vadd.f32 %v4749, %v584
        %v4752 = vadd.f32 %v4750, %v584
        %v4753 = vsel %vm1010, %v4601, -inf
        %4754 = vmax.xlane.f32.xlu0 %v4753
        %v4755 = vpop.xlane.xlu0 %4754
        %v4756 = vsel %vm1010, %v4602, -inf
        %4757 = vmax.xlane.f32.xlu0 %v4756
        %v4758 = vpop.xlane.xlu0 %4757
        %v4759 = vsel %vm1010, %v4751, -inf
        %4760 = vmax.xlane.f32.xlu0 %v4759
        %v4761 = vpop.xlane.xlu0 %4760
        %v4762 = vsel %vm1010, %v4752, -inf
        %4763 = vmax.xlane.f32.xlu0 %v4762
        %v4764 = vpop.xlane.xlu0 %4763
        %v4765 = vmax.f32 %v4755, %v4761
        %v4766 = vmax.f32 %v4758, %v4764
        %v4767 = vsub.f32 %v4601, %v4765
        %v4768 = vsub.f32 %v4602, %v4766
        %v4769 = vmul.f32 %v4767, 1.442695
        %v4770 = vpow.pop %v4769
        %v4771 = vmul.f32 %v4768, 1.442695
        %v4772 = vpow.pop %v4771
        %v4773 = vsub.f32 %v4751, %v4765
        %v4774 = vsub.f32 %v4752, %v4766
        %v4775 = vmul.f32 %v4773, 1.442695
        %v4776 = vpow.pop %v4775
        %v4777 = vmul.f32 %v4774, 1.442695
        %v4778 = vpow.pop %v4777
        %v4779 = vsel %vm1010, %v4770, 0.0
        %4780 = vadd.xlane.f32.xlu0 %v4779
        %v4781 = vpop.xlane.xlu0 %4780
        %v4782 = vsel %vm1010, %v4772, 0.0
        %4783 = vadd.xlane.f32.xlu0 %v4782
        %v4784 = vpop.xlane.xlu0 %4783
        %v4785 = vsel %vm1010, %v4776, 0.0
        %4786 = vadd.xlane.f32.xlu0 %v4785
        %v4787 = vpop.xlane.xlu0 %4786
        %v4788 = vsel %vm1010, %v4778, 0.0
        %4789 = vadd.xlane.f32.xlu0 %v4788
        %v4790 = vpop.xlane.xlu0 %4789
        %v4791 = vadd.f32 %v4781, %v4787
        %v4792 = vadd.f32 %v4784, %v4790
        %v4793 = vrcp.pop %v4791
        %v4794 = vrcp.pop %v4792
        %v4795 = vmul.f32 %v4791, %v4793
        %v4796 = vmul.f32 %v4792, %v4794
        %v4797 = vsub.f32 2.0, %v4795
        %v4798 = vsub.f32 2.0, %v4796
        %v4799 = vmul.f32 %v4793, %v4797
        %v4800 = vmul.f32 %v4794, %v4798
        %v4802 = vsel %vm1010, %v4776, 0
        %4804 = vmatprep.subr.mxu0 0.0
        %4805 = vmatpush1.msra.mxu0 0.0
        %4806 = vmatprep.subr.mxu0 0.0
        %4807 = vmatpush1.msra.mxu0 0.0
        %4808 = vmatprep.subr.mxu0 0.0
        %4809 = vmatpush1.msra.mxu0 0.0
        %4810 = vmatprep.subr.mxu0 0.0
        %4811 = vmatpush1.msra.mxu0 0.0
        %4812 = vmatprep.subr.mxu0 0.0
        %4813 = vmatpush1.msra.mxu0 0.0
        %4814 = vmatprep.subr.mxu0 0.0
        %4815 = vmatpush1.msra.mxu0 0.0
        %4816 = vmatprep.subr.mxu0 0.0
        %4817 = vmatpush1.msra.mxu0 0.0
        %4818 = vmatprep.subr.mxu0 0.0
        %4819 = vmatpush1.msra.mxu0 0.0
        %4820 = vmatprep.subr.mxu0 0.0
        %4821 = vmatpush1.msra.mxu0 0.0
        %4822 = vmatprep.subr.mxu0 0.0
        %4823 = vmatpush1.msra.mxu0 0.0
        %4824 = vmatprep.subr.mxu0 0.0
        %4825 = vmatpush1.msra.mxu0 0.0
        %4826 = vmatprep.subr.mxu0 0.0
        %4827 = vmatpush1.msra.mxu0 0.0
        %4828 = vmatprep.subr.mxu0 0.0
        %4829 = vmatpush1.msra.mxu0 0.0
        %4830 = vmatprep.subr.mxu0 0.0
        %4831 = vmatpush1.msra.mxu0 0.0
        %4832 = vmatprep.subr.mxu0 0.0
        %4833 = vmatpush1.msra.mxu0 0.0
        %4834 = vmatprep.subr.mxu0 0.0
        %4835 = vmatpush1.msra.mxu0 %v4289
        %4836 = vmatprep.subr.mxu0 0.0
        %4837 = vmatpush2.msra.mxu0 0.0
        %4838 = vmatprep.subr.mxu0 0.0
        %4839 = vmatpush2.msra.mxu0 0.0
        %4840 = vmatprep.subr.mxu0 0.0
        %4841 = vmatpush2.msra.mxu0 0.0
        %4842 = vmatprep.subr.mxu0 0.0
        %4843 = vmatpush2.msra.mxu0 0.0
        %4844 = vmatprep.subr.mxu0 0.0
        %4845 = vmatpush2.msra.mxu0 0.0
        %4846 = vmatprep.subr.mxu0 0.0
        %4847 = vmatpush2.msra.mxu0 0.0
        %4848 = vmatprep.subr.mxu0 0.0
        %4849 = vmatpush2.msra.mxu0 0.0
        %4850 = vmatprep.subr.mxu0 0.0
        %4851 = vmatpush2.msra.mxu0 0.0
        %4852 = vmatprep.subr.mxu0 0.0
        %4853 = vmatpush2.msra.mxu0 0.0
        %4854 = vmatprep.subr.mxu0 0.0
        %4855 = vmatpush2.msra.mxu0 0.0
        %4856 = vmatprep.subr.mxu0 0.0
        %4857 = vmatpush2.msra.mxu0 0.0
        %4858 = vmatprep.subr.mxu0 0.0
        %4859 = vmatpush2.msra.mxu0 0.0
        %4860 = vmatprep.subr.mxu0 0.0
        %4861 = vmatpush2.msra.mxu0 0.0
        %4862 = vmatprep.subr.mxu0 0.0
        %4863 = vmatpush2.msra.mxu0 0.0
        %4864 = vmatprep.subr.mxu0 0.0
        %4865 = vmatpush2.msra.mxu0 0.0
        %4866 = vmatprep.subr.mxu0 0.0
        %4867 = vmatpush2.msra.mxu0 0.0
        %4868 = vmatprep.mubr.f32.mxu0 0.0
        %4869 = vmatmul.mubr.f32.gmra.mxu0 %v4802
        %v4870 = vpop.f32.mrf.mxu0
        %v4871 = vadd.f32 0.0, %v4870
        %v4872 = vpop.f32.mrf.mxu0
        %4873 = vdwg.mxu0
        %v4875 = vsel %vm1010, %v4778, 0
        %4877 = vmatprep.subr.mxu0 0.0
        %4878 = vmatpush1.msra.mxu0 0.0
        %4879 = vmatprep.subr.mxu0 0.0
        %4880 = vmatpush1.msra.mxu0 0.0
        %4881 = vmatprep.subr.mxu0 0.0
        %4882 = vmatpush1.msra.mxu0 0.0
        %4883 = vmatprep.subr.mxu0 0.0
        %4884 = vmatpush1.msra.mxu0 0.0
        %4885 = vmatprep.subr.mxu0 0.0
        %4886 = vmatpush1.msra.mxu0 0.0
        %4887 = vmatprep.subr.mxu0 0.0
        %4888 = vmatpush1.msra.mxu0 0.0
        %4889 = vmatprep.subr.mxu0 0.0
        %4890 = vmatpush1.msra.mxu0 0.0
        %4891 = vmatprep.subr.mxu0 0.0
        %4892 = vmatpush1.msra.mxu0 0.0
        %4893 = vmatprep.subr.mxu0 0.0
        %4894 = vmatpush1.msra.mxu0 0.0
        %4895 = vmatprep.subr.mxu0 0.0
        %4896 = vmatpush1.msra.mxu0 0.0
        %4897 = vmatprep.subr.mxu0 0.0
        %4898 = vmatpush1.msra.mxu0 0.0
        %4899 = vmatprep.subr.mxu0 0.0
        %4900 = vmatpush1.msra.mxu0 0.0
        %4901 = vmatprep.subr.mxu0 0.0
        %4902 = vmatpush1.msra.mxu0 0.0
        %4903 = vmatprep.subr.mxu0 0.0
        %4904 = vmatpush1.msra.mxu0 0.0
        %4905 = vmatprep.subr.mxu0 0.0
        %4906 = vmatpush1.msra.mxu0 0.0
        %4907 = vmatprep.subr.mxu0 0.0
        %4908 = vmatpush1.msra.mxu0 %v4294
        %4909 = vmatprep.subr.mxu0 0.0
        %4910 = vmatpush2.msra.mxu0 0.0
        %4911 = vmatprep.subr.mxu0 0.0
        %4912 = vmatpush2.msra.mxu0 0.0
        %4913 = vmatprep.subr.mxu0 0.0
        %4914 = vmatpush2.msra.mxu0 0.0
        %4915 = vmatprep.subr.mxu0 0.0
        %4916 = vmatpush2.msra.mxu0 0.0
        %4917 = vmatprep.subr.mxu0 0.0
        %4918 = vmatpush2.msra.mxu0 0.0
        %4919 = vmatprep.subr.mxu0 0.0
        %4920 = vmatpush2.msra.mxu0 0.0
        %4921 = vmatprep.subr.mxu0 0.0
        %4922 = vmatpush2.msra.mxu0 0.0
        %4923 = vmatprep.subr.mxu0 0.0
        %4924 = vmatpush2.msra.mxu0 0.0
        %4925 = vmatprep.subr.mxu0 0.0
        %4926 = vmatpush2.msra.mxu0 0.0
        %4927 = vmatprep.subr.mxu0 0.0
        %4928 = vmatpush2.msra.mxu0 0.0
        %4929 = vmatprep.subr.mxu0 0.0
        %4930 = vmatpush2.msra.mxu0 0.0
        %4931 = vmatprep.subr.mxu0 0.0
        %4932 = vmatpush2.msra.mxu0 0.0
        %4933 = vmatprep.subr.mxu0 0.0
        %4934 = vmatpush2.msra.mxu0 0.0
        %4935 = vmatprep.subr.mxu0 0.0
        %4936 = vmatpush2.msra.mxu0 0.0
        %4937 = vmatprep.subr.mxu0 0.0
        %4938 = vmatpush2.msra.mxu0 0.0
        %4939 = vmatprep.subr.mxu0 0.0
        %4940 = vmatpush2.msra.mxu0 0.0
        %4941 = vmatprep.mubr.f32.mxu0 0.0
        %4942 = vmatmul.mubr.f32.gmra.mxu0 %v4875
        %v4943 = vpop.f32.mrf.mxu0
        %v4944 = vadd.f32 0.0, %v4943
        %v4945 = vpop.f32.mrf.mxu0
        %4946 = vdwg.mxu0
        %v4948 = vsel %vm1010, %v4770, 0
        %4950 = vmatprep.subr.mxu0 0.0
        %4951 = vmatpush1.msra.mxu0 0.0
        %4952 = vmatprep.subr.mxu0 0.0
        %4953 = vmatpush1.msra.mxu0 0.0
        %4954 = vmatprep.subr.mxu0 0.0
        %4955 = vmatpush1.msra.mxu0 0.0
        %4956 = vmatprep.subr.mxu0 0.0
        %4957 = vmatpush1.msra.mxu0 0.0
        %4958 = vmatprep.subr.mxu0 0.0
        %4959 = vmatpush1.msra.mxu0 0.0
        %4960 = vmatprep.subr.mxu0 0.0
        %4961 = vmatpush1.msra.mxu0 0.0
        %4962 = vmatprep.subr.mxu0 0.0
        %4963 = vmatpush1.msra.mxu0 0.0
        %4964 = vmatprep.subr.mxu0 0.0
        %4965 = vmatpush1.msra.mxu0 0.0
        %4966 = vmatprep.subr.mxu0 0.0
        %4967 = vmatpush1.msra.mxu0 0.0
        %4968 = vmatprep.subr.mxu0 0.0
        %4969 = vmatpush1.msra.mxu0 0.0
        %4970 = vmatprep.subr.mxu0 0.0
        %4971 = vmatpush1.msra.mxu0 0.0
        %4972 = vmatprep.subr.mxu0 0.0
        %4973 = vmatpush1.msra.mxu0 0.0
        %4974 = vmatprep.subr.mxu0 0.0
        %4975 = vmatpush1.msra.mxu0 0.0
        %4976 = vmatprep.subr.mxu0 0.0
        %4977 = vmatpush1.msra.mxu0 0.0
        %4978 = vmatprep.subr.mxu0 0.0
        %4979 = vmatpush1.msra.mxu0 0.0
        %4980 = vmatprep.subr.mxu0 0.0
        %4981 = vmatpush1.msra.mxu0 %v4439
        %4982 = vmatprep.subr.mxu0 0.0
        %4983 = vmatpush2.msra.mxu0 0.0
        %4984 = vmatprep.subr.mxu0 0.0
        %4985 = vmatpush2.msra.mxu0 0.0
        %4986 = vmatprep.subr.mxu0 0.0
        %4987 = vmatpush2.msra.mxu0 0.0
        %4988 = vmatprep.subr.mxu0 0.0
        %4989 = vmatpush2.msra.mxu0 0.0
        %4990 = vmatprep.subr.mxu0 0.0
        %4991 = vmatpush2.msra.mxu0 0.0
        %4992 = vmatprep.subr.mxu0 0.0
        %4993 = vmatpush2.msra.mxu0 0.0
        %4994 = vmatprep.subr.mxu0 0.0
        %4995 = vmatpush2.msra.mxu0 0.0
        %4996 = vmatprep.subr.mxu0 0.0
        %4997 = vmatpush2.msra.mxu0 0.0
        %4998 = vmatprep.subr.mxu0 0.0
        %4999 = vmatpush2.msra.mxu0 0.0
        %5000 = vmatprep.subr.mxu0 0.0
        %5001 = vmatpush2.msra.mxu0 0.0
        %5002 = vmatprep.subr.mxu0 0.0
        %5003 = vmatpush2.msra.mxu0 0.0
        %5004 = vmatprep.subr.mxu0 0.0
        %5005 = vmatpush2.msra.mxu0 0.0
        %5006 = vmatprep.subr.mxu0 0.0
        %5007 = vmatpush2.msra.mxu0 0.0
        %5008 = vmatprep.subr.mxu0 0.0
        %5009 = vmatpush2.msra.mxu0 0.0
        %5010 = vmatprep.subr.mxu0 0.0
        %5011 = vmatpush2.msra.mxu0 0.0
        %5012 = vmatprep.subr.mxu0 0.0
        %5013 = vmatpush2.msra.mxu0 0.0
        %5014 = vmatprep.mubr.f32.mxu0 0.0
        %5015 = vmatmul.mubr.f32.gmra.mxu0 %v4948
        %v5016 = vpop.f32.mrf.mxu0
        %v5017 = vadd.f32 %v4871, %v5016
        %v5018 = vpop.f32.mrf.mxu0
        %5019 = vdwg.mxu0
        %v5021 = vsel %vm1010, %v4772, 0
        %5023 = vmatprep.subr.mxu0 0.0
        %5024 = vmatpush1.msra.mxu0 0.0
        %5025 = vmatprep.subr.mxu0 0.0
        %5026 = vmatpush1.msra.mxu0 0.0
        %5027 = vmatprep.subr.mxu0 0.0
        %5028 = vmatpush1.msra.mxu0 0.0
        %5029 = vmatprep.subr.mxu0 0.0
        %5030 = vmatpush1.msra.mxu0 0.0
        %5031 = vmatprep.subr.mxu0 0.0
        %5032 = vmatpush1.msra.mxu0 0.0
        %5033 = vmatprep.subr.mxu0 0.0
        %5034 = vmatpush1.msra.mxu0 0.0
        %5035 = vmatprep.subr.mxu0 0.0
        %5036 = vmatpush1.msra.mxu0 0.0
        %5037 = vmatprep.subr.mxu0 0.0
        %5038 = vmatpush1.msra.mxu0 0.0
        %5039 = vmatprep.subr.mxu0 0.0
        %5040 = vmatpush1.msra.mxu0 0.0
        %5041 = vmatprep.subr.mxu0 0.0
        %5042 = vmatpush1.msra.mxu0 0.0
        %5043 = vmatprep.subr.mxu0 0.0
        %5044 = vmatpush1.msra.mxu0 0.0
        %5045 = vmatprep.subr.mxu0 0.0
        %5046 = vmatpush1.msra.mxu0 0.0
        %5047 = vmatprep.subr.mxu0 0.0
        %5048 = vmatpush1.msra.mxu0 0.0
        %5049 = vmatprep.subr.mxu0 0.0
        %5050 = vmatpush1.msra.mxu0 0.0
        %5051 = vmatprep.subr.mxu0 0.0
        %5052 = vmatpush1.msra.mxu0 0.0
        %5053 = vmatprep.subr.mxu0 0.0
        %5054 = vmatpush1.msra.mxu0 %v4444
        %5055 = vmatprep.subr.mxu0 0.0
        %5056 = vmatpush2.msra.mxu0 0.0
        %5057 = vmatprep.subr.mxu0 0.0
        %5058 = vmatpush2.msra.mxu0 0.0
        %5059 = vmatprep.subr.mxu0 0.0
        %5060 = vmatpush2.msra.mxu0 0.0
        %5061 = vmatprep.subr.mxu0 0.0
        %5062 = vmatpush2.msra.mxu0 0.0
        %5063 = vmatprep.subr.mxu0 0.0
        %5064 = vmatpush2.msra.mxu0 0.0
        %5065 = vmatprep.subr.mxu0 0.0
        %5066 = vmatpush2.msra.mxu0 0.0
        %5067 = vmatprep.subr.mxu0 0.0
        %5068 = vmatpush2.msra.mxu0 0.0
        %5069 = vmatprep.subr.mxu0 0.0
        %5070 = vmatpush2.msra.mxu0 0.0
        %5071 = vmatprep.subr.mxu0 0.0
        %5072 = vmatpush2.msra.mxu0 0.0
        %5073 = vmatprep.subr.mxu0 0.0
        %5074 = vmatpush2.msra.mxu0 0.0
        %5075 = vmatprep.subr.mxu0 0.0
        %5076 = vmatpush2.msra.mxu0 0.0
        %5077 = vmatprep.subr.mxu0 0.0
        %5078 = vmatpush2.msra.mxu0 0.0
        %5079 = vmatprep.subr.mxu0 0.0
        %5080 = vmatpush2.msra.mxu0 0.0
        %5081 = vmatprep.subr.mxu0 0.0
        %5082 = vmatpush2.msra.mxu0 0.0
        %5083 = vmatprep.subr.mxu0 0.0
        %5084 = vmatpush2.msra.mxu0 0.0
        %5085 = vmatprep.subr.mxu0 0.0
        %5086 = vmatpush2.msra.mxu0 0.0
        %5087 = vmatprep.mubr.f32.mxu0 0.0
        %5088 = vmatmul.mubr.f32.gmra.mxu0 %v5021
        %v5089 = vpop.f32.mrf.mxu0
        %v5090 = vadd.f32 %v4944, %v5089
        %v5091 = vpop.f32.mrf.mxu0
        %5092 = vdwg.mxu0
        %v5093 = vmul.f32 %v5017, %v4799
        %v5094 = vmul.f32 %v5090, %v4800
        %s5095 = scalar_lea.vmem %s524, 24
        %v5096 = vld [vmem:[%s5095] sm:$0xff]
        %v5098 = vsel %vm1010, %v5093, 0
        %v5101 = vsel %vm1010, %v5094, 0
        %5103 = vmatprep.subr.mxu0 0.0
        %5104 = vmatpush1.msra.mxu0 0.0
        %5105 = vmatprep.subr.mxu0 0.0
        %5106 = vmatpush1.msra.mxu0 0.0
        %5107 = vmatprep.subr.mxu0 0.0
        %5108 = vmatpush1.msra.mxu0 0.0
        %5109 = vmatprep.subr.mxu0 0.0
        %5110 = vmatpush1.msra.mxu0 0.0
        %5111 = vmatprep.subr.mxu0 0.0
        %5112 = vmatpush1.msra.mxu0 0.0
        %5113 = vmatprep.subr.mxu0 0.0
        %5114 = vmatpush1.msra.mxu0 0.0
        %5115 = vmatprep.subr.mxu0 0.0
        %5116 = vmatpush1.msra.mxu0 0.0
        %5117 = vmatprep.subr.mxu0 0.0
        %5118 = vmatpush1.msra.mxu0 0.0
        %5119 = vmatprep.subr.mxu0 0.0
        %5120 = vmatpush1.msra.mxu0 0.0
        %5121 = vmatprep.subr.mxu0 0.0
        %5122 = vmatpush1.msra.mxu0 0.0
        %5123 = vmatprep.subr.mxu0 0.0
        %5124 = vmatpush1.msra.mxu0 0.0
        %5125 = vmatprep.subr.mxu0 0.0
        %5126 = vmatpush1.msra.mxu0 0.0
        %5127 = vmatprep.subr.mxu0 0.0
        %5128 = vmatpush1.msra.mxu0 0.0
        %5129 = vmatprep.subr.mxu0 0.0
        %5130 = vmatpush1.msra.mxu0 0.0
        %5131 = vmatprep.subr.mxu0 0.0
        %5132 = vmatpush1.msra.mxu0 0.0
        %5133 = vmatprep.subr.mxu0 0.0
        %5134 = vmatpush1.msra.mxu0 %v5096
        %5135 = vmatprep.subr.mxu0 0.0
        %5136 = vmatpush2.msra.mxu0 0.0
        %5137 = vmatprep.subr.mxu0 0.0
        %5138 = vmatpush2.msra.mxu0 0.0
        %5139 = vmatprep.subr.mxu0 0.0
        %5140 = vmatpush2.msra.mxu0 0.0
        %5141 = vmatprep.subr.mxu0 0.0
        %5142 = vmatpush2.msra.mxu0 0.0
        %5143 = vmatprep.subr.mxu0 0.0
        %5144 = vmatpush2.msra.mxu0 0.0
        %5145 = vmatprep.subr.mxu0 0.0
        %5146 = vmatpush2.msra.mxu0 0.0
        %5147 = vmatprep.subr.mxu0 0.0
        %5148 = vmatpush2.msra.mxu0 0.0
        %5149 = vmatprep.subr.mxu0 0.0
        %5150 = vmatpush2.msra.mxu0 0.0
        %5151 = vmatprep.subr.mxu0 0.0
        %5152 = vmatpush2.msra.mxu0 0.0
        %5153 = vmatprep.subr.mxu0 0.0
        %5154 = vmatpush2.msra.mxu0 0.0
        %5155 = vmatprep.subr.mxu0 0.0
        %5156 = vmatpush2.msra.mxu0 0.0
        %5157 = vmatprep.subr.mxu0 0.0
        %5158 = vmatpush2.msra.mxu0 0.0
        %5159 = vmatprep.subr.mxu0 0.0
        %5160 = vmatpush2.msra.mxu0 0.0
        %5161 = vmatprep.subr.mxu0 0.0
        %5162 = vmatpush2.msra.mxu0 0.0
        %5163 = vmatprep.subr.mxu0 0.0
        %5164 = vmatpush2.msra.mxu0 0.0
        %5165 = vmatprep.subr.mxu0 0.0
        %5166 = vmatpush2.msra.mxu0 0.0
        %5167 = vmatprep.mubr.f32.mxu0 0.0
        %5168 = vmatmul.mubr.f32.gmra.mxu0 %v5098
        %v5169 = vpop.f32.mrf.mxu0
        %v5170 = vadd.f32 0.0, %v5169
        %v5171 = vpop.f32.mrf.mxu0
        %5172 = vmatprep.mubr.f32.mxu0 0.0
        %5173 = vmatmul.mubr.f32.gmra.mxu0 %v5101
        %v5174 = vpop.f32.mrf.mxu0
        %v5175 = vadd.f32 0.0, %v5174
        %v5176 = vpop.f32.mrf.mxu0
        %5177 = vdwg.mxu0
        %v5178 = vadd.f32 %v4031, %v5170
        %v5179 = vadd.f32 %v4032, %v5175
        %v5180 = vld [vmem:[%s527] sm:$0x1]
        %v5182 = vlaneseq
        %v5183 = vshrl.u32 %v5182, 7
        %v5184 = vsub.s32 0, %v5183
        %v5185 = vrot.slane %v5180, %v5184
        %v5187 = vadd.f32 %v5178, %v5185
        %v5188 = vadd.f32 %v5179, %v5185
        %v5189 = vsel %vm556, %v5187, 0.0
        %5190 = vadd.xlane.f32.xlu0 %v5189
        %v5191 = vpop.xlane.xlu0 %5190
        %v5192 = vsel %vm556, %v5188, 0.0
        %5193 = vadd.xlane.f32.xlu0 %v5192
        %v5194 = vpop.xlane.xlu0 %5193
        %v5195 = vmul.f32 %v5191, %v563
        %v5196 = vmul.f32 %v5194, %v563
        %v5197 = vsub.f32 %v5187, %v5195
        %v5198 = vsub.f32 %v5188, %v5196
        %v5199 = vmul.f32 %v5197, %v5197
        %v5200 = vmul.f32 %v5198, %v5198
        %v5201 = vsel %vm556, %v5199, 0.0
        %5202 = vadd.xlane.f32.xlu0 %v5201
        %v5203 = vpop.xlane.xlu0 %5202
        %v5204 = vsel %vm556, %v5200, 0.0
        %5205 = vadd.xlane.f32.xlu0 %v5204
        %v5206 = vpop.xlane.xlu0 %5205
        %v5207 = vmul.f32 %v5203, %v563
        %v5208 = vmul.f32 %v5206, %v563
        %v5209 = vadd.f32 %v5207, 1e-05
        %v5210 = vadd.f32 %v5208, 1e-05
        %v5211 = vrsqrt.pop %v5209
        %v5212 = vrsqrt.pop %v5210
        %v5213 = vmul.f32 %v5197, %v5211
        %v5214 = vmul.f32 %v5198, %v5212
        %v5215 = vld [vmem:[%s531] sm:$0x1]
        %v5217 = vlaneseq
        %v5218 = vshrl.u32 %v5217, 7
        %v5219 = vsub.s32 0, %v5218
        %v5220 = vrot.slane %v5215, %v5219
        %v5222 = vmul.f32 %v5213, %v5220
        %v5223 = vmul.f32 %v5214, %v5220
        %s5224 = scalar_lea.vmem %s531, 1
        %v5225 = vld [vmem:[%s5224] sm:$0x1]
        %v5227 = vlaneseq
        %v5228 = vshrl.u32 %v5227, 7
        %v5229 = vsub.s32 0, %v5228
        %v5230 = vrot.slane %v5225, %v5229
        %v5232 = vadd.f32 %v5222, %v5230
        %v5233 = vadd.f32 %v5223, %v5230
        %v5234 = vadd.f32 %v552, %v5232
        %v5235 = vadd.f32 %v553, %v5233
        %v5236 = vsel %vm556, %v5234, 0.0
        %5237 = vadd.xlane.f32.xlu0 %v5236
        %v5238 = vpop.xlane.xlu0 %5237
        %v5239 = vsel %vm556, %v5235, 0.0
        %5240 = vadd.xlane.f32.xlu0 %v5239
        %v5241 = vpop.xlane.xlu0 %5240
        %v5242 = vmul.f32 %v5238, %v563
        %v5243 = vmul.f32 %v5241, %v563
        %v5244 = vsub.f32 %v5234, %v5242
        %v5245 = vsub.f32 %v5235, %v5243
        %v5246 = vmul.f32 %v5244, %v5244
        %v5247 = vmul.f32 %v5245, %v5245
        %v5248 = vsel %vm556, %v5246, 0.0
        %5249 = vadd.xlane.f32.xlu0 %v5248
        %v5250 = vpop.xlane.xlu0 %5249
        %v5251 = vsel %vm556, %v5247, 0.0
        %5252 = vadd.xlane.f32.xlu0 %v5251
        %v5253 = vpop.xlane.xlu0 %5252
        %v5254 = vmul.f32 %v5250, %v563
        %v5255 = vmul.f32 %v5253, %v563
        %v5256 = vadd.f32 %v5254, 1e-05
        %v5257 = vadd.f32 %v5255, 1e-05
        %v5258 = vrsqrt.pop %v5256
        %v5259 = vrsqrt.pop %v5257
        %v5260 = vmul.f32 %v5244, %v5258
        %v5261 = vmul.f32 %v5245, %v5259
        %v5262 = vld [vmem:[%s536] sm:$0xff]
        %v5263 = vld [vmem:[%s536 + $0x8] sm:$0xff]
        %v5264 = vld [vmem:[%s536 + $0x10] sm:$0xff]
        %v5265 = vld [vmem:[%s536 + $0x18] sm:$0xff]
        %v5267 = vsel %vm556, %v5260, 0
        %v5270 = vsel %vm556, %v5261, 0
        %5272 = vmatprep.subr.mxu0 0.0
        %5273 = vmatpush1.msra.mxu0 0.0
        %5274 = vmatprep.subr.mxu0 0.0
        %5275 = vmatpush1.msra.mxu0 0.0
        %5276 = vmatprep.subr.mxu0 0.0
        %5277 = vmatpush1.msra.mxu0 0.0
        %5278 = vmatprep.subr.mxu0 0.0
        %5279 = vmatpush1.msra.mxu0 0.0
        %5280 = vmatprep.subr.mxu0 0.0
        %5281 = vmatpush1.msra.mxu0 0.0
        %5282 = vmatprep.subr.mxu0 0.0
        %5283 = vmatpush1.msra.mxu0 0.0
        %5284 = vmatprep.subr.mxu0 0.0
        %5285 = vmatpush1.msra.mxu0 0.0
        %5286 = vmatprep.subr.mxu0 0.0
        %5287 = vmatpush1.msra.mxu0 0.0
        %5288 = vmatprep.subr.mxu0 0.0
        %5289 = vmatpush1.msra.mxu0 0.0
        %5290 = vmatprep.subr.mxu0 0.0
        %5291 = vmatpush1.msra.mxu0 0.0
        %5292 = vmatprep.subr.mxu0 0.0
        %5293 = vmatpush1.msra.mxu0 0.0
        %5294 = vmatprep.subr.mxu0 0.0
        %5295 = vmatpush1.msra.mxu0 0.0
        %5296 = vmatprep.subr.mxu0 0.0
        %5297 = vmatpush1.msra.mxu0 %v5265
        %5298 = vmatprep.subr.mxu0 0.0
        %5299 = vmatpush1.msra.mxu0 %v5264
        %5300 = vmatprep.subr.mxu0 0.0
        %5301 = vmatpush1.msra.mxu0 %v5263
        %5302 = vmatprep.subr.mxu0 0.0
        %5303 = vmatpush1.msra.mxu0 %v5262
        %5304 = vmatprep.subr.mxu0 0.0
        %5305 = vmatpush2.msra.mxu0 0.0
        %5306 = vmatprep.subr.mxu0 0.0
        %5307 = vmatpush2.msra.mxu0 0.0
        %5308 = vmatprep.subr.mxu0 0.0
        %5309 = vmatpush2.msra.mxu0 0.0
        %5310 = vmatprep.subr.mxu0 0.0
        %5311 = vmatpush2.msra.mxu0 0.0
        %5312 = vmatprep.subr.mxu0 0.0
        %5313 = vmatpush2.msra.mxu0 0.0
        %5314 = vmatprep.subr.mxu0 0.0
        %5315 = vmatpush2.msra.mxu0 0.0
        %5316 = vmatprep.subr.mxu0 0.0
        %5317 = vmatpush2.msra.mxu0 0.0
        %5318 = vmatprep.subr.mxu0 0.0
        %5319 = vmatpush2.msra.mxu0 0.0
        %5320 = vmatprep.subr.mxu0 0.0
        %5321 = vmatpush2.msra.mxu0 0.0
        %5322 = vmatprep.subr.mxu0 0.0
        %5323 = vmatpush2.msra.mxu0 0.0
        %5324 = vmatprep.subr.mxu0 0.0
        %5325 = vmatpush2.msra.mxu0 0.0
        %5326 = vmatprep.subr.mxu0 0.0
        %5327 = vmatpush2.msra.mxu0 0.0
        %5328 = vmatprep.subr.mxu0 0.0
        %5329 = vmatpush2.msra.mxu0 0.0
        %5330 = vmatprep.subr.mxu0 0.0
        %5331 = vmatpush2.msra.mxu0 0.0
        %5332 = vmatprep.subr.mxu0 0.0
        %5333 = vmatpush2.msra.mxu0 0.0
        %5334 = vmatprep.subr.mxu0 0.0
        %5335 = vmatpush2.msra.mxu0 0.0
        %5336 = vmatprep.mubr.f32.mxu0 0.0
        %5337 = vmatmul.mubr.f32.gmra.mxu0 %v5267
        %v5338 = vpop.f32.mrf.mxu0
        %v5339 = vadd.f32 0.0, %v5338
        %v5340 = vpop.f32.mrf.mxu0
        %5341 = vmatprep.mubr.f32.mxu0 0.0
        %5342 = vmatmul.mubr.f32.gmra.mxu0 %v5270
        %v5343 = vpop.f32.mrf.mxu0
        %v5344 = vadd.f32 0.0, %v5343
        %v5345 = vpop.f32.mrf.mxu0
        %5346 = vdwg.mxu0
        %s5347 = scalar_lea.vmem %s536, 32
        %v5348 = vld [vmem:[%s5347] sm:$0xff]
        %v5349 = vld [vmem:[%s5347 + $0x8] sm:$0xff]
        %v5350 = vld [vmem:[%s5347 + $0x10] sm:$0xff]
        %v5351 = vld [vmem:[%s5347 + $0x18] sm:$0xff]
        %5352 = vmatprep.subr.mxu0 0.0
        %5353 = vmatpush1.msra.mxu0 0.0
        %5354 = vmatprep.subr.mxu0 0.0
        %5355 = vmatpush1.msra.mxu0 0.0
        %5356 = vmatprep.subr.mxu0 0.0
        %5357 = vmatpush1.msra.mxu0 0.0
        %5358 = vmatprep.subr.mxu0 0.0
        %5359 = vmatpush1.msra.mxu0 0.0
        %5360 = vmatprep.subr.mxu0 0.0
        %5361 = vmatpush1.msra.mxu0 0.0
        %5362 = vmatprep.subr.mxu0 0.0
        %5363 = vmatpush1.msra.mxu0 0.0
        %5364 = vmatprep.subr.mxu0 0.0
        %5365 = vmatpush1.msra.mxu0 0.0
        %5366 = vmatprep.subr.mxu0 0.0
        %5367 = vmatpush1.msra.mxu0 0.0
        %5368 = vmatprep.subr.mxu0 0.0
        %5369 = vmatpush1.msra.mxu0 0.0
        %5370 = vmatprep.subr.mxu0 0.0
        %5371 = vmatpush1.msra.mxu0 0.0
        %5372 = vmatprep.subr.mxu0 0.0
        %5373 = vmatpush1.msra.mxu0 0.0
        %5374 = vmatprep.subr.mxu0 0.0
        %5375 = vmatpush1.msra.mxu0 0.0
        %5376 = vmatprep.subr.mxu0 0.0
        %5377 = vmatpush1.msra.mxu0 %v5351
        %5378 = vmatprep.subr.mxu0 0.0
        %5379 = vmatpush1.msra.mxu0 %v5350
        %5380 = vmatprep.subr.mxu0 0.0
        %5381 = vmatpush1.msra.mxu0 %v5349
        %5382 = vmatprep.subr.mxu0 0.0
        %5383 = vmatpush1.msra.mxu0 %v5348
        %5384 = vmatprep.subr.mxu0 0.0
        %5385 = vmatpush2.msra.mxu0 0.0
        %5386 = vmatprep.subr.mxu0 0.0
        %5387 = vmatpush2.msra.mxu0 0.0
        %5388 = vmatprep.subr.mxu0 0.0
        %5389 = vmatpush2.msra.mxu0 0.0
        %5390 = vmatprep.subr.mxu0 0.0
        %5391 = vmatpush2.msra.mxu0 0.0
        %5392 = vmatprep.subr.mxu0 0.0
        %5393 = vmatpush2.msra.mxu0 0.0
        %5394 = vmatprep.subr.mxu0 0.0
        %5395 = vmatpush2.msra.mxu0 0.0
        %5396 = vmatprep.subr.mxu0 0.0
        %5397 = vmatpush2.msra.mxu0 0.0
        %5398 = vmatprep.subr.mxu0 0.0
        %5399 = vmatpush2.msra.mxu0 0.0
        %5400 = vmatprep.subr.mxu0 0.0
        %5401 = vmatpush2.msra.mxu0 0.0
        %5402 = vmatprep.subr.mxu0 0.0
        %5403 = vmatpush2.msra.mxu0 0.0
        %5404 = vmatprep.subr.mxu0 0.0
        %5405 = vmatpush2.msra.mxu0 0.0
        %5406 = vmatprep.subr.mxu0 0.0
        %5407 = vmatpush2.msra.mxu0 0.0
        %5408 = vmatprep.subr.mxu0 0.0
        %5409 = vmatpush2.msra.mxu0 0.0
        %5410 = vmatprep.subr.mxu0 0.0
        %5411 = vmatpush2.msra.mxu0 0.0
        %5412 = vmatprep.subr.mxu0 0.0
        %5413 = vmatpush2.msra.mxu0 0.0
        %5414 = vmatprep.subr.mxu0 0.0
        %5415 = vmatpush2.msra.mxu0 0.0
        %5416 = vmatprep.mubr.f32.mxu0 0.0
        %5417 = vmatmul.mubr.f32.gmra.mxu0 %v5267
        %v5418 = vpop.f32.mrf.mxu0
        %v5419 = vadd.f32 0.0, %v5418
        %v5420 = vpop.f32.mrf.mxu0
        %5421 = vmatprep.mubr.f32.mxu0 0.0
        %5422 = vmatmul.mubr.f32.gmra.mxu0 %v5270
        %v5423 = vpop.f32.mrf.mxu0
        %v5424 = vadd.f32 0.0, %v5423
        %v5425 = vpop.f32.mrf.mxu0
        %5426 = vdwg.mxu0
        %v5427 = vmul.f32 %v5419, 0.70710677
        %v5428 = vmul.f32 %v5424, 0.70710677
        %v5429 = vand.u32 2147483647, %v5427
        %v5430 = vand.u32 2147483647, %v5428
        %v5431 = vmul.f32 %v5429, 0.3275911
        %v5432 = vmul.f32 %v5430, 0.3275911
        %v5433 = vadd.f32 %v5431, 1.0
        %v5434 = vadd.f32 %v5432, 1.0
        %v5435 = vrcp.pop %v5433
        %v5436 = vmul.f32 1.0, %v5435
        %v5437 = vrcp.pop %v5434
        %v5438 = vmul.f32 1.0, %v5437
        %v5439 = vmul.f32 %v5436, 1.0614054
        %v5440 = vmul.f32 %v5438, 1.0614054
        %v5441 = vsub.f32 %v5439, 1.4531521
        %v5442 = vsub.f32 %v5440, 1.4531521
        %v5443 = vmul.f32 %v5441, %v5436
        %v5444 = vmul.f32 %v5442, %v5438
        %v5445 = vadd.f32 %v5443, 1.4214138
        %v5446 = vadd.f32 %v5444, 1.4214138
        %v5447 = vmul.f32 %v5445, %v5436
        %v5448 = vmul.f32 %v5446, %v5438
        %v5449 = vsub.f32 %v5447, 0.28449672
        %v5450 = vsub.f32 %v5448, 0.28449672
        %v5451 = vmul.f32 %v5449, %v5436
        %v5452 = vmul.f32 %v5450, %v5438
        %v5453 = vadd.f32 %v5451, 0.2548296
        %v5454 = vadd.f32 %v5452, 0.2548296
        %v5455 = vmul.f32 %v5453, %v5436
        %v5456 = vmul.f32 %v5454, %v5438
        %v5457 = vsub.f32 0.0, %v5429
        %v5458 = vsub.f32 0.0, %v5430
        %v5459 = vmul.f32 %v5457, %v5429
        %v5460 = vmul.f32 %v5458, %v5430
        %v5461 = vmul.f32 %v5459, 1.442695
        %v5462 = vpow.pop %v5461
        %v5463 = vmul.f32 %v5460, 1.442695
        %v5464 = vpow.pop %v5463
        %v5465 = vmul.f32 %v5455, %v5462
        %v5466 = vmul.f32 %v5456, %v5464
        %v5467 = vsub.f32 1.0, %v5465
        %v5468 = vsub.f32 1.0, %v5466
        %vm5469 = vcmp.ge.f32.partialorder %v5427, 0.0
        %vm5470 = vcmp.ge.f32.partialorder %v5428, 0.0
        %v5471 = vsub.f32 0.0, %v5467
        %v5472 = vsub.f32 0.0, %v5468
        %v5473 = vsel %vm5469, %v5467, %v5471
        %v5474 = vsel %vm5470, %v5468, %v5472
        %v5475 = vmul.f32 %v5419, 0.5
        %v5476 = vmul.f32 %v5424, 0.5
        %v5477 = vadd.f32 %v5473, 1.0
        %v5478 = vadd.f32 %v5474, 1.0
        %v5479 = vmul.f32 %v5475, %v5477
        %v5480 = vmul.f32 %v5476, %v5478
        %v5481 = vmul.f32 %v5339, %v5479
        %v5482 = vmul.f32 %v5344, %v5480
        %vm5483 = vcmask 343040
        %v5484 = vsel %vm5483, %v5481, 0.0
        %5485 = vadd.xlane.f32.xlu0 %v5484
        %v5486 = vpop.xlane.xlu0 %5485
        %v5487 = vsel %vm5483, %v5482, 0.0
        %5488 = vadd.xlane.f32.xlu0 %v5487
        %v5489 = vpop.xlane.xlu0 %5488
        %v5490 = vrcp.pop 42.0
        %v5491 = vmul.f32 %v5486, %v5490
        %v5492 = vmul.f32 %v5489, %v5490
        %v5493 = vsub.f32 %v5481, %v5491
        %v5494 = vsub.f32 %v5482, %v5492
        %v5495 = vmul.f32 %v5493, %v5493
        %v5496 = vmul.f32 %v5494, %v5494
        %v5497 = vsel %vm5483, %v5495, 0.0
        %5498 = vadd.xlane.f32.xlu0 %v5497
        %v5499 = vpop.xlane.xlu0 %5498
        %v5500 = vsel %vm5483, %v5496, 0.0
        %5501 = vadd.xlane.f32.xlu0 %v5500
        %v5502 = vpop.xlane.xlu0 %5501
        %v5503 = vmul.f32 %v5499, %v5490
        %v5504 = vmul.f32 %v5502, %v5490
        %v5505 = vadd.f32 %v5503, 1e-05
        %v5506 = vadd.f32 %v5504, 1e-05
        %v5507 = vrsqrt.pop %v5505
        %v5508 = vrsqrt.pop %v5506
        %v5509 = vmul.f32 %v5493, %v5507
        %v5510 = vmul.f32 %v5494, %v5508
        %v5511 = vld [vmem:[%s541] sm:$0xff]
        %v5512 = vld [vmem:[%s541 + $0x8] sm:$0xff]
        %v5513 = vld [vmem:[%s541 + $0x10] sm:$0xff]
        %v5514 = vld [vmem:[%s541 + $0x18] sm:$0xff]
        %v5515 = vld [vmem:[%s541 + $0x20] sm:$0xff]
        %v5516 = vld [vmem:[%s541 + $0x28] sm:$0x3]
        %v5518 = vsel %vm5483, %v5509, 0
        %v5521 = vsel %vm5483, %v5510, 0
        %vm5523 = vcmask 1041408
        %v5525 = vsel %vm5523, %v5516, 0
        %5527 = vmatprep.subr.mxu0 0.0
        %5528 = vmatpush1.msra.mxu0 0.0
        %5529 = vmatprep.subr.mxu0 0.0
        %5530 = vmatpush1.msra.mxu0 0.0
        %5531 = vmatprep.subr.mxu0 0.0
        %5532 = vmatpush1.msra.mxu0 0.0
        %5533 = vmatprep.subr.mxu0 0.0
        %5534 = vmatpush1.msra.mxu0 0.0
        %5535 = vmatprep.subr.mxu0 0.0
        %5536 = vmatpush1.msra.mxu0 0.0
        %5537 = vmatprep.subr.mxu0 0.0
        %5538 = vmatpush1.msra.mxu0 0.0
        %5539 = vmatprep.subr.mxu0 0.0
        %5540 = vmatpush1.msra.mxu0 0.0
        %5541 = vmatprep.subr.mxu0 0.0
        %5542 = vmatpush1.msra.mxu0 0.0
        %5543 = vmatprep.subr.mxu0 0.0
        %5544 = vmatpush1.msra.mxu0 0.0
        %5545 = vmatprep.subr.mxu0 0.0
        %5546 = vmatpush1.msra.mxu0 0.0
        %5547 = vmatprep.subr.mxu0 0.0
        %5548 = vmatpush1.msra.mxu0 %v5525
        %5549 = vmatprep.subr.mxu0 0.0
        %5550 = vmatpush1.msra.mxu0 %v5515
        %5551 = vmatprep.subr.mxu0 0.0
        %5552 = vmatpush1.msra.mxu0 %v5514
        %5553 = vmatprep.subr.mxu0 0.0
        %5554 = vmatpush1.msra.mxu0 %v5513
        %5555 = vmatprep.subr.mxu0 0.0
        %5556 = vmatpush1.msra.mxu0 %v5512
        %5557 = vmatprep.subr.mxu0 0.0
        %5558 = vmatpush1.msra.mxu0 %v5511
        %5559 = vmatprep.subr.mxu0 0.0
        %5560 = vmatpush2.msra.mxu0 0.0
        %5561 = vmatprep.subr.mxu0 0.0
        %5562 = vmatpush2.msra.mxu0 0.0
        %5563 = vmatprep.subr.mxu0 0.0
        %5564 = vmatpush2.msra.mxu0 0.0
        %5565 = vmatprep.subr.mxu0 0.0
        %5566 = vmatpush2.msra.mxu0 0.0
        %5567 = vmatprep.subr.mxu0 0.0
        %5568 = vmatpush2.msra.mxu0 0.0
        %5569 = vmatprep.subr.mxu0 0.0
        %5570 = vmatpush2.msra.mxu0 0.0
        %5571 = vmatprep.subr.mxu0 0.0
        %5572 = vmatpush2.msra.mxu0 0.0
        %5573 = vmatprep.subr.mxu0 0.0
        %5574 = vmatpush2.msra.mxu0 0.0
        %5575 = vmatprep.subr.mxu0 0.0
        %5576 = vmatpush2.msra.mxu0 0.0
        %5577 = vmatprep.subr.mxu0 0.0
        %5578 = vmatpush2.msra.mxu0 0.0
        %5579 = vmatprep.subr.mxu0 0.0
        %5580 = vmatpush2.msra.mxu0 0.0
        %5581 = vmatprep.subr.mxu0 0.0
        %5582 = vmatpush2.msra.mxu0 0.0
        %5583 = vmatprep.subr.mxu0 0.0
        %5584 = vmatpush2.msra.mxu0 0.0
        %5585 = vmatprep.subr.mxu0 0.0
        %5586 = vmatpush2.msra.mxu0 0.0
        %5587 = vmatprep.subr.mxu0 0.0
        %5588 = vmatpush2.msra.mxu0 0.0
        %5589 = vmatprep.subr.mxu0 0.0
        %5590 = vmatpush2.msra.mxu0 0.0
        %5591 = vmatprep.mubr.f32.mxu0 0.0
        %5592 = vmatmul.mubr.f32.gmra.mxu0 %v5518
        %v5593 = vpop.f32.mrf.mxu0
        %v5594 = vadd.f32 0.0, %v5593
        %v5595 = vpop.f32.mrf.mxu0
        %5596 = vmatprep.mubr.f32.mxu0 0.0
        %5597 = vmatmul.mubr.f32.gmra.mxu0 %v5521
        %v5598 = vpop.f32.mrf.mxu0
        %v5599 = vadd.f32 0.0, %v5598
        %v5600 = vpop.f32.mrf.mxu0
        %5601 = vdwg.mxu0
        %v5602 = vadd.f32 %v5234, %v5594
        %v5603 = vadd.f32 %v5235, %v5599
        %5604 = vst.msk [vmem:[#allocation2] sm:$0xff] %vm556, %v5602
        %5605 = vst.msk [vmem:[#allocation2 + $0x8] sm:$0xff] %vm556, %v5603
        %p5606 = scmp.eq.s32.totalorder %s28, 1
        // Predicated region
        $region69: #{tpu_custom_call.1} parent=63 // pred_check
          %p5607 = pneg %p5606
        $region70: #{tpu_custom_call.1} parent=63 // pred_check_branch
          %5609 = sbr.rel (%p5607) target = $region72
        $region71: #{tpu_custom_call.1} parent=63 // pred_region
          %v5610 = vsel %vm556, %v5602, 0.0
          %5611 = vadd.xlane.f32.xlu0 %v5610
          %v5612 = vpop.xlane.xlu0 %5611
          %v5613 = vsel %vm556, %v5603, 0.0
          %5614 = vadd.xlane.f32.xlu0 %v5613
          %v5615 = vpop.xlane.xlu0 %5614
          %v5616 = vmul.f32 %v5612, %v563
          %v5617 = vmul.f32 %v5615, %v563
          %v5618 = vsub.f32 %v5602, %v5616
          %v5619 = vsub.f32 %v5603, %v5617
          %v5620 = vmul.f32 %v5618, %v5618
          %v5621 = vmul.f32 %v5619, %v5619
          %v5622 = vsel %vm556, %v5620, 0.0
          %5623 = vadd.xlane.f32.xlu0 %v5622
          %v5624 = vpop.xlane.xlu0 %5623
          %v5625 = vsel %vm556, %v5621, 0.0
          %5626 = vadd.xlane.f32.xlu0 %v5625
          %v5627 = vpop.xlane.xlu0 %5626
          %v5628 = vmul.f32 %v5624, %v563
          %v5629 = vmul.f32 %v5627, %v563
          %v5630 = vadd.f32 %v5628, 1e-05
          %v5631 = vadd.f32 %v5629, 1e-05
          %v5632 = vrsqrt.pop %v5630
          %v5633 = vrsqrt.pop %v5631
          %v5634 = vmul.f32 %v5618, %v5632
          %v5635 = vmul.f32 %v5619, %v5633
          %5636 = vst.msk [vmem:[#allocation3] sm:$0xff] %vm556, %v5634
          %5637 = vst.msk [vmem:[#allocation3 + $0x8] sm:$0xff] %vm556, %v5635
        $region72: #{tpu_custom_call.1} parent=63 // pred_fallthru
          _
        // Predicated region
        $region73: #{tpu_custom_call.1} parent=63 // pred_check
          %p5638 = pneg %p329
        $region74: #{tpu_custom_call.1} parent=63 // pred_check_branch
          %5640 = sbr.rel (%p5638) target = $region76
        $region75: #{tpu_custom_call.1} parent=63 // pred_region
          %s5641 = smul.u32 2, %s27
          %s5643 = ssub.s32 256, 256
          %5644 = vsyncadd [#allocation4], %s5643
          %s5645 = smul.addr %s5641, 128
          %s5646 = scalar_lea.hbm %s11, %s5645
          %s5647 = sshll.u32 [#allocation3], 4
          %s5648 = int_to_ptr.vmem [resolvable:$true] %s5647
          %5653 = dma.vmem_to_hbm [thread:$0]  %s5648, 256, %s5646, [#allocation4], 128, 128, 8
        $region76: #{tpu_custom_call.1} parent=63 // pred_fallthru
          _
        // Predicated region
        $region77: #{tpu_custom_call.1} parent=63 // pred_check
          %p5654 = pneg %p329
        $region78: #{tpu_custom_call.1} parent=63 // pred_check_branch
          %5656 = sbr.rel (%p5654) target = $region80
        $region79: #{tpu_custom_call.1} parent=63 // pred_region
          %5657 = dma.done [#allocation4], 256
        $region80: #{tpu_custom_call.1} parent=63 // pred_fallthru
          _
      $region64: #{tpu_custom_call.1} parent=5 // pred_fallthru
        _
      %p5658 = scmp.le.s32.totalorder 2, %s18
      // Predicated region
      $region81: #{tpu_custom_call.1} parent=5 // pred_check
        %p5659 = pneg %p5658
      $region82: #{tpu_custom_call.1} parent=5 // pred_check_branch
        %5661 = sbr.rel (%p5659) target = $region84
      $region83: #{tpu_custom_call.1} parent=5 // pred_region
        %s5662 = ssub.s32 %s18, 2
      $region84: #{tpu_custom_call.1} parent=5 // pred_fallthru
        _
    $region6: #{tpu_custom_call.1} parent=1 // loop_footer
      %s22 = sadd.s32 1, %s18
    $region7: #{tpu_custom_call.1} parent=1 // loop_footer_branch
      %17 = sbr.rel target = $region3
    $region8: #{tpu_custom_call.1} parent=1 // loop_exit
      _
    %5663 = vsyncpa [#allocation4], 1
    %s5664 = scalar_lea.sflag [#allocation4], 1
    %5665 = vsyncpa %s5664, 1

</llo_original>
